<compile_context>
chip_gen: v7x
topology: tpu7x:2x2x1
jax: 0.10.0
libtpu: 0.0.40
codegen_flags: <defaults>
</compile_context>

<pallas_src>
import functools

import jax
import jax.numpy as jnp
from jax.experimental import pallas as pl
from jax.experimental.pallas import tpu as pltpu  # noqa: F401  (TPU backend)

# ----------------------------------------------------------------------------
# Scaled-down ResNet-101-style bottleneck backbone config.
# TODO(synk): torchvision resnet101 is [3,4,23,3] blocks / width 64 / 2048 final
# features with pretrained weights; here depth/width are scaled down ([1,1,1,1],
# width 8, 256 features) and weights are synthetic, but the forward structure
# (7x7 stem conv + BN + ReLU, 3x3 maxpool, bottleneck blocks with 1x1 downsample,
# global avgpool, permute(0,2,3,1).reshape(-1,F), two Linear heads) is identical.
STEM_WIDTH = 8
STAGE_PLANES = (8, 16, 32, 64)
STAGE_BLOCKS = (1, 1, 1, 1)
STAGE_STRIDES = (1, 2, 2, 2)
EXPANSION = 4
CLASSIFY_IN_FEATURES = STAGE_PLANES[-1] * EXPANSION  # 256
ACTION_DIM = 6
CRITIC_DIM = 1
BN_EPS = 1e-5

LANE = 128  # channel axes are zero-padded to multiples of this for lane-dense stores


def _rup(x, m=LANE):
    return ((x + m - 1) // m) * m


# ----------------------------------------------------------------------------
# Pallas kernels.  Gridless single-block calls: every operand is tiny (<1 MB) so
# whole-array blocks fit scoped VMEM on v5e/v6e/v7x with huge margin.
# TODO(synk): when batch/resolution scale to real ResNet-101 sizes, add an M-row
# grid (dimension_semantics=("parallel",...) for the v7x dual-TC split, 512-1024
# row tiles, vmem_limit_bytes per generation) together with a cross-tile sum /
# sum-sq reduction for the BN batch statistics.
# ----------------------------------------------------------------------------
def _bn(y, g, b):
    # Train-mode BatchNorm with per-forward batch stats.  Two-pass variance
    # (mean, then centered moment) avoids one-pass E[y^2]-E[y]^2 cancellation;
    # stats folded into per-channel scale/shift so the (M, C) apply is 2 VALU
    # ops/elem, rsqrt stays on the EUP slot.  Padded output channels have zero
    # weights/gamma/beta -> scale=shift=0 -> they stay exactly zero.
    m = jnp.mean(y, axis=0, keepdims=True)
    d = y - m
    var = jnp.mean(d * d, axis=0, keepdims=True)
    scale = jax.lax.rsqrt(var + BN_EPS) * g
    shift = b - m * scale
    return y * scale + shift


def _conv_bn_kernel(a_ref, w_ref, g_ref, b_ref, o_ref, *, relu):
    # a: (M, K) bf16 patches, w: (K, Cp) bf16, g/b: (1, Cp) f32, o: (M, Cp) bf16
    y = jnp.dot(a_ref[...], w_ref[...], preferred_element_type=jnp.float32)
    y = _bn(y, g_ref[...], b_ref[...])
    if relu:
        y = jnp.maximum(y, 0.0)
    o_ref[...] = y.astype(o_ref.dtype)


def _block_tail_down_kernel(p2_ref, w2_ref, g2_ref, b2_ref,
                            w3_ref, g3_ref, b3_ref,
                            idn_ref, wd_ref, gd_ref, bd_ref, o_ref):
    # Fused bottleneck tail (one launch): conv2 (3x3 as im2col GEMM)+BN+ReLU ->
    # conv3 (1x1)+BN, downsample (1x1 on the strided identity)+BN, add, ReLU.
    # Each BN sees exactly the rows PyTorch would (output-resolution M rows).
    h = jnp.dot(p2_ref[...], w2_ref[...], preferred_element_type=jnp.float32)
    h = jnp.maximum(_bn(h, g2_ref[...], b2_ref[...]), 0.0)
    y = jnp.dot(h.astype(jnp.bfloat16), w3_ref[...],
                preferred_element_type=jnp.float32)
    y = _bn(y, g3_ref[...], b3_ref[...])
    idn = jnp.dot(idn_ref[...], wd_ref[...], preferred_element_type=jnp.float32)
    idn = _bn(idn, gd_ref[...], bd_ref[...])
    o_ref[...] = jnp.maximum(y + idn, 0.0).astype(o_ref.dtype)


def _block_tail_id_kernel(p2_ref, w2_ref, g2_ref, b2_ref,
                          w3_ref, g3_ref, b3_ref, idn_ref, o_ref):
    # Same as above but with an identity residual (no downsample conv).
    h = jnp.dot(p2_ref[...], w2_ref[...], preferred_element_type=jnp.float32)
    h = jnp.maximum(_bn(h, g2_ref[...], b2_ref[...]), 0.0)
    y = jnp.dot(h.astype(jnp.bfloat16), w3_ref[...],
                preferred_element_type=jnp.float32)
    y = _bn(y, g3_ref[...], b3_ref[...])
    o_ref[...] = jnp.maximum(y + idn_ref[...].astype(jnp.float32),
                             0.0).astype(o_ref.dtype)


def _pool_heads_kernel(x_ref, w_ref, b_ref, o_ref):
    # fused AdaptiveAvgPool2d((1,1)) + concatenated action/critic Linear heads
    pooled = jnp.mean(x_ref[...].astype(jnp.float32), axis=1)        # (N, C)
    o_ref[...] = jnp.dot(pooled, w_ref[...],
                         preferred_element_type=jnp.float32) + b_ref[...]


def _pallas_full(kernel, args, out_shape):
    # gridless pallas_call: whole arrays become single VMEM blocks.
    return pl.pallas_call(kernel, out_shape=out_shape)(*args)


# ----------------------------------------------------------------------------
# Wrapper glue (padding / strided views / reshapes) stays in the jitted wrapper
# where XLA fuses it; all GEMM / BN / pool math is in Pallas.
# ----------------------------------------------------------------------------
def _im2col(x, c_real, kh, kw, stride, pad):
    """Compact-K GEMM patches from a lane-padded NHWC activation.

    The channel axis is sliced back to its real width before the kh*kw taps are
    concatenated; only the TOTAL K = kh*kw*c_real is zero-padded once to a 128
    multiple (no per-tap 128-lane padding).
    """
    n, h, w, c_store = x.shape
    if kh == 1 and kw == 1 and pad == 0 and c_store == _rup(c_real):
        # 1x1 conv on a lane-padded activation: padded lanes are exactly zero,
        # so K is already the lane-padded width (keeps lane-dense stores; at
        # toy widths this padding, not math, sets the MXU cycles -- accepted).
        if stride != 1:
            x = x[:, ::stride, ::stride, :]
        _, ho, wo, _ = x.shape
        return x.reshape(n * ho * wo, c_store), ho, wo
    xs = x[..., :c_real]
    xp = jnp.pad(xs, ((0, 0), (pad, pad), (pad, pad), (0, 0)))
    ho = (h + 2 * pad - kh) // stride + 1
    wo = (w + 2 * pad - kw) // stride + 1
    cols = [xp[:, i:i + stride * ho:stride, j:j + stride * wo:stride, :]
            for i in range(kh) for j in range(kw)]
    patches = jnp.concatenate(cols, axis=-1).reshape(n * ho * wo, kh * kw * c_real)
    k_pad = _rup(patches.shape[1])
    if k_pad != patches.shape[1]:
        patches = jnp.pad(patches, ((0, 0), (0, k_pad - patches.shape[1])))
    return patches, ho, wo


def conv_bn(x, layer, *, stride, pad, relu):
    patches, ho, wo = _im2col(x, layer["cin"], layer["kh"], layer["kw"], stride, pad)
    cp = layer["w"].shape[1]
    out = _pallas_full(
        functools.partial(_conv_bn_kernel, relu=relu),
        [patches.astype(jnp.bfloat16), layer["w"], layer["g"], layer["b"]],
        jax.ShapeDtypeStruct((patches.shape[0], cp), jnp.bfloat16))
    return out.reshape(x.shape[0], ho, wo, cp)


def maxpool2d(x, k=3, stride=2, pad=1):
    # Pairwise max over the 9 strided window views, fused by XLA in the jitted
    # wrapper: no stacked (9, M, C) slab in HBM, no extra launch, stays bf16.
    # Zero spatial padding is equivalent to -inf here because the input is
    # post-ReLU (>= 0) -- do not reuse this pool on signed activations.
    n, h, w, c = x.shape
    xp = jnp.pad(x, ((0, 0), (pad, pad), (pad, pad), (0, 0)))
    ho = (h + 2 * pad - k) // stride + 1
    wo = (w + 2 * pad - k) // stride + 1
    out = None
    for i in range(k):
        for j in range(k):
            v = xp[:, i:i + stride * ho:stride, j:j + stride * wo:stride, :]
            out = v if out is None else jnp.maximum(out, v)
    return out


# ----------------------------------------------------------------------------
# Parameters: deterministic synthetic weights in PyTorch layouts, packed ONCE
# into kernel-ready form: (K_pad, Cout_pad) bf16 GEMM matrices with COMPACT K,
# (1, Cout_pad) f32 BN affine, and both Linear heads merged into one GEMM.
# ----------------------------------------------------------------------------
def _make_conv(key, cout, cin, kh, kw):
    return jax.random.normal(key, (cout, cin, kh, kw), jnp.float32) * 0.05


def _make_bn(key, c):
    kg, kb = jax.random.split(key)
    gamma = 1.0 + 0.1 * jax.random.normal(kg, (1, c), jnp.float32)
    beta = 0.1 * jax.random.normal(kb, (1, c), jnp.float32)
    return gamma, beta


def _init_bottleneck(key, cin, planes, stride):
    ks = jax.random.split(key, 8)
    p = {
        "conv1": _make_conv(ks[0], planes, cin, 1, 1), "bn1": _make_bn(ks[1], planes),
        "conv2": _make_conv(ks[2], planes, planes, 3, 3), "bn2": _make_bn(ks[3], planes),
        "conv3": _make_conv(ks[4], planes * EXPANSION, planes, 1, 1),
        "bn3": _make_bn(ks[5], planes * EXPANSION),
        "stride": stride,
    }
    if stride != 1 or cin != planes * EXPANSION:
        p["down_conv"] = _make_conv(ks[6], planes * EXPANSION, cin, 1, 1)
        p["down_bn"] = _make_bn(ks[7], planes * EXPANSION)
    return p


def init_params(key):
    ks = jax.random.split(key, 16)
    params = {"stem_conv": _make_conv(ks[0], STEM_WIDTH, 3, 7, 7),
              "stem_bn": _make_bn(ks[1], STEM_WIDTH)}
    stages, cin, kidx = [], STEM_WIDTH, 2
    for planes, nblocks, stride in zip(STAGE_PLANES, STAGE_BLOCKS, STAGE_STRIDES):
        blocks = []
        for b in range(nblocks):
            s = stride if b == 0 else 1
            blocks.append(_init_bottleneck(ks[kidx], cin, planes, s))
            kidx += 1
            cin = planes * EXPANSION
        stages.append(blocks)
    params["stages"] = stages
    # PyTorch Linear layouts: weight (out, in), bias (out,)
    params["wa"] = jax.random.normal(ks[kidx + 0], (ACTION_DIM, CLASSIFY_IN_FEATURES),
                                     jnp.float32) * 0.05
    params["ba"] = jax.random.normal(ks[kidx + 1], (ACTION_DIM,), jnp.float32) * 0.05
    params["wc"] = jax.random.normal(ks[kidx + 2], (CRITIC_DIM, CLASSIFY_IN_FEATURES),
                                     jnp.float32) * 0.05
    params["bc"] = jax.random.normal(ks[kidx + 3], (CRITIC_DIM,), jnp.float32) * 0.05
    return params


def _pack_conv_bn(w, bn):
    gamma, beta = bn
    cout, cin, kh, kw = w.shape
    cout_pad = _rup(cout)
    # K ordering (kh, kw, cin) matches the im2col tap concatenation; K padded
    # ONCE to a 128 multiple.  For 1x1 convs this equals the lane-padded
    # activation width, so weight rows line up with the activation as stored.
    wmat = jnp.transpose(w, (2, 3, 1, 0)).reshape(kh * kw * cin, cout)
    k_pad = _rup(kh * kw * cin)
    wmat = jnp.pad(wmat, ((0, k_pad - kh * kw * cin), (0, cout_pad - cout)))
    return {"w": wmat.astype(jnp.bfloat16),
            "g": jnp.pad(gamma, ((0, 0), (0, cout_pad - cout))),
            "b": jnp.pad(beta, ((0, 0), (0, cout_pad - cout))),
            "kh": kh, "kw": kw, "cin": cin}


def pack_params(p):
    packed = {"stem": _pack_conv_bn(p["stem_conv"], p["stem_bn"])}
    stages = []
    for stage in p["stages"]:
        blocks = []
        for bp in stage:
            pb = {"c1": _pack_conv_bn(bp["conv1"], bp["bn1"]),
                  "c2": _pack_conv_bn(bp["conv2"], bp["bn2"]),
                  "c3": _pack_conv_bn(bp["conv3"], bp["bn3"]),
                  "stride": bp["stride"]}
            if "down_conv" in bp:
                pb["down"] = _pack_conv_bn(bp["down_conv"], bp["down_bn"])
            blocks.append(pb)
        stages.append(blocks)
    packed["stages"] = stages
    # merged action+critic heads: one GEMM with a lane-padded output, sliced later
    wh = jnp.concatenate([p["wa"], p["wc"]], axis=0)          # (7, 256)
    bh = jnp.concatenate([p["ba"], p["bc"]], axis=0)          # (7,)
    hp = _rup(ACTION_DIM + CRITIC_DIM)
    cfp = _rup(CLASSIFY_IN_FEATURES)
    packed["w_heads"] = jnp.pad(wh.T, ((0, cfp - CLASSIFY_IN_FEATURES),
                                       (0, hp - wh.shape[0])))
    packed["b_heads"] = jnp.pad(bh.reshape(1, -1), ((0, 0), (0, hp - bh.shape[0])))
    return packed


# ----------------------------------------------------------------------------
# Forward pass (ResNet backbone up to & incl. avgpool, permute to NHWC features,
# reshape(-1, classify_in_features), two Linear heads).
# ----------------------------------------------------------------------------
def _bottleneck_forward(x, p):
    n = x.shape[0]
    stride = p["stride"]
    # kernel 1: conv1 (1x1) GEMM + BN + ReLU
    y1 = conv_bn(x, p["c1"], stride=1, pad=0, relu=True)
    # conv2 patches with compact K, built in the jitted wrapper (XLA glue).
    # TODO(synk): at real ResNet-101 scale build the 3x3 taps in-kernel (shifted
    # pl.ds slices + f32 VMEM accumulator) to avoid this small HBM round-trip.
    patches, ho, wo = _im2col(y1, p["c2"]["cin"], 3, 3, stride, 1)
    cp = p["c3"]["w"].shape[1]
    out_shape = jax.ShapeDtypeStruct((patches.shape[0], cp), jnp.bfloat16)
    if "down" in p:
        x_sub = x if stride == 1 else x[:, ::stride, ::stride, :]
        idn = x_sub.reshape(patches.shape[0], x.shape[-1])
        out = _pallas_full(
            _block_tail_down_kernel,
            [patches.astype(jnp.bfloat16),
             p["c2"]["w"], p["c2"]["g"], p["c2"]["b"],
             p["c3"]["w"], p["c3"]["g"], p["c3"]["b"],
             idn, p["down"]["w"], p["down"]["g"], p["down"]["b"]],
            out_shape)
    else:
        idn = x.reshape(patches.shape[0], cp)
        out = _pallas_full(
            _block_tail_id_kernel,
            [patches.astype(jnp.bfloat16),
             p["c2"]["w"], p["c2"]["g"], p["c2"]["b"],
             p["c3"]["w"], p["c3"]["g"], p["c3"]["b"], idn],
            out_shape)
    return out.reshape(n, ho, wo, cp)


def model_forward(packed, x_nchw):
    x = jnp.transpose(x_nchw, (0, 2, 3, 1)).astype(jnp.bfloat16)   # NCHW -> NHWC bf16
    x = conv_bn(x, packed["stem"], stride=2, pad=3, relu=True)     # 7x7 s2, compact K
    x = maxpool2d(x, k=3, stride=2, pad=1)                          # XLA-fused, bf16
    for stage in packed["stages"]:
        for block in stage:
            x = _bottleneck_forward(x, block)
    n, h, w, c = x.shape
    # features.permute(0,2,3,1).reshape(-1, classify_in_features): pooled spatial
    # is 1x1 and the final channel count (256) is already lane-aligned.
    out = _pallas_full(
        _pool_heads_kernel,
        [x.reshape(n, h * w, c), packed["w_heads"], packed["b_heads"]],
        jax.ShapeDtypeStruct((n, packed["w_heads"].shape[1]), jnp.float32))
    return out[:, :ACTION_DIM], out[:, ACTION_DIM:ACTION_DIM + CRITIC_DIM]


if __name__ == "__main__":
    key = jax.random.PRNGKey(0)
    pkey, xkey = jax.random.split(key)
    packed = pack_params(init_params(pkey))
    images = jax.random.normal(xkey, (2, 3, 32, 32), jnp.float32)  # NCHW like PyTorch
    # jit the entire forward; packed params are closed over (constants), so weight
    # packing is done once and all im2col / pooling glue fuses around the kernels.
    fwd = jax.jit(functools.partial(model_forward, packed))
    out_action, out_critic = fwd(images)
    jax.block_until_ready((out_action, out_critic))
    assert out_action.shape == (2, ACTION_DIM)
    assert out_critic.shape == (2, CRITIC_DIM)
    print("KERNEL_OK")
</pallas_src>

<mosaic_0001>
module attributes {stable_mosaic.version = 11 : i64} {
  func.func @_conv_bn_kernel(%arg0: memref<512x256xbf16, #tpu.memory_space<vmem>>, %arg1: memref<256x128xbf16, #tpu.memory_space<vmem>>, %arg2: memref<1x128xf32, #tpu.memory_space<vmem>>, %arg3: memref<1x128xf32, #tpu.memory_space<vmem>>, %arg4: memref<512x128xbf16, #tpu.memory_space<vmem>>) attributes {dimension_semantics = [], scalar_prefetch = 0 : i64, scratch_operands = 0 : i64, tpu.core_type = #tpu.core_type<tc>} {
    %c0 = arith.constant 0 : index
    %c0_0 = arith.constant 0 : index
    %0 = vector.load %arg0[%c0, %c0_0] : memref<512x256xbf16, #tpu.memory_space<vmem>>, vector<512x256xbf16>
    %c0_1 = arith.constant 0 : index
    %c0_2 = arith.constant 0 : index
    %1 = vector.load %arg1[%c0_1, %c0_2] : memref<256x128xbf16, #tpu.memory_space<vmem>>, vector<256x128xbf16>
    %cst = arith.constant dense<0.000000e+00> : vector<512x128xf32>
    %2 = tpu.matmul %0, %1, %cst {dimension_numbers = #tpu.dot_dimension_numbers<[1], [0], [0], [1], [0, 0, 1, 1], [], []>} : vector<512x256xbf16>, vector<256x128xbf16>, vector<512x128xf32> -> vector<512x128xf32>
    %c0_3 = arith.constant 0 : index
    %c0_4 = arith.constant 0 : index
    %3 = vector.load %arg2[%c0_3, %c0_4] : memref<1x128xf32, #tpu.memory_space<vmem>>, vector<1x128xf32>
    %c0_5 = arith.constant 0 : index
    %c0_6 = arith.constant 0 : index
    %4 = vector.load %arg3[%c0_5, %c0_6] : memref<1x128xf32, #tpu.memory_space<vmem>>, vector<1x128xf32>
    %cst_7 = arith.constant dense<0.000000e+00> : vector<128xf32>
    %5 = vector.multi_reduction <add>, %2, %cst_7 [0] : vector<512x128xf32> to vector<128xf32>
    %6 = vector.shape_cast %5 : vector<128xf32> to vector<1x128xf32>
    %cst_8 = arith.constant 5.120000e+02 : f32
    %7 = vector.broadcast %cst_8 : f32 to vector<1x128xf32>
    %8 = arith.divf %6, %7 : vector<1x128xf32>
    %9 = vector.broadcast %8 : vector<1x128xf32> to vector<512x128xf32>
    %10 = arith.subf %2, %9 : vector<512x128xf32>
    %11 = arith.mulf %10, %10 : vector<512x128xf32>
    %cst_9 = arith.constant dense<0.000000e+00> : vector<128xf32>
    %12 = vector.multi_reduction <add>, %11, %cst_9 [0] : vector<512x128xf32> to vector<128xf32>
    %13 = vector.shape_cast %12 : vector<128xf32> to vector<1x128xf32>
    %cst_10 = arith.constant 5.120000e+02 : f32
    %14 = vector.broadcast %cst_10 : f32 to vector<1x128xf32>
    %15 = arith.divf %13, %14 : vector<1x128xf32>
    %cst_11 = arith.constant 9.99999974E-6 : f32
    %16 = vector.broadcast %cst_11 : f32 to vector<1x128xf32>
    %17 = arith.addf %15, %16 : vector<1x128xf32>
    %18 = math.rsqrt %17 : vector<1x128xf32>
    %19 = arith.mulf %18, %3 : vector<1x128xf32>
    %20 = arith.mulf %8, %19 : vector<1x128xf32>
    %21 = arith.subf %4, %20 : vector<1x128xf32>
    %22 = vector.broadcast %19 : vector<1x128xf32> to vector<512x128xf32>
    %23 = arith.mulf %2, %22 : vector<512x128xf32>
    %24 = vector.broadcast %21 : vector<1x128xf32> to vector<512x128xf32>
    %25 = arith.addf %23, %24 : vector<512x128xf32>
    %cst_12 = arith.constant 0.000000e+00 : f32
    %26 = vector.broadcast %cst_12 : f32 to vector<512x128xf32>
    %27 = arith.maximumf %25, %26 : vector<512x128xf32>
    %28 = arith.truncf %27 : vector<512x128xf32> to vector<512x128xbf16>
    %c0_13 = arith.constant 0 : index
    %c0_14 = arith.constant 0 : index
    %29 = vector.load %arg4[%c0_13, %c0_14] : memref<512x128xbf16, #tpu.memory_space<vmem>>, vector<512x128xbf16>
    tpu.vector_store %arg4[%c0_13, %c0_14], %28 {strides = array<i32>} : memref<512x128xbf16, #tpu.memory_space<vmem>>, vector<512x128xbf16>,
    return
  }
}

module attributes {stable_mosaic.version = 11 : i64} {
  func.func @_conv_bn_kernel(%arg0: memref<128x128xbf16, #tpu.memory_space<vmem>>, %arg1: memref<128x128xbf16, #tpu.memory_space<vmem>>, %arg2: memref<1x128xf32, #tpu.memory_space<vmem>>, %arg3: memref<1x128xf32, #tpu.memory_space<vmem>>, %arg4: memref<128x128xbf16, #tpu.memory_space<vmem>>) attributes {dimension_semantics = [], scalar_prefetch = 0 : i64, scratch_operands = 0 : i64, tpu.core_type = #tpu.core_type<tc>} {
    %c0 = arith.constant 0 : index
    %c0_0 = arith.constant 0 : index
    %0 = vector.load %arg0[%c0, %c0_0] : memref<128x128xbf16, #tpu.memory_space<vmem>>, vector<128x128xbf16>
    %c0_1 = arith.constant 0 : index
    %c0_2 = arith.constant 0 : index
    %1 = vector.load %arg1[%c0_1, %c0_2] : memref<128x128xbf16, #tpu.memory_space<vmem>>, vector<128x128xbf16>
    %cst = arith.constant dense<0.000000e+00> : vector<128x128xf32>
    %2 = tpu.matmul %0, %1, %cst {dimension_numbers = #tpu.dot_dimension_numbers<[1], [0], [0], [1], [0, 0, 1, 1], [], []>} : vector<128x128xbf16>, vector<128x128xbf16>, vector<128x128xf32> -> vector<128x128xf32>
    %c0_3 = arith.constant 0 : index
    %c0_4 = arith.constant 0 : index
    %3 = vector.load %arg2[%c0_3, %c0_4] : memref<1x128xf32, #tpu.memory_space<vmem>>, vector<1x128xf32>
    %c0_5 = arith.constant 0 : index
    %c0_6 = arith.constant 0 : index
    %4 = vector.load %arg3[%c0_5, %c0_6] : memref<1x128xf32, #tpu.memory_space<vmem>>, vector<1x128xf32>
    %cst_7 = arith.constant dense<0.000000e+00> : vector<128xf32>
    %5 = vector.multi_reduction <add>, %2, %cst_7 [0] : vector<128x128xf32> to vector<128xf32>
    %6 = vector.shape_cast %5 : vector<128xf32> to vector<1x128xf32>
    %cst_8 = arith.constant 1.280000e+02 : f32
    %7 = vector.broadcast %cst_8 : f32 to vector<1x128xf32>
    %8 = arith.divf %6, %7 : vector<1x128xf32>
    %9 = vector.broadcast %8 : vector<1x128xf32> to vector<128x128xf32>
    %10 = arith.subf %2, %9 : vector<128x128xf32>
    %11 = arith.mulf %10, %10 : vector<128x128xf32>
    %cst_9 = arith.constant dense<0.000000e+00> : vector<128xf32>
    %12 = vector.multi_reduction <add>, %11, %cst_9 [0] : vector<128x128xf32> to vector<128xf32>
    %13 = vector.shape_cast %12 : vector<128xf32> to vector<1x128xf32>
    %cst_10 = arith.constant 1.280000e+02 : f32
    %14 = vector.broadcast %cst_10 : f32 to vector<1x128xf32>
    %15 = arith.divf %13, %14 : vector<1x128xf32>
    %cst_11 = arith.constant 9.99999974E-6 : f32
    %16 = vector.broadcast %cst_11 : f32 to vector<1x128xf32>
    %17 = arith.addf %15, %16 : vector<1x128xf32>
    %18 = math.rsqrt %17 : vector<1x128xf32>
    %19 = arith.mulf %18, %3 : vector<1x128xf32>
    %20 = arith.mulf %8, %19 : vector<1x128xf32>
    %21 = arith.subf %4, %20 : vector<1x128xf32>
    %22 = vector.broadcast %19 : vector<1x128xf32> to vector<128x128xf32>
    %23 = arith.mulf %2, %22 : vector<128x128xf32>
    %24 = vector.broadcast %21 : vector<1x128xf32> to vector<128x128xf32>
    %25 = arith.addf %23, %24 : vector<128x128xf32>
    %cst_12 = arith.constant 0.000000e+00 : f32
    %26 = vector.broadcast %cst_12 : f32 to vector<128x128xf32>
    %27 = arith.maximumf %25, %26 : vector<128x128xf32>
    %28 = arith.truncf %27 : vector<128x128xf32> to vector<128x128xbf16>
    %c0_13 = arith.constant 0 : index
    %c0_14 = arith.constant 0 : index
    %29 = vector.load %arg4[%c0_13, %c0_14] : memref<128x128xbf16, #tpu.memory_space<vmem>>, vector<128x128xbf16>
    tpu.vector_store %arg4[%c0_13, %c0_14], %28 {strides = array<i32>} : memref<128x128xbf16, #tpu.memory_space<vmem>>, vector<128x128xbf16>,
    return
  }
}

module attributes {stable_mosaic.version = 11 : i64} {
  func.func @_block_tail_down_kernel(%arg0: memref<128x128xbf16, #tpu.memory_space<vmem>>, %arg1: memref<128x128xbf16, #tpu.memory_space<vmem>>, %arg2: memref<1x128xf32, #tpu.memory_space<vmem>>, %arg3: memref<1x128xf32, #tpu.memory_space<vmem>>, %arg4: memref<128x128xbf16, #tpu.memory_space<vmem>>, %arg5: memref<1x128xf32, #tpu.memory_space<vmem>>, %arg6: memref<1x128xf32, #tpu.memory_space<vmem>>, %arg7: memref<128x128xbf16, #tpu.memory_space<vmem>>, %arg8: memref<128x128xbf16, #tpu.memory_space<vmem>>, %arg9: memref<1x128xf32, #tpu.memory_space<vmem>>, %arg10: memref<1x128xf32, #tpu.memory_space<vmem>>, %arg11: memref<128x128xbf16, #tpu.memory_space<vmem>>) attributes {dimension_semantics = [], scalar_prefetch = 0 : i64, scratch_operands = 0 : i64, tpu.core_type = #tpu.core_type<tc>} {
    %c0 = arith.constant 0 : index
    %c0_0 = arith.constant 0 : index
    %0 = vector.load %arg0[%c0, %c0_0] : memref<128x128xbf16, #tpu.memory_space<vmem>>, vector<128x128xbf16>
    %c0_1 = arith.constant 0 : index
    %c0_2 = arith.constant 0 : index
    %1 = vector.load %arg1[%c0_1, %c0_2] : memref<128x128xbf16, #tpu.memory_space<vmem>>, vector<128x128xbf16>
    %cst = arith.constant dense<0.000000e+00> : vector<128x128xf32>
    %2 = tpu.matmul %0, %1, %cst {dimension_numbers = #tpu.dot_dimension_numbers<[1], [0], [0], [1], [0, 0, 1, 1], [], []>} : vector<128x128xbf16>, vector<128x128xbf16>, vector<128x128xf32> -> vector<128x128xf32>
    %c0_3 = arith.constant 0 : index
    %c0_4 = arith.constant 0 : index
    %3 = vector.load %arg2[%c0_3, %c0_4] : memref<1x128xf32, #tpu.memory_space<vmem>>, vector<1x128xf32>
    %c0_5 = arith.constant 0 : index
    %c0_6 = arith.constant 0 : index
    %4 = vector.load %arg3[%c0_5, %c0_6] : memref<1x128xf32, #tpu.memory_space<vmem>>, vector<1x128xf32>
    %cst_7 = arith.constant dense<0.000000e+00> : vector<128xf32>
    %5 = vector.multi_reduction <add>, %2, %cst_7 [0] : vector<128x128xf32> to vector<128xf32>
    %6 = vector.shape_cast %5 : vector<128xf32> to vector<1x128xf32>
    %cst_8 = arith.constant 1.280000e+02 : f32
    %7 = vector.broadcast %cst_8 : f32 to vector<1x128xf32>
    %8 = arith.divf %6, %7 : vector<1x128xf32>
    %9 = vector.broadcast %8 : vector<1x128xf32> to vector<128x128xf32>
    %10 = arith.subf %2, %9 : vector<128x128xf32>
    %11 = arith.mulf %10, %10 : vector<128x128xf32>
    %cst_9 = arith.constant dense<0.000000e+00> : vector<128xf32>
    %12 = vector.multi_reduction <add>, %11, %cst_9 [0] : vector<128x128xf32> to vector<128xf32>
    %13 = vector.shape_cast %12 : vector<128xf32> to vector<1x128xf32>
    %cst_10 = arith.constant 1.280000e+02 : f32
    %14 = vector.broadcast %cst_10 : f32 to vector<1x128xf32>
    %15 = arith.divf %13, %14 : vector<1x128xf32>
    %cst_11 = arith.constant 9.99999974E-6 : f32
    %16 = vector.broadcast %cst_11 : f32 to vector<1x128xf32>
    %17 = arith.addf %15, %16 : vector<1x128xf32>
    %18 = math.rsqrt %17 : vector<1x128xf32>
    %19 = arith.mulf %18, %3 : vector<1x128xf32>
    %20 = arith.mulf %8, %19 : vector<1x128xf32>
    %21 = arith.subf %4, %20 : vector<1x128xf32>
    %22 = vector.broadcast %19 : vector<1x128xf32> to vector<128x128xf32>
    %23 = arith.mulf %2, %22 : vector<128x128xf32>
    %24 = vector.broadcast %21 : vector<1x128xf32> to vector<128x128xf32>
    %25 = arith.addf %23, %24 : vector<128x128xf32>
    %cst_12 = arith.constant 0.000000e+00 : f32
    %26 = vector.broadcast %cst_12 : f32 to vector<128x128xf32>
    %27 = arith.maximumf %25, %26 : vector<128x128xf32>
    %28 = arith.truncf %27 : vector<128x128xf32> to vector<128x128xbf16>
    %c0_13 = arith.constant 0 : index
    %c0_14 = arith.constant 0 : index
    %29 = vector.load %arg4[%c0_13, %c0_14] : memref<128x128xbf16, #tpu.memory_space<vmem>>, vector<128x128xbf16>
    %cst_15 = arith.constant dense<0.000000e+00> : vector<128x128xf32>
    %30 = tpu.matmul %28, %29, %cst_15 {dimension_numbers = #tpu.dot_dimension_numbers<[1], [0], [0], [1], [0, 0, 1, 1], [], []>} : vector<128x128xbf16>, vector<128x128xbf16>, vector<128x128xf32> -> vector<128x128xf32>
    %c0_16 = arith.constant 0 : index
    %c0_17 = arith.constant 0 : index
    %31 = vector.load %arg5[%c0_16, %c0_17] : memref<1x128xf32, #tpu.memory_space<vmem>>, vector<1x128xf32>
    %c0_18 = arith.constant 0 : index
    %c0_19 = arith.constant 0 : index
    %32 = vector.load %arg6[%c0_18, %c0_19] : memref<1x128xf32, #tpu.memory_space<vmem>>, vector<1x128xf32>
    %cst_20 = arith.constant dense<0.000000e+00> : vector<128xf32>
    %33 = vector.multi_reduction <add>, %30, %cst_20 [0] : vector<128x128xf32> to vector<128xf32>
    %34 = vector.shape_cast %33 : vector<128xf32> to vector<1x128xf32>
    %cst_21 = arith.constant 1.280000e+02 : f32
    %35 = vector.broadcast %cst_21 : f32 to vector<1x128xf32>
    %36 = arith.divf %34, %35 : vector<1x128xf32>
    %37 = vector.broadcast %36 : vector<1x128xf32> to vector<128x128xf32>
    %38 = arith.subf %30, %37 : vector<128x128xf32>
    %39 = arith.mulf %38, %38 : vector<128x128xf32>
    %cst_22 = arith.constant dense<0.000000e+00> : vector<128xf32>
    %40 = vector.multi_reduction <add>, %39, %cst_22 [0] : vector<128x128xf32> to vector<128xf32>
    %41 = vector.shape_cast %40 : vector<128xf32> to vector<1x128xf32>
    %cst_23 = arith.constant 1.280000e+02 : f32
    %42 = vector.broadcast %cst_23 : f32 to vector<1x128xf32>
    %43 = arith.divf %41, %42 : vector<1x128xf32>
    %cst_24 = arith.constant 9.99999974E-6 : f32
    %44 = vector.broadcast %cst_24 : f32 to vector<1x128xf32>
    %45 = arith.addf %43, %44 : vector<1x128xf32>
    %46 = math.rsqrt %45 : vector<1x128xf32>
    %47 = arith.mulf %46, %31 : vector<1x128xf32>
    %48 = arith.mulf %36, %47 : vector<1x128xf32>
    %49 = arith.subf %32, %48 : vector<1x128xf32>
    %50 = vector.broadcast %47 : vector<1x128xf32> to vector<128x128xf32>
    %51 = arith.mulf %30, %50 : vector<128x128xf32>
    %52 = vector.broadcast %49 : vector<1x128xf32> to vector<128x128xf32>
    %53 = arith.addf %51, %52 : vector<128x128xf32>
    %c0_25 = arith.constant 0 : index
    %c0_26 = arith.constant 0 : index
    %54 = vector.load %arg7[%c0_25, %c0_26] : memref<128x128xbf16, #tpu.memory_space<vmem>>, vector<128x128xbf16>
    %c0_27 = arith.constant 0 : index
    %c0_28 = arith.constant 0 : index
    %55 = vector.load %arg8[%c0_27, %c0_28] : memref<128x128xbf16, #tpu.memory_space<vmem>>, vector<128x128xbf16>
    %cst_29 = arith.constant dense<0.000000e+00> : vector<128x128xf32>
    %56 = tpu.matmul %54, %55, %cst_29 {dimension_numbers = #tpu.dot_dimension_numbers<[1], [0], [0], [1], [0, 0, 1, 1], [], []>} : vector<128x128xbf16>, vector<128x128xbf16>, vector<128x128xf32> -> vector<128x128xf32>
    %c0_30 = arith.constant 0 : index
    %c0_31 = arith.constant 0 : index
    %57 = vector.load %arg9[%c0_30, %c0_31] : memref<1x128xf32, #tpu.memory_space<vmem>>, vector<1x128xf32>
    %c0_32 = arith.constant 0 : index
    %c0_33 = arith.constant 0 : index
    %58 = vector.load %arg10[%c0_32, %c0_33] : memref<1x128xf32, #tpu.memory_space<vmem>>, vector<1x128xf32>
    %cst_34 = arith.constant dense<0.000000e+00> : vector<128xf32>
    %59 = vector.multi_reduction <add>, %56, %cst_34 [0] : vector<128x128xf32> to vector<128xf32>
    %60 = vector.shape_cast %59 : vector<128xf32> to vector<1x128xf32>
    %cst_35 = arith.constant 1.280000e+02 : f32
    %61 = vector.broadcast %cst_35 : f32 to vector<1x128xf32>
    %62 = arith.divf %60, %61 : vector<1x128xf32>
    %63 = vector.broadcast %62 : vector<1x128xf32> to vector<128x128xf32>
    %64 = arith.subf %56, %63 : vector<128x128xf32>
    %65 = arith.mulf %64, %64 : vector<128x128xf32>
    %cst_36 = arith.constant dense<0.000000e+00> : vector<128xf32>
    %66 = vector.multi_reduction <add>, %65, %cst_36 [0] : vector<128x128xf32> to vector<128xf32>
    %67 = vector.shape_cast %66 : vector<128xf32> to vector<1x128xf32>
    %cst_37 = arith.constant 1.280000e+02 : f32
    %68 = vector.broadcast %cst_37 : f32 to vector<1x128xf32>
    %69 = arith.divf %67, %68 : vector<1x128xf32>
    %cst_38 = arith.constant 9.99999974E-6 : f32
    %70 = vector.broadcast %cst_38 : f32 to vector<1x128xf32>
    %71 = arith.addf %69, %70 : vector<1x128xf32>
    %72 = math.rsqrt %71 : vector<1x128xf32>
    %73 = arith.mulf %72, %57 : vector<1x128xf32>
    %74 = arith.mulf %62, %73 : vector<1x128xf32>
    %75 = arith.subf %58, %74 : vector<1x128xf32>
    %76 = vector.broadcast %73 : vector<1x128xf32> to vector<128x128xf32>
    %77 = arith.mulf %56, %76 : vector<128x128xf32>
    %78 = vector.broadcast %75 : vector<1x128xf32> to vector<128x128xf32>
    %79 = arith.addf %77, %78 : vector<128x128xf32>
    %80 = arith.addf %53, %79 : vector<128x128xf32>
    %cst_39 = arith.constant 0.000000e+00 : f32
    %81 = vector.broadcast %cst_39 : f32 to vector<128x128xf32>
    %82 = arith.maximumf %80, %81 : vector<128x128xf32>
    %83 = arith.truncf %82 : vector<128x128xf32> to vector<128x128xbf16>
    %c0_40 = arith.constant 0 : index
    %c0_41 = arith.constant 0 : index
    %84 = vector.load %arg11[%c0_40, %c0_41] : memref<128x128xbf16, #tpu.memory_space<vmem>>, vector<128x128xbf16>
    tpu.vector_store %arg11[%c0_40, %c0_41], %83 {strides = array<i32>} : memref<128x128xbf16, #tpu.memory_space<vmem>>, vector<128x128xbf16>,
    return
  }
}

module attributes {stable_mosaic.version = 11 : i64} {
  func.func @_block_tail_down_kernel(%arg0: memref<32x256xbf16, #tpu.memory_space<vmem>>, %arg1: memref<256x128xbf16, #tpu.memory_space<vmem>>, %arg2: memref<1x128xf32, #tpu.memory_space<vmem>>, %arg3: memref<1x128xf32, #tpu.memory_space<vmem>>, %arg4: memref<128x128xbf16, #tpu.memory_space<vmem>>, %arg5: memref<1x128xf32, #tpu.memory_space<vmem>>, %arg6: memref<1x128xf32, #tpu.memory_space<vmem>>, %arg7: memref<32x128xbf16, #tpu.memory_space<vmem>>, %arg8: memref<128x128xbf16, #tpu.memory_space<vmem>>, %arg9: memref<1x128xf32, #tpu.memory_space<vmem>>, %arg10: memref<1x128xf32, #tpu.memory_space<vmem>>, %arg11: memref<32x128xbf16, #tpu.memory_space<vmem>>) attributes {dimension_semantics = [], scalar_prefetch = 0 : i64, scratch_operands = 0 : i64, tpu.core_type = #tpu.core_type<tc>} {
    %c0 = arith.constant 0 : index
    %c0_0 = arith.constant 0 : index
    %0 = vector.load %arg0[%c0, %c0_0] : memref<32x256xbf16, #tpu.memory_space<vmem>>, vector<32x256xbf16>
    %c0_1 = arith.constant 0 : index
    %c0_2 = arith.constant 0 : index
    %1 = vector.load %arg1[%c0_1, %c0_2] : memref<256x128xbf16, #tpu.memory_space<vmem>>, vector<256x128xbf16>
    %cst = arith.constant dense<0.000000e+00> : vector<32x128xf32>
    %2 = tpu.matmul %0, %1, %cst {dimension_numbers = #tpu.dot_dimension_numbers<[1], [0], [0], [1], [0, 0, 1, 1], [], []>} : vector<32x256xbf16>, vector<256x128xbf16>, vector<32x128xf32> -> vector<32x128xf32>
    %c0_3 = arith.constant 0 : index
    %c0_4 = arith.constant 0 : index
    %3 = vector.load %arg2[%c0_3, %c0_4] : memref<1x128xf32, #tpu.memory_space<vmem>>, vector<1x128xf32>
    %c0_5 = arith.constant 0 : index
    %c0_6 = arith.constant 0 : index
    %4 = vector.load %arg3[%c0_5, %c0_6] : memref<1x128xf32, #tpu.memory_space<vmem>>, vector<1x128xf32>
    %cst_7 = arith.constant dense<0.000000e+00> : vector<128xf32>
    %5 = vector.multi_reduction <add>, %2, %cst_7 [0] : vector<32x128xf32> to vector<128xf32>
    %6 = vector.shape_cast %5 : vector<128xf32> to vector<1x128xf32>
    %cst_8 = arith.constant 3.200000e+01 : f32
    %7 = vector.broadcast %cst_8 : f32 to vector<1x128xf32>
    %8 = arith.divf %6, %7 : vector<1x128xf32>
    %9 = vector.broadcast %8 : vector<1x128xf32> to vector<32x128xf32>
    %10 = arith.subf %2, %9 : vector<32x128xf32>
    %11 = arith.mulf %10, %10 : vector<32x128xf32>
    %cst_9 = arith.constant dense<0.000000e+00> : vector<128xf32>
    %12 = vector.multi_reduction <add>, %11, %cst_9 [0] : vector<32x128xf32> to vector<128xf32>
    %13 = vector.shape_cast %12 : vector<128xf32> to vector<1x128xf32>
    %cst_10 = arith.constant 3.200000e+01 : f32
    %14 = vector.broadcast %cst_10 : f32 to vector<1x128xf32>
    %15 = arith.divf %13, %14 : vector<1x128xf32>
    %cst_11 = arith.constant 9.99999974E-6 : f32
    %16 = vector.broadcast %cst_11 : f32 to vector<1x128xf32>
    %17 = arith.addf %15, %16 : vector<1x128xf32>
    %18 = math.rsqrt %17 : vector<1x128xf32>
    %19 = arith.mulf %18, %3 : vector<1x128xf32>
    %20 = arith.mulf %8, %19 : vector<1x128xf32>
    %21 = arith.subf %4, %20 : vector<1x128xf32>
    %22 = vector.broadcast %19 : vector<1x128xf32> to vector<32x128xf32>
    %23 = arith.mulf %2, %22 : vector<32x128xf32>
    %24 = vector.broadcast %21 : vector<1x128xf32> to vector<32x128xf32>
    %25 = arith.addf %23, %24 : vector<32x128xf32>
    %cst_12 = arith.constant 0.000000e+00 : f32
    %26 = vector.broadcast %cst_12 : f32 to vector<32x128xf32>
    %27 = arith.maximumf %25, %26 : vector<32x128xf32>
    %28 = arith.truncf %27 : vector<32x128xf32> to vector<32x128xbf16>
    %c0_13 = arith.constant 0 : index
    %c0_14 = arith.constant 0 : index
    %29 = vector.load %arg4[%c0_13, %c0_14] : memref<128x128xbf16, #tpu.memory_space<vmem>>, vector<128x128xbf16>
    %cst_15 = arith.constant dense<0.000000e+00> : vector<32x128xf32>
    %30 = tpu.matmul %28, %29, %cst_15 {dimension_numbers = #tpu.dot_dimension_numbers<[1], [0], [0], [1], [0, 0, 1, 1], [], []>} : vector<32x128xbf16>, vector<128x128xbf16>, vector<32x128xf32> -> vector<32x128xf32>
    %c0_16 = arith.constant 0 : index
    %c0_17 = arith.constant 0 : index
    %31 = vector.load %arg5[%c0_16, %c0_17] : memref<1x128xf32, #tpu.memory_space<vmem>>, vector<1x128xf32>
    %c0_18 = arith.constant 0 : index
    %c0_19 = arith.constant 0 : index
    %32 = vector.load %arg6[%c0_18, %c0_19] : memref<1x128xf32, #tpu.memory_space<vmem>>, vector<1x128xf32>
    %cst_20 = arith.constant dense<0.000000e+00> : vector<128xf32>
    %33 = vector.multi_reduction <add>, %30, %cst_20 [0] : vector<32x128xf32> to vector<128xf32>
    %34 = vector.shape_cast %33 : vector<128xf32> to vector<1x128xf32>
    %cst_21 = arith.constant 3.200000e+01 : f32
    %35 = vector.broadcast %cst_21 : f32 to vector<1x128xf32>
    %36 = arith.divf %34, %35 : vector<1x128xf32>
    %37 = vector.broadcast %36 : vector<1x128xf32> to vector<32x128xf32>
    %38 = arith.subf %30, %37 : vector<32x128xf32>
    %39 = arith.mulf %38, %38 : vector<32x128xf32>
    %cst_22 = arith.constant dense<0.000000e+00> : vector<128xf32>
    %40 = vector.multi_reduction <add>, %39, %cst_22 [0] : vector<32x128xf32> to vector<128xf32>
    %41 = vector.shape_cast %40 : vector<128xf32> to vector<1x128xf32>
    %cst_23 = arith.constant 3.200000e+01 : f32
    %42 = vector.broadcast %cst_23 : f32 to vector<1x128xf32>
    %43 = arith.divf %41, %42 : vector<1x128xf32>
    %cst_24 = arith.constant 9.99999974E-6 : f32
    %44 = vector.broadcast %cst_24 : f32 to vector<1x128xf32>
    %45 = arith.addf %43, %44 : vector<1x128xf32>
    %46 = math.rsqrt %45 : vector<1x128xf32>
    %47 = arith.mulf %46, %31 : vector<1x128xf32>
    %48 = arith.mulf %36, %47 : vector<1x128xf32>
    %49 = arith.subf %32, %48 : vector<1x128xf32>
    %50 = vector.broadcast %47 : vector<1x128xf32> to vector<32x128xf32>
    %51 = arith.mulf %30, %50 : vector<32x128xf32>
    %52 = vector.broadcast %49 : vector<1x128xf32> to vector<32x128xf32>
    %53 = arith.addf %51, %52 : vector<32x128xf32>
    %c0_25 = arith.constant 0 : index
    %c0_26 = arith.constant 0 : index
    %54 = vector.load %arg7[%c0_25, %c0_26] : memref<32x128xbf16, #tpu.memory_space<vmem>>, vector<32x128xbf16>
    %c0_27 = arith.constant 0 : index
    %c0_28 = arith.constant 0 : index
    %55 = vector.load %arg8[%c0_27, %c0_28] : memref<128x128xbf16, #tpu.memory_space<vmem>>, vector<128x128xbf16>
    %cst_29 = arith.constant dense<0.000000e+00> : vector<32x128xf32>
    %56 = tpu.matmul %54, %55, %cst_29 {dimension_numbers = #tpu.dot_dimension_numbers<[1], [0], [0], [1], [0, 0, 1, 1], [], []>} : vector<32x128xbf16>, vector<128x128xbf16>, vector<32x128xf32> -> vector<32x128xf32>
    %c0_30 = arith.constant 0 : index
    %c0_31 = arith.constant 0 : index
    %57 = vector.load %arg9[%c0_30, %c0_31] : memref<1x128xf32, #tpu.memory_space<vmem>>, vector<1x128xf32>
    %c0_32 = arith.constant 0 : index
    %c0_33 = arith.constant 0 : index
    %58 = vector.load %arg10[%c0_32, %c0_33] : memref<1x128xf32, #tpu.memory_space<vmem>>, vector<1x128xf32>
    %cst_34 = arith.constant dense<0.000000e+00> : vector<128xf32>
    %59 = vector.multi_reduction <add>, %56, %cst_34 [0] : vector<32x128xf32> to vector<128xf32>
    %60 = vector.shape_cast %59 : vector<128xf32> to vector<1x128xf32>
    %cst_35 = arith.constant 3.200000e+01 : f32
    %61 = vector.broadcast %cst_35 : f32 to vector<1x128xf32>
    %62 = arith.divf %60, %61 : vector<1x128xf32>
    %63 = vector.broadcast %62 : vector<1x128xf32> to vector<32x128xf32>
    %64 = arith.subf %56, %63 : vector<32x128xf32>
    %65 = arith.mulf %64, %64 : vector<32x128xf32>
    %cst_36 = arith.constant dense<0.000000e+00> : vector<128xf32>
    %66 = vector.multi_reduction <add>, %65, %cst_36 [0] : vector<32x128xf32> to vector<128xf32>
    %67 = vector.shape_cast %66 : vector<128xf32> to vector<1x128xf32>
    %cst_37 = arith.constant 3.200000e+01 : f32
    %68 = vector.broadcast %cst_37 : f32 to vector<1x128xf32>
    %69 = arith.divf %67, %68 : vector<1x128xf32>
    %cst_38 = arith.constant 9.99999974E-6 : f32
    %70 = vector.broadcast %cst_38 : f32 to vector<1x128xf32>
    %71 = arith.addf %69, %70 : vector<1x128xf32>
    %72 = math.rsqrt %71 : vector<1x128xf32>
    %73 = arith.mulf %72, %57 : vector<1x128xf32>
    %74 = arith.mulf %62, %73 : vector<1x128xf32>
    %75 = arith.subf %58, %74 : vector<1x128xf32>
    %76 = vector.broadcast %73 : vector<1x128xf32> to vector<32x128xf32>
    %77 = arith.mulf %56, %76 : vector<32x128xf32>
    %78 = vector.broadcast %75 : vector<1x128xf32> to vector<32x128xf32>
    %79 = arith.addf %77, %78 : vector<32x128xf32>
    %80 = arith.addf %53, %79 : vector<32x128xf32>
    %cst_39 = arith.constant 0.000000e+00 : f32
    %81 = vector.broadcast %cst_39 : f32 to vector<32x128xf32>
    %82 = arith.maximumf %80, %81 : vector<32x128xf32>
    %83 = arith.truncf %82 : vector<32x128xf32> to vector<32x128xbf16>
    %c0_40 = arith.constant 0 : index
    %c0_41 = arith.constant 0 : index
    %84 = vector.load %arg11[%c0_40, %c0_41] : memref<32x128xbf16, #tpu.memory_space<vmem>>, vector<32x128xbf16>
    tpu.vector_store %arg11[%c0_40, %c0_41], %83 {strides = array<i32>} : memref<32x128xbf16, #tpu.memory_space<vmem>>, vector<32x128xbf16>,
    return
  }
}

module attributes {stable_mosaic.version = 11 : i64} {
  func.func @_conv_bn_kernel(%arg0: memref<32x128xbf16, #tpu.memory_space<vmem>>, %arg1: memref<128x128xbf16, #tpu.memory_space<vmem>>, %arg2: memref<1x128xf32, #tpu.memory_space<vmem>>, %arg3: memref<1x128xf32, #tpu.memory_space<vmem>>, %arg4: memref<32x128xbf16, #tpu.memory_space<vmem>>) attributes {dimension_semantics = [], scalar_prefetch = 0 : i64, scratch_operands = 0 : i64, tpu.core_type = #tpu.core_type<tc>} {
    %c0 = arith.constant 0 : index
    %c0_0 = arith.constant 0 : index
    %0 = vector.load %arg0[%c0, %c0_0] : memref<32x128xbf16, #tpu.memory_space<vmem>>, vector<32x128xbf16>
    %c0_1 = arith.constant 0 : index
    %c0_2 = arith.constant 0 : index
    %1 = vector.load %arg1[%c0_1, %c0_2] : memref<128x128xbf16, #tpu.memory_space<vmem>>, vector<128x128xbf16>
    %cst = arith.constant dense<0.000000e+00> : vector<32x128xf32>
    %2 = tpu.matmul %0, %1, %cst {dimension_numbers = #tpu.dot_dimension_numbers<[1], [0], [0], [1], [0, 0, 1, 1], [], []>} : vector<32x128xbf16>, vector<128x128xbf16>, vector<32x128xf32> -> vector<32x128xf32>
    %c0_3 = arith.constant 0 : index
    %c0_4 = arith.constant 0 : index
    %3 = vector.load %arg2[%c0_3, %c0_4] : memref<1x128xf32, #tpu.memory_space<vmem>>, vector<1x128xf32>
    %c0_5 = arith.constant 0 : index
    %c0_6 = arith.constant 0 : index
    %4 = vector.load %arg3[%c0_5, %c0_6] : memref<1x128xf32, #tpu.memory_space<vmem>>, vector<1x128xf32>
    %cst_7 = arith.constant dense<0.000000e+00> : vector<128xf32>
    %5 = vector.multi_reduction <add>, %2, %cst_7 [0] : vector<32x128xf32> to vector<128xf32>
    %6 = vector.shape_cast %5 : vector<128xf32> to vector<1x128xf32>
    %cst_8 = arith.constant 3.200000e+01 : f32
    %7 = vector.broadcast %cst_8 : f32 to vector<1x128xf32>
    %8 = arith.divf %6, %7 : vector<1x128xf32>
    %9 = vector.broadcast %8 : vector<1x128xf32> to vector<32x128xf32>
    %10 = arith.subf %2, %9 : vector<32x128xf32>
    %11 = arith.mulf %10, %10 : vector<32x128xf32>
    %cst_9 = arith.constant dense<0.000000e+00> : vector<128xf32>
    %12 = vector.multi_reduction <add>, %11, %cst_9 [0] : vector<32x128xf32> to vector<128xf32>
    %13 = vector.shape_cast %12 : vector<128xf32> to vector<1x128xf32>
    %cst_10 = arith.constant 3.200000e+01 : f32
    %14 = vector.broadcast %cst_10 : f32 to vector<1x128xf32>
    %15 = arith.divf %13, %14 : vector<1x128xf32>
    %cst_11 = arith.constant 9.99999974E-6 : f32
    %16 = vector.broadcast %cst_11 : f32 to vector<1x128xf32>
    %17 = arith.addf %15, %16 : vector<1x128xf32>
    %18 = math.rsqrt %17 : vector<1x128xf32>
    %19 = arith.mulf %18, %3 : vector<1x128xf32>
    %20 = arith.mulf %8, %19 : vector<1x128xf32>
    %21 = arith.subf %4, %20 : vector<1x128xf32>
    %22 = vector.broadcast %19 : vector<1x128xf32> to vector<32x128xf32>
    %23 = arith.mulf %2, %22 : vector<32x128xf32>
    %24 = vector.broadcast %21 : vector<1x128xf32> to vector<32x128xf32>
    %25 = arith.addf %23, %24 : vector<32x128xf32>
    %cst_12 = arith.constant 0.000000e+00 : f32
    %26 = vector.broadcast %cst_12 : f32 to vector<32x128xf32>
    %27 = arith.maximumf %25, %26 : vector<32x128xf32>
    %28 = arith.truncf %27 : vector<32x128xf32> to vector<32x128xbf16>
    %c0_13 = arith.constant 0 : index
    %c0_14 = arith.constant 0 : index
    %29 = vector.load %arg4[%c0_13, %c0_14] : memref<32x128xbf16, #tpu.memory_space<vmem>>, vector<32x128xbf16>
    tpu.vector_store %arg4[%c0_13, %c0_14], %28 {strides = array<i32>} : memref<32x128xbf16, #tpu.memory_space<vmem>>, vector<32x128xbf16>,
    return
  }
}

module attributes {stable_mosaic.version = 11 : i64} {
  func.func @_block_tail_down_kernel(%arg0: memref<8x384xbf16, #tpu.memory_space<vmem>>, %arg1: memref<384x128xbf16, #tpu.memory_space<vmem>>, %arg2: memref<1x128xf32, #tpu.memory_space<vmem>>, %arg3: memref<1x128xf32, #tpu.memory_space<vmem>>, %arg4: memref<128x128xbf16, #tpu.memory_space<vmem>>, %arg5: memref<1x128xf32, #tpu.memory_space<vmem>>, %arg6: memref<1x128xf32, #tpu.memory_space<vmem>>, %arg7: memref<8x128xbf16, #tpu.memory_space<vmem>>, %arg8: memref<128x128xbf16, #tpu.memory_space<vmem>>, %arg9: memref<1x128xf32, #tpu.memory_space<vmem>>, %arg10: memref<1x128xf32, #tpu.memory_space<vmem>>, %arg11: memref<8x128xbf16, #tpu.memory_space<vmem>>) attributes {dimension_semantics = [], scalar_prefetch = 0 : i64, scratch_operands = 0 : i64, tpu.core_type = #tpu.core_type<tc>} {
    %c0 = arith.constant 0 : index
    %c0_0 = arith.constant 0 : index
    %0 = vector.load %arg0[%c0, %c0_0] : memref<8x384xbf16, #tpu.memory_space<vmem>>, vector<8x384xbf16>
    %c0_1 = arith.constant 0 : index
    %c0_2 = arith.constant 0 : index
    %1 = vector.load %arg1[%c0_1, %c0_2] : memref<384x128xbf16, #tpu.memory_space<vmem>>, vector<384x128xbf16>
    %cst = arith.constant dense<0.000000e+00> : vector<8x128xf32>
    %2 = tpu.matmul %0, %1, %cst {dimension_numbers = #tpu.dot_dimension_numbers<[1], [0], [0], [1], [0, 0, 1, 1], [], []>} : vector<8x384xbf16>, vector<384x128xbf16>, vector<8x128xf32> -> vector<8x128xf32>
    %c0_3 = arith.constant 0 : index
    %c0_4 = arith.constant 0 : index
    %3 = vector.load %arg2[%c0_3, %c0_4] : memref<1x128xf32, #tpu.memory_space<vmem>>, vector<1x128xf32>
    %c0_5 = arith.constant 0 : index
    %c0_6 = arith.constant 0 : index
    %4 = vector.load %arg3[%c0_5, %c0_6] : memref<1x128xf32, #tpu.memory_space<vmem>>, vector<1x128xf32>
    %cst_7 = arith.constant dense<0.000000e+00> : vector<128xf32>
    %5 = vector.multi_reduction <add>, %2, %cst_7 [0] : vector<8x128xf32> to vector<128xf32>
    %6 = vector.shape_cast %5 : vector<128xf32> to vector<1x128xf32>
    %cst_8 = arith.constant 8.000000e+00 : f32
    %7 = vector.broadcast %cst_8 : f32 to vector<1x128xf32>
    %8 = arith.divf %6, %7 : vector<1x128xf32>
    %9 = vector.broadcast %8 : vector<1x128xf32> to vector<8x128xf32>
    %10 = arith.subf %2, %9 : vector<8x128xf32>
    %11 = arith.mulf %10, %10 : vector<8x128xf32>
    %cst_9 = arith.constant dense<0.000000e+00> : vector<128xf32>
    %12 = vector.multi_reduction <add>, %11, %cst_9 [0] : vector<8x128xf32> to vector<128xf32>
    %13 = vector.shape_cast %12 : vector<128xf32> to vector<1x128xf32>
    %cst_10 = arith.constant 8.000000e+00 : f32
    %14 = vector.broadcast %cst_10 : f32 to vector<1x128xf32>
    %15 = arith.divf %13, %14 : vector<1x128xf32>
    %cst_11 = arith.constant 9.99999974E-6 : f32
    %16 = vector.broadcast %cst_11 : f32 to vector<1x128xf32>
    %17 = arith.addf %15, %16 : vector<1x128xf32>
    %18 = math.rsqrt %17 : vector<1x128xf32>
    %19 = arith.mulf %18, %3 : vector<1x128xf32>
    %20 = arith.mulf %8, %19 : vector<1x128xf32>
    %21 = arith.subf %4, %20 : vector<1x128xf32>
    %22 = vector.broadcast %19 : vector<1x128xf32> to vector<8x128xf32>
    %23 = arith.mulf %2, %22 : vector<8x128xf32>
    %24 = vector.broadcast %21 : vector<1x128xf32> to vector<8x128xf32>
    %25 = arith.addf %23, %24 : vector<8x128xf32>
    %cst_12 = arith.constant 0.000000e+00 : f32
    %26 = vector.broadcast %cst_12 : f32 to vector<8x128xf32>
    %27 = arith.maximumf %25, %26 : vector<8x128xf32>
    %28 = arith.truncf %27 : vector<8x128xf32> to vector<8x128xbf16>
    %c0_13 = arith.constant 0 : index
    %c0_14 = arith.constant 0 : index
    %29 = vector.load %arg4[%c0_13, %c0_14] : memref<128x128xbf16, #tpu.memory_space<vmem>>, vector<128x128xbf16>
    %cst_15 = arith.constant dense<0.000000e+00> : vector<8x128xf32>
    %30 = tpu.matmul %28, %29, %cst_15 {dimension_numbers = #tpu.dot_dimension_numbers<[1], [0], [0], [1], [0, 0, 1, 1], [], []>} : vector<8x128xbf16>, vector<128x128xbf16>, vector<8x128xf32> -> vector<8x128xf32>
    %c0_16 = arith.constant 0 : index
    %c0_17 = arith.constant 0 : index
    %31 = vector.load %arg5[%c0_16, %c0_17] : memref<1x128xf32, #tpu.memory_space<vmem>>, vector<1x128xf32>
    %c0_18 = arith.constant 0 : index
    %c0_19 = arith.constant 0 : index
    %32 = vector.load %arg6[%c0_18, %c0_19] : memref<1x128xf32, #tpu.memory_space<vmem>>, vector<1x128xf32>
    %cst_20 = arith.constant dense<0.000000e+00> : vector<128xf32>
    %33 = vector.multi_reduction <add>, %30, %cst_20 [0] : vector<8x128xf32> to vector<128xf32>
    %34 = vector.shape_cast %33 : vector<128xf32> to vector<1x128xf32>
    %cst_21 = arith.constant 8.000000e+00 : f32
    %35 = vector.broadcast %cst_21 : f32 to vector<1x128xf32>
    %36 = arith.divf %34, %35 : vector<1x128xf32>
    %37 = vector.broadcast %36 : vector<1x128xf32> to vector<8x128xf32>
    %38 = arith.subf %30, %37 : vector<8x128xf32>
    %39 = arith.mulf %38, %38 : vector<8x128xf32>
    %cst_22 = arith.constant dense<0.000000e+00> : vector<128xf32>
    %40 = vector.multi_reduction <add>, %39, %cst_22 [0] : vector<8x128xf32> to vector<128xf32>
    %41 = vector.shape_cast %40 : vector<128xf32> to vector<1x128xf32>
    %cst_23 = arith.constant 8.000000e+00 : f32
    %42 = vector.broadcast %cst_23 : f32 to vector<1x128xf32>
    %43 = arith.divf %41, %42 : vector<1x128xf32>
    %cst_24 = arith.constant 9.99999974E-6 : f32
    %44 = vector.broadcast %cst_24 : f32 to vector<1x128xf32>
    %45 = arith.addf %43, %44 : vector<1x128xf32>
    %46 = math.rsqrt %45 : vector<1x128xf32>
    %47 = arith.mulf %46, %31 : vector<1x128xf32>
    %48 = arith.mulf %36, %47 : vector<1x128xf32>
    %49 = arith.subf %32, %48 : vector<1x128xf32>
    %50 = vector.broadcast %47 : vector<1x128xf32> to vector<8x128xf32>
    %51 = arith.mulf %30, %50 : vector<8x128xf32>
    %52 = vector.broadcast %49 : vector<1x128xf32> to vector<8x128xf32>
    %53 = arith.addf %51, %52 : vector<8x128xf32>
    %c0_25 = arith.constant 0 : index
    %c0_26 = arith.constant 0 : index
    %54 = vector.load %arg7[%c0_25, %c0_26] : memref<8x128xbf16, #tpu.memory_space<vmem>>, vector<8x128xbf16>
    %c0_27 = arith.constant 0 : index
    %c0_28 = arith.constant 0 : index
    %55 = vector.load %arg8[%c0_27, %c0_28] : memref<128x128xbf16, #tpu.memory_space<vmem>>, vector<128x128xbf16>
    %cst_29 = arith.constant dense<0.000000e+00> : vector<8x128xf32>
    %56 = tpu.matmul %54, %55, %cst_29 {dimension_numbers = #tpu.dot_dimension_numbers<[1], [0], [0], [1], [0, 0, 1, 1], [], []>} : vector<8x128xbf16>, vector<128x128xbf16>, vector<8x128xf32> -> vector<8x128xf32>
    %c0_30 = arith.constant 0 : index
    %c0_31 = arith.constant 0 : index
    %57 = vector.load %arg9[%c0_30, %c0_31] : memref<1x128xf32, #tpu.memory_space<vmem>>, vector<1x128xf32>
    %c0_32 = arith.constant 0 : index
    %c0_33 = arith.constant 0 : index
    %58 = vector.load %arg10[%c0_32, %c0_33] : memref<1x128xf32, #tpu.memory_space<vmem>>, vector<1x128xf32>
    %cst_34 = arith.constant dense<0.000000e+00> : vector<128xf32>
    %59 = vector.multi_reduction <add>, %56, %cst_34 [0] : vector<8x128xf32> to vector<128xf32>
    %60 = vector.shape_cast %59 : vector<128xf32> to vector<1x128xf32>
    %cst_35 = arith.constant 8.000000e+00 : f32
    %61 = vector.broadcast %cst_35 : f32 to vector<1x128xf32>
    %62 = arith.divf %60, %61 : vector<1x128xf32>
    %63 = vector.broadcast %62 : vector<1x128xf32> to vector<8x128xf32>
    %64 = arith.subf %56, %63 : vector<8x128xf32>
    %65 = arith.mulf %64, %64 : vector<8x128xf32>
    %cst_36 = arith.constant dense<0.000000e+00> : vector<128xf32>
    %66 = vector.multi_reduction <add>, %65, %cst_36 [0] : vector<8x128xf32> to vector<128xf32>
    %67 = vector.shape_cast %66 : vector<128xf32> to vector<1x128xf32>
    %cst_37 = arith.constant 8.000000e+00 : f32
    %68 = vector.broadcast %cst_37 : f32 to vector<1x128xf32>
    %69 = arith.divf %67, %68 : vector<1x128xf32>
    %cst_38 = arith.constant 9.99999974E-6 : f32
    %70 = vector.broadcast %cst_38 : f32 to vector<1x128xf32>
    %71 = arith.addf %69, %70 : vector<1x128xf32>
    %72 = math.rsqrt %71 : vector<1x128xf32>
    %73 = arith.mulf %72, %57 : vector<1x128xf32>
    %74 = arith.mulf %62, %73 : vector<1x128xf32>
    %75 = arith.subf %58, %74 : vector<1x128xf32>
    %76 = vector.broadcast %73 : vector<1x128xf32> to vector<8x128xf32>
    %77 = arith.mulf %56, %76 : vector<8x128xf32>
    %78 = vector.broadcast %75 : vector<1x128xf32> to vector<8x128xf32>
    %79 = arith.addf %77, %78 : vector<8x128xf32>
    %80 = arith.addf %53, %79 : vector<8x128xf32>
    %cst_39 = arith.constant 0.000000e+00 : f32
    %81 = vector.broadcast %cst_39 : f32 to vector<8x128xf32>
    %82 = arith.maximumf %80, %81 : vector<8x128xf32>
    %83 = arith.truncf %82 : vector<8x128xf32> to vector<8x128xbf16>
    %c0_40 = arith.constant 0 : index
    %c0_41 = arith.constant 0 : index
    %84 = vector.load %arg11[%c0_40, %c0_41] : memref<8x128xbf16, #tpu.memory_space<vmem>>, vector<8x128xbf16>
    tpu.vector_store %arg11[%c0_40, %c0_41], %83 {strides = array<i32>} : memref<8x128xbf16, #tpu.memory_space<vmem>>, vector<8x128xbf16>,
    return
  }
}

module attributes {stable_mosaic.version = 11 : i64} {
  func.func @_conv_bn_kernel(%arg0: memref<8x128xbf16, #tpu.memory_space<vmem>>, %arg1: memref<128x128xbf16, #tpu.memory_space<vmem>>, %arg2: memref<1x128xf32, #tpu.memory_space<vmem>>, %arg3: memref<1x128xf32, #tpu.memory_space<vmem>>, %arg4: memref<8x128xbf16, #tpu.memory_space<vmem>>) attributes {dimension_semantics = [], scalar_prefetch = 0 : i64, scratch_operands = 0 : i64, tpu.core_type = #tpu.core_type<tc>} {
    %c0 = arith.constant 0 : index
    %c0_0 = arith.constant 0 : index
    %0 = vector.load %arg0[%c0, %c0_0] : memref<8x128xbf16, #tpu.memory_space<vmem>>, vector<8x128xbf16>
    %c0_1 = arith.constant 0 : index
    %c0_2 = arith.constant 0 : index
    %1 = vector.load %arg1[%c0_1, %c0_2] : memref<128x128xbf16, #tpu.memory_space<vmem>>, vector<128x128xbf16>
    %cst = arith.constant dense<0.000000e+00> : vector<8x128xf32>
    %2 = tpu.matmul %0, %1, %cst {dimension_numbers = #tpu.dot_dimension_numbers<[1], [0], [0], [1], [0, 0, 1, 1], [], []>} : vector<8x128xbf16>, vector<128x128xbf16>, vector<8x128xf32> -> vector<8x128xf32>
    %c0_3 = arith.constant 0 : index
    %c0_4 = arith.constant 0 : index
    %3 = vector.load %arg2[%c0_3, %c0_4] : memref<1x128xf32, #tpu.memory_space<vmem>>, vector<1x128xf32>
    %c0_5 = arith.constant 0 : index
    %c0_6 = arith.constant 0 : index
    %4 = vector.load %arg3[%c0_5, %c0_6] : memref<1x128xf32, #tpu.memory_space<vmem>>, vector<1x128xf32>
    %cst_7 = arith.constant dense<0.000000e+00> : vector<128xf32>
    %5 = vector.multi_reduction <add>, %2, %cst_7 [0] : vector<8x128xf32> to vector<128xf32>
    %6 = vector.shape_cast %5 : vector<128xf32> to vector<1x128xf32>
    %cst_8 = arith.constant 8.000000e+00 : f32
    %7 = vector.broadcast %cst_8 : f32 to vector<1x128xf32>
    %8 = arith.divf %6, %7 : vector<1x128xf32>
    %9 = vector.broadcast %8 : vector<1x128xf32> to vector<8x128xf32>
    %10 = arith.subf %2, %9 : vector<8x128xf32>
    %11 = arith.mulf %10, %10 : vector<8x128xf32>
    %cst_9 = arith.constant dense<0.000000e+00> : vector<128xf32>
    %12 = vector.multi_reduction <add>, %11, %cst_9 [0] : vector<8x128xf32> to vector<128xf32>
    %13 = vector.shape_cast %12 : vector<128xf32> to vector<1x128xf32>
    %cst_10 = arith.constant 8.000000e+00 : f32
    %14 = vector.broadcast %cst_10 : f32 to vector<1x128xf32>
    %15 = arith.divf %13, %14 : vector<1x128xf32>
    %cst_11 = arith.constant 9.99999974E-6 : f32
    %16 = vector.broadcast %cst_11 : f32 to vector<1x128xf32>
    %17 = arith.addf %15, %16 : vector<1x128xf32>
    %18 = math.rsqrt %17 : vector<1x128xf32>
    %19 = arith.mulf %18, %3 : vector<1x128xf32>
    %20 = arith.mulf %8, %19 : vector<1x128xf32>
    %21 = arith.subf %4, %20 : vector<1x128xf32>
    %22 = vector.broadcast %19 : vector<1x128xf32> to vector<8x128xf32>
    %23 = arith.mulf %2, %22 : vector<8x128xf32>
    %24 = vector.broadcast %21 : vector<1x128xf32> to vector<8x128xf32>
    %25 = arith.addf %23, %24 : vector<8x128xf32>
    %cst_12 = arith.constant 0.000000e+00 : f32
    %26 = vector.broadcast %cst_12 : f32 to vector<8x128xf32>
    %27 = arith.maximumf %25, %26 : vector<8x128xf32>
    %28 = arith.truncf %27 : vector<8x128xf32> to vector<8x128xbf16>
    %c0_13 = arith.constant 0 : index
    %c0_14 = arith.constant 0 : index
    %29 = vector.load %arg4[%c0_13, %c0_14] : memref<8x128xbf16, #tpu.memory_space<vmem>>, vector<8x128xbf16>
    tpu.vector_store %arg4[%c0_13, %c0_14], %28 {strides = array<i32>} : memref<8x128xbf16, #tpu.memory_space<vmem>>, vector<8x128xbf16>,
    return
  }
}

module attributes {stable_mosaic.version = 11 : i64} {
  func.func @_pool_heads_kernel(%arg0: memref<2x1x256xbf16, #tpu.memory_space<vmem>>, %arg1: memref<256x128xf32, #tpu.memory_space<vmem>>, %arg2: memref<1x128xf32, #tpu.memory_space<vmem>>, %arg3: memref<2x128xf32, #tpu.memory_space<vmem>>) attributes {dimension_semantics = [], scalar_prefetch = 0 : i64, scratch_operands = 0 : i64, tpu.core_type = #tpu.core_type<tc>} {
    %c0 = arith.constant 0 : index
    %c0_0 = arith.constant 0 : index
    %c0_1 = arith.constant 0 : index
    %0 = vector.load %arg0[%c0, %c0_0, %c0_1] : memref<2x1x256xbf16, #tpu.memory_space<vmem>>, vector<2x1x256xbf16>
    %1 = arith.extf %0 : vector<2x1x256xbf16> to vector<2x1x256xf32>
    %cst = arith.constant dense<0.000000e+00> : vector<2x256xf32>
    %2 = vector.multi_reduction <add>, %1, %cst [1] : vector<2x1x256xf32> to vector<2x256xf32>
    %cst_2 = arith.constant 1.000000e+00 : f32
    %3 = vector.broadcast %cst_2 : f32 to vector<2x256xf32>
    %4 = arith.divf %2, %3 : vector<2x256xf32>
    %c0_3 = arith.constant 0 : index
    %c0_4 = arith.constant 0 : index
    %5 = vector.load %arg1[%c0_3, %c0_4] : memref<256x128xf32, #tpu.memory_space<vmem>>, vector<256x128xf32>
    %cst_5 = arith.constant dense<0.000000e+00> : vector<2x128xf32>
    %6 = tpu.matmul %4, %5, %cst_5 {dimension_numbers = #tpu.dot_dimension_numbers<[1], [0], [0], [1], [0, 0, 1, 1], [], []>} : vector<2x256xf32>, vector<256x128xf32>, vector<2x128xf32> -> vector<2x128xf32>
    %c0_6 = arith.constant 0 : index
    %c0_7 = arith.constant 0 : index
    %7 = vector.load %arg2[%c0_6, %c0_7] : memref<1x128xf32, #tpu.memory_space<vmem>>, vector<1x128xf32>
    %8 = vector.broadcast %7 : vector<1x128xf32> to vector<2x128xf32>
    %9 = arith.addf %6, %8 : vector<2x128xf32>
    %c0_8 = arith.constant 0 : index
    %c0_9 = arith.constant 0 : index
    %10 = vector.load %arg3[%c0_8, %c0_9] : memref<2x128xf32, #tpu.memory_space<vmem>>, vector<2x128xf32>
    tpu.vector_store %arg3[%c0_8, %c0_9], %9 {strides = array<i32>} : memref<2x128xf32, #tpu.memory_space<vmem>>, vector<2x128xf32>,
    return
  }
}

module attributes {stable_mosaic.version = 11 : i64} {
  func.func @_block_tail_down_kernel(%arg0: memref<2x640xbf16, #tpu.memory_space<vmem>>, %arg1: memref<640x128xbf16, #tpu.memory_space<vmem>>, %arg2: memref<1x128xf32, #tpu.memory_space<vmem>>, %arg3: memref<1x128xf32, #tpu.memory_space<vmem>>, %arg4: memref<128x256xbf16, #tpu.memory_space<vmem>>, %arg5: memref<1x256xf32, #tpu.memory_space<vmem>>, %arg6: memref<1x256xf32, #tpu.memory_space<vmem>>, %arg7: memref<2x128xbf16, #tpu.memory_space<vmem>>, %arg8: memref<128x256xbf16, #tpu.memory_space<vmem>>, %arg9: memref<1x256xf32, #tpu.memory_space<vmem>>, %arg10: memref<1x256xf32, #tpu.memory_space<vmem>>, %arg11: memref<2x256xbf16, #tpu.memory_space<vmem>>) attributes {dimension_semantics = [], scalar_prefetch = 0 : i64, scratch_operands = 0 : i64, tpu.core_type = #tpu.core_type<tc>} {
    %c0 = arith.constant 0 : index
    %c0_0 = arith.constant 0 : index
    %0 = vector.load %arg0[%c0, %c0_0] : memref<2x640xbf16, #tpu.memory_space<vmem>>, vector<2x640xbf16>
    %c0_1 = arith.constant 0 : index
    %c0_2 = arith.constant 0 : index
    %1 = vector.load %arg1[%c0_1, %c0_2] : memref<640x128xbf16, #tpu.memory_space<vmem>>, vector<640x128xbf16>
    %cst = arith.constant dense<0.000000e+00> : vector<2x128xf32>
    %2 = tpu.matmul %0, %1, %cst {dimension_numbers = #tpu.dot_dimension_numbers<[1], [0], [0], [1], [0, 0, 1, 1], [], []>} : vector<2x640xbf16>, vector<640x128xbf16>, vector<2x128xf32> -> vector<2x128xf32>
    %c0_3 = arith.constant 0 : index
    %c0_4 = arith.constant 0 : index
    %3 = vector.load %arg2[%c0_3, %c0_4] : memref<1x128xf32, #tpu.memory_space<vmem>>, vector<1x128xf32>
    %c0_5 = arith.constant 0 : index
    %c0_6 = arith.constant 0 : index
    %4 = vector.load %arg3[%c0_5, %c0_6] : memref<1x128xf32, #tpu.memory_space<vmem>>, vector<1x128xf32>
    %cst_7 = arith.constant dense<0.000000e+00> : vector<128xf32>
    %5 = vector.multi_reduction <add>, %2, %cst_7 [0] : vector<2x128xf32> to vector<128xf32>
    %6 = vector.shape_cast %5 : vector<128xf32> to vector<1x128xf32>
    %cst_8 = arith.constant 2.000000e+00 : f32
    %7 = vector.broadcast %cst_8 : f32 to vector<1x128xf32>
    %8 = arith.divf %6, %7 : vector<1x128xf32>
    %9 = vector.broadcast %8 : vector<1x128xf32> to vector<2x128xf32>
    %10 = arith.subf %2, %9 : vector<2x128xf32>
    %11 = arith.mulf %10, %10 : vector<2x128xf32>
    %cst_9 = arith.constant dense<0.000000e+00> : vector<128xf32>
    %12 = vector.multi_reduction <add>, %11, %cst_9 [0] : vector<2x128xf32> to vector<128xf32>
    %13 = vector.shape_cast %12 : vector<128xf32> to vector<1x128xf32>
    %cst_10 = arith.constant 2.000000e+00 : f32
    %14 = vector.broadcast %cst_10 : f32 to vector<1x128xf32>
    %15 = arith.divf %13, %14 : vector<1x128xf32>
    %cst_11 = arith.constant 9.99999974E-6 : f32
    %16 = vector.broadcast %cst_11 : f32 to vector<1x128xf32>
    %17 = arith.addf %15, %16 : vector<1x128xf32>
    %18 = math.rsqrt %17 : vector<1x128xf32>
    %19 = arith.mulf %18, %3 : vector<1x128xf32>
    %20 = arith.mulf %8, %19 : vector<1x128xf32>
    %21 = arith.subf %4, %20 : vector<1x128xf32>
    %22 = vector.broadcast %19 : vector<1x128xf32> to vector<2x128xf32>
    %23 = arith.mulf %2, %22 : vector<2x128xf32>
    %24 = vector.broadcast %21 : vector<1x128xf32> to vector<2x128xf32>
    %25 = arith.addf %23, %24 : vector<2x128xf32>
    %cst_12 = arith.constant 0.000000e+00 : f32
    %26 = vector.broadcast %cst_12 : f32 to vector<2x128xf32>
    %27 = arith.maximumf %25, %26 : vector<2x128xf32>
    %28 = arith.truncf %27 : vector<2x128xf32> to vector<2x128xbf16>
    %c0_13 = arith.constant 0 : index
    %c0_14 = arith.constant 0 : index
    %29 = vector.load %arg4[%c0_13, %c0_14] : memref<128x256xbf16, #tpu.memory_space<vmem>>, vector<128x256xbf16>
    %cst_15 = arith.constant dense<0.000000e+00> : vector<2x256xf32>
    %30 = tpu.matmul %28, %29, %cst_15 {dimension_numbers = #tpu.dot_dimension_numbers<[1], [0], [0], [1], [0, 0, 1, 1], [], []>} : vector<2x128xbf16>, vector<128x256xbf16>, vector<2x256xf32> -> vector<2x256xf32>
    %c0_16 = arith.constant 0 : index
    %c0_17 = arith.constant 0 : index
    %31 = vector.load %arg5[%c0_16, %c0_17] : memref<1x256xf32, #tpu.memory_space<vmem>>, vector<1x256xf32>
    %c0_18 = arith.constant 0 : index
    %c0_19 = arith.constant 0 : index
    %32 = vector.load %arg6[%c0_18, %c0_19] : memref<1x256xf32, #tpu.memory_space<vmem>>, vector<1x256xf32>
    %cst_20 = arith.constant dense<0.000000e+00> : vector<256xf32>
    %33 = vector.multi_reduction <add>, %30, %cst_20 [0] : vector<2x256xf32> to vector<256xf32>
    %34 = vector.shape_cast %33 : vector<256xf32> to vector<1x256xf32>
    %cst_21 = arith.constant 2.000000e+00 : f32
    %35 = vector.broadcast %cst_21 : f32 to vector<1x256xf32>
    %36 = arith.divf %34, %35 : vector<1x256xf32>
    %37 = vector.broadcast %36 : vector<1x256xf32> to vector<2x256xf32>
    %38 = arith.subf %30, %37 : vector<2x256xf32>
    %39 = arith.mulf %38, %38 : vector<2x256xf32>
    %cst_22 = arith.constant dense<0.000000e+00> : vector<256xf32>
    %40 = vector.multi_reduction <add>, %39, %cst_22 [0] : vector<2x256xf32> to vector<256xf32>
    %41 = vector.shape_cast %40 : vector<256xf32> to vector<1x256xf32>
    %cst_23 = arith.constant 2.000000e+00 : f32
    %42 = vector.broadcast %cst_23 : f32 to vector<1x256xf32>
    %43 = arith.divf %41, %42 : vector<1x256xf32>
    %cst_24 = arith.constant 9.99999974E-6 : f32
    %44 = vector.broadcast %cst_24 : f32 to vector<1x256xf32>
    %45 = arith.addf %43, %44 : vector<1x256xf32>
    %46 = math.rsqrt %45 : vector<1x256xf32>
    %47 = arith.mulf %46, %31 : vector<1x256xf32>
    %48 = arith.mulf %36, %47 : vector<1x256xf32>
    %49 = arith.subf %32, %48 : vector<1x256xf32>
    %50 = vector.broadcast %47 : vector<1x256xf32> to vector<2x256xf32>
    %51 = arith.mulf %30, %50 : vector<2x256xf32>
    %52 = vector.broadcast %49 : vector<1x256xf32> to vector<2x256xf32>
    %53 = arith.addf %51, %52 : vector<2x256xf32>
    %c0_25 = arith.constant 0 : index
    %c0_26 = arith.constant 0 : index
    %54 = vector.load %arg7[%c0_25, %c0_26] : memref<2x128xbf16, #tpu.memory_space<vmem>>, vector<2x128xbf16>
    %c0_27 = arith.constant 0 : index
    %c0_28 = arith.constant 0 : index
    %55 = vector.load %arg8[%c0_27, %c0_28] : memref<128x256xbf16, #tpu.memory_space<vmem>>, vector<128x256xbf16>
    %cst_29 = arith.constant dense<0.000000e+00> : vector<2x256xf32>
    %56 = tpu.matmul %54, %55, %cst_29 {dimension_numbers = #tpu.dot_dimension_numbers<[1], [0], [0], [1], [0, 0, 1, 1], [], []>} : vector<2x128xbf16>, vector<128x256xbf16>, vector<2x256xf32> -> vector<2x256xf32>
    %c0_30 = arith.constant 0 : index
    %c0_31 = arith.constant 0 : index
    %57 = vector.load %arg9[%c0_30, %c0_31] : memref<1x256xf32, #tpu.memory_space<vmem>>, vector<1x256xf32>
    %c0_32 = arith.constant 0 : index
    %c0_33 = arith.constant 0 : index
    %58 = vector.load %arg10[%c0_32, %c0_33] : memref<1x256xf32, #tpu.memory_space<vmem>>, vector<1x256xf32>
    %cst_34 = arith.constant dense<0.000000e+00> : vector<256xf32>
    %59 = vector.multi_reduction <add>, %56, %cst_34 [0] : vector<2x256xf32> to vector<256xf32>
    %60 = vector.shape_cast %59 : vector<256xf32> to vector<1x256xf32>
    %cst_35 = arith.constant 2.000000e+00 : f32
    %61 = vector.broadcast %cst_35 : f32 to vector<1x256xf32>
    %62 = arith.divf %60, %61 : vector<1x256xf32>
    %63 = vector.broadcast %62 : vector<1x256xf32> to vector<2x256xf32>
    %64 = arith.subf %56, %63 : vector<2x256xf32>
    %65 = arith.mulf %64, %64 : vector<2x256xf32>
    %cst_36 = arith.constant dense<0.000000e+00> : vector<256xf32>
    %66 = vector.multi_reduction <add>, %65, %cst_36 [0] : vector<2x256xf32> to vector<256xf32>
    %67 = vector.shape_cast %66 : vector<256xf32> to vector<1x256xf32>
    %cst_37 = arith.constant 2.000000e+00 : f32
    %68 = vector.broadcast %cst_37 : f32 to vector<1x256xf32>
    %69 = arith.divf %67, %68 : vector<1x256xf32>
    %cst_38 = arith.constant 9.99999974E-6 : f32
    %70 = vector.broadcast %cst_38 : f32 to vector<1x256xf32>
    %71 = arith.addf %69, %70 : vector<1x256xf32>
    %72 = math.rsqrt %71 : vector<1x256xf32>
    %73 = arith.mulf %72, %57 : vector<1x256xf32>
    %74 = arith.mulf %62, %73 : vector<1x256xf32>
    %75 = arith.subf %58, %74 : vector<1x256xf32>
    %76 = vector.broadcast %73 : vector<1x256xf32> to vector<2x256xf32>
    %77 = arith.mulf %56, %76 : vector<2x256xf32>
    %78 = vector.broadcast %75 : vector<1x256xf32> to vector<2x256xf32>
    %79 = arith.addf %77, %78 : vector<2x256xf32>
    %80 = arith.addf %53, %79 : vector<2x256xf32>
    %cst_39 = arith.constant 0.000000e+00 : f32
    %81 = vector.broadcast %cst_39 : f32 to vector<2x256xf32>
    %82 = arith.maximumf %80, %81 : vector<2x256xf32>
    %83 = arith.truncf %82 : vector<2x256xf32> to vector<2x256xbf16>
    %c0_40 = arith.constant 0 : index
    %c0_41 = arith.constant 0 : index
    %84 = vector.load %arg11[%c0_40, %c0_41] : memref<2x256xbf16, #tpu.memory_space<vmem>>, vector<2x256xbf16>
    tpu.vector_store %arg11[%c0_40, %c0_41], %83 {strides = array<i32>} : memref<2x256xbf16, #tpu.memory_space<vmem>>, vector<2x256xbf16>,
    return
  }
}

</mosaic_0001>

<llo_original>
// kernel: model_forward.11
$region0: #{model_forward.11}
  #allocation0 [shape = 'u32[]', space=smem, size = 0x4, offset = 0x4, fixed_abs, tag = 'smem constant byte address 0x4 - core index']
  #allocation1 [shape = 'u32[144,128]{1,0:T(1,128)}', space=vmem, size = 0x12000, scoped, tag = 'internal scratch']
  %s0 = inlined_call_operand.vmem [shape: bf16[128,128], index: 0, kind: input, shape index: {}]
  %s1 = inlined_call_operand.vmem [shape: bf16[128,128], index: 1, kind: input, shape index: {}]
  %s2 = inlined_call_operand.vmem [shape: f32[1,128], index: 2, kind: input, shape index: {}]
  %s3 = inlined_call_operand.vmem [shape: f32[1,128], index: 3, kind: input, shape index: {}]
  %s4 = inlined_call_operand.vmem [shape: bf16[128,128], index: 4, kind: output, shape index: {}]
  %s5 = sld [smem:[#allocation0]]
  $region26: #{model_forward.11} parent=0
    _
  %s7 = ssub.s32 1, %s5
  %s8 = scalar_select 0, %s7, %s5
  // Predicated region
  $region2: #{model_forward.11} parent=0 // pred_check
    _
  $region3: #{model_forward.11} parent=0 // pred_check_branch
    %10 = sbr.rel (0) target = $region5
  $region4: #{model_forward.11} parent=0 // pred_region
    _
  $region5: #{model_forward.11} parent=0 // pred_fallthru
    _
  // Predicated region
  $region6: #{model_forward.11} parent=0 // pred_check
    _
  $region7: #{model_forward.11} parent=0 // pred_check_branch
    %12 = sbr.rel (0) target = $region9
  $region8: #{model_forward.11} parent=0 // pred_region
    _
  $region9: #{model_forward.11} parent=0 // pred_fallthru
    _
  // Predicated region
  $region10: #{model_forward.11} parent=0 // pred_check
    _
  $region11: #{model_forward.11} parent=0 // pred_check_branch
    %14 = sbr.rel (0) target = $region13
  $region12: #{model_forward.11} parent=0 // pred_region
    _
  $region13: #{model_forward.11} parent=0 // pred_fallthru
    _
  // Predicated region
  $region14: #{model_forward.11} parent=0 // pred_check
    _
  $region15: #{model_forward.11} parent=0 // pred_check_branch
    %16 = sbr.rel (0) target = $region17
  $region16: #{model_forward.11} parent=0 // pred_region
    _
  $region17: #{model_forward.11} parent=0 // pred_fallthru
    _
  %v18 = vld [vmem:[%s0] sm:$0xf]
  %v19 = vld [vmem:[%s0 + $0x4] sm:$0xf]
  %v20 = vld [vmem:[%s0 + $0x8] sm:$0xf]
  %v21 = vld [vmem:[%s0 + $0xc] sm:$0xf]
  %v22 = vld [vmem:[%s0 + $0x10] sm:$0xf]
  %v23 = vld [vmem:[%s0 + $0x14] sm:$0xf]
  %v24 = vld [vmem:[%s0 + $0x18] sm:$0xf]
  %v25 = vld [vmem:[%s0 + $0x1c] sm:$0xf]
  %v26 = vld [vmem:[%s0 + $0x20] sm:$0xf]
  %v27 = vld [vmem:[%s0 + $0x24] sm:$0xf]
  %v28 = vld [vmem:[%s0 + $0x28] sm:$0xf]
  %v29 = vld [vmem:[%s0 + $0x2c] sm:$0xf]
  %v30 = vld [vmem:[%s0 + $0x30] sm:$0xf]
  %v31 = vld [vmem:[%s0 + $0x34] sm:$0xf]
  %v32 = vld [vmem:[%s0 + $0x38] sm:$0xf]
  %v33 = vld [vmem:[%s0 + $0x3c] sm:$0xf]
  %v34 = vld [vmem:[%s1] sm:$0xf]
  %v35 = vld [vmem:[%s1 + $0x4] sm:$0xf]
  %v36 = vld [vmem:[%s1 + $0x8] sm:$0xf]
  %v37 = vld [vmem:[%s1 + $0xc] sm:$0xf]
  %v38 = vld [vmem:[%s1 + $0x10] sm:$0xf]
  %v39 = vld [vmem:[%s1 + $0x14] sm:$0xf]
  %v40 = vld [vmem:[%s1 + $0x18] sm:$0xf]
  %v41 = vld [vmem:[%s1 + $0x1c] sm:$0xf]
  %v42 = vld [vmem:[%s1 + $0x20] sm:$0xf]
  %v43 = vld [vmem:[%s1 + $0x24] sm:$0xf]
  %v44 = vld [vmem:[%s1 + $0x28] sm:$0xf]
  %v45 = vld [vmem:[%s1 + $0x2c] sm:$0xf]
  %v46 = vld [vmem:[%s1 + $0x30] sm:$0xf]
  %v47 = vld [vmem:[%s1 + $0x34] sm:$0xf]
  %v48 = vld [vmem:[%s1 + $0x38] sm:$0xf]
  %v49 = vld [vmem:[%s1 + $0x3c] sm:$0xf]
  %v66 = vunpack.c.l.b16 %v18
  %v67 = vunpack.c.l.b16 %v19
  %v68 = vunpack.c.l.b16 %v20
  %v69 = vunpack.c.l.b16 %v21
  %v70 = vunpack.c.l.b16 %v22
  %v71 = vunpack.c.l.b16 %v23
  %v72 = vunpack.c.l.b16 %v24
  %v73 = vunpack.c.l.b16 %v25
  %v74 = vunpack.c.l.b16 %v26
  %v75 = vunpack.c.l.b16 %v27
  %v76 = vunpack.c.l.b16 %v28
  %v77 = vunpack.c.l.b16 %v29
  %v78 = vunpack.c.l.b16 %v30
  %v79 = vunpack.c.l.b16 %v31
  %v80 = vunpack.c.l.b16 %v32
  %v81 = vunpack.c.l.b16 %v33
  %v82 = vpack.c.b16 %v67, %v66
  %v83 = vpack.c.b16 %v69, %v68
  %v84 = vpack.c.b16 %v71, %v70
  %v85 = vpack.c.b16 %v73, %v72
  %v86 = vpack.c.b16 %v75, %v74
  %v87 = vpack.c.b16 %v77, %v76
  %v88 = vpack.c.b16 %v79, %v78
  %v89 = vpack.c.b16 %v81, %v80
  %v114 = vunpack.c.l.b16 %v34
  %v115 = vunpack.c.l.b16 %v35
  %v116 = vunpack.c.l.b16 %v36
  %v117 = vunpack.c.l.b16 %v37
  %v118 = vunpack.c.l.b16 %v38
  %v119 = vunpack.c.l.b16 %v39
  %v120 = vunpack.c.l.b16 %v40
  %v121 = vunpack.c.l.b16 %v41
  %v122 = vunpack.c.l.b16 %v42
  %v123 = vunpack.c.l.b16 %v43
  %v124 = vunpack.c.l.b16 %v44
  %v125 = vunpack.c.l.b16 %v45
  %v126 = vunpack.c.l.b16 %v46
  %v127 = vunpack.c.l.b16 %v47
  %v128 = vunpack.c.l.b16 %v48
  %v129 = vunpack.c.l.b16 %v49
  %v130 = vpack.c.b16 %v115, %v114
  %v131 = vpack.c.b16 %v117, %v116
  %v132 = vpack.c.b16 %v119, %v118
  %v133 = vpack.c.b16 %v121, %v120
  %v134 = vpack.c.b16 %v123, %v122
  %v135 = vpack.c.b16 %v125, %v124
  %v136 = vpack.c.b16 %v127, %v126
  %v137 = vpack.c.b16 %v129, %v128
  %146 = vmatprep.subr.bf16.mxu0 0
  %147 = vmatpush1.bf16.msra.mxu0 %v130
  %148 = vmatprep.subr.bf16.mxu0 0
  %149 = vmatpush1.bf16.msra.mxu0 %v131
  %150 = vmatprep.subr.bf16.mxu0 0
  %151 = vmatpush1.bf16.msra.mxu0 %v132
  %152 = vmatprep.subr.bf16.mxu0 0
  %153 = vmatpush1.bf16.msra.mxu0 %v133
  %154 = vmatprep.subr.bf16.mxu0 0
  %155 = vmatpush1.bf16.msra.mxu0 %v134
  %156 = vmatprep.subr.bf16.mxu0 0
  %157 = vmatpush1.bf16.msra.mxu0 %v135
  %158 = vmatprep.subr.bf16.mxu0 0
  %159 = vmatpush1.bf16.msra.mxu0 %v136
  %160 = vmatprep.subr.bf16.mxu0 0
  %161 = vmatpush1.bf16.msra.mxu0 %v137
  %162 = vmatprep.subr.bf16.mxu0 0
  %163 = vmatpush1.bf16.msra.mxu0 0
  %164 = vmatprep.subr.bf16.mxu0 0
  %165 = vmatpush1.bf16.msra.mxu0 0
  %166 = vmatprep.subr.bf16.mxu0 0
  %167 = vmatpush1.bf16.msra.mxu0 0
  %168 = vmatprep.subr.bf16.mxu0 0
  %169 = vmatpush1.bf16.msra.mxu0 0
  %170 = vmatprep.subr.bf16.mxu0 0
  %171 = vmatpush1.bf16.msra.mxu0 0
  %172 = vmatprep.subr.bf16.mxu0 0
  %173 = vmatpush1.bf16.msra.mxu0 0
  %174 = vmatprep.subr.bf16.mxu0 0
  %175 = vmatpush1.bf16.msra.mxu0 0
  %176 = vmatprep.subr.bf16.mxu0 0
  %177 = vmatpush1.bf16.msra.mxu0 0
  %178 = vmatprep.mubr.bf16.mxu0 0
  %179 = vmatmul.mubr.bf16.gmra.mrb[0].mxu0 %v82
  %v180 = vpop.f32.mrb[0].mxu0
  %v181 = vadd.f32 0.0, %v180
  %v182 = vpop.f32.mrb[0].mxu0
  %v183 = vpop.f32.mrb[0].mxu0
  %v184 = vadd.f32 0.0, %v183
  %v185 = vpop.f32.mrb[0].mxu0
  %186 = vmatprep.mubr.bf16.mxu0 0
  %187 = vmatmul.mubr.bf16.gmra.mrb[0].mxu0 %v83
  %v188 = vpop.f32.mrb[0].mxu0
  %v189 = vadd.f32 0.0, %v188
  %v190 = vpop.f32.mrb[0].mxu0
  %v191 = vpop.f32.mrb[0].mxu0
  %v192 = vadd.f32 0.0, %v191
  %v193 = vpop.f32.mrb[0].mxu0
  %194 = vmatprep.mubr.bf16.mxu0 0
  %195 = vmatmul.mubr.bf16.gmra.mrb[0].mxu0 %v84
  %v196 = vpop.f32.mrb[0].mxu0
  %v197 = vadd.f32 0.0, %v196
  %v198 = vpop.f32.mrb[0].mxu0
  %v199 = vpop.f32.mrb[0].mxu0
  %v200 = vadd.f32 0.0, %v199
  %v201 = vpop.f32.mrb[0].mxu0
  %202 = vmatprep.mubr.bf16.mxu0 0
  %203 = vmatmul.mubr.bf16.gmra.mrb[0].mxu0 %v85
  %v204 = vpop.f32.mrb[0].mxu0
  %v205 = vadd.f32 0.0, %v204
  %v206 = vpop.f32.mrb[0].mxu0
  %v207 = vpop.f32.mrb[0].mxu0
  %v208 = vadd.f32 0.0, %v207
  %v209 = vpop.f32.mrb[0].mxu0
  %210 = vmatprep.mubr.bf16.mxu0 0
  %211 = vmatmul.mubr.bf16.gmra.mrb[0].mxu0 %v86
  %v212 = vpop.f32.mrb[0].mxu0
  %v213 = vadd.f32 0.0, %v212
  %v214 = vpop.f32.mrb[0].mxu0
  %v215 = vpop.f32.mrb[0].mxu0
  %v216 = vadd.f32 0.0, %v215
  %v217 = vpop.f32.mrb[0].mxu0
  %218 = vmatprep.mubr.bf16.mxu0 0
  %219 = vmatmul.mubr.bf16.gmra.mrb[0].mxu0 %v87
  %v220 = vpop.f32.mrb[0].mxu0
  %v221 = vadd.f32 0.0, %v220
  %v222 = vpop.f32.mrb[0].mxu0
  %v223 = vpop.f32.mrb[0].mxu0
  %v224 = vadd.f32 0.0, %v223
  %v225 = vpop.f32.mrb[0].mxu0
  %226 = vmatprep.mubr.bf16.mxu0 0
  %227 = vmatmul.mubr.bf16.gmra.mrb[0].mxu0 %v88
  %v228 = vpop.f32.mrb[0].mxu0
  %v229 = vadd.f32 0.0, %v228
  %v230 = vpop.f32.mrb[0].mxu0
  %v231 = vpop.f32.mrb[0].mxu0
  %v232 = vadd.f32 0.0, %v231
  %v233 = vpop.f32.mrb[0].mxu0
  %234 = vmatprep.mubr.bf16.mxu0 0
  %235 = vmatmul.mubr.bf16.gmra.mrb[0].mxu0 %v89
  %v236 = vpop.f32.mrb[0].mxu0
  %v237 = vadd.f32 0.0, %v236
  %v238 = vpop.f32.mrb[0].mxu0
  %v239 = vpop.f32.mrb[0].mxu0
  %v240 = vadd.f32 0.0, %v239
  %v241 = vpop.f32.mrb[0].mxu0
  %242 = vdwg.mxu0
  %v243 = vld [vmem:[%s2] sm:$0x1]
  %v244 = vld [vmem:[%s3] sm:$0x1]
  %v245 = vadd.f32 %v181, %v184
  %v246 = vadd.f32 %v245, %v189
  %v247 = vadd.f32 %v246, %v192
  %v248 = vadd.f32 %v247, %v197
  %v249 = vadd.f32 %v248, %v200
  %v250 = vadd.f32 %v249, %v205
  %v251 = vadd.f32 %v250, %v208
  %v252 = vadd.f32 %v251, %v213
  %v253 = vadd.f32 %v252, %v216
  %v254 = vadd.f32 %v253, %v221
  %v255 = vadd.f32 %v254, %v224
  %v256 = vadd.f32 %v255, %v229
  %v257 = vadd.f32 %v256, %v232
  %v258 = vadd.f32 %v257, %v237
  %v259 = vadd.f32 %v258, %v240
  %v260 = vrot.slane %v259, 4
  %v261 = vadd.f32 %v259, %v260
  %v262 = vrot.slane %v261, 2
  %v263 = vadd.f32 %v261, %v262
  %v264 = vrot.slane %v263, 1
  %v265 = vadd.f32 %v263, %v264
  %v266 = vrcp.pop 128.0
  %v267 = vmul.f32 %v265, %v266
  %v268 = vsub.f32 %v181, %v267
  %v269 = vsub.f32 %v184, %v267
  %v270 = vsub.f32 %v189, %v267
  %v271 = vsub.f32 %v192, %v267
  %v272 = vsub.f32 %v197, %v267
  %v273 = vsub.f32 %v200, %v267
  %v274 = vsub.f32 %v205, %v267
  %v275 = vsub.f32 %v208, %v267
  %v276 = vsub.f32 %v213, %v267
  %v277 = vsub.f32 %v216, %v267
  %v278 = vsub.f32 %v221, %v267
  %v279 = vsub.f32 %v224, %v267
  %v280 = vsub.f32 %v229, %v267
  %v281 = vsub.f32 %v232, %v267
  %v282 = vsub.f32 %v237, %v267
  %v283 = vsub.f32 %v240, %v267
  %v284 = vmul.f32 %v268, %v268
  %v285 = vmul.f32 %v269, %v269
  %v286 = vmul.f32 %v270, %v270
  %v287 = vmul.f32 %v271, %v271
  %v288 = vmul.f32 %v272, %v272
  %v289 = vmul.f32 %v273, %v273
  %v290 = vmul.f32 %v274, %v274
  %v291 = vmul.f32 %v275, %v275
  %v292 = vmul.f32 %v276, %v276
  %v293 = vmul.f32 %v277, %v277
  %v294 = vmul.f32 %v278, %v278
  %v295 = vmul.f32 %v279, %v279
  %v296 = vmul.f32 %v280, %v280
  %v297 = vmul.f32 %v281, %v281
  %v298 = vmul.f32 %v282, %v282
  %v299 = vmul.f32 %v283, %v283
  %v300 = vadd.f32 %v284, %v285
  %v301 = vadd.f32 %v300, %v286
  %v302 = vadd.f32 %v301, %v287
  %v303 = vadd.f32 %v302, %v288
  %v304 = vadd.f32 %v303, %v289
  %v305 = vadd.f32 %v304, %v290
  %v306 = vadd.f32 %v305, %v291
  %v307 = vadd.f32 %v306, %v292
  %v308 = vadd.f32 %v307, %v293
  %v309 = vadd.f32 %v308, %v294
  %v310 = vadd.f32 %v309, %v295
  %v311 = vadd.f32 %v310, %v296
  %v312 = vadd.f32 %v311, %v297
  %v313 = vadd.f32 %v312, %v298
  %v314 = vadd.f32 %v313, %v299
  %v315 = vrot.slane %v314, 4
  %v316 = vadd.f32 %v314, %v315
  %v317 = vrot.slane %v316, 2
  %v318 = vadd.f32 %v316, %v317
  %v319 = vrot.slane %v318, 1
  %v320 = vadd.f32 %v318, %v319
  %v321 = vmul.f32 %v320, %v266
  %v322 = vadd.f32 %v321, 1e-05
  %v323 = vrsqrt.pop %v322
  %v324 = vmul.f32 %v323, %v243
  %v325 = vmul.f32 %v267, %v324
  %v326 = vsub.f32 %v244, %v325
  %v327 = vlaneseq
  %v328 = vshrl.u32 %v327, 7
  %v329 = vsub.s32 0, %v328
  %v330 = vrot.slane %v324, %v329
  %v331 = vmul.f32 %v181, %v330
  %v332 = vmul.f32 %v184, %v330
  %v333 = vmul.f32 %v189, %v330
  %v334 = vmul.f32 %v192, %v330
  %v335 = vmul.f32 %v197, %v330
  %v336 = vmul.f32 %v200, %v330
  %v337 = vmul.f32 %v205, %v330
  %v338 = vmul.f32 %v208, %v330
  %v339 = vmul.f32 %v213, %v330
  %v340 = vmul.f32 %v216, %v330
  %v341 = vmul.f32 %v221, %v330
  %v342 = vmul.f32 %v224, %v330
  %v343 = vmul.f32 %v229, %v330
  %v344 = vmul.f32 %v232, %v330
  %v345 = vmul.f32 %v237, %v330
  %v346 = vmul.f32 %v240, %v330
  %v348 = vlaneseq
  %v349 = vshrl.u32 %v348, 7
  %v350 = vsub.s32 0, %v349
  %v351 = vrot.slane %v326, %v350
  %v353 = vadd.f32 %v331, %v351
  %v354 = vadd.f32 %v332, %v351
  %v355 = vadd.f32 %v333, %v351
  %v356 = vadd.f32 %v334, %v351
  %v357 = vadd.f32 %v335, %v351
  %v358 = vadd.f32 %v336, %v351
  %v359 = vadd.f32 %v337, %v351
  %v360 = vadd.f32 %v338, %v351
  %v361 = vadd.f32 %v339, %v351
  %v362 = vadd.f32 %v340, %v351
  %v363 = vadd.f32 %v341, %v351
  %v364 = vadd.f32 %v342, %v351
  %v365 = vadd.f32 %v343, %v351
  %v366 = vadd.f32 %v344, %v351
  %v367 = vadd.f32 %v345, %v351
  %v368 = vadd.f32 %v346, %v351
  %v369 = vmax.f32 %v353, 0.0
  %v370 = vmax.f32 %v354, 0.0
  %v371 = vmax.f32 %v355, 0.0
  %v372 = vmax.f32 %v356, 0.0
  %v373 = vmax.f32 %v357, 0.0
  %v374 = vmax.f32 %v358, 0.0
  %v375 = vmax.f32 %v359, 0.0
  %v376 = vmax.f32 %v360, 0.0
  %v377 = vmax.f32 %v361, 0.0
  %v378 = vmax.f32 %v362, 0.0
  %v379 = vmax.f32 %v363, 0.0
  %v380 = vmax.f32 %v364, 0.0
  %v381 = vmax.f32 %v365, 0.0
  %v382 = vmax.f32 %v366, 0.0
  %v383 = vmax.f32 %v367, 0.0
  %v384 = vmax.f32 %v368, 0.0
  %v385 = vpack.c.bf16 %v370, %v369
  %v386 = vpack.c.bf16 %v372, %v371
  %v387 = vpack.c.bf16 %v374, %v373
  %v388 = vpack.c.bf16 %v376, %v375
  %v389 = vpack.c.bf16 %v378, %v377
  %v390 = vpack.c.bf16 %v380, %v379
  %v391 = vpack.c.bf16 %v382, %v381
  %v392 = vpack.c.bf16 %v384, %v383
  %v401 = vunpack.c.l.b16 %v385
  %v402 = vunpack.c.h.b16 %v385
  %v403 = vunpack.c.l.b16 %v386
  %v404 = vunpack.c.h.b16 %v386
  %v405 = vunpack.c.l.b16 %v387
  %v406 = vunpack.c.h.b16 %v387
  %v407 = vunpack.c.l.b16 %v388
  %v408 = vunpack.c.h.b16 %v388
  %v409 = vunpack.c.l.b16 %v389
  %v410 = vunpack.c.h.b16 %v389
  %v411 = vunpack.c.l.b16 %v390
  %v412 = vunpack.c.h.b16 %v390
  %v413 = vunpack.c.l.b16 %v391
  %v414 = vunpack.c.h.b16 %v391
  %v415 = vunpack.c.l.b16 %v392
  %v416 = vunpack.c.h.b16 %v392
  %v417 = vpack.c.b16 %v401, %v401
  %v418 = vpack.c.b16 %v402, %v402
  %v419 = vpack.c.b16 %v403, %v403
  %v420 = vpack.c.b16 %v404, %v404
  %v421 = vpack.c.b16 %v405, %v405
  %v422 = vpack.c.b16 %v406, %v406
  %v423 = vpack.c.b16 %v407, %v407
  %v424 = vpack.c.b16 %v408, %v408
  %v425 = vpack.c.b16 %v409, %v409
  %v426 = vpack.c.b16 %v410, %v410
  %v427 = vpack.c.b16 %v411, %v411
  %v428 = vpack.c.b16 %v412, %v412
  %v429 = vpack.c.b16 %v413, %v413
  %v430 = vpack.c.b16 %v414, %v414
  %v431 = vpack.c.b16 %v415, %v415
  %v432 = vpack.c.b16 %v416, %v416
  %449 = vst [vmem:[%s4] sm:$0xf] %v417
  %450 = vst [vmem:[%s4 + $0x4] sm:$0xf] %v418
  %451 = vst [vmem:[%s4 + $0x8] sm:$0xf] %v419
  %452 = vst [vmem:[%s4 + $0xc] sm:$0xf] %v420
  %453 = vst [vmem:[%s4 + $0x10] sm:$0xf] %v421
  %454 = vst [vmem:[%s4 + $0x14] sm:$0xf] %v422
  %455 = vst [vmem:[%s4 + $0x18] sm:$0xf] %v423
  %456 = vst [vmem:[%s4 + $0x1c] sm:$0xf] %v424
  %457 = vst [vmem:[%s4 + $0x20] sm:$0xf] %v425
  %458 = vst [vmem:[%s4 + $0x24] sm:$0xf] %v426
  %459 = vst [vmem:[%s4 + $0x28] sm:$0xf] %v427
  %460 = vst [vmem:[%s4 + $0x2c] sm:$0xf] %v428
  %461 = vst [vmem:[%s4 + $0x30] sm:$0xf] %v429
  %462 = vst [vmem:[%s4 + $0x34] sm:$0xf] %v430
  %463 = vst [vmem:[%s4 + $0x38] sm:$0xf] %v431
  %464 = vst [vmem:[%s4 + $0x3c] sm:$0xf] %v432
  // Predicated region
  $region18: #{model_forward.11} parent=0 // pred_check
    _
  $region19: #{model_forward.11} parent=0 // pred_check_branch
    %466 = sbr.rel (0) target = $region21
  $region20: #{model_forward.11} parent=0 // pred_region
    _
  $region21: #{model_forward.11} parent=0 // pred_fallthru
    _
  // Predicated region
  $region22: #{model_forward.11} parent=0 // pred_check
    _
  $region23: #{model_forward.11} parent=0 // pred_check_branch
    %468 = sbr.rel (0) target = $region25
  $region24: #{model_forward.11} parent=0 // pred_region
    _
  $region25: #{model_forward.11} parent=0 // pred_fallthru
    _

// kernel: model_forward.10
$region0: #{model_forward.10}
  #allocation0 [shape = 'u32[]', space=smem, size = 0x4, offset = 0x4, fixed_abs, tag = 'smem constant byte address 0x4 - core index']
  #allocation1 [shape = 'u32[144,128]{1,0:T(1,128)}', space=vmem, size = 0x12000, scoped, tag = 'internal scratch']
  %s0 = inlined_call_operand.vmem [shape: bf16[512,256], index: 0, kind: input, shape index: {}]
  %s1 = inlined_call_operand.vmem [shape: bf16[256,128], index: 1, kind: input, shape index: {}]
  %s2 = inlined_call_operand.vmem [shape: f32[1,128], index: 2, kind: input, shape index: {}]
  %s3 = inlined_call_operand.vmem [shape: f32[1,128], index: 3, kind: input, shape index: {}]
  %s4 = inlined_call_operand.vmem [shape: bf16[512,128], index: 4, kind: output, shape index: {}]
  %s5 = sld [smem:[#allocation0]]
  $region26: #{model_forward.10} parent=0
    _
  %s7 = ssub.s32 1, %s5
  %s8 = scalar_select 0, %s7, %s5
  // Predicated region
  $region2: #{model_forward.10} parent=0 // pred_check
    _
  $region3: #{model_forward.10} parent=0 // pred_check_branch
    %10 = sbr.rel (0) target = $region5
  $region4: #{model_forward.10} parent=0 // pred_region
    _
  $region5: #{model_forward.10} parent=0 // pred_fallthru
    _
  // Predicated region
  $region6: #{model_forward.10} parent=0 // pred_check
    _
  $region7: #{model_forward.10} parent=0 // pred_check_branch
    %12 = sbr.rel (0) target = $region9
  $region8: #{model_forward.10} parent=0 // pred_region
    _
  $region9: #{model_forward.10} parent=0 // pred_fallthru
    _
  // Predicated region
  $region10: #{model_forward.10} parent=0 // pred_check
    _
  $region11: #{model_forward.10} parent=0 // pred_check_branch
    %14 = sbr.rel (0) target = $region13
  $region12: #{model_forward.10} parent=0 // pred_region
    _
  $region13: #{model_forward.10} parent=0 // pred_fallthru
    _
  // Predicated region
  $region14: #{model_forward.10} parent=0 // pred_check
    _
  $region15: #{model_forward.10} parent=0 // pred_check_branch
    %16 = sbr.rel (0) target = $region17
  $region16: #{model_forward.10} parent=0 // pred_region
    _
  $region17: #{model_forward.10} parent=0 // pred_fallthru
    _
  %v18 = vld [vmem:[%s0] sm:$0xff]
  %v19 = vld [vmem:[%s0 + $0x8] sm:$0xff]
  %v20 = vld [vmem:[%s0 + $0x10] sm:$0xff]
  %v21 = vld [vmem:[%s0 + $0x18] sm:$0xff]
  %v22 = vld [vmem:[%s0 + $0x20] sm:$0xff]
  %v23 = vld [vmem:[%s0 + $0x28] sm:$0xff]
  %v24 = vld [vmem:[%s0 + $0x30] sm:$0xff]
  %v25 = vld [vmem:[%s0 + $0x38] sm:$0xff]
  %v26 = vld [vmem:[%s0 + $0x40] sm:$0xff]
  %v27 = vld [vmem:[%s0 + $0x48] sm:$0xff]
  %v28 = vld [vmem:[%s0 + $0x50] sm:$0xff]
  %v29 = vld [vmem:[%s0 + $0x58] sm:$0xff]
  %v30 = vld [vmem:[%s0 + $0x60] sm:$0xff]
  %v31 = vld [vmem:[%s0 + $0x68] sm:$0xff]
  %v32 = vld [vmem:[%s0 + $0x70] sm:$0xff]
  %v33 = vld [vmem:[%s0 + $0x78] sm:$0xff]
  %v34 = vld [vmem:[%s0 + $0x80] sm:$0xff]
  %v35 = vld [vmem:[%s0 + $0x88] sm:$0xff]
  %v36 = vld [vmem:[%s0 + $0x90] sm:$0xff]
  %v37 = vld [vmem:[%s0 + $0x98] sm:$0xff]
  %v38 = vld [vmem:[%s0 + $0xa0] sm:$0xff]
  %v39 = vld [vmem:[%s0 + $0xa8] sm:$0xff]
  %v40 = vld [vmem:[%s0 + $0xb0] sm:$0xff]
  %v41 = vld [vmem:[%s0 + $0xb8] sm:$0xff]
  %v42 = vld [vmem:[%s0 + $0xc0] sm:$0xff]
  %v43 = vld [vmem:[%s0 + $0xc8] sm:$0xff]
  %v44 = vld [vmem:[%s0 + $0xd0] sm:$0xff]
  %v45 = vld [vmem:[%s0 + $0xd8] sm:$0xff]
  %v46 = vld [vmem:[%s0 + $0xe0] sm:$0xff]
  %v47 = vld [vmem:[%s0 + $0xe8] sm:$0xff]
  %v48 = vld [vmem:[%s0 + $0xf0] sm:$0xff]
  %v49 = vld [vmem:[%s0 + $0xf8] sm:$0xff]
  %v50 = vld [vmem:[%s0 + $0x100] sm:$0xff]
  %v51 = vld [vmem:[%s0 + $0x108] sm:$0xff]
  %v52 = vld [vmem:[%s0 + $0x110] sm:$0xff]
  %v53 = vld [vmem:[%s0 + $0x118] sm:$0xff]
  %v54 = vld [vmem:[%s0 + $0x120] sm:$0xff]
  %v55 = vld [vmem:[%s0 + $0x128] sm:$0xff]
  %v56 = vld [vmem:[%s0 + $0x130] sm:$0xff]
  %v57 = vld [vmem:[%s0 + $0x138] sm:$0xff]
  %v58 = vld [vmem:[%s0 + $0x140] sm:$0xff]
  %v59 = vld [vmem:[%s0 + $0x148] sm:$0xff]
  %v60 = vld [vmem:[%s0 + $0x150] sm:$0xff]
  %v61 = vld [vmem:[%s0 + $0x158] sm:$0xff]
  %v62 = vld [vmem:[%s0 + $0x160] sm:$0xff]
  %v63 = vld [vmem:[%s0 + $0x168] sm:$0xff]
  %v64 = vld [vmem:[%s0 + $0x170] sm:$0xff]
  %v65 = vld [vmem:[%s0 + $0x178] sm:$0xff]
  %v66 = vld [vmem:[%s0 + $0x180] sm:$0xff]
  %v67 = vld [vmem:[%s0 + $0x188] sm:$0xff]
  %v68 = vld [vmem:[%s0 + $0x190] sm:$0xff]
  %v69 = vld [vmem:[%s0 + $0x198] sm:$0xff]
  %v70 = vld [vmem:[%s0 + $0x1a0] sm:$0xff]
  %v71 = vld [vmem:[%s0 + $0x1a8] sm:$0xff]
  %v72 = vld [vmem:[%s0 + $0x1b0] sm:$0xff]
  %v73 = vld [vmem:[%s0 + $0x1b8] sm:$0xff]
  %v74 = vld [vmem:[%s0 + $0x1c0] sm:$0xff]
  %v75 = vld [vmem:[%s0 + $0x1c8] sm:$0xff]
  %v76 = vld [vmem:[%s0 + $0x1d0] sm:$0xff]
  %v77 = vld [vmem:[%s0 + $0x1d8] sm:$0xff]
  %v78 = vld [vmem:[%s0 + $0x1e0] sm:$0xff]
  %v79 = vld [vmem:[%s0 + $0x1e8] sm:$0xff]
  %v80 = vld [vmem:[%s0 + $0x1f0] sm:$0xff]
  %v81 = vld [vmem:[%s0 + $0x1f8] sm:$0xff]
  %v82 = vld [vmem:[%s1] sm:$0xf]
  %v83 = vld [vmem:[%s1 + $0x4] sm:$0xf]
  %v84 = vld [vmem:[%s1 + $0x8] sm:$0xf]
  %v85 = vld [vmem:[%s1 + $0xc] sm:$0xf]
  %v86 = vld [vmem:[%s1 + $0x10] sm:$0xf]
  %v87 = vld [vmem:[%s1 + $0x14] sm:$0xf]
  %v88 = vld [vmem:[%s1 + $0x18] sm:$0xf]
  %v89 = vld [vmem:[%s1 + $0x1c] sm:$0xf]
  %v90 = vld [vmem:[%s1 + $0x20] sm:$0xf]
  %v91 = vld [vmem:[%s1 + $0x24] sm:$0xf]
  %v92 = vld [vmem:[%s1 + $0x28] sm:$0xf]
  %v93 = vld [vmem:[%s1 + $0x2c] sm:$0xf]
  %v94 = vld [vmem:[%s1 + $0x30] sm:$0xf]
  %v95 = vld [vmem:[%s1 + $0x34] sm:$0xf]
  %v96 = vld [vmem:[%s1 + $0x38] sm:$0xf]
  %v97 = vld [vmem:[%s1 + $0x3c] sm:$0xf]
  %v98 = vld [vmem:[%s1 + $0x40] sm:$0xf]
  %v99 = vld [vmem:[%s1 + $0x44] sm:$0xf]
  %v100 = vld [vmem:[%s1 + $0x48] sm:$0xf]
  %v101 = vld [vmem:[%s1 + $0x4c] sm:$0xf]
  %v102 = vld [vmem:[%s1 + $0x50] sm:$0xf]
  %v103 = vld [vmem:[%s1 + $0x54] sm:$0xf]
  %v104 = vld [vmem:[%s1 + $0x58] sm:$0xf]
  %v105 = vld [vmem:[%s1 + $0x5c] sm:$0xf]
  %v106 = vld [vmem:[%s1 + $0x60] sm:$0xf]
  %v107 = vld [vmem:[%s1 + $0x64] sm:$0xf]
  %v108 = vld [vmem:[%s1 + $0x68] sm:$0xf]
  %v109 = vld [vmem:[%s1 + $0x6c] sm:$0xf]
  %v110 = vld [vmem:[%s1 + $0x70] sm:$0xf]
  %v111 = vld [vmem:[%s1 + $0x74] sm:$0xf]
  %v112 = vld [vmem:[%s1 + $0x78] sm:$0xf]
  %v113 = vld [vmem:[%s1 + $0x7c] sm:$0xf]
  %v178 = vunpack.c.l.b16 %v18
  %v179 = vunpack.c.h.b16 %v18
  %v180 = vunpack.c.l.b16 %v19
  %v181 = vunpack.c.h.b16 %v19
  %v182 = vunpack.c.l.b16 %v20
  %v183 = vunpack.c.h.b16 %v20
  %v184 = vunpack.c.l.b16 %v21
  %v185 = vunpack.c.h.b16 %v21
  %v186 = vunpack.c.l.b16 %v22
  %v187 = vunpack.c.h.b16 %v22
  %v188 = vunpack.c.l.b16 %v23
  %v189 = vunpack.c.h.b16 %v23
  %v190 = vunpack.c.l.b16 %v24
  %v191 = vunpack.c.h.b16 %v24
  %v192 = vunpack.c.l.b16 %v25
  %v193 = vunpack.c.h.b16 %v25
  %v194 = vunpack.c.l.b16 %v26
  %v195 = vunpack.c.h.b16 %v26
  %v196 = vunpack.c.l.b16 %v27
  %v197 = vunpack.c.h.b16 %v27
  %v198 = vunpack.c.l.b16 %v28
  %v199 = vunpack.c.h.b16 %v28
  %v200 = vunpack.c.l.b16 %v29
  %v201 = vunpack.c.h.b16 %v29
  %v202 = vunpack.c.l.b16 %v30
  %v203 = vunpack.c.h.b16 %v30
  %v204 = vunpack.c.l.b16 %v31
  %v205 = vunpack.c.h.b16 %v31
  %v206 = vunpack.c.l.b16 %v32
  %v207 = vunpack.c.h.b16 %v32
  %v208 = vunpack.c.l.b16 %v33
  %v209 = vunpack.c.h.b16 %v33
  %v210 = vunpack.c.l.b16 %v34
  %v211 = vunpack.c.h.b16 %v34
  %v212 = vunpack.c.l.b16 %v35
  %v213 = vunpack.c.h.b16 %v35
  %v214 = vunpack.c.l.b16 %v36
  %v215 = vunpack.c.h.b16 %v36
  %v216 = vunpack.c.l.b16 %v37
  %v217 = vunpack.c.h.b16 %v37
  %v218 = vunpack.c.l.b16 %v38
  %v219 = vunpack.c.h.b16 %v38
  %v220 = vunpack.c.l.b16 %v39
  %v221 = vunpack.c.h.b16 %v39
  %v222 = vunpack.c.l.b16 %v40
  %v223 = vunpack.c.h.b16 %v40
  %v224 = vunpack.c.l.b16 %v41
  %v225 = vunpack.c.h.b16 %v41
  %v226 = vunpack.c.l.b16 %v42
  %v227 = vunpack.c.h.b16 %v42
  %v228 = vunpack.c.l.b16 %v43
  %v229 = vunpack.c.h.b16 %v43
  %v230 = vunpack.c.l.b16 %v44
  %v231 = vunpack.c.h.b16 %v44
  %v232 = vunpack.c.l.b16 %v45
  %v233 = vunpack.c.h.b16 %v45
  %v234 = vunpack.c.l.b16 %v46
  %v235 = vunpack.c.h.b16 %v46
  %v236 = vunpack.c.l.b16 %v47
  %v237 = vunpack.c.h.b16 %v47
  %v238 = vunpack.c.l.b16 %v48
  %v239 = vunpack.c.h.b16 %v48
  %v240 = vunpack.c.l.b16 %v49
  %v241 = vunpack.c.h.b16 %v49
  %v242 = vunpack.c.l.b16 %v50
  %v243 = vunpack.c.h.b16 %v50
  %v244 = vunpack.c.l.b16 %v51
  %v245 = vunpack.c.h.b16 %v51
  %v246 = vunpack.c.l.b16 %v52
  %v247 = vunpack.c.h.b16 %v52
  %v248 = vunpack.c.l.b16 %v53
  %v249 = vunpack.c.h.b16 %v53
  %v250 = vunpack.c.l.b16 %v54
  %v251 = vunpack.c.h.b16 %v54
  %v252 = vunpack.c.l.b16 %v55
  %v253 = vunpack.c.h.b16 %v55
  %v254 = vunpack.c.l.b16 %v56
  %v255 = vunpack.c.h.b16 %v56
  %v256 = vunpack.c.l.b16 %v57
  %v257 = vunpack.c.h.b16 %v57
  %v258 = vunpack.c.l.b16 %v58
  %v259 = vunpack.c.h.b16 %v58
  %v260 = vunpack.c.l.b16 %v59
  %v261 = vunpack.c.h.b16 %v59
  %v262 = vunpack.c.l.b16 %v60
  %v263 = vunpack.c.h.b16 %v60
  %v264 = vunpack.c.l.b16 %v61
  %v265 = vunpack.c.h.b16 %v61
  %v266 = vunpack.c.l.b16 %v62
  %v267 = vunpack.c.h.b16 %v62
  %v268 = vunpack.c.l.b16 %v63
  %v269 = vunpack.c.h.b16 %v63
  %v270 = vunpack.c.l.b16 %v64
  %v271 = vunpack.c.h.b16 %v64
  %v272 = vunpack.c.l.b16 %v65
  %v273 = vunpack.c.h.b16 %v65
  %v274 = vunpack.c.l.b16 %v66
  %v275 = vunpack.c.h.b16 %v66
  %v276 = vunpack.c.l.b16 %v67
  %v277 = vunpack.c.h.b16 %v67
  %v278 = vunpack.c.l.b16 %v68
  %v279 = vunpack.c.h.b16 %v68
  %v280 = vunpack.c.l.b16 %v69
  %v281 = vunpack.c.h.b16 %v69
  %v282 = vunpack.c.l.b16 %v70
  %v283 = vunpack.c.h.b16 %v70
  %v284 = vunpack.c.l.b16 %v71
  %v285 = vunpack.c.h.b16 %v71
  %v286 = vunpack.c.l.b16 %v72
  %v287 = vunpack.c.h.b16 %v72
  %v288 = vunpack.c.l.b16 %v73
  %v289 = vunpack.c.h.b16 %v73
  %v290 = vunpack.c.l.b16 %v74
  %v291 = vunpack.c.h.b16 %v74
  %v292 = vunpack.c.l.b16 %v75
  %v293 = vunpack.c.h.b16 %v75
  %v294 = vunpack.c.l.b16 %v76
  %v295 = vunpack.c.h.b16 %v76
  %v296 = vunpack.c.l.b16 %v77
  %v297 = vunpack.c.h.b16 %v77
  %v298 = vunpack.c.l.b16 %v78
  %v299 = vunpack.c.h.b16 %v78
  %v300 = vunpack.c.l.b16 %v79
  %v301 = vunpack.c.h.b16 %v79
  %v302 = vunpack.c.l.b16 %v80
  %v303 = vunpack.c.h.b16 %v80
  %v304 = vunpack.c.l.b16 %v81
  %v305 = vunpack.c.h.b16 %v81
  %v306 = vpack.c.b16 %v180, %v178
  %v307 = vpack.c.b16 %v181, %v179
  %v308 = vpack.c.b16 %v184, %v182
  %v309 = vpack.c.b16 %v185, %v183
  %v310 = vpack.c.b16 %v188, %v186
  %v311 = vpack.c.b16 %v189, %v187
  %v312 = vpack.c.b16 %v192, %v190
  %v313 = vpack.c.b16 %v193, %v191
  %v314 = vpack.c.b16 %v196, %v194
  %v315 = vpack.c.b16 %v197, %v195
  %v316 = vpack.c.b16 %v200, %v198
  %v317 = vpack.c.b16 %v201, %v199
  %v318 = vpack.c.b16 %v204, %v202
  %v319 = vpack.c.b16 %v205, %v203
  %v320 = vpack.c.b16 %v208, %v206
  %v321 = vpack.c.b16 %v209, %v207
  %v322 = vpack.c.b16 %v212, %v210
  %v323 = vpack.c.b16 %v213, %v211
  %v324 = vpack.c.b16 %v216, %v214
  %v325 = vpack.c.b16 %v217, %v215
  %v326 = vpack.c.b16 %v220, %v218
  %v327 = vpack.c.b16 %v221, %v219
  %v328 = vpack.c.b16 %v224, %v222
  %v329 = vpack.c.b16 %v225, %v223
  %v330 = vpack.c.b16 %v228, %v226
  %v331 = vpack.c.b16 %v229, %v227
  %v332 = vpack.c.b16 %v232, %v230
  %v333 = vpack.c.b16 %v233, %v231
  %v334 = vpack.c.b16 %v236, %v234
  %v335 = vpack.c.b16 %v237, %v235
  %v336 = vpack.c.b16 %v240, %v238
  %v337 = vpack.c.b16 %v241, %v239
  %v338 = vpack.c.b16 %v244, %v242
  %v339 = vpack.c.b16 %v245, %v243
  %v340 = vpack.c.b16 %v248, %v246
  %v341 = vpack.c.b16 %v249, %v247
  %v342 = vpack.c.b16 %v252, %v250
  %v343 = vpack.c.b16 %v253, %v251
  %v344 = vpack.c.b16 %v256, %v254
  %v345 = vpack.c.b16 %v257, %v255
  %v346 = vpack.c.b16 %v260, %v258
  %v347 = vpack.c.b16 %v261, %v259
  %v348 = vpack.c.b16 %v264, %v262
  %v349 = vpack.c.b16 %v265, %v263
  %v350 = vpack.c.b16 %v268, %v266
  %v351 = vpack.c.b16 %v269, %v267
  %v352 = vpack.c.b16 %v272, %v270
  %v353 = vpack.c.b16 %v273, %v271
  %v354 = vpack.c.b16 %v276, %v274
  %v355 = vpack.c.b16 %v277, %v275
  %v356 = vpack.c.b16 %v280, %v278
  %v357 = vpack.c.b16 %v281, %v279
  %v358 = vpack.c.b16 %v284, %v282
  %v359 = vpack.c.b16 %v285, %v283
  %v360 = vpack.c.b16 %v288, %v286
  %v361 = vpack.c.b16 %v289, %v287
  %v362 = vpack.c.b16 %v292, %v290
  %v363 = vpack.c.b16 %v293, %v291
  %v364 = vpack.c.b16 %v296, %v294
  %v365 = vpack.c.b16 %v297, %v295
  %v366 = vpack.c.b16 %v300, %v298
  %v367 = vpack.c.b16 %v301, %v299
  %v368 = vpack.c.b16 %v304, %v302
  %v369 = vpack.c.b16 %v305, %v303
  %v466 = vunpack.c.l.b16 %v82
  %v467 = vunpack.c.l.b16 %v83
  %v468 = vunpack.c.l.b16 %v84
  %v469 = vunpack.c.l.b16 %v85
  %v470 = vunpack.c.l.b16 %v86
  %v471 = vunpack.c.l.b16 %v87
  %v472 = vunpack.c.l.b16 %v88
  %v473 = vunpack.c.l.b16 %v89
  %v474 = vunpack.c.l.b16 %v90
  %v475 = vunpack.c.l.b16 %v91
  %v476 = vunpack.c.l.b16 %v92
  %v477 = vunpack.c.l.b16 %v93
  %v478 = vunpack.c.l.b16 %v94
  %v479 = vunpack.c.l.b16 %v95
  %v480 = vunpack.c.l.b16 %v96
  %v481 = vunpack.c.l.b16 %v97
  %v482 = vunpack.c.l.b16 %v98
  %v483 = vunpack.c.l.b16 %v99
  %v484 = vunpack.c.l.b16 %v100
  %v485 = vunpack.c.l.b16 %v101
  %v486 = vunpack.c.l.b16 %v102
  %v487 = vunpack.c.l.b16 %v103
  %v488 = vunpack.c.l.b16 %v104
  %v489 = vunpack.c.l.b16 %v105
  %v490 = vunpack.c.l.b16 %v106
  %v491 = vunpack.c.l.b16 %v107
  %v492 = vunpack.c.l.b16 %v108
  %v493 = vunpack.c.l.b16 %v109
  %v494 = vunpack.c.l.b16 %v110
  %v495 = vunpack.c.l.b16 %v111
  %v496 = vunpack.c.l.b16 %v112
  %v497 = vunpack.c.l.b16 %v113
  %v498 = vpack.c.b16 %v467, %v466
  %v499 = vpack.c.b16 %v469, %v468
  %v500 = vpack.c.b16 %v471, %v470
  %v501 = vpack.c.b16 %v473, %v472
  %v502 = vpack.c.b16 %v475, %v474
  %v503 = vpack.c.b16 %v477, %v476
  %v504 = vpack.c.b16 %v479, %v478
  %v505 = vpack.c.b16 %v481, %v480
  %v506 = vpack.c.b16 %v483, %v482
  %v507 = vpack.c.b16 %v485, %v484
  %v508 = vpack.c.b16 %v487, %v486
  %v509 = vpack.c.b16 %v489, %v488
  %v510 = vpack.c.b16 %v491, %v490
  %v511 = vpack.c.b16 %v493, %v492
  %v512 = vpack.c.b16 %v495, %v494
  %v513 = vpack.c.b16 %v497, %v496
  %530 = vmatprep.subr.bf16.mxu0 0
  %531 = vmatpush1.bf16.msra.mxu0 %v498
  %532 = vmatprep.subr.bf16.mxu0 0
  %533 = vmatpush1.bf16.msra.mxu0 %v499
  %534 = vmatprep.subr.bf16.mxu0 0
  %535 = vmatpush1.bf16.msra.mxu0 %v500
  %536 = vmatprep.subr.bf16.mxu0 0
  %537 = vmatpush1.bf16.msra.mxu0 %v501
  %538 = vmatprep.subr.bf16.mxu0 0
  %539 = vmatpush1.bf16.msra.mxu0 %v502
  %540 = vmatprep.subr.bf16.mxu0 0
  %541 = vmatpush1.bf16.msra.mxu0 %v503
  %542 = vmatprep.subr.bf16.mxu0 0
  %543 = vmatpush1.bf16.msra.mxu0 %v504
  %544 = vmatprep.subr.bf16.mxu0 0
  %545 = vmatpush1.bf16.msra.mxu0 %v505
  %546 = vmatprep.subr.bf16.mxu0 0
  %547 = vmatpush1.bf16.msra.mxu0 %v506
  %548 = vmatprep.subr.bf16.mxu0 0
  %549 = vmatpush1.bf16.msra.mxu0 %v507
  %550 = vmatprep.subr.bf16.mxu0 0
  %551 = vmatpush1.bf16.msra.mxu0 %v508
  %552 = vmatprep.subr.bf16.mxu0 0
  %553 = vmatpush1.bf16.msra.mxu0 %v509
  %554 = vmatprep.subr.bf16.mxu0 0
  %555 = vmatpush1.bf16.msra.mxu0 %v510
  %556 = vmatprep.subr.bf16.mxu0 0
  %557 = vmatpush1.bf16.msra.mxu0 %v511
  %558 = vmatprep.subr.bf16.mxu0 0
  %559 = vmatpush1.bf16.msra.mxu0 %v512
  %560 = vmatprep.subr.bf16.mxu0 0
  %561 = vmatpush1.bf16.msra.mxu0 %v513
  %562 = vmatprep.mubr.bf16.mxu0 %v307
  %563 = vmatmul.mubr.bf16.gmra.mrb[0].mxu0 %v306
  %v564 = vpop.f32.mrb[0].mxu0
  %v565 = vadd.f32 0.0, %v564
  %v566 = vpop.f32.mrb[0].mxu0
  %v567 = vpop.f32.mrb[0].mxu0
  %v568 = vadd.f32 0.0, %v567
  %v569 = vpop.f32.mrb[0].mxu0
  %570 = vmatprep.mubr.bf16.mxu0 %v309
  %571 = vmatmul.mubr.bf16.gmra.mrb[0].mxu0 %v308
  %v572 = vpop.f32.mrb[0].mxu0
  %v573 = vadd.f32 0.0, %v572
  %v574 = vpop.f32.mrb[0].mxu0
  %v575 = vpop.f32.mrb[0].mxu0
  %v576 = vadd.f32 0.0, %v575
  %v577 = vpop.f32.mrb[0].mxu0
  %578 = vmatprep.mubr.bf16.mxu0 %v311
  %579 = vmatmul.mubr.bf16.gmra.mrb[0].mxu0 %v310
  %v580 = vpop.f32.mrb[0].mxu0
  %v581 = vadd.f32 0.0, %v580
  %v582 = vpop.f32.mrb[0].mxu0
  %v583 = vpop.f32.mrb[0].mxu0
  %v584 = vadd.f32 0.0, %v583
  %v585 = vpop.f32.mrb[0].mxu0
  %586 = vmatprep.mubr.bf16.mxu0 %v313
  %587 = vmatmul.mubr.bf16.gmra.mrb[0].mxu0 %v312
  %v588 = vpop.f32.mrb[0].mxu0
  %v589 = vadd.f32 0.0, %v588
  %v590 = vpop.f32.mrb[0].mxu0
  %v591 = vpop.f32.mrb[0].mxu0
  %v592 = vadd.f32 0.0, %v591
  %v593 = vpop.f32.mrb[0].mxu0
  %594 = vmatprep.mubr.bf16.mxu0 %v315
  %595 = vmatmul.mubr.bf16.gmra.mrb[0].mxu0 %v314
  %v596 = vpop.f32.mrb[0].mxu0
  %v597 = vadd.f32 0.0, %v596
  %v598 = vpop.f32.mrb[0].mxu0
  %v599 = vpop.f32.mrb[0].mxu0
  %v600 = vadd.f32 0.0, %v599
  %v601 = vpop.f32.mrb[0].mxu0
  %602 = vmatprep.mubr.bf16.mxu0 %v317
  %603 = vmatmul.mubr.bf16.gmra.mrb[0].mxu0 %v316
  %v604 = vpop.f32.mrb[0].mxu0
  %v605 = vadd.f32 0.0, %v604
  %v606 = vpop.f32.mrb[0].mxu0
  %v607 = vpop.f32.mrb[0].mxu0
  %v608 = vadd.f32 0.0, %v607
  %v609 = vpop.f32.mrb[0].mxu0
  %610 = vmatprep.mubr.bf16.mxu0 %v319
  %611 = vmatmul.mubr.bf16.gmra.mrb[0].mxu0 %v318
  %v612 = vpop.f32.mrb[0].mxu0
  %v613 = vadd.f32 0.0, %v612
  %v614 = vpop.f32.mrb[0].mxu0
  %v615 = vpop.f32.mrb[0].mxu0
  %v616 = vadd.f32 0.0, %v615
  %v617 = vpop.f32.mrb[0].mxu0
  %618 = vmatprep.mubr.bf16.mxu0 %v321
  %619 = vmatmul.mubr.bf16.gmra.mrb[0].mxu0 %v320
  %v620 = vpop.f32.mrb[0].mxu0
  %v621 = vadd.f32 0.0, %v620
  %v622 = vpop.f32.mrb[0].mxu0
  %v623 = vpop.f32.mrb[0].mxu0
  %v624 = vadd.f32 0.0, %v623
  %v625 = vpop.f32.mrb[0].mxu0
  %626 = vmatprep.mubr.bf16.mxu0 %v323
  %627 = vmatmul.mubr.bf16.gmra.mrb[0].mxu0 %v322
  %v628 = vpop.f32.mrb[0].mxu0
  %v629 = vadd.f32 0.0, %v628
  %v630 = vpop.f32.mrb[0].mxu0
  %v631 = vpop.f32.mrb[0].mxu0
  %v632 = vadd.f32 0.0, %v631
  %v633 = vpop.f32.mrb[0].mxu0
  %634 = vmatprep.mubr.bf16.mxu0 %v325
  %635 = vmatmul.mubr.bf16.gmra.mrb[0].mxu0 %v324
  %v636 = vpop.f32.mrb[0].mxu0
  %v637 = vadd.f32 0.0, %v636
  %v638 = vpop.f32.mrb[0].mxu0
  %v639 = vpop.f32.mrb[0].mxu0
  %v640 = vadd.f32 0.0, %v639
  %v641 = vpop.f32.mrb[0].mxu0
  %642 = vmatprep.mubr.bf16.mxu0 %v327
  %643 = vmatmul.mubr.bf16.gmra.mrb[0].mxu0 %v326
  %v644 = vpop.f32.mrb[0].mxu0
  %v645 = vadd.f32 0.0, %v644
  %v646 = vpop.f32.mrb[0].mxu0
  %v647 = vpop.f32.mrb[0].mxu0
  %v648 = vadd.f32 0.0, %v647
  %v649 = vpop.f32.mrb[0].mxu0
  %650 = vmatprep.mubr.bf16.mxu0 %v329
  %651 = vmatmul.mubr.bf16.gmra.mrb[0].mxu0 %v328
  %v652 = vpop.f32.mrb[0].mxu0
  %v653 = vadd.f32 0.0, %v652
  %v654 = vpop.f32.mrb[0].mxu0
  %v655 = vpop.f32.mrb[0].mxu0
  %v656 = vadd.f32 0.0, %v655
  %v657 = vpop.f32.mrb[0].mxu0
  %658 = vmatprep.mubr.bf16.mxu0 %v331
  %659 = vmatmul.mubr.bf16.gmra.mrb[0].mxu0 %v330
  %v660 = vpop.f32.mrb[0].mxu0
  %v661 = vadd.f32 0.0, %v660
  %v662 = vpop.f32.mrb[0].mxu0
  %v663 = vpop.f32.mrb[0].mxu0
  %v664 = vadd.f32 0.0, %v663
  %v665 = vpop.f32.mrb[0].mxu0
  %666 = vmatprep.mubr.bf16.mxu0 %v333
  %667 = vmatmul.mubr.bf16.gmra.mrb[0].mxu0 %v332
  %v668 = vpop.f32.mrb[0].mxu0
  %v669 = vadd.f32 0.0, %v668
  %v670 = vpop.f32.mrb[0].mxu0
  %v671 = vpop.f32.mrb[0].mxu0
  %v672 = vadd.f32 0.0, %v671
  %v673 = vpop.f32.mrb[0].mxu0
  %674 = vmatprep.mubr.bf16.mxu0 %v335
  %675 = vmatmul.mubr.bf16.gmra.mrb[0].mxu0 %v334
  %v676 = vpop.f32.mrb[0].mxu0
  %v677 = vadd.f32 0.0, %v676
  %v678 = vpop.f32.mrb[0].mxu0
  %v679 = vpop.f32.mrb[0].mxu0
  %v680 = vadd.f32 0.0, %v679
  %v681 = vpop.f32.mrb[0].mxu0
  %682 = vmatprep.mubr.bf16.mxu0 %v337
  %683 = vmatmul.mubr.bf16.gmra.mrb[0].mxu0 %v336
  %v684 = vpop.f32.mrb[0].mxu0
  %v685 = vadd.f32 0.0, %v684
  %v686 = vpop.f32.mrb[0].mxu0
  %v687 = vpop.f32.mrb[0].mxu0
  %v688 = vadd.f32 0.0, %v687
  %v689 = vpop.f32.mrb[0].mxu0
  %690 = vmatprep.mubr.bf16.mxu0 %v339
  %691 = vmatmul.mubr.bf16.gmra.mrb[0].mxu0 %v338
  %v692 = vpop.f32.mrb[0].mxu0
  %v693 = vadd.f32 0.0, %v692
  %v694 = vpop.f32.mrb[0].mxu0
  %v695 = vpop.f32.mrb[0].mxu0
  %v696 = vadd.f32 0.0, %v695
  %v697 = vpop.f32.mrb[0].mxu0
  %698 = vmatprep.mubr.bf16.mxu0 %v341
  %699 = vmatmul.mubr.bf16.gmra.mrb[0].mxu0 %v340
  %v700 = vpop.f32.mrb[0].mxu0
  %v701 = vadd.f32 0.0, %v700
  %v702 = vpop.f32.mrb[0].mxu0
  %v703 = vpop.f32.mrb[0].mxu0
  %v704 = vadd.f32 0.0, %v703
  %v705 = vpop.f32.mrb[0].mxu0
  %706 = vmatprep.mubr.bf16.mxu0 %v343
  %707 = vmatmul.mubr.bf16.gmra.mrb[0].mxu0 %v342
  %v708 = vpop.f32.mrb[0].mxu0
  %v709 = vadd.f32 0.0, %v708
  %v710 = vpop.f32.mrb[0].mxu0
  %v711 = vpop.f32.mrb[0].mxu0
  %v712 = vadd.f32 0.0, %v711
  %v713 = vpop.f32.mrb[0].mxu0
  %714 = vmatprep.mubr.bf16.mxu0 %v345
  %715 = vmatmul.mubr.bf16.gmra.mrb[0].mxu0 %v344
  %v716 = vpop.f32.mrb[0].mxu0
  %v717 = vadd.f32 0.0, %v716
  %v718 = vpop.f32.mrb[0].mxu0
  %v719 = vpop.f32.mrb[0].mxu0
  %v720 = vadd.f32 0.0, %v719
  %v721 = vpop.f32.mrb[0].mxu0
  %722 = vmatprep.mubr.bf16.mxu0 %v347
  %723 = vmatmul.mubr.bf16.gmra.mrb[0].mxu0 %v346
  %v724 = vpop.f32.mrb[0].mxu0
  %v725 = vadd.f32 0.0, %v724
  %v726 = vpop.f32.mrb[0].mxu0
  %v727 = vpop.f32.mrb[0].mxu0
  %v728 = vadd.f32 0.0, %v727
  %v729 = vpop.f32.mrb[0].mxu0
  %730 = vmatprep.mubr.bf16.mxu0 %v349
  %731 = vmatmul.mubr.bf16.gmra.mrb[0].mxu0 %v348
  %v732 = vpop.f32.mrb[0].mxu0
  %v733 = vadd.f32 0.0, %v732
  %v734 = vpop.f32.mrb[0].mxu0
  %v735 = vpop.f32.mrb[0].mxu0
  %v736 = vadd.f32 0.0, %v735
  %v737 = vpop.f32.mrb[0].mxu0
  %738 = vmatprep.mubr.bf16.mxu0 %v351
  %739 = vmatmul.mubr.bf16.gmra.mrb[0].mxu0 %v350
  %v740 = vpop.f32.mrb[0].mxu0
  %v741 = vadd.f32 0.0, %v740
  %v742 = vpop.f32.mrb[0].mxu0
  %v743 = vpop.f32.mrb[0].mxu0
  %v744 = vadd.f32 0.0, %v743
  %v745 = vpop.f32.mrb[0].mxu0
  %746 = vmatprep.mubr.bf16.mxu0 %v353
  %747 = vmatmul.mubr.bf16.gmra.mrb[0].mxu0 %v352
  %v748 = vpop.f32.mrb[0].mxu0
  %v749 = vadd.f32 0.0, %v748
  %v750 = vpop.f32.mrb[0].mxu0
  %v751 = vpop.f32.mrb[0].mxu0
  %v752 = vadd.f32 0.0, %v751
  %v753 = vpop.f32.mrb[0].mxu0
  %754 = vmatprep.mubr.bf16.mxu0 %v355
  %755 = vmatmul.mubr.bf16.gmra.mrb[0].mxu0 %v354
  %v756 = vpop.f32.mrb[0].mxu0
  %v757 = vadd.f32 0.0, %v756
  %v758 = vpop.f32.mrb[0].mxu0
  %v759 = vpop.f32.mrb[0].mxu0
  %v760 = vadd.f32 0.0, %v759
  %v761 = vpop.f32.mrb[0].mxu0
  %762 = vmatprep.mubr.bf16.mxu0 %v357
  %763 = vmatmul.mubr.bf16.gmra.mrb[0].mxu0 %v356
  %v764 = vpop.f32.mrb[0].mxu0
  %v765 = vadd.f32 0.0, %v764
  %v766 = vpop.f32.mrb[0].mxu0
  %v767 = vpop.f32.mrb[0].mxu0
  %v768 = vadd.f32 0.0, %v767
  %v769 = vpop.f32.mrb[0].mxu0
  %770 = vmatprep.mubr.bf16.mxu0 %v359
  %771 = vmatmul.mubr.bf16.gmra.mrb[0].mxu0 %v358
  %v772 = vpop.f32.mrb[0].mxu0
  %v773 = vadd.f32 0.0, %v772
  %v774 = vpop.f32.mrb[0].mxu0
  %v775 = vpop.f32.mrb[0].mxu0
  %v776 = vadd.f32 0.0, %v775
  %v777 = vpop.f32.mrb[0].mxu0
  %778 = vmatprep.mubr.bf16.mxu0 %v361
  %779 = vmatmul.mubr.bf16.gmra.mrb[0].mxu0 %v360
  %v780 = vpop.f32.mrb[0].mxu0
  %v781 = vadd.f32 0.0, %v780
  %v782 = vpop.f32.mrb[0].mxu0
  %v783 = vpop.f32.mrb[0].mxu0
  %v784 = vadd.f32 0.0, %v783
  %v785 = vpop.f32.mrb[0].mxu0
  %786 = vmatprep.mubr.bf16.mxu0 %v363
  %787 = vmatmul.mubr.bf16.gmra.mrb[0].mxu0 %v362
  %v788 = vpop.f32.mrb[0].mxu0
  %v789 = vadd.f32 0.0, %v788
  %v790 = vpop.f32.mrb[0].mxu0
  %v791 = vpop.f32.mrb[0].mxu0
  %v792 = vadd.f32 0.0, %v791
  %v793 = vpop.f32.mrb[0].mxu0
  %794 = vmatprep.mubr.bf16.mxu0 %v365
  %795 = vmatmul.mubr.bf16.gmra.mrb[0].mxu0 %v364
  %v796 = vpop.f32.mrb[0].mxu0
  %v797 = vadd.f32 0.0, %v796
  %v798 = vpop.f32.mrb[0].mxu0
  %v799 = vpop.f32.mrb[0].mxu0
  %v800 = vadd.f32 0.0, %v799
  %v801 = vpop.f32.mrb[0].mxu0
  %802 = vmatprep.mubr.bf16.mxu0 %v367
  %803 = vmatmul.mubr.bf16.gmra.mrb[0].mxu0 %v366
  %v804 = vpop.f32.mrb[0].mxu0
  %v805 = vadd.f32 0.0, %v804
  %v806 = vpop.f32.mrb[0].mxu0
  %v807 = vpop.f32.mrb[0].mxu0
  %v808 = vadd.f32 0.0, %v807
  %v809 = vpop.f32.mrb[0].mxu0
  %810 = vmatprep.mubr.bf16.mxu0 %v369
  %811 = vmatmul.mubr.bf16.gmra.mrb[0].mxu0 %v368
  %v812 = vpop.f32.mrb[0].mxu0
  %v813 = vadd.f32 0.0, %v812
  %v814 = vpop.f32.mrb[0].mxu0
  %v815 = vpop.f32.mrb[0].mxu0
  %v816 = vadd.f32 0.0, %v815
  %v817 = vpop.f32.mrb[0].mxu0
  %818 = vdwg.mxu0
  %v819 = vld [vmem:[%s2] sm:$0x1]
  %v820 = vld [vmem:[%s3] sm:$0x1]
  %v821 = vadd.f32 %v565, %v568
  %v822 = vadd.f32 %v821, %v573
  %v823 = vadd.f32 %v822, %v576
  %v824 = vadd.f32 %v823, %v581
  %v825 = vadd.f32 %v824, %v584
  %v826 = vadd.f32 %v825, %v589
  %v827 = vadd.f32 %v826, %v592
  %v828 = vadd.f32 %v827, %v597
  %v829 = vadd.f32 %v828, %v600
  %v830 = vadd.f32 %v829, %v605
  %v831 = vadd.f32 %v830, %v608
  %v832 = vadd.f32 %v831, %v613
  %v833 = vadd.f32 %v832, %v616
  %v834 = vadd.f32 %v833, %v621
  %v835 = vadd.f32 %v834, %v624
  %v836 = vadd.f32 %v835, %v629
  %v837 = vadd.f32 %v836, %v632
  %v838 = vadd.f32 %v837, %v637
  %v839 = vadd.f32 %v838, %v640
  %v840 = vadd.f32 %v839, %v645
  %v841 = vadd.f32 %v840, %v648
  %v842 = vadd.f32 %v841, %v653
  %v843 = vadd.f32 %v842, %v656
  %v844 = vadd.f32 %v843, %v661
  %v845 = vadd.f32 %v844, %v664
  %v846 = vadd.f32 %v845, %v669
  %v847 = vadd.f32 %v846, %v672
  %v848 = vadd.f32 %v847, %v677
  %v849 = vadd.f32 %v848, %v680
  %v850 = vadd.f32 %v849, %v685
  %v851 = vadd.f32 %v850, %v688
  %v852 = vadd.f32 %v851, %v693
  %v853 = vadd.f32 %v852, %v696
  %v854 = vadd.f32 %v853, %v701
  %v855 = vadd.f32 %v854, %v704
  %v856 = vadd.f32 %v855, %v709
  %v857 = vadd.f32 %v856, %v712
  %v858 = vadd.f32 %v857, %v717
  %v859 = vadd.f32 %v858, %v720
  %v860 = vadd.f32 %v859, %v725
  %v861 = vadd.f32 %v860, %v728
  %v862 = vadd.f32 %v861, %v733
  %v863 = vadd.f32 %v862, %v736
  %v864 = vadd.f32 %v863, %v741
  %v865 = vadd.f32 %v864, %v744
  %v866 = vadd.f32 %v865, %v749
  %v867 = vadd.f32 %v866, %v752
  %v868 = vadd.f32 %v867, %v757
  %v869 = vadd.f32 %v868, %v760
  %v870 = vadd.f32 %v869, %v765
  %v871 = vadd.f32 %v870, %v768
  %v872 = vadd.f32 %v871, %v773
  %v873 = vadd.f32 %v872, %v776
  %v874 = vadd.f32 %v873, %v781
  %v875 = vadd.f32 %v874, %v784
  %v876 = vadd.f32 %v875, %v789
  %v877 = vadd.f32 %v876, %v792
  %v878 = vadd.f32 %v877, %v797
  %v879 = vadd.f32 %v878, %v800
  %v880 = vadd.f32 %v879, %v805
  %v881 = vadd.f32 %v880, %v808
  %v882 = vadd.f32 %v881, %v813
  %v883 = vadd.f32 %v882, %v816
  %v884 = vrot.slane %v883, 4
  %v885 = vadd.f32 %v883, %v884
  %v886 = vrot.slane %v885, 2
  %v887 = vadd.f32 %v885, %v886
  %v888 = vrot.slane %v887, 1
  %v889 = vadd.f32 %v887, %v888
  %v890 = vrcp.pop 512.0
  %v891 = vmul.f32 %v889, %v890
  %v892 = vsub.f32 %v565, %v891
  %v893 = vsub.f32 %v568, %v891
  %v894 = vsub.f32 %v573, %v891
  %v895 = vsub.f32 %v576, %v891
  %v896 = vsub.f32 %v581, %v891
  %v897 = vsub.f32 %v584, %v891
  %v898 = vsub.f32 %v589, %v891
  %v899 = vsub.f32 %v592, %v891
  %v900 = vsub.f32 %v597, %v891
  %v901 = vsub.f32 %v600, %v891
  %v902 = vsub.f32 %v605, %v891
  %v903 = vsub.f32 %v608, %v891
  %v904 = vsub.f32 %v613, %v891
  %v905 = vsub.f32 %v616, %v891
  %v906 = vsub.f32 %v621, %v891
  %v907 = vsub.f32 %v624, %v891
  %v908 = vsub.f32 %v629, %v891
  %v909 = vsub.f32 %v632, %v891
  %v910 = vsub.f32 %v637, %v891
  %v911 = vsub.f32 %v640, %v891
  %v912 = vsub.f32 %v645, %v891
  %v913 = vsub.f32 %v648, %v891
  %v914 = vsub.f32 %v653, %v891
  %v915 = vsub.f32 %v656, %v891
  %v916 = vsub.f32 %v661, %v891
  %v917 = vsub.f32 %v664, %v891
  %v918 = vsub.f32 %v669, %v891
  %v919 = vsub.f32 %v672, %v891
  %v920 = vsub.f32 %v677, %v891
  %v921 = vsub.f32 %v680, %v891
  %v922 = vsub.f32 %v685, %v891
  %v923 = vsub.f32 %v688, %v891
  %v924 = vsub.f32 %v693, %v891
  %v925 = vsub.f32 %v696, %v891
  %v926 = vsub.f32 %v701, %v891
  %v927 = vsub.f32 %v704, %v891
  %v928 = vsub.f32 %v709, %v891
  %v929 = vsub.f32 %v712, %v891
  %v930 = vsub.f32 %v717, %v891
  %v931 = vsub.f32 %v720, %v891
  %v932 = vsub.f32 %v725, %v891
  %v933 = vsub.f32 %v728, %v891
  %v934 = vsub.f32 %v733, %v891
  %v935 = vsub.f32 %v736, %v891
  %v936 = vsub.f32 %v741, %v891
  %v937 = vsub.f32 %v744, %v891
  %v938 = vsub.f32 %v749, %v891
  %v939 = vsub.f32 %v752, %v891
  %v940 = vsub.f32 %v757, %v891
  %v941 = vsub.f32 %v760, %v891
  %v942 = vsub.f32 %v765, %v891
  %v943 = vsub.f32 %v768, %v891
  %v944 = vsub.f32 %v773, %v891
  %v945 = vsub.f32 %v776, %v891
  %v946 = vsub.f32 %v781, %v891
  %v947 = vsub.f32 %v784, %v891
  %v948 = vsub.f32 %v789, %v891
  %v949 = vsub.f32 %v792, %v891
  %v950 = vsub.f32 %v797, %v891
  %v951 = vsub.f32 %v800, %v891
  %v952 = vsub.f32 %v805, %v891
  %v953 = vsub.f32 %v808, %v891
  %v954 = vsub.f32 %v813, %v891
  %v955 = vsub.f32 %v816, %v891
  %v956 = vmul.f32 %v892, %v892
  %v957 = vmul.f32 %v893, %v893
  %v958 = vmul.f32 %v894, %v894
  %v959 = vmul.f32 %v895, %v895
  %v960 = vmul.f32 %v896, %v896
  %v961 = vmul.f32 %v897, %v897
  %v962 = vmul.f32 %v898, %v898
  %v963 = vmul.f32 %v899, %v899
  %v964 = vmul.f32 %v900, %v900
  %v965 = vmul.f32 %v901, %v901
  %v966 = vmul.f32 %v902, %v902
  %v967 = vmul.f32 %v903, %v903
  %v968 = vmul.f32 %v904, %v904
  %v969 = vmul.f32 %v905, %v905
  %v970 = vmul.f32 %v906, %v906
  %v971 = vmul.f32 %v907, %v907
  %v972 = vmul.f32 %v908, %v908
  %v973 = vmul.f32 %v909, %v909
  %v974 = vmul.f32 %v910, %v910
  %v975 = vmul.f32 %v911, %v911
  %v976 = vmul.f32 %v912, %v912
  %v977 = vmul.f32 %v913, %v913
  %v978 = vmul.f32 %v914, %v914
  %v979 = vmul.f32 %v915, %v915
  %v980 = vmul.f32 %v916, %v916
  %v981 = vmul.f32 %v917, %v917
  %v982 = vmul.f32 %v918, %v918
  %v983 = vmul.f32 %v919, %v919
  %v984 = vmul.f32 %v920, %v920
  %v985 = vmul.f32 %v921, %v921
  %v986 = vmul.f32 %v922, %v922
  %v987 = vmul.f32 %v923, %v923
  %v988 = vmul.f32 %v924, %v924
  %v989 = vmul.f32 %v925, %v925
  %v990 = vmul.f32 %v926, %v926
  %v991 = vmul.f32 %v927, %v927
  %v992 = vmul.f32 %v928, %v928
  %v993 = vmul.f32 %v929, %v929
  %v994 = vmul.f32 %v930, %v930
  %v995 = vmul.f32 %v931, %v931
  %v996 = vmul.f32 %v932, %v932
  %v997 = vmul.f32 %v933, %v933
  %v998 = vmul.f32 %v934, %v934
  %v999 = vmul.f32 %v935, %v935
  %v1000 = vmul.f32 %v936, %v936
  %v1001 = vmul.f32 %v937, %v937
  %v1002 = vmul.f32 %v938, %v938
  %v1003 = vmul.f32 %v939, %v939
  %v1004 = vmul.f32 %v940, %v940
  %v1005 = vmul.f32 %v941, %v941
  %v1006 = vmul.f32 %v942, %v942
  %v1007 = vmul.f32 %v943, %v943
  %v1008 = vmul.f32 %v944, %v944
  %v1009 = vmul.f32 %v945, %v945
  %v1010 = vmul.f32 %v946, %v946
  %v1011 = vmul.f32 %v947, %v947
  %v1012 = vmul.f32 %v948, %v948
  %v1013 = vmul.f32 %v949, %v949
  %v1014 = vmul.f32 %v950, %v950
  %v1015 = vmul.f32 %v951, %v951
  %v1016 = vmul.f32 %v952, %v952
  %v1017 = vmul.f32 %v953, %v953
  %v1018 = vmul.f32 %v954, %v954
  %v1019 = vmul.f32 %v955, %v955
  %v1020 = vadd.f32 %v956, %v957
  %v1021 = vadd.f32 %v1020, %v958
  %v1022 = vadd.f32 %v1021, %v959
  %v1023 = vadd.f32 %v1022, %v960
  %v1024 = vadd.f32 %v1023, %v961
  %v1025 = vadd.f32 %v1024, %v962
  %v1026 = vadd.f32 %v1025, %v963
  %v1027 = vadd.f32 %v1026, %v964
  %v1028 = vadd.f32 %v1027, %v965
  %v1029 = vadd.f32 %v1028, %v966
  %v1030 = vadd.f32 %v1029, %v967
  %v1031 = vadd.f32 %v1030, %v968
  %v1032 = vadd.f32 %v1031, %v969
  %v1033 = vadd.f32 %v1032, %v970
  %v1034 = vadd.f32 %v1033, %v971
  %v1035 = vadd.f32 %v1034, %v972
  %v1036 = vadd.f32 %v1035, %v973
  %v1037 = vadd.f32 %v1036, %v974
  %v1038 = vadd.f32 %v1037, %v975
  %v1039 = vadd.f32 %v1038, %v976
  %v1040 = vadd.f32 %v1039, %v977
  %v1041 = vadd.f32 %v1040, %v978
  %v1042 = vadd.f32 %v1041, %v979
  %v1043 = vadd.f32 %v1042, %v980
  %v1044 = vadd.f32 %v1043, %v981
  %v1045 = vadd.f32 %v1044, %v982
  %v1046 = vadd.f32 %v1045, %v983
  %v1047 = vadd.f32 %v1046, %v984
  %v1048 = vadd.f32 %v1047, %v985
  %v1049 = vadd.f32 %v1048, %v986
  %v1050 = vadd.f32 %v1049, %v987
  %v1051 = vadd.f32 %v1050, %v988
  %v1052 = vadd.f32 %v1051, %v989
  %v1053 = vadd.f32 %v1052, %v990
  %v1054 = vadd.f32 %v1053, %v991
  %v1055 = vadd.f32 %v1054, %v992
  %v1056 = vadd.f32 %v1055, %v993
  %v1057 = vadd.f32 %v1056, %v994
  %v1058 = vadd.f32 %v1057, %v995
  %v1059 = vadd.f32 %v1058, %v996
  %v1060 = vadd.f32 %v1059, %v997
  %v1061 = vadd.f32 %v1060, %v998
  %v1062 = vadd.f32 %v1061, %v999
  %v1063 = vadd.f32 %v1062, %v1000
  %v1064 = vadd.f32 %v1063, %v1001
  %v1065 = vadd.f32 %v1064, %v1002
  %v1066 = vadd.f32 %v1065, %v1003
  %v1067 = vadd.f32 %v1066, %v1004
  %v1068 = vadd.f32 %v1067, %v1005
  %v1069 = vadd.f32 %v1068, %v1006
  %v1070 = vadd.f32 %v1069, %v1007
  %v1071 = vadd.f32 %v1070, %v1008
  %v1072 = vadd.f32 %v1071, %v1009
  %v1073 = vadd.f32 %v1072, %v1010
  %v1074 = vadd.f32 %v1073, %v1011
  %v1075 = vadd.f32 %v1074, %v1012
  %v1076 = vadd.f32 %v1075, %v1013
  %v1077 = vadd.f32 %v1076, %v1014
  %v1078 = vadd.f32 %v1077, %v1015
  %v1079 = vadd.f32 %v1078, %v1016
  %v1080 = vadd.f32 %v1079, %v1017
  %v1081 = vadd.f32 %v1080, %v1018
  %v1082 = vadd.f32 %v1081, %v1019
  %v1083 = vrot.slane %v1082, 4
  %v1084 = vadd.f32 %v1082, %v1083
  %v1085 = vrot.slane %v1084, 2
  %v1086 = vadd.f32 %v1084, %v1085
  %v1087 = vrot.slane %v1086, 1
  %v1088 = vadd.f32 %v1086, %v1087
  %v1089 = vmul.f32 %v1088, %v890
  %v1090 = vadd.f32 %v1089, 1e-05
  %v1091 = vrsqrt.pop %v1090
  %v1092 = vmul.f32 %v1091, %v819
  %v1093 = vmul.f32 %v891, %v1092
  %v1094 = vsub.f32 %v820, %v1093
  %v1095 = vlaneseq
  %v1096 = vshrl.u32 %v1095, 7
  %v1097 = vsub.s32 0, %v1096
  %v1098 = vrot.slane %v1092, %v1097
  %v1099 = vmul.f32 %v565, %v1098
  %v1100 = vmul.f32 %v568, %v1098
  %v1101 = vmul.f32 %v573, %v1098
  %v1102 = vmul.f32 %v576, %v1098
  %v1103 = vmul.f32 %v581, %v1098
  %v1104 = vmul.f32 %v584, %v1098
  %v1105 = vmul.f32 %v589, %v1098
  %v1106 = vmul.f32 %v592, %v1098
  %v1107 = vmul.f32 %v597, %v1098
  %v1108 = vmul.f32 %v600, %v1098
  %v1109 = vmul.f32 %v605, %v1098
  %v1110 = vmul.f32 %v608, %v1098
  %v1111 = vmul.f32 %v613, %v1098
  %v1112 = vmul.f32 %v616, %v1098
  %v1113 = vmul.f32 %v621, %v1098
  %v1114 = vmul.f32 %v624, %v1098
  %v1115 = vmul.f32 %v629, %v1098
  %v1116 = vmul.f32 %v632, %v1098
  %v1117 = vmul.f32 %v637, %v1098
  %v1118 = vmul.f32 %v640, %v1098
  %v1119 = vmul.f32 %v645, %v1098
  %v1120 = vmul.f32 %v648, %v1098
  %v1121 = vmul.f32 %v653, %v1098
  %v1122 = vmul.f32 %v656, %v1098
  %v1123 = vmul.f32 %v661, %v1098
  %v1124 = vmul.f32 %v664, %v1098
  %v1125 = vmul.f32 %v669, %v1098
  %v1126 = vmul.f32 %v672, %v1098
  %v1127 = vmul.f32 %v677, %v1098
  %v1128 = vmul.f32 %v680, %v1098
  %v1129 = vmul.f32 %v685, %v1098
  %v1130 = vmul.f32 %v688, %v1098
  %v1131 = vmul.f32 %v693, %v1098
  %v1132 = vmul.f32 %v696, %v1098
  %v1133 = vmul.f32 %v701, %v1098
  %v1134 = vmul.f32 %v704, %v1098
  %v1135 = vmul.f32 %v709, %v1098
  %v1136 = vmul.f32 %v712, %v1098
  %v1137 = vmul.f32 %v717, %v1098
  %v1138 = vmul.f32 %v720, %v1098
  %v1139 = vmul.f32 %v725, %v1098
  %v1140 = vmul.f32 %v728, %v1098
  %v1141 = vmul.f32 %v733, %v1098
  %v1142 = vmul.f32 %v736, %v1098
  %v1143 = vmul.f32 %v741, %v1098
  %v1144 = vmul.f32 %v744, %v1098
  %v1145 = vmul.f32 %v749, %v1098
  %v1146 = vmul.f32 %v752, %v1098
  %v1147 = vmul.f32 %v757, %v1098
  %v1148 = vmul.f32 %v760, %v1098
  %v1149 = vmul.f32 %v765, %v1098
  %v1150 = vmul.f32 %v768, %v1098
  %v1151 = vmul.f32 %v773, %v1098
  %v1152 = vmul.f32 %v776, %v1098
  %v1153 = vmul.f32 %v781, %v1098
  %v1154 = vmul.f32 %v784, %v1098
  %v1155 = vmul.f32 %v789, %v1098
  %v1156 = vmul.f32 %v792, %v1098
  %v1157 = vmul.f32 %v797, %v1098
  %v1158 = vmul.f32 %v800, %v1098
  %v1159 = vmul.f32 %v805, %v1098
  %v1160 = vmul.f32 %v808, %v1098
  %v1161 = vmul.f32 %v813, %v1098
  %v1162 = vmul.f32 %v816, %v1098
  %v1164 = vlaneseq
  %v1165 = vshrl.u32 %v1164, 7
  %v1166 = vsub.s32 0, %v1165
  %v1167 = vrot.slane %v1094, %v1166
  %v1169 = vadd.f32 %v1099, %v1167
  %v1170 = vadd.f32 %v1100, %v1167
  %v1171 = vadd.f32 %v1101, %v1167
  %v1172 = vadd.f32 %v1102, %v1167
  %v1173 = vadd.f32 %v1103, %v1167
  %v1174 = vadd.f32 %v1104, %v1167
  %v1175 = vadd.f32 %v1105, %v1167
  %v1176 = vadd.f32 %v1106, %v1167
  %v1177 = vadd.f32 %v1107, %v1167
  %v1178 = vadd.f32 %v1108, %v1167
  %v1179 = vadd.f32 %v1109, %v1167
  %v1180 = vadd.f32 %v1110, %v1167
  %v1181 = vadd.f32 %v1111, %v1167
  %v1182 = vadd.f32 %v1112, %v1167
  %v1183 = vadd.f32 %v1113, %v1167
  %v1184 = vadd.f32 %v1114, %v1167
  %v1185 = vadd.f32 %v1115, %v1167
  %v1186 = vadd.f32 %v1116, %v1167
  %v1187 = vadd.f32 %v1117, %v1167
  %v1188 = vadd.f32 %v1118, %v1167
  %v1189 = vadd.f32 %v1119, %v1167
  %v1190 = vadd.f32 %v1120, %v1167
  %v1191 = vadd.f32 %v1121, %v1167
  %v1192 = vadd.f32 %v1122, %v1167
  %v1193 = vadd.f32 %v1123, %v1167
  %v1194 = vadd.f32 %v1124, %v1167
  %v1195 = vadd.f32 %v1125, %v1167
  %v1196 = vadd.f32 %v1126, %v1167
  %v1197 = vadd.f32 %v1127, %v1167
  %v1198 = vadd.f32 %v1128, %v1167
  %v1199 = vadd.f32 %v1129, %v1167
  %v1200 = vadd.f32 %v1130, %v1167
  %v1201 = vadd.f32 %v1131, %v1167
  %v1202 = vadd.f32 %v1132, %v1167
  %v1203 = vadd.f32 %v1133, %v1167
  %v1204 = vadd.f32 %v1134, %v1167
  %v1205 = vadd.f32 %v1135, %v1167
  %v1206 = vadd.f32 %v1136, %v1167
  %v1207 = vadd.f32 %v1137, %v1167
  %v1208 = vadd.f32 %v1138, %v1167
  %v1209 = vadd.f32 %v1139, %v1167
  %v1210 = vadd.f32 %v1140, %v1167
  %v1211 = vadd.f32 %v1141, %v1167
  %v1212 = vadd.f32 %v1142, %v1167
  %v1213 = vadd.f32 %v1143, %v1167
  %v1214 = vadd.f32 %v1144, %v1167
  %v1215 = vadd.f32 %v1145, %v1167
  %v1216 = vadd.f32 %v1146, %v1167
  %v1217 = vadd.f32 %v1147, %v1167
  %v1218 = vadd.f32 %v1148, %v1167
  %v1219 = vadd.f32 %v1149, %v1167
  %v1220 = vadd.f32 %v1150, %v1167
  %v1221 = vadd.f32 %v1151, %v1167
  %v1222 = vadd.f32 %v1152, %v1167
  %v1223 = vadd.f32 %v1153, %v1167
  %v1224 = vadd.f32 %v1154, %v1167
  %v1225 = vadd.f32 %v1155, %v1167
  %v1226 = vadd.f32 %v1156, %v1167
  %v1227 = vadd.f32 %v1157, %v1167
  %v1228 = vadd.f32 %v1158, %v1167
  %v1229 = vadd.f32 %v1159, %v1167
  %v1230 = vadd.f32 %v1160, %v1167
  %v1231 = vadd.f32 %v1161, %v1167
  %v1232 = vadd.f32 %v1162, %v1167
  %v1233 = vmax.f32 %v1169, 0.0
  %v1234 = vmax.f32 %v1170, 0.0
  %v1235 = vmax.f32 %v1171, 0.0
  %v1236 = vmax.f32 %v1172, 0.0
  %v1237 = vmax.f32 %v1173, 0.0
  %v1238 = vmax.f32 %v1174, 0.0
  %v1239 = vmax.f32 %v1175, 0.0
  %v1240 = vmax.f32 %v1176, 0.0
  %v1241 = vmax.f32 %v1177, 0.0
  %v1242 = vmax.f32 %v1178, 0.0
  %v1243 = vmax.f32 %v1179, 0.0
  %v1244 = vmax.f32 %v1180, 0.0
  %v1245 = vmax.f32 %v1181, 0.0
  %v1246 = vmax.f32 %v1182, 0.0
  %v1247 = vmax.f32 %v1183, 0.0
  %v1248 = vmax.f32 %v1184, 0.0
  %v1249 = vmax.f32 %v1185, 0.0
  %v1250 = vmax.f32 %v1186, 0.0
  %v1251 = vmax.f32 %v1187, 0.0
  %v1252 = vmax.f32 %v1188, 0.0
  %v1253 = vmax.f32 %v1189, 0.0
  %v1254 = vmax.f32 %v1190, 0.0
  %v1255 = vmax.f32 %v1191, 0.0
  %v1256 = vmax.f32 %v1192, 0.0
  %v1257 = vmax.f32 %v1193, 0.0
  %v1258 = vmax.f32 %v1194, 0.0
  %v1259 = vmax.f32 %v1195, 0.0
  %v1260 = vmax.f32 %v1196, 0.0
  %v1261 = vmax.f32 %v1197, 0.0
  %v1262 = vmax.f32 %v1198, 0.0
  %v1263 = vmax.f32 %v1199, 0.0
  %v1264 = vmax.f32 %v1200, 0.0
  %v1265 = vmax.f32 %v1201, 0.0
  %v1266 = vmax.f32 %v1202, 0.0
  %v1267 = vmax.f32 %v1203, 0.0
  %v1268 = vmax.f32 %v1204, 0.0
  %v1269 = vmax.f32 %v1205, 0.0
  %v1270 = vmax.f32 %v1206, 0.0
  %v1271 = vmax.f32 %v1207, 0.0
  %v1272 = vmax.f32 %v1208, 0.0
  %v1273 = vmax.f32 %v1209, 0.0
  %v1274 = vmax.f32 %v1210, 0.0
  %v1275 = vmax.f32 %v1211, 0.0
  %v1276 = vmax.f32 %v1212, 0.0
  %v1277 = vmax.f32 %v1213, 0.0
  %v1278 = vmax.f32 %v1214, 0.0
  %v1279 = vmax.f32 %v1215, 0.0
  %v1280 = vmax.f32 %v1216, 0.0
  %v1281 = vmax.f32 %v1217, 0.0
  %v1282 = vmax.f32 %v1218, 0.0
  %v1283 = vmax.f32 %v1219, 0.0
  %v1284 = vmax.f32 %v1220, 0.0
  %v1285 = vmax.f32 %v1221, 0.0
  %v1286 = vmax.f32 %v1222, 0.0
  %v1287 = vmax.f32 %v1223, 0.0
  %v1288 = vmax.f32 %v1224, 0.0
  %v1289 = vmax.f32 %v1225, 0.0
  %v1290 = vmax.f32 %v1226, 0.0
  %v1291 = vmax.f32 %v1227, 0.0
  %v1292 = vmax.f32 %v1228, 0.0
  %v1293 = vmax.f32 %v1229, 0.0
  %v1294 = vmax.f32 %v1230, 0.0
  %v1295 = vmax.f32 %v1231, 0.0
  %v1296 = vmax.f32 %v1232, 0.0
  %v1297 = vpack.c.bf16 %v1234, %v1233
  %v1298 = vpack.c.bf16 %v1236, %v1235
  %v1299 = vpack.c.bf16 %v1238, %v1237
  %v1300 = vpack.c.bf16 %v1240, %v1239
  %v1301 = vpack.c.bf16 %v1242, %v1241
  %v1302 = vpack.c.bf16 %v1244, %v1243
  %v1303 = vpack.c.bf16 %v1246, %v1245
  %v1304 = vpack.c.bf16 %v1248, %v1247
  %v1305 = vpack.c.bf16 %v1250, %v1249
  %v1306 = vpack.c.bf16 %v1252, %v1251
  %v1307 = vpack.c.bf16 %v1254, %v1253
  %v1308 = vpack.c.bf16 %v1256, %v1255
  %v1309 = vpack.c.bf16 %v1258, %v1257
  %v1310 = vpack.c.bf16 %v1260, %v1259
  %v1311 = vpack.c.bf16 %v1262, %v1261
  %v1312 = vpack.c.bf16 %v1264, %v1263
  %v1313 = vpack.c.bf16 %v1266, %v1265
  %v1314 = vpack.c.bf16 %v1268, %v1267
  %v1315 = vpack.c.bf16 %v1270, %v1269
  %v1316 = vpack.c.bf16 %v1272, %v1271
  %v1317 = vpack.c.bf16 %v1274, %v1273
  %v1318 = vpack.c.bf16 %v1276, %v1275
  %v1319 = vpack.c.bf16 %v1278, %v1277
  %v1320 = vpack.c.bf16 %v1280, %v1279
  %v1321 = vpack.c.bf16 %v1282, %v1281
  %v1322 = vpack.c.bf16 %v1284, %v1283
  %v1323 = vpack.c.bf16 %v1286, %v1285
  %v1324 = vpack.c.bf16 %v1288, %v1287
  %v1325 = vpack.c.bf16 %v1290, %v1289
  %v1326 = vpack.c.bf16 %v1292, %v1291
  %v1327 = vpack.c.bf16 %v1294, %v1293
  %v1328 = vpack.c.bf16 %v1296, %v1295
  %v1361 = vunpack.c.l.b16 %v1297
  %v1362 = vunpack.c.h.b16 %v1297
  %v1363 = vunpack.c.l.b16 %v1298
  %v1364 = vunpack.c.h.b16 %v1298
  %v1365 = vunpack.c.l.b16 %v1299
  %v1366 = vunpack.c.h.b16 %v1299
  %v1367 = vunpack.c.l.b16 %v1300
  %v1368 = vunpack.c.h.b16 %v1300
  %v1369 = vunpack.c.l.b16 %v1301
  %v1370 = vunpack.c.h.b16 %v1301
  %v1371 = vunpack.c.l.b16 %v1302
  %v1372 = vunpack.c.h.b16 %v1302
  %v1373 = vunpack.c.l.b16 %v1303
  %v1374 = vunpack.c.h.b16 %v1303
  %v1375 = vunpack.c.l.b16 %v1304
  %v1376 = vunpack.c.h.b16 %v1304
  %v1377 = vunpack.c.l.b16 %v1305
  %v1378 = vunpack.c.h.b16 %v1305
  %v1379 = vunpack.c.l.b16 %v1306
  %v1380 = vunpack.c.h.b16 %v1306
  %v1381 = vunpack.c.l.b16 %v1307
  %v1382 = vunpack.c.h.b16 %v1307
  %v1383 = vunpack.c.l.b16 %v1308
  %v1384 = vunpack.c.h.b16 %v1308
  %v1385 = vunpack.c.l.b16 %v1309
  %v1386 = vunpack.c.h.b16 %v1309
  %v1387 = vunpack.c.l.b16 %v1310
  %v1388 = vunpack.c.h.b16 %v1310
  %v1389 = vunpack.c.l.b16 %v1311
  %v1390 = vunpack.c.h.b16 %v1311
  %v1391 = vunpack.c.l.b16 %v1312
  %v1392 = vunpack.c.h.b16 %v1312
  %v1393 = vunpack.c.l.b16 %v1313
  %v1394 = vunpack.c.h.b16 %v1313
  %v1395 = vunpack.c.l.b16 %v1314
  %v1396 = vunpack.c.h.b16 %v1314
  %v1397 = vunpack.c.l.b16 %v1315
  %v1398 = vunpack.c.h.b16 %v1315
  %v1399 = vunpack.c.l.b16 %v1316
  %v1400 = vunpack.c.h.b16 %v1316
  %v1401 = vunpack.c.l.b16 %v1317
  %v1402 = vunpack.c.h.b16 %v1317
  %v1403 = vunpack.c.l.b16 %v1318
  %v1404 = vunpack.c.h.b16 %v1318
  %v1405 = vunpack.c.l.b16 %v1319
  %v1406 = vunpack.c.h.b16 %v1319
  %v1407 = vunpack.c.l.b16 %v1320
  %v1408 = vunpack.c.h.b16 %v1320
  %v1409 = vunpack.c.l.b16 %v1321
  %v1410 = vunpack.c.h.b16 %v1321
  %v1411 = vunpack.c.l.b16 %v1322
  %v1412 = vunpack.c.h.b16 %v1322
  %v1413 = vunpack.c.l.b16 %v1323
  %v1414 = vunpack.c.h.b16 %v1323
  %v1415 = vunpack.c.l.b16 %v1324
  %v1416 = vunpack.c.h.b16 %v1324
  %v1417 = vunpack.c.l.b16 %v1325
  %v1418 = vunpack.c.h.b16 %v1325
  %v1419 = vunpack.c.l.b16 %v1326
  %v1420 = vunpack.c.h.b16 %v1326
  %v1421 = vunpack.c.l.b16 %v1327
  %v1422 = vunpack.c.h.b16 %v1327
  %v1423 = vunpack.c.l.b16 %v1328
  %v1424 = vunpack.c.h.b16 %v1328
  %v1425 = vpack.c.b16 %v1361, %v1361
  %v1426 = vpack.c.b16 %v1362, %v1362
  %v1427 = vpack.c.b16 %v1363, %v1363
  %v1428 = vpack.c.b16 %v1364, %v1364
  %v1429 = vpack.c.b16 %v1365, %v1365
  %v1430 = vpack.c.b16 %v1366, %v1366
  %v1431 = vpack.c.b16 %v1367, %v1367
  %v1432 = vpack.c.b16 %v1368, %v1368
  %v1433 = vpack.c.b16 %v1369, %v1369
  %v1434 = vpack.c.b16 %v1370, %v1370
  %v1435 = vpack.c.b16 %v1371, %v1371
  %v1436 = vpack.c.b16 %v1372, %v1372
  %v1437 = vpack.c.b16 %v1373, %v1373
  %v1438 = vpack.c.b16 %v1374, %v1374
  %v1439 = vpack.c.b16 %v1375, %v1375
  %v1440 = vpack.c.b16 %v1376, %v1376
  %v1441 = vpack.c.b16 %v1377, %v1377
  %v1442 = vpack.c.b16 %v1378, %v1378
  %v1443 = vpack.c.b16 %v1379, %v1379
  %v1444 = vpack.c.b16 %v1380, %v1380
  %v1445 = vpack.c.b16 %v1381, %v1381
  %v1446 = vpack.c.b16 %v1382, %v1382
  %v1447 = vpack.c.b16 %v1383, %v1383
  %v1448 = vpack.c.b16 %v1384, %v1384
  %v1449 = vpack.c.b16 %v1385, %v1385
  %v1450 = vpack.c.b16 %v1386, %v1386
  %v1451 = vpack.c.b16 %v1387, %v1387
  %v1452 = vpack.c.b16 %v1388, %v1388
  %v1453 = vpack.c.b16 %v1389, %v1389
  %v1454 = vpack.c.b16 %v1390, %v1390
  %v1455 = vpack.c.b16 %v1391, %v1391
  %v1456 = vpack.c.b16 %v1392, %v1392
  %v1457 = vpack.c.b16 %v1393, %v1393
  %v1458 = vpack.c.b16 %v1394, %v1394
  %v1459 = vpack.c.b16 %v1395, %v1395
  %v1460 = vpack.c.b16 %v1396, %v1396
  %v1461 = vpack.c.b16 %v1397, %v1397
  %v1462 = vpack.c.b16 %v1398, %v1398
  %v1463 = vpack.c.b16 %v1399, %v1399
  %v1464 = vpack.c.b16 %v1400, %v1400
  %v1465 = vpack.c.b16 %v1401, %v1401
  %v1466 = vpack.c.b16 %v1402, %v1402
  %v1467 = vpack.c.b16 %v1403, %v1403
  %v1468 = vpack.c.b16 %v1404, %v1404
  %v1469 = vpack.c.b16 %v1405, %v1405
  %v1470 = vpack.c.b16 %v1406, %v1406
  %v1471 = vpack.c.b16 %v1407, %v1407
  %v1472 = vpack.c.b16 %v1408, %v1408
  %v1473 = vpack.c.b16 %v1409, %v1409
  %v1474 = vpack.c.b16 %v1410, %v1410
  %v1475 = vpack.c.b16 %v1411, %v1411
  %v1476 = vpack.c.b16 %v1412, %v1412
  %v1477 = vpack.c.b16 %v1413, %v1413
  %v1478 = vpack.c.b16 %v1414, %v1414
  %v1479 = vpack.c.b16 %v1415, %v1415
  %v1480 = vpack.c.b16 %v1416, %v1416
  %v1481 = vpack.c.b16 %v1417, %v1417
  %v1482 = vpack.c.b16 %v1418, %v1418
  %v1483 = vpack.c.b16 %v1419, %v1419
  %v1484 = vpack.c.b16 %v1420, %v1420
  %v1485 = vpack.c.b16 %v1421, %v1421
  %v1486 = vpack.c.b16 %v1422, %v1422
  %v1487 = vpack.c.b16 %v1423, %v1423
  %v1488 = vpack.c.b16 %v1424, %v1424
  %1553 = vst [vmem:[%s4] sm:$0xf] %v1425
  %1554 = vst [vmem:[%s4 + $0x4] sm:$0xf] %v1426
  %1555 = vst [vmem:[%s4 + $0x8] sm:$0xf] %v1427
  %1556 = vst [vmem:[%s4 + $0xc] sm:$0xf] %v1428
  %1557 = vst [vmem:[%s4 + $0x10] sm:$0xf] %v1429
  %1558 = vst [vmem:[%s4 + $0x14] sm:$0xf] %v1430
  %1559 = vst [vmem:[%s4 + $0x18] sm:$0xf] %v1431
  %1560 = vst [vmem:[%s4 + $0x1c] sm:$0xf] %v1432
  %1561 = vst [vmem:[%s4 + $0x20] sm:$0xf] %v1433
  %1562 = vst [vmem:[%s4 + $0x24] sm:$0xf] %v1434
  %1563 = vst [vmem:[%s4 + $0x28] sm:$0xf] %v1435
  %1564 = vst [vmem:[%s4 + $0x2c] sm:$0xf] %v1436
  %1565 = vst [vmem:[%s4 + $0x30] sm:$0xf] %v1437
  %1566 = vst [vmem:[%s4 + $0x34] sm:$0xf] %v1438
  %1567 = vst [vmem:[%s4 + $0x38] sm:$0xf] %v1439
  %1568 = vst [vmem:[%s4 + $0x3c] sm:$0xf] %v1440
  %1569 = vst [vmem:[%s4 + $0x40] sm:$0xf] %v1441
  %1570 = vst [vmem:[%s4 + $0x44] sm:$0xf] %v1442
  %1571 = vst [vmem:[%s4 + $0x48] sm:$0xf] %v1443
  %1572 = vst [vmem:[%s4 + $0x4c] sm:$0xf] %v1444
  %1573 = vst [vmem:[%s4 + $0x50] sm:$0xf] %v1445
  %1574 = vst [vmem:[%s4 + $0x54] sm:$0xf] %v1446
  %1575 = vst [vmem:[%s4 + $0x58] sm:$0xf] %v1447
  %1576 = vst [vmem:[%s4 + $0x5c] sm:$0xf] %v1448
  %1577 = vst [vmem:[%s4 + $0x60] sm:$0xf] %v1449
  %1578 = vst [vmem:[%s4 + $0x64] sm:$0xf] %v1450
  %1579 = vst [vmem:[%s4 + $0x68] sm:$0xf] %v1451
  %1580 = vst [vmem:[%s4 + $0x6c] sm:$0xf] %v1452
  %1581 = vst [vmem:[%s4 + $0x70] sm:$0xf] %v1453
  %1582 = vst [vmem:[%s4 + $0x74] sm:$0xf] %v1454
  %1583 = vst [vmem:[%s4 + $0x78] sm:$0xf] %v1455
  %1584 = vst [vmem:[%s4 + $0x7c] sm:$0xf] %v1456
  %1585 = vst [vmem:[%s4 + $0x80] sm:$0xf] %v1457
  %1586 = vst [vmem:[%s4 + $0x84] sm:$0xf] %v1458
  %1587 = vst [vmem:[%s4 + $0x88] sm:$0xf] %v1459
  %1588 = vst [vmem:[%s4 + $0x8c] sm:$0xf] %v1460
  %1589 = vst [vmem:[%s4 + $0x90] sm:$0xf] %v1461
  %1590 = vst [vmem:[%s4 + $0x94] sm:$0xf] %v1462
  %1591 = vst [vmem:[%s4 + $0x98] sm:$0xf] %v1463
  %1592 = vst [vmem:[%s4 + $0x9c] sm:$0xf] %v1464
  %1593 = vst [vmem:[%s4 + $0xa0] sm:$0xf] %v1465
  %1594 = vst [vmem:[%s4 + $0xa4] sm:$0xf] %v1466
  %1595 = vst [vmem:[%s4 + $0xa8] sm:$0xf] %v1467
  %1596 = vst [vmem:[%s4 + $0xac] sm:$0xf] %v1468
  %1597 = vst [vmem:[%s4 + $0xb0] sm:$0xf] %v1469
  %1598 = vst [vmem:[%s4 + $0xb4] sm:$0xf] %v1470
  %1599 = vst [vmem:[%s4 + $0xb8] sm:$0xf] %v1471
  %1600 = vst [vmem:[%s4 + $0xbc] sm:$0xf] %v1472
  %1601 = vst [vmem:[%s4 + $0xc0] sm:$0xf] %v1473
  %1602 = vst [vmem:[%s4 + $0xc4] sm:$0xf] %v1474
  %1603 = vst [vmem:[%s4 + $0xc8] sm:$0xf] %v1475
  %1604 = vst [vmem:[%s4 + $0xcc] sm:$0xf] %v1476
  %1605 = vst [vmem:[%s4 + $0xd0] sm:$0xf] %v1477
  %1606 = vst [vmem:[%s4 + $0xd4] sm:$0xf] %v1478
  %1607 = vst [vmem:[%s4 + $0xd8] sm:$0xf] %v1479
  %1608 = vst [vmem:[%s4 + $0xdc] sm:$0xf] %v1480
  %1609 = vst [vmem:[%s4 + $0xe0] sm:$0xf] %v1481
  %1610 = vst [vmem:[%s4 + $0xe4] sm:$0xf] %v1482
  %1611 = vst [vmem:[%s4 + $0xe8] sm:$0xf] %v1483
  %1612 = vst [vmem:[%s4 + $0xec] sm:$0xf] %v1484
  %1613 = vst [vmem:[%s4 + $0xf0] sm:$0xf] %v1485
  %1614 = vst [vmem:[%s4 + $0xf4] sm:$0xf] %v1486
  %1615 = vst [vmem:[%s4 + $0xf8] sm:$0xf] %v1487
  %1616 = vst [vmem:[%s4 + $0xfc] sm:$0xf] %v1488
  // Predicated region
  $region18: #{model_forward.10} parent=0 // pred_check
    _
  $region19: #{model_forward.10} parent=0 // pred_check_branch
    %1618 = sbr.rel (0) target = $region21
  $region20: #{model_forward.10} parent=0 // pred_region
    _
  $region21: #{model_forward.10} parent=0 // pred_fallthru
    _
  // Predicated region
  $region22: #{model_forward.10} parent=0 // pred_check
    _
  $region23: #{model_forward.10} parent=0 // pred_check_branch
    %1620 = sbr.rel (0) target = $region25
  $region24: #{model_forward.10} parent=0 // pred_region
    _
  $region25: #{model_forward.10} parent=0 // pred_fallthru
    _

// kernel: model_forward.12
$region0: #{model_forward.12}
  #allocation0 [shape = 'u32[]', space=smem, size = 0x4, offset = 0x4, fixed_abs, tag = 'smem constant byte address 0x4 - core index']
  #allocation1 [shape = 'u32[144,128]{1,0:T(1,128)}', space=vmem, size = 0x12000, scoped, tag = 'internal scratch']
  %s0 = inlined_call_operand.vmem [shape: bf16[128,128], index: 0, kind: input, shape index: {}]
  %s1 = inlined_call_operand.vmem [shape: bf16[128,128], index: 1, kind: input, shape index: {}]
  %s2 = inlined_call_operand.vmem [shape: f32[1,128], index: 2, kind: input, shape index: {}]
  %s3 = inlined_call_operand.vmem [shape: f32[1,128], index: 3, kind: input, shape index: {}]
  %s4 = inlined_call_operand.vmem [shape: bf16[128,128], index: 4, kind: input, shape index: {}]
  %s5 = inlined_call_operand.vmem [shape: f32[1,128], index: 5, kind: input, shape index: {}]
  %s6 = inlined_call_operand.vmem [shape: f32[1,128], index: 6, kind: input, shape index: {}]
  %s7 = inlined_call_operand.vmem [shape: bf16[128,128], index: 7, kind: input, shape index: {}]
  %s8 = inlined_call_operand.vmem [shape: bf16[128,128], index: 8, kind: input, shape index: {}]
  %s9 = inlined_call_operand.vmem [shape: f32[1,128], index: 9, kind: input, shape index: {}]
  %s10 = inlined_call_operand.vmem [shape: f32[1,128], index: 10, kind: input, shape index: {}]
  %s11 = inlined_call_operand.vmem [shape: bf16[128,128], index: 11, kind: output, shape index: {}]
  %s12 = sld [smem:[#allocation0]]
  $region54: #{model_forward.12} parent=0
    _
  %s14 = ssub.s32 1, %s12
  %s15 = scalar_select 0, %s14, %s12
  // Predicated region
  $region2: #{model_forward.12} parent=0 // pred_check
    _
  $region3: #{model_forward.12} parent=0 // pred_check_branch
    %17 = sbr.rel (0) target = $region5
  $region4: #{model_forward.12} parent=0 // pred_region
    _
  $region5: #{model_forward.12} parent=0 // pred_fallthru
    _
  // Predicated region
  $region6: #{model_forward.12} parent=0 // pred_check
    _
  $region7: #{model_forward.12} parent=0 // pred_check_branch
    %19 = sbr.rel (0) target = $region9
  $region8: #{model_forward.12} parent=0 // pred_region
    _
  $region9: #{model_forward.12} parent=0 // pred_fallthru
    _
  // Predicated region
  $region10: #{model_forward.12} parent=0 // pred_check
    _
  $region11: #{model_forward.12} parent=0 // pred_check_branch
    %21 = sbr.rel (0) target = $region13
  $region12: #{model_forward.12} parent=0 // pred_region
    _
  $region13: #{model_forward.12} parent=0 // pred_fallthru
    _
  // Predicated region
  $region14: #{model_forward.12} parent=0 // pred_check
    _
  $region15: #{model_forward.12} parent=0 // pred_check_branch
    %23 = sbr.rel (0) target = $region17
  $region16: #{model_forward.12} parent=0 // pred_region
    _
  $region17: #{model_forward.12} parent=0 // pred_fallthru
    _
  // Predicated region
  $region18: #{model_forward.12} parent=0 // pred_check
    _
  $region19: #{model_forward.12} parent=0 // pred_check_branch
    %25 = sbr.rel (0) target = $region21
  $region20: #{model_forward.12} parent=0 // pred_region
    _
  $region21: #{model_forward.12} parent=0 // pred_fallthru
    _
  // Predicated region
  $region22: #{model_forward.12} parent=0 // pred_check
    _
  $region23: #{model_forward.12} parent=0 // pred_check_branch
    %27 = sbr.rel (0) target = $region25
  $region24: #{model_forward.12} parent=0 // pred_region
    _
  $region25: #{model_forward.12} parent=0 // pred_fallthru
    _
  // Predicated region
  $region26: #{model_forward.12} parent=0 // pred_check
    _
  $region27: #{model_forward.12} parent=0 // pred_check_branch
    %29 = sbr.rel (0) target = $region29
  $region28: #{model_forward.12} parent=0 // pred_region
    _
  $region29: #{model_forward.12} parent=0 // pred_fallthru
    _
  // Predicated region
  $region30: #{model_forward.12} parent=0 // pred_check
    _
  $region31: #{model_forward.12} parent=0 // pred_check_branch
    %31 = sbr.rel (0) target = $region33
  $region32: #{model_forward.12} parent=0 // pred_region
    _
  $region33: #{model_forward.12} parent=0 // pred_fallthru
    _
  // Predicated region
  $region34: #{model_forward.12} parent=0 // pred_check
    _
  $region35: #{model_forward.12} parent=0 // pred_check_branch
    %33 = sbr.rel (0) target = $region37
  $region36: #{model_forward.12} parent=0 // pred_region
    _
  $region37: #{model_forward.12} parent=0 // pred_fallthru
    _
  // Predicated region
  $region38: #{model_forward.12} parent=0 // pred_check
    _
  $region39: #{model_forward.12} parent=0 // pred_check_branch
    %35 = sbr.rel (0) target = $region41
  $region40: #{model_forward.12} parent=0 // pred_region
    _
  $region41: #{model_forward.12} parent=0 // pred_fallthru
    _
  // Predicated region
  $region42: #{model_forward.12} parent=0 // pred_check
    _
  $region43: #{model_forward.12} parent=0 // pred_check_branch
    %37 = sbr.rel (0) target = $region45
  $region44: #{model_forward.12} parent=0 // pred_region
    _
  $region45: #{model_forward.12} parent=0 // pred_fallthru
    _
  %v39 = vld [vmem:[%s0] sm:$0xf]
  %v40 = vld [vmem:[%s0 + $0x4] sm:$0xf]
  %v41 = vld [vmem:[%s0 + $0x8] sm:$0xf]
  %v42 = vld [vmem:[%s0 + $0xc] sm:$0xf]
  %v43 = vld [vmem:[%s0 + $0x10] sm:$0xf]
  %v44 = vld [vmem:[%s0 + $0x14] sm:$0xf]
  %v45 = vld [vmem:[%s0 + $0x18] sm:$0xf]
  %v46 = vld [vmem:[%s0 + $0x1c] sm:$0xf]
  %v47 = vld [vmem:[%s0 + $0x20] sm:$0xf]
  %v48 = vld [vmem:[%s0 + $0x24] sm:$0xf]
  %v49 = vld [vmem:[%s0 + $0x28] sm:$0xf]
  %v50 = vld [vmem:[%s0 + $0x2c] sm:$0xf]
  %v51 = vld [vmem:[%s0 + $0x30] sm:$0xf]
  %v52 = vld [vmem:[%s0 + $0x34] sm:$0xf]
  %v53 = vld [vmem:[%s0 + $0x38] sm:$0xf]
  %v54 = vld [vmem:[%s0 + $0x3c] sm:$0xf]
  %v55 = vld [vmem:[%s1] sm:$0xf]
  %v56 = vld [vmem:[%s1 + $0x4] sm:$0xf]
  %v57 = vld [vmem:[%s1 + $0x8] sm:$0xf]
  %v58 = vld [vmem:[%s1 + $0xc] sm:$0xf]
  %v59 = vld [vmem:[%s1 + $0x10] sm:$0xf]
  %v60 = vld [vmem:[%s1 + $0x14] sm:$0xf]
  %v61 = vld [vmem:[%s1 + $0x18] sm:$0xf]
  %v62 = vld [vmem:[%s1 + $0x1c] sm:$0xf]
  %v63 = vld [vmem:[%s1 + $0x20] sm:$0xf]
  %v64 = vld [vmem:[%s1 + $0x24] sm:$0xf]
  %v65 = vld [vmem:[%s1 + $0x28] sm:$0xf]
  %v66 = vld [vmem:[%s1 + $0x2c] sm:$0xf]
  %v67 = vld [vmem:[%s1 + $0x30] sm:$0xf]
  %v68 = vld [vmem:[%s1 + $0x34] sm:$0xf]
  %v69 = vld [vmem:[%s1 + $0x38] sm:$0xf]
  %v70 = vld [vmem:[%s1 + $0x3c] sm:$0xf]
  %v87 = vunpack.c.l.b16 %v39
  %v88 = vunpack.c.l.b16 %v40
  %v89 = vunpack.c.l.b16 %v41
  %v90 = vunpack.c.l.b16 %v42
  %v91 = vunpack.c.l.b16 %v43
  %v92 = vunpack.c.l.b16 %v44
  %v93 = vunpack.c.l.b16 %v45
  %v94 = vunpack.c.l.b16 %v46
  %v95 = vunpack.c.l.b16 %v47
  %v96 = vunpack.c.l.b16 %v48
  %v97 = vunpack.c.l.b16 %v49
  %v98 = vunpack.c.l.b16 %v50
  %v99 = vunpack.c.l.b16 %v51
  %v100 = vunpack.c.l.b16 %v52
  %v101 = vunpack.c.l.b16 %v53
  %v102 = vunpack.c.l.b16 %v54
  %v103 = vpack.c.b16 %v88, %v87
  %v104 = vpack.c.b16 %v90, %v89
  %v105 = vpack.c.b16 %v92, %v91
  %v106 = vpack.c.b16 %v94, %v93
  %v107 = vpack.c.b16 %v96, %v95
  %v108 = vpack.c.b16 %v98, %v97
  %v109 = vpack.c.b16 %v100, %v99
  %v110 = vpack.c.b16 %v102, %v101
  %v135 = vunpack.c.l.b16 %v55
  %v136 = vunpack.c.l.b16 %v56
  %v137 = vunpack.c.l.b16 %v57
  %v138 = vunpack.c.l.b16 %v58
  %v139 = vunpack.c.l.b16 %v59
  %v140 = vunpack.c.l.b16 %v60
  %v141 = vunpack.c.l.b16 %v61
  %v142 = vunpack.c.l.b16 %v62
  %v143 = vunpack.c.l.b16 %v63
  %v144 = vunpack.c.l.b16 %v64
  %v145 = vunpack.c.l.b16 %v65
  %v146 = vunpack.c.l.b16 %v66
  %v147 = vunpack.c.l.b16 %v67
  %v148 = vunpack.c.l.b16 %v68
  %v149 = vunpack.c.l.b16 %v69
  %v150 = vunpack.c.l.b16 %v70
  %v151 = vpack.c.b16 %v136, %v135
  %v152 = vpack.c.b16 %v138, %v137
  %v153 = vpack.c.b16 %v140, %v139
  %v154 = vpack.c.b16 %v142, %v141
  %v155 = vpack.c.b16 %v144, %v143
  %v156 = vpack.c.b16 %v146, %v145
  %v157 = vpack.c.b16 %v148, %v147
  %v158 = vpack.c.b16 %v150, %v149
  %167 = vmatprep.subr.bf16.mxu0 0
  %168 = vmatpush1.bf16.msra.mxu0 %v151
  %169 = vmatprep.subr.bf16.mxu0 0
  %170 = vmatpush1.bf16.msra.mxu0 %v152
  %171 = vmatprep.subr.bf16.mxu0 0
  %172 = vmatpush1.bf16.msra.mxu0 %v153
  %173 = vmatprep.subr.bf16.mxu0 0
  %174 = vmatpush1.bf16.msra.mxu0 %v154
  %175 = vmatprep.subr.bf16.mxu0 0
  %176 = vmatpush1.bf16.msra.mxu0 %v155
  %177 = vmatprep.subr.bf16.mxu0 0
  %178 = vmatpush1.bf16.msra.mxu0 %v156
  %179 = vmatprep.subr.bf16.mxu0 0
  %180 = vmatpush1.bf16.msra.mxu0 %v157
  %181 = vmatprep.subr.bf16.mxu0 0
  %182 = vmatpush1.bf16.msra.mxu0 %v158
  %183 = vmatprep.subr.bf16.mxu0 0
  %184 = vmatpush1.bf16.msra.mxu0 0
  %185 = vmatprep.subr.bf16.mxu0 0
  %186 = vmatpush1.bf16.msra.mxu0 0
  %187 = vmatprep.subr.bf16.mxu0 0
  %188 = vmatpush1.bf16.msra.mxu0 0
  %189 = vmatprep.subr.bf16.mxu0 0
  %190 = vmatpush1.bf16.msra.mxu0 0
  %191 = vmatprep.subr.bf16.mxu0 0
  %192 = vmatpush1.bf16.msra.mxu0 0
  %193 = vmatprep.subr.bf16.mxu0 0
  %194 = vmatpush1.bf16.msra.mxu0 0
  %195 = vmatprep.subr.bf16.mxu0 0
  %196 = vmatpush1.bf16.msra.mxu0 0
  %197 = vmatprep.subr.bf16.mxu0 0
  %198 = vmatpush1.bf16.msra.mxu0 0
  %199 = vmatprep.mubr.bf16.mxu0 0
  %200 = vmatmul.mubr.bf16.gmra.mrb[0].mxu0 %v103
  %v201 = vpop.f32.mrb[0].mxu0
  %v202 = vadd.f32 0.0, %v201
  %v203 = vpop.f32.mrb[0].mxu0
  %v204 = vpop.f32.mrb[0].mxu0
  %v205 = vadd.f32 0.0, %v204
  %v206 = vpop.f32.mrb[0].mxu0
  %207 = vmatprep.mubr.bf16.mxu0 0
  %208 = vmatmul.mubr.bf16.gmra.mrb[0].mxu0 %v104
  %v209 = vpop.f32.mrb[0].mxu0
  %v210 = vadd.f32 0.0, %v209
  %v211 = vpop.f32.mrb[0].mxu0
  %v212 = vpop.f32.mrb[0].mxu0
  %v213 = vadd.f32 0.0, %v212
  %v214 = vpop.f32.mrb[0].mxu0
  %215 = vmatprep.mubr.bf16.mxu0 0
  %216 = vmatmul.mubr.bf16.gmra.mrb[0].mxu0 %v105
  %v217 = vpop.f32.mrb[0].mxu0
  %v218 = vadd.f32 0.0, %v217
  %v219 = vpop.f32.mrb[0].mxu0
  %v220 = vpop.f32.mrb[0].mxu0
  %v221 = vadd.f32 0.0, %v220
  %v222 = vpop.f32.mrb[0].mxu0
  %223 = vmatprep.mubr.bf16.mxu0 0
  %224 = vmatmul.mubr.bf16.gmra.mrb[0].mxu0 %v106
  %v225 = vpop.f32.mrb[0].mxu0
  %v226 = vadd.f32 0.0, %v225
  %v227 = vpop.f32.mrb[0].mxu0
  %v228 = vpop.f32.mrb[0].mxu0
  %v229 = vadd.f32 0.0, %v228
  %v230 = vpop.f32.mrb[0].mxu0
  %231 = vmatprep.mubr.bf16.mxu0 0
  %232 = vmatmul.mubr.bf16.gmra.mrb[0].mxu0 %v107
  %v233 = vpop.f32.mrb[0].mxu0
  %v234 = vadd.f32 0.0, %v233
  %v235 = vpop.f32.mrb[0].mxu0
  %v236 = vpop.f32.mrb[0].mxu0
  %v237 = vadd.f32 0.0, %v236
  %v238 = vpop.f32.mrb[0].mxu0
  %239 = vmatprep.mubr.bf16.mxu0 0
  %240 = vmatmul.mubr.bf16.gmra.mrb[0].mxu0 %v108
  %v241 = vpop.f32.mrb[0].mxu0
  %v242 = vadd.f32 0.0, %v241
  %v243 = vpop.f32.mrb[0].mxu0
  %v244 = vpop.f32.mrb[0].mxu0
  %v245 = vadd.f32 0.0, %v244
  %v246 = vpop.f32.mrb[0].mxu0
  %247 = vmatprep.mubr.bf16.mxu0 0
  %248 = vmatmul.mubr.bf16.gmra.mrb[0].mxu0 %v109
  %v249 = vpop.f32.mrb[0].mxu0
  %v250 = vadd.f32 0.0, %v249
  %v251 = vpop.f32.mrb[0].mxu0
  %v252 = vpop.f32.mrb[0].mxu0
  %v253 = vadd.f32 0.0, %v252
  %v254 = vpop.f32.mrb[0].mxu0
  %255 = vmatprep.mubr.bf16.mxu0 0
  %256 = vmatmul.mubr.bf16.gmra.mrb[0].mxu0 %v110
  %v257 = vpop.f32.mrb[0].mxu0
  %v258 = vadd.f32 0.0, %v257
  %v259 = vpop.f32.mrb[0].mxu0
  %v260 = vpop.f32.mrb[0].mxu0
  %v261 = vadd.f32 0.0, %v260
  %v262 = vpop.f32.mrb[0].mxu0
  %263 = vdwg.mxu0
  %v264 = vld [vmem:[%s2] sm:$0x1]
  %v265 = vld [vmem:[%s3] sm:$0x1]
  %v266 = vadd.f32 %v202, %v205
  %v267 = vadd.f32 %v266, %v210
  %v268 = vadd.f32 %v267, %v213
  %v269 = vadd.f32 %v268, %v218
  %v270 = vadd.f32 %v269, %v221
  %v271 = vadd.f32 %v270, %v226
  %v272 = vadd.f32 %v271, %v229
  %v273 = vadd.f32 %v272, %v234
  %v274 = vadd.f32 %v273, %v237
  %v275 = vadd.f32 %v274, %v242
  %v276 = vadd.f32 %v275, %v245
  %v277 = vadd.f32 %v276, %v250
  %v278 = vadd.f32 %v277, %v253
  %v279 = vadd.f32 %v278, %v258
  %v280 = vadd.f32 %v279, %v261
  %v281 = vrot.slane %v280, 4
  %v282 = vadd.f32 %v280, %v281
  %v283 = vrot.slane %v282, 2
  %v284 = vadd.f32 %v282, %v283
  %v285 = vrot.slane %v284, 1
  %v286 = vadd.f32 %v284, %v285
  %v287 = vrcp.pop 128.0
  %v288 = vmul.f32 %v286, %v287
  %v289 = vsub.f32 %v202, %v288
  %v290 = vsub.f32 %v205, %v288
  %v291 = vsub.f32 %v210, %v288
  %v292 = vsub.f32 %v213, %v288
  %v293 = vsub.f32 %v218, %v288
  %v294 = vsub.f32 %v221, %v288
  %v295 = vsub.f32 %v226, %v288
  %v296 = vsub.f32 %v229, %v288
  %v297 = vsub.f32 %v234, %v288
  %v298 = vsub.f32 %v237, %v288
  %v299 = vsub.f32 %v242, %v288
  %v300 = vsub.f32 %v245, %v288
  %v301 = vsub.f32 %v250, %v288
  %v302 = vsub.f32 %v253, %v288
  %v303 = vsub.f32 %v258, %v288
  %v304 = vsub.f32 %v261, %v288
  %v305 = vmul.f32 %v289, %v289
  %v306 = vmul.f32 %v290, %v290
  %v307 = vmul.f32 %v291, %v291
  %v308 = vmul.f32 %v292, %v292
  %v309 = vmul.f32 %v293, %v293
  %v310 = vmul.f32 %v294, %v294
  %v311 = vmul.f32 %v295, %v295
  %v312 = vmul.f32 %v296, %v296
  %v313 = vmul.f32 %v297, %v297
  %v314 = vmul.f32 %v298, %v298
  %v315 = vmul.f32 %v299, %v299
  %v316 = vmul.f32 %v300, %v300
  %v317 = vmul.f32 %v301, %v301
  %v318 = vmul.f32 %v302, %v302
  %v319 = vmul.f32 %v303, %v303
  %v320 = vmul.f32 %v304, %v304
  %v321 = vadd.f32 %v305, %v306
  %v322 = vadd.f32 %v321, %v307
  %v323 = vadd.f32 %v322, %v308
  %v324 = vadd.f32 %v323, %v309
  %v325 = vadd.f32 %v324, %v310
  %v326 = vadd.f32 %v325, %v311
  %v327 = vadd.f32 %v326, %v312
  %v328 = vadd.f32 %v327, %v313
  %v329 = vadd.f32 %v328, %v314
  %v330 = vadd.f32 %v329, %v315
  %v331 = vadd.f32 %v330, %v316
  %v332 = vadd.f32 %v331, %v317
  %v333 = vadd.f32 %v332, %v318
  %v334 = vadd.f32 %v333, %v319
  %v335 = vadd.f32 %v334, %v320
  %v336 = vrot.slane %v335, 4
  %v337 = vadd.f32 %v335, %v336
  %v338 = vrot.slane %v337, 2
  %v339 = vadd.f32 %v337, %v338
  %v340 = vrot.slane %v339, 1
  %v341 = vadd.f32 %v339, %v340
  %v342 = vmul.f32 %v341, %v287
  %v343 = vadd.f32 %v342, 1e-05
  %v344 = vrsqrt.pop %v343
  %v345 = vmul.f32 %v344, %v264
  %v346 = vmul.f32 %v288, %v345
  %v347 = vsub.f32 %v265, %v346
  %v348 = vlaneseq
  %v349 = vshrl.u32 %v348, 7
  %v350 = vsub.s32 0, %v349
  %v351 = vrot.slane %v345, %v350
  %v352 = vmul.f32 %v202, %v351
  %v353 = vmul.f32 %v205, %v351
  %v354 = vmul.f32 %v210, %v351
  %v355 = vmul.f32 %v213, %v351
  %v356 = vmul.f32 %v218, %v351
  %v357 = vmul.f32 %v221, %v351
  %v358 = vmul.f32 %v226, %v351
  %v359 = vmul.f32 %v229, %v351
  %v360 = vmul.f32 %v234, %v351
  %v361 = vmul.f32 %v237, %v351
  %v362 = vmul.f32 %v242, %v351
  %v363 = vmul.f32 %v245, %v351
  %v364 = vmul.f32 %v250, %v351
  %v365 = vmul.f32 %v253, %v351
  %v366 = vmul.f32 %v258, %v351
  %v367 = vmul.f32 %v261, %v351
  %v369 = vlaneseq
  %v370 = vshrl.u32 %v369, 7
  %v371 = vsub.s32 0, %v370
  %v372 = vrot.slane %v347, %v371
  %v374 = vadd.f32 %v352, %v372
  %v375 = vadd.f32 %v353, %v372
  %v376 = vadd.f32 %v354, %v372
  %v377 = vadd.f32 %v355, %v372
  %v378 = vadd.f32 %v356, %v372
  %v379 = vadd.f32 %v357, %v372
  %v380 = vadd.f32 %v358, %v372
  %v381 = vadd.f32 %v359, %v372
  %v382 = vadd.f32 %v360, %v372
  %v383 = vadd.f32 %v361, %v372
  %v384 = vadd.f32 %v362, %v372
  %v385 = vadd.f32 %v363, %v372
  %v386 = vadd.f32 %v364, %v372
  %v387 = vadd.f32 %v365, %v372
  %v388 = vadd.f32 %v366, %v372
  %v389 = vadd.f32 %v367, %v372
  %v390 = vmax.f32 %v374, 0.0
  %v391 = vmax.f32 %v375, 0.0
  %v392 = vmax.f32 %v376, 0.0
  %v393 = vmax.f32 %v377, 0.0
  %v394 = vmax.f32 %v378, 0.0
  %v395 = vmax.f32 %v379, 0.0
  %v396 = vmax.f32 %v380, 0.0
  %v397 = vmax.f32 %v381, 0.0
  %v398 = vmax.f32 %v382, 0.0
  %v399 = vmax.f32 %v383, 0.0
  %v400 = vmax.f32 %v384, 0.0
  %v401 = vmax.f32 %v385, 0.0
  %v402 = vmax.f32 %v386, 0.0
  %v403 = vmax.f32 %v387, 0.0
  %v404 = vmax.f32 %v388, 0.0
  %v405 = vmax.f32 %v389, 0.0
  %v406 = vpack.c.bf16 %v391, %v390
  %v407 = vpack.c.bf16 %v393, %v392
  %v408 = vpack.c.bf16 %v395, %v394
  %v409 = vpack.c.bf16 %v397, %v396
  %v410 = vpack.c.bf16 %v399, %v398
  %v411 = vpack.c.bf16 %v401, %v400
  %v412 = vpack.c.bf16 %v403, %v402
  %v413 = vpack.c.bf16 %v405, %v404
  %v414 = vld [vmem:[%s4] sm:$0xf]
  %v415 = vld [vmem:[%s4 + $0x4] sm:$0xf]
  %v416 = vld [vmem:[%s4 + $0x8] sm:$0xf]
  %v417 = vld [vmem:[%s4 + $0xc] sm:$0xf]
  %v418 = vld [vmem:[%s4 + $0x10] sm:$0xf]
  %v419 = vld [vmem:[%s4 + $0x14] sm:$0xf]
  %v420 = vld [vmem:[%s4 + $0x18] sm:$0xf]
  %v421 = vld [vmem:[%s4 + $0x1c] sm:$0xf]
  %v422 = vld [vmem:[%s4 + $0x20] sm:$0xf]
  %v423 = vld [vmem:[%s4 + $0x24] sm:$0xf]
  %v424 = vld [vmem:[%s4 + $0x28] sm:$0xf]
  %v425 = vld [vmem:[%s4 + $0x2c] sm:$0xf]
  %v426 = vld [vmem:[%s4 + $0x30] sm:$0xf]
  %v427 = vld [vmem:[%s4 + $0x34] sm:$0xf]
  %v428 = vld [vmem:[%s4 + $0x38] sm:$0xf]
  %v429 = vld [vmem:[%s4 + $0x3c] sm:$0xf]
  %v446 = vunpack.c.l.b16 %v414
  %v447 = vunpack.c.l.b16 %v415
  %v448 = vunpack.c.l.b16 %v416
  %v449 = vunpack.c.l.b16 %v417
  %v450 = vunpack.c.l.b16 %v418
  %v451 = vunpack.c.l.b16 %v419
  %v452 = vunpack.c.l.b16 %v420
  %v453 = vunpack.c.l.b16 %v421
  %v454 = vunpack.c.l.b16 %v422
  %v455 = vunpack.c.l.b16 %v423
  %v456 = vunpack.c.l.b16 %v424
  %v457 = vunpack.c.l.b16 %v425
  %v458 = vunpack.c.l.b16 %v426
  %v459 = vunpack.c.l.b16 %v427
  %v460 = vunpack.c.l.b16 %v428
  %v461 = vunpack.c.l.b16 %v429
  %v462 = vpack.c.b16 %v447, %v446
  %v463 = vpack.c.b16 %v449, %v448
  %v464 = vpack.c.b16 %v451, %v450
  %v465 = vpack.c.b16 %v453, %v452
  %v466 = vpack.c.b16 %v455, %v454
  %v467 = vpack.c.b16 %v457, %v456
  %v468 = vpack.c.b16 %v459, %v458
  %v469 = vpack.c.b16 %v461, %v460
  %478 = vmatprep.subr.bf16.mxu0 0
  %479 = vmatpush1.bf16.msra.mxu0 %v462
  %480 = vmatprep.subr.bf16.mxu0 0
  %481 = vmatpush1.bf16.msra.mxu0 %v463
  %482 = vmatprep.subr.bf16.mxu0 0
  %483 = vmatpush1.bf16.msra.mxu0 %v464
  %484 = vmatprep.subr.bf16.mxu0 0
  %485 = vmatpush1.bf16.msra.mxu0 %v465
  %486 = vmatprep.subr.bf16.mxu0 0
  %487 = vmatpush1.bf16.msra.mxu0 %v466
  %488 = vmatprep.subr.bf16.mxu0 0
  %489 = vmatpush1.bf16.msra.mxu0 %v467
  %490 = vmatprep.subr.bf16.mxu0 0
  %491 = vmatpush1.bf16.msra.mxu0 %v468
  %492 = vmatprep.subr.bf16.mxu0 0
  %493 = vmatpush1.bf16.msra.mxu0 %v469
  %494 = vmatprep.subr.bf16.mxu0 0
  %495 = vmatpush1.bf16.msra.mxu0 0
  %496 = vmatprep.subr.bf16.mxu0 0
  %497 = vmatpush1.bf16.msra.mxu0 0
  %498 = vmatprep.subr.bf16.mxu0 0
  %499 = vmatpush1.bf16.msra.mxu0 0
  %500 = vmatprep.subr.bf16.mxu0 0
  %501 = vmatpush1.bf16.msra.mxu0 0
  %502 = vmatprep.subr.bf16.mxu0 0
  %503 = vmatpush1.bf16.msra.mxu0 0
  %504 = vmatprep.subr.bf16.mxu0 0
  %505 = vmatpush1.bf16.msra.mxu0 0
  %506 = vmatprep.subr.bf16.mxu0 0
  %507 = vmatpush1.bf16.msra.mxu0 0
  %508 = vmatprep.subr.bf16.mxu0 0
  %509 = vmatpush1.bf16.msra.mxu0 0
  %510 = vmatprep.mubr.bf16.mxu0 0
  %511 = vmatmul.mubr.bf16.gmra.mrb[0].mxu0 %v406
  %v512 = vpop.f32.mrb[0].mxu0
  %v513 = vadd.f32 0.0, %v512
  %v514 = vpop.f32.mrb[0].mxu0
  %v515 = vpop.f32.mrb[0].mxu0
  %v516 = vadd.f32 0.0, %v515
  %v517 = vpop.f32.mrb[0].mxu0
  %518 = vmatprep.mubr.bf16.mxu0 0
  %519 = vmatmul.mubr.bf16.gmra.mrb[0].mxu0 %v407
  %v520 = vpop.f32.mrb[0].mxu0
  %v521 = vadd.f32 0.0, %v520
  %v522 = vpop.f32.mrb[0].mxu0
  %v523 = vpop.f32.mrb[0].mxu0
  %v524 = vadd.f32 0.0, %v523
  %v525 = vpop.f32.mrb[0].mxu0
  %526 = vmatprep.mubr.bf16.mxu0 0
  %527 = vmatmul.mubr.bf16.gmra.mrb[0].mxu0 %v408
  %v528 = vpop.f32.mrb[0].mxu0
  %v529 = vadd.f32 0.0, %v528
  %v530 = vpop.f32.mrb[0].mxu0
  %v531 = vpop.f32.mrb[0].mxu0
  %v532 = vadd.f32 0.0, %v531
  %v533 = vpop.f32.mrb[0].mxu0
  %534 = vmatprep.mubr.bf16.mxu0 0
  %535 = vmatmul.mubr.bf16.gmra.mrb[0].mxu0 %v409
  %v536 = vpop.f32.mrb[0].mxu0
  %v537 = vadd.f32 0.0, %v536
  %v538 = vpop.f32.mrb[0].mxu0
  %v539 = vpop.f32.mrb[0].mxu0
  %v540 = vadd.f32 0.0, %v539
  %v541 = vpop.f32.mrb[0].mxu0
  %542 = vmatprep.mubr.bf16.mxu0 0
  %543 = vmatmul.mubr.bf16.gmra.mrb[0].mxu0 %v410
  %v544 = vpop.f32.mrb[0].mxu0
  %v545 = vadd.f32 0.0, %v544
  %v546 = vpop.f32.mrb[0].mxu0
  %v547 = vpop.f32.mrb[0].mxu0
  %v548 = vadd.f32 0.0, %v547
  %v549 = vpop.f32.mrb[0].mxu0
  %550 = vmatprep.mubr.bf16.mxu0 0
  %551 = vmatmul.mubr.bf16.gmra.mrb[0].mxu0 %v411
  %v552 = vpop.f32.mrb[0].mxu0
  %v553 = vadd.f32 0.0, %v552
  %v554 = vpop.f32.mrb[0].mxu0
  %v555 = vpop.f32.mrb[0].mxu0
  %v556 = vadd.f32 0.0, %v555
  %v557 = vpop.f32.mrb[0].mxu0
  %558 = vmatprep.mubr.bf16.mxu0 0
  %559 = vmatmul.mubr.bf16.gmra.mrb[0].mxu0 %v412
  %v560 = vpop.f32.mrb[0].mxu0
  %v561 = vadd.f32 0.0, %v560
  %v562 = vpop.f32.mrb[0].mxu0
  %v563 = vpop.f32.mrb[0].mxu0
  %v564 = vadd.f32 0.0, %v563
  %v565 = vpop.f32.mrb[0].mxu0
  %566 = vmatprep.mubr.bf16.mxu0 0
  %567 = vmatmul.mubr.bf16.gmra.mrb[0].mxu0 %v413
  %v568 = vpop.f32.mrb[0].mxu0
  %v569 = vadd.f32 0.0, %v568
  %v570 = vpop.f32.mrb[0].mxu0
  %v571 = vpop.f32.mrb[0].mxu0
  %v572 = vadd.f32 0.0, %v571
  %v573 = vpop.f32.mrb[0].mxu0
  %574 = vdwg.mxu0
  %v575 = vld [vmem:[%s5] sm:$0x1]
  %v576 = vld [vmem:[%s6] sm:$0x1]
  %v577 = vadd.f32 %v513, %v516
  %v578 = vadd.f32 %v577, %v521
  %v579 = vadd.f32 %v578, %v524
  %v580 = vadd.f32 %v579, %v529
  %v581 = vadd.f32 %v580, %v532
  %v582 = vadd.f32 %v581, %v537
  %v583 = vadd.f32 %v582, %v540
  %v584 = vadd.f32 %v583, %v545
  %v585 = vadd.f32 %v584, %v548
  %v586 = vadd.f32 %v585, %v553
  %v587 = vadd.f32 %v586, %v556
  %v588 = vadd.f32 %v587, %v561
  %v589 = vadd.f32 %v588, %v564
  %v590 = vadd.f32 %v589, %v569
  %v591 = vadd.f32 %v590, %v572
  %v592 = vrot.slane %v591, 4
  %v593 = vadd.f32 %v591, %v592
  %v594 = vrot.slane %v593, 2
  %v595 = vadd.f32 %v593, %v594
  %v596 = vrot.slane %v595, 1
  %v597 = vadd.f32 %v595, %v596
  %v598 = vmul.f32 %v597, %v287
  %v599 = vsub.f32 %v513, %v598
  %v600 = vsub.f32 %v516, %v598
  %v601 = vsub.f32 %v521, %v598
  %v602 = vsub.f32 %v524, %v598
  %v603 = vsub.f32 %v529, %v598
  %v604 = vsub.f32 %v532, %v598
  %v605 = vsub.f32 %v537, %v598
  %v606 = vsub.f32 %v540, %v598
  %v607 = vsub.f32 %v545, %v598
  %v608 = vsub.f32 %v548, %v598
  %v609 = vsub.f32 %v553, %v598
  %v610 = vsub.f32 %v556, %v598
  %v611 = vsub.f32 %v561, %v598
  %v612 = vsub.f32 %v564, %v598
  %v613 = vsub.f32 %v569, %v598
  %v614 = vsub.f32 %v572, %v598
  %v615 = vmul.f32 %v599, %v599
  %v616 = vmul.f32 %v600, %v600
  %v617 = vmul.f32 %v601, %v601
  %v618 = vmul.f32 %v602, %v602
  %v619 = vmul.f32 %v603, %v603
  %v620 = vmul.f32 %v604, %v604
  %v621 = vmul.f32 %v605, %v605
  %v622 = vmul.f32 %v606, %v606
  %v623 = vmul.f32 %v607, %v607
  %v624 = vmul.f32 %v608, %v608
  %v625 = vmul.f32 %v609, %v609
  %v626 = vmul.f32 %v610, %v610
  %v627 = vmul.f32 %v611, %v611
  %v628 = vmul.f32 %v612, %v612
  %v629 = vmul.f32 %v613, %v613
  %v630 = vmul.f32 %v614, %v614
  %v631 = vadd.f32 %v615, %v616
  %v632 = vadd.f32 %v631, %v617
  %v633 = vadd.f32 %v632, %v618
  %v634 = vadd.f32 %v633, %v619
  %v635 = vadd.f32 %v634, %v620
  %v636 = vadd.f32 %v635, %v621
  %v637 = vadd.f32 %v636, %v622
  %v638 = vadd.f32 %v637, %v623
  %v639 = vadd.f32 %v638, %v624
  %v640 = vadd.f32 %v639, %v625
  %v641 = vadd.f32 %v640, %v626
  %v642 = vadd.f32 %v641, %v627
  %v643 = vadd.f32 %v642, %v628
  %v644 = vadd.f32 %v643, %v629
  %v645 = vadd.f32 %v644, %v630
  %v646 = vrot.slane %v645, 4
  %v647 = vadd.f32 %v645, %v646
  %v648 = vrot.slane %v647, 2
  %v649 = vadd.f32 %v647, %v648
  %v650 = vrot.slane %v649, 1
  %v651 = vadd.f32 %v649, %v650
  %v652 = vmul.f32 %v651, %v287
  %v653 = vadd.f32 %v652, 1e-05
  %v654 = vrsqrt.pop %v653
  %v655 = vmul.f32 %v654, %v575
  %v656 = vmul.f32 %v598, %v655
  %v657 = vsub.f32 %v576, %v656
  %v658 = vlaneseq
  %v659 = vshrl.u32 %v658, 7
  %v660 = vsub.s32 0, %v659
  %v661 = vrot.slane %v655, %v660
  %v662 = vmul.f32 %v513, %v661
  %v663 = vmul.f32 %v516, %v661
  %v664 = vmul.f32 %v521, %v661
  %v665 = vmul.f32 %v524, %v661
  %v666 = vmul.f32 %v529, %v661
  %v667 = vmul.f32 %v532, %v661
  %v668 = vmul.f32 %v537, %v661
  %v669 = vmul.f32 %v540, %v661
  %v670 = vmul.f32 %v545, %v661
  %v671 = vmul.f32 %v548, %v661
  %v672 = vmul.f32 %v553, %v661
  %v673 = vmul.f32 %v556, %v661
  %v674 = vmul.f32 %v561, %v661
  %v675 = vmul.f32 %v564, %v661
  %v676 = vmul.f32 %v569, %v661
  %v677 = vmul.f32 %v572, %v661
  %v679 = vlaneseq
  %v680 = vshrl.u32 %v679, 7
  %v681 = vsub.s32 0, %v680
  %v682 = vrot.slane %v657, %v681
  %v684 = vadd.f32 %v662, %v682
  %v685 = vadd.f32 %v663, %v682
  %v686 = vadd.f32 %v664, %v682
  %v687 = vadd.f32 %v665, %v682
  %v688 = vadd.f32 %v666, %v682
  %v689 = vadd.f32 %v667, %v682
  %v690 = vadd.f32 %v668, %v682
  %v691 = vadd.f32 %v669, %v682
  %v692 = vadd.f32 %v670, %v682
  %v693 = vadd.f32 %v671, %v682
  %v694 = vadd.f32 %v672, %v682
  %v695 = vadd.f32 %v673, %v682
  %v696 = vadd.f32 %v674, %v682
  %v697 = vadd.f32 %v675, %v682
  %v698 = vadd.f32 %v676, %v682
  %v699 = vadd.f32 %v677, %v682
  %v700 = vld [vmem:[%s7] sm:$0xf]
  %v701 = vld [vmem:[%s7 + $0x4] sm:$0xf]
  %v702 = vld [vmem:[%s7 + $0x8] sm:$0xf]
  %v703 = vld [vmem:[%s7 + $0xc] sm:$0xf]
  %v704 = vld [vmem:[%s7 + $0x10] sm:$0xf]
  %v705 = vld [vmem:[%s7 + $0x14] sm:$0xf]
  %v706 = vld [vmem:[%s7 + $0x18] sm:$0xf]
  %v707 = vld [vmem:[%s7 + $0x1c] sm:$0xf]
  %v708 = vld [vmem:[%s7 + $0x20] sm:$0xf]
  %v709 = vld [vmem:[%s7 + $0x24] sm:$0xf]
  %v710 = vld [vmem:[%s7 + $0x28] sm:$0xf]
  %v711 = vld [vmem:[%s7 + $0x2c] sm:$0xf]
  %v712 = vld [vmem:[%s7 + $0x30] sm:$0xf]
  %v713 = vld [vmem:[%s7 + $0x34] sm:$0xf]
  %v714 = vld [vmem:[%s7 + $0x38] sm:$0xf]
  %v715 = vld [vmem:[%s7 + $0x3c] sm:$0xf]
  %v716 = vld [vmem:[%s8] sm:$0xf]
  %v717 = vld [vmem:[%s8 + $0x4] sm:$0xf]
  %v718 = vld [vmem:[%s8 + $0x8] sm:$0xf]
  %v719 = vld [vmem:[%s8 + $0xc] sm:$0xf]
  %v720 = vld [vmem:[%s8 + $0x10] sm:$0xf]
  %v721 = vld [vmem:[%s8 + $0x14] sm:$0xf]
  %v722 = vld [vmem:[%s8 + $0x18] sm:$0xf]
  %v723 = vld [vmem:[%s8 + $0x1c] sm:$0xf]
  %v724 = vld [vmem:[%s8 + $0x20] sm:$0xf]
  %v725 = vld [vmem:[%s8 + $0x24] sm:$0xf]
  %v726 = vld [vmem:[%s8 + $0x28] sm:$0xf]
  %v727 = vld [vmem:[%s8 + $0x2c] sm:$0xf]
  %v728 = vld [vmem:[%s8 + $0x30] sm:$0xf]
  %v729 = vld [vmem:[%s8 + $0x34] sm:$0xf]
  %v730 = vld [vmem:[%s8 + $0x38] sm:$0xf]
  %v731 = vld [vmem:[%s8 + $0x3c] sm:$0xf]
  %v748 = vunpack.c.l.b16 %v700
  %v749 = vunpack.c.l.b16 %v701
  %v750 = vunpack.c.l.b16 %v702
  %v751 = vunpack.c.l.b16 %v703
  %v752 = vunpack.c.l.b16 %v704
  %v753 = vunpack.c.l.b16 %v705
  %v754 = vunpack.c.l.b16 %v706
  %v755 = vunpack.c.l.b16 %v707
  %v756 = vunpack.c.l.b16 %v708
  %v757 = vunpack.c.l.b16 %v709
  %v758 = vunpack.c.l.b16 %v710
  %v759 = vunpack.c.l.b16 %v711
  %v760 = vunpack.c.l.b16 %v712
  %v761 = vunpack.c.l.b16 %v713
  %v762 = vunpack.c.l.b16 %v714
  %v763 = vunpack.c.l.b16 %v715
  %v764 = vpack.c.b16 %v749, %v748
  %v765 = vpack.c.b16 %v751, %v750
  %v766 = vpack.c.b16 %v753, %v752
  %v767 = vpack.c.b16 %v755, %v754
  %v768 = vpack.c.b16 %v757, %v756
  %v769 = vpack.c.b16 %v759, %v758
  %v770 = vpack.c.b16 %v761, %v760
  %v771 = vpack.c.b16 %v763, %v762
  %v796 = vunpack.c.l.b16 %v716
  %v797 = vunpack.c.l.b16 %v717
  %v798 = vunpack.c.l.b16 %v718
  %v799 = vunpack.c.l.b16 %v719
  %v800 = vunpack.c.l.b16 %v720
  %v801 = vunpack.c.l.b16 %v721
  %v802 = vunpack.c.l.b16 %v722
  %v803 = vunpack.c.l.b16 %v723
  %v804 = vunpack.c.l.b16 %v724
  %v805 = vunpack.c.l.b16 %v725
  %v806 = vunpack.c.l.b16 %v726
  %v807 = vunpack.c.l.b16 %v727
  %v808 = vunpack.c.l.b16 %v728
  %v809 = vunpack.c.l.b16 %v729
  %v810 = vunpack.c.l.b16 %v730
  %v811 = vunpack.c.l.b16 %v731
  %v812 = vpack.c.b16 %v797, %v796
  %v813 = vpack.c.b16 %v799, %v798
  %v814 = vpack.c.b16 %v801, %v800
  %v815 = vpack.c.b16 %v803, %v802
  %v816 = vpack.c.b16 %v805, %v804
  %v817 = vpack.c.b16 %v807, %v806
  %v818 = vpack.c.b16 %v809, %v808
  %v819 = vpack.c.b16 %v811, %v810
  %828 = vmatprep.subr.bf16.mxu0 0
  %829 = vmatpush1.bf16.msra.mxu0 %v812
  %830 = vmatprep.subr.bf16.mxu0 0
  %831 = vmatpush1.bf16.msra.mxu0 %v813
  %832 = vmatprep.subr.bf16.mxu0 0
  %833 = vmatpush1.bf16.msra.mxu0 %v814
  %834 = vmatprep.subr.bf16.mxu0 0
  %835 = vmatpush1.bf16.msra.mxu0 %v815
  %836 = vmatprep.subr.bf16.mxu0 0
  %837 = vmatpush1.bf16.msra.mxu0 %v816
  %838 = vmatprep.subr.bf16.mxu0 0
  %839 = vmatpush1.bf16.msra.mxu0 %v817
  %840 = vmatprep.subr.bf16.mxu0 0
  %841 = vmatpush1.bf16.msra.mxu0 %v818
  %842 = vmatprep.subr.bf16.mxu0 0
  %843 = vmatpush1.bf16.msra.mxu0 %v819
  %844 = vmatprep.subr.bf16.mxu0 0
  %845 = vmatpush1.bf16.msra.mxu0 0
  %846 = vmatprep.subr.bf16.mxu0 0
  %847 = vmatpush1.bf16.msra.mxu0 0
  %848 = vmatprep.subr.bf16.mxu0 0
  %849 = vmatpush1.bf16.msra.mxu0 0
  %850 = vmatprep.subr.bf16.mxu0 0
  %851 = vmatpush1.bf16.msra.mxu0 0
  %852 = vmatprep.subr.bf16.mxu0 0
  %853 = vmatpush1.bf16.msra.mxu0 0
  %854 = vmatprep.subr.bf16.mxu0 0
  %855 = vmatpush1.bf16.msra.mxu0 0
  %856 = vmatprep.subr.bf16.mxu0 0
  %857 = vmatpush1.bf16.msra.mxu0 0
  %858 = vmatprep.subr.bf16.mxu0 0
  %859 = vmatpush1.bf16.msra.mxu0 0
  %860 = vmatprep.mubr.bf16.mxu0 0
  %861 = vmatmul.mubr.bf16.gmra.mrb[0].mxu0 %v764
  %v862 = vpop.f32.mrb[0].mxu0
  %v863 = vadd.f32 0.0, %v862
  %v864 = vpop.f32.mrb[0].mxu0
  %v865 = vpop.f32.mrb[0].mxu0
  %v866 = vadd.f32 0.0, %v865
  %v867 = vpop.f32.mrb[0].mxu0
  %868 = vmatprep.mubr.bf16.mxu0 0
  %869 = vmatmul.mubr.bf16.gmra.mrb[0].mxu0 %v765
  %v870 = vpop.f32.mrb[0].mxu0
  %v871 = vadd.f32 0.0, %v870
  %v872 = vpop.f32.mrb[0].mxu0
  %v873 = vpop.f32.mrb[0].mxu0
  %v874 = vadd.f32 0.0, %v873
  %v875 = vpop.f32.mrb[0].mxu0
  %876 = vmatprep.mubr.bf16.mxu0 0
  %877 = vmatmul.mubr.bf16.gmra.mrb[0].mxu0 %v766
  %v878 = vpop.f32.mrb[0].mxu0
  %v879 = vadd.f32 0.0, %v878
  %v880 = vpop.f32.mrb[0].mxu0
  %v881 = vpop.f32.mrb[0].mxu0
  %v882 = vadd.f32 0.0, %v881
  %v883 = vpop.f32.mrb[0].mxu0
  %884 = vmatprep.mubr.bf16.mxu0 0
  %885 = vmatmul.mubr.bf16.gmra.mrb[0].mxu0 %v767
  %v886 = vpop.f32.mrb[0].mxu0
  %v887 = vadd.f32 0.0, %v886
  %v888 = vpop.f32.mrb[0].mxu0
  %v889 = vpop.f32.mrb[0].mxu0
  %v890 = vadd.f32 0.0, %v889
  %v891 = vpop.f32.mrb[0].mxu0
  %892 = vmatprep.mubr.bf16.mxu0 0
  %893 = vmatmul.mubr.bf16.gmra.mrb[0].mxu0 %v768
  %v894 = vpop.f32.mrb[0].mxu0
  %v895 = vadd.f32 0.0, %v894
  %v896 = vpop.f32.mrb[0].mxu0
  %v897 = vpop.f32.mrb[0].mxu0
  %v898 = vadd.f32 0.0, %v897
  %v899 = vpop.f32.mrb[0].mxu0
  %900 = vmatprep.mubr.bf16.mxu0 0
  %901 = vmatmul.mubr.bf16.gmra.mrb[0].mxu0 %v769
  %v902 = vpop.f32.mrb[0].mxu0
  %v903 = vadd.f32 0.0, %v902
  %v904 = vpop.f32.mrb[0].mxu0
  %v905 = vpop.f32.mrb[0].mxu0
  %v906 = vadd.f32 0.0, %v905
  %v907 = vpop.f32.mrb[0].mxu0
  %908 = vmatprep.mubr.bf16.mxu0 0
  %909 = vmatmul.mubr.bf16.gmra.mrb[0].mxu0 %v770
  %v910 = vpop.f32.mrb[0].mxu0
  %v911 = vadd.f32 0.0, %v910
  %v912 = vpop.f32.mrb[0].mxu0
  %v913 = vpop.f32.mrb[0].mxu0
  %v914 = vadd.f32 0.0, %v913
  %v915 = vpop.f32.mrb[0].mxu0
  %916 = vmatprep.mubr.bf16.mxu0 0
  %917 = vmatmul.mubr.bf16.gmra.mrb[0].mxu0 %v771
  %v918 = vpop.f32.mrb[0].mxu0
  %v919 = vadd.f32 0.0, %v918
  %v920 = vpop.f32.mrb[0].mxu0
  %v921 = vpop.f32.mrb[0].mxu0
  %v922 = vadd.f32 0.0, %v921
  %v923 = vpop.f32.mrb[0].mxu0
  %924 = vdwg.mxu0
  %v925 = vld [vmem:[%s9] sm:$0x1]
  %v926 = vld [vmem:[%s10] sm:$0x1]
  %v927 = vadd.f32 %v863, %v866
  %v928 = vadd.f32 %v927, %v871
  %v929 = vadd.f32 %v928, %v874
  %v930 = vadd.f32 %v929, %v879
  %v931 = vadd.f32 %v930, %v882
  %v932 = vadd.f32 %v931, %v887
  %v933 = vadd.f32 %v932, %v890
  %v934 = vadd.f32 %v933, %v895
  %v935 = vadd.f32 %v934, %v898
  %v936 = vadd.f32 %v935, %v903
  %v937 = vadd.f32 %v936, %v906
  %v938 = vadd.f32 %v937, %v911
  %v939 = vadd.f32 %v938, %v914
  %v940 = vadd.f32 %v939, %v919
  %v941 = vadd.f32 %v940, %v922
  %v942 = vrot.slane %v941, 4
  %v943 = vadd.f32 %v941, %v942
  %v944 = vrot.slane %v943, 2
  %v945 = vadd.f32 %v943, %v944
  %v946 = vrot.slane %v945, 1
  %v947 = vadd.f32 %v945, %v946
  %v948 = vmul.f32 %v947, %v287
  %v949 = vsub.f32 %v863, %v948
  %v950 = vsub.f32 %v866, %v948
  %v951 = vsub.f32 %v871, %v948
  %v952 = vsub.f32 %v874, %v948
  %v953 = vsub.f32 %v879, %v948
  %v954 = vsub.f32 %v882, %v948
  %v955 = vsub.f32 %v887, %v948
  %v956 = vsub.f32 %v890, %v948
  %v957 = vsub.f32 %v895, %v948
  %v958 = vsub.f32 %v898, %v948
  %v959 = vsub.f32 %v903, %v948
  %v960 = vsub.f32 %v906, %v948
  %v961 = vsub.f32 %v911, %v948
  %v962 = vsub.f32 %v914, %v948
  %v963 = vsub.f32 %v919, %v948
  %v964 = vsub.f32 %v922, %v948
  %v965 = vmul.f32 %v949, %v949
  %v966 = vmul.f32 %v950, %v950
  %v967 = vmul.f32 %v951, %v951
  %v968 = vmul.f32 %v952, %v952
  %v969 = vmul.f32 %v953, %v953
  %v970 = vmul.f32 %v954, %v954
  %v971 = vmul.f32 %v955, %v955
  %v972 = vmul.f32 %v956, %v956
  %v973 = vmul.f32 %v957, %v957
  %v974 = vmul.f32 %v958, %v958
  %v975 = vmul.f32 %v959, %v959
  %v976 = vmul.f32 %v960, %v960
  %v977 = vmul.f32 %v961, %v961
  %v978 = vmul.f32 %v962, %v962
  %v979 = vmul.f32 %v963, %v963
  %v980 = vmul.f32 %v964, %v964
  %v981 = vadd.f32 %v965, %v966
  %v982 = vadd.f32 %v981, %v967
  %v983 = vadd.f32 %v982, %v968
  %v984 = vadd.f32 %v983, %v969
  %v985 = vadd.f32 %v984, %v970
  %v986 = vadd.f32 %v985, %v971
  %v987 = vadd.f32 %v986, %v972
  %v988 = vadd.f32 %v987, %v973
  %v989 = vadd.f32 %v988, %v974
  %v990 = vadd.f32 %v989, %v975
  %v991 = vadd.f32 %v990, %v976
  %v992 = vadd.f32 %v991, %v977
  %v993 = vadd.f32 %v992, %v978
  %v994 = vadd.f32 %v993, %v979
  %v995 = vadd.f32 %v994, %v980
  %v996 = vrot.slane %v995, 4
  %v997 = vadd.f32 %v995, %v996
  %v998 = vrot.slane %v997, 2
  %v999 = vadd.f32 %v997, %v998
  %v1000 = vrot.slane %v999, 1
  %v1001 = vadd.f32 %v999, %v1000
  %v1002 = vmul.f32 %v1001, %v287
  %v1003 = vadd.f32 %v1002, 1e-05
  %v1004 = vrsqrt.pop %v1003
  %v1005 = vmul.f32 %v1004, %v925
  %v1006 = vmul.f32 %v948, %v1005
  %v1007 = vsub.f32 %v926, %v1006
  %v1008 = vlaneseq
  %v1009 = vshrl.u32 %v1008, 7
  %v1010 = vsub.s32 0, %v1009
  %v1011 = vrot.slane %v1005, %v1010
  %v1012 = vmul.f32 %v863, %v1011
  %v1013 = vmul.f32 %v866, %v1011
  %v1014 = vmul.f32 %v871, %v1011
  %v1015 = vmul.f32 %v874, %v1011
  %v1016 = vmul.f32 %v879, %v1011
  %v1017 = vmul.f32 %v882, %v1011
  %v1018 = vmul.f32 %v887, %v1011
  %v1019 = vmul.f32 %v890, %v1011
  %v1020 = vmul.f32 %v895, %v1011
  %v1021 = vmul.f32 %v898, %v1011
  %v1022 = vmul.f32 %v903, %v1011
  %v1023 = vmul.f32 %v906, %v1011
  %v1024 = vmul.f32 %v911, %v1011
  %v1025 = vmul.f32 %v914, %v1011
  %v1026 = vmul.f32 %v919, %v1011
  %v1027 = vmul.f32 %v922, %v1011
  %v1029 = vlaneseq
  %v1030 = vshrl.u32 %v1029, 7
  %v1031 = vsub.s32 0, %v1030
  %v1032 = vrot.slane %v1007, %v1031
  %v1034 = vadd.f32 %v1012, %v1032
  %v1035 = vadd.f32 %v1013, %v1032
  %v1036 = vadd.f32 %v1014, %v1032
  %v1037 = vadd.f32 %v1015, %v1032
  %v1038 = vadd.f32 %v1016, %v1032
  %v1039 = vadd.f32 %v1017, %v1032
  %v1040 = vadd.f32 %v1018, %v1032
  %v1041 = vadd.f32 %v1019, %v1032
  %v1042 = vadd.f32 %v1020, %v1032
  %v1043 = vadd.f32 %v1021, %v1032
  %v1044 = vadd.f32 %v1022, %v1032
  %v1045 = vadd.f32 %v1023, %v1032
  %v1046 = vadd.f32 %v1024, %v1032
  %v1047 = vadd.f32 %v1025, %v1032
  %v1048 = vadd.f32 %v1026, %v1032
  %v1049 = vadd.f32 %v1027, %v1032
  %v1050 = vadd.f32 %v684, %v1034
  %v1051 = vadd.f32 %v685, %v1035
  %v1052 = vadd.f32 %v686, %v1036
  %v1053 = vadd.f32 %v687, %v1037
  %v1054 = vadd.f32 %v688, %v1038
  %v1055 = vadd.f32 %v689, %v1039
  %v1056 = vadd.f32 %v690, %v1040
  %v1057 = vadd.f32 %v691, %v1041
  %v1058 = vadd.f32 %v692, %v1042
  %v1059 = vadd.f32 %v693, %v1043
  %v1060 = vadd.f32 %v694, %v1044
  %v1061 = vadd.f32 %v695, %v1045
  %v1062 = vadd.f32 %v696, %v1046
  %v1063 = vadd.f32 %v697, %v1047
  %v1064 = vadd.f32 %v698, %v1048
  %v1065 = vadd.f32 %v699, %v1049
  %v1066 = vmax.f32 %v1050, 0.0
  %v1067 = vmax.f32 %v1051, 0.0
  %v1068 = vmax.f32 %v1052, 0.0
  %v1069 = vmax.f32 %v1053, 0.0
  %v1070 = vmax.f32 %v1054, 0.0
  %v1071 = vmax.f32 %v1055, 0.0
  %v1072 = vmax.f32 %v1056, 0.0
  %v1073 = vmax.f32 %v1057, 0.0
  %v1074 = vmax.f32 %v1058, 0.0
  %v1075 = vmax.f32 %v1059, 0.0
  %v1076 = vmax.f32 %v1060, 0.0
  %v1077 = vmax.f32 %v1061, 0.0
  %v1078 = vmax.f32 %v1062, 0.0
  %v1079 = vmax.f32 %v1063, 0.0
  %v1080 = vmax.f32 %v1064, 0.0
  %v1081 = vmax.f32 %v1065, 0.0
  %v1082 = vpack.c.bf16 %v1067, %v1066
  %v1083 = vpack.c.bf16 %v1069, %v1068
  %v1084 = vpack.c.bf16 %v1071, %v1070
  %v1085 = vpack.c.bf16 %v1073, %v1072
  %v1086 = vpack.c.bf16 %v1075, %v1074
  %v1087 = vpack.c.bf16 %v1077, %v1076
  %v1088 = vpack.c.bf16 %v1079, %v1078
  %v1089 = vpack.c.bf16 %v1081, %v1080
  %v1098 = vunpack.c.l.b16 %v1082
  %v1099 = vunpack.c.h.b16 %v1082
  %v1100 = vunpack.c.l.b16 %v1083
  %v1101 = vunpack.c.h.b16 %v1083
  %v1102 = vunpack.c.l.b16 %v1084
  %v1103 = vunpack.c.h.b16 %v1084
  %v1104 = vunpack.c.l.b16 %v1085
  %v1105 = vunpack.c.h.b16 %v1085
  %v1106 = vunpack.c.l.b16 %v1086
  %v1107 = vunpack.c.h.b16 %v1086
  %v1108 = vunpack.c.l.b16 %v1087
  %v1109 = vunpack.c.h.b16 %v1087
  %v1110 = vunpack.c.l.b16 %v1088
  %v1111 = vunpack.c.h.b16 %v1088
  %v1112 = vunpack.c.l.b16 %v1089
  %v1113 = vunpack.c.h.b16 %v1089
  %v1114 = vpack.c.b16 %v1098, %v1098
  %v1115 = vpack.c.b16 %v1099, %v1099
  %v1116 = vpack.c.b16 %v1100, %v1100
  %v1117 = vpack.c.b16 %v1101, %v1101
  %v1118 = vpack.c.b16 %v1102, %v1102
  %v1119 = vpack.c.b16 %v1103, %v1103
  %v1120 = vpack.c.b16 %v1104, %v1104
  %v1121 = vpack.c.b16 %v1105, %v1105
  %v1122 = vpack.c.b16 %v1106, %v1106
  %v1123 = vpack.c.b16 %v1107, %v1107
  %v1124 = vpack.c.b16 %v1108, %v1108
  %v1125 = vpack.c.b16 %v1109, %v1109
  %v1126 = vpack.c.b16 %v1110, %v1110
  %v1127 = vpack.c.b16 %v1111, %v1111
  %v1128 = vpack.c.b16 %v1112, %v1112
  %v1129 = vpack.c.b16 %v1113, %v1113
  %1146 = vst [vmem:[%s11] sm:$0xf] %v1114
  %1147 = vst [vmem:[%s11 + $0x4] sm:$0xf] %v1115
  %1148 = vst [vmem:[%s11 + $0x8] sm:$0xf] %v1116
  %1149 = vst [vmem:[%s11 + $0xc] sm:$0xf] %v1117
  %1150 = vst [vmem:[%s11 + $0x10] sm:$0xf] %v1118
  %1151 = vst [vmem:[%s11 + $0x14] sm:$0xf] %v1119
  %1152 = vst [vmem:[%s11 + $0x18] sm:$0xf] %v1120
  %1153 = vst [vmem:[%s11 + $0x1c] sm:$0xf] %v1121
  %1154 = vst [vmem:[%s11 + $0x20] sm:$0xf] %v1122
  %1155 = vst [vmem:[%s11 + $0x24] sm:$0xf] %v1123
  %1156 = vst [vmem:[%s11 + $0x28] sm:$0xf] %v1124
  %1157 = vst [vmem:[%s11 + $0x2c] sm:$0xf] %v1125
  %1158 = vst [vmem:[%s11 + $0x30] sm:$0xf] %v1126
  %1159 = vst [vmem:[%s11 + $0x34] sm:$0xf] %v1127
  %1160 = vst [vmem:[%s11 + $0x38] sm:$0xf] %v1128
  %1161 = vst [vmem:[%s11 + $0x3c] sm:$0xf] %v1129
  // Predicated region
  $region46: #{model_forward.12} parent=0 // pred_check
    _
  $region47: #{model_forward.12} parent=0 // pred_check_branch
    %1163 = sbr.rel (0) target = $region49
  $region48: #{model_forward.12} parent=0 // pred_region
    _
  $region49: #{model_forward.12} parent=0 // pred_fallthru
    _
  // Predicated region
  $region50: #{model_forward.12} parent=0 // pred_check
    _
  $region51: #{model_forward.12} parent=0 // pred_check_branch
    %1165 = sbr.rel (0) target = $region53
  $region52: #{model_forward.12} parent=0 // pred_region
    _
  $region53: #{model_forward.12} parent=0 // pred_fallthru
    _

// kernel: model_forward.15
$region0: #{model_forward.15}
  #allocation0 [shape = 'u32[]', space=smem, size = 0x4, offset = 0x4, fixed_abs, tag = 'smem constant byte address 0x4 - core index']
  #allocation1 [shape = 'u32[144,128]{1,0:T(1,128)}', space=vmem, size = 0x12000, scoped, tag = 'internal scratch']
  %s0 = inlined_call_operand.vmem [shape: bf16[32,128], index: 0, kind: input, shape index: {}]
  %s1 = inlined_call_operand.vmem [shape: bf16[128,128], index: 1, kind: input, shape index: {}]
  %s2 = inlined_call_operand.vmem [shape: f32[1,128], index: 2, kind: input, shape index: {}]
  %s3 = inlined_call_operand.vmem [shape: f32[1,128], index: 3, kind: input, shape index: {}]
  %s4 = inlined_call_operand.vmem [shape: bf16[32,128], index: 4, kind: output, shape index: {}]
  %s5 = sld [smem:[#allocation0]]
  $region26: #{model_forward.15} parent=0
    _
  %s7 = ssub.s32 1, %s5
  %s8 = scalar_select 0, %s7, %s5
  // Predicated region
  $region2: #{model_forward.15} parent=0 // pred_check
    _
  $region3: #{model_forward.15} parent=0 // pred_check_branch
    %10 = sbr.rel (0) target = $region5
  $region4: #{model_forward.15} parent=0 // pred_region
    _
  $region5: #{model_forward.15} parent=0 // pred_fallthru
    _
  // Predicated region
  $region6: #{model_forward.15} parent=0 // pred_check
    _
  $region7: #{model_forward.15} parent=0 // pred_check_branch
    %12 = sbr.rel (0) target = $region9
  $region8: #{model_forward.15} parent=0 // pred_region
    _
  $region9: #{model_forward.15} parent=0 // pred_fallthru
    _
  // Predicated region
  $region10: #{model_forward.15} parent=0 // pred_check
    _
  $region11: #{model_forward.15} parent=0 // pred_check_branch
    %14 = sbr.rel (0) target = $region13
  $region12: #{model_forward.15} parent=0 // pred_region
    _
  $region13: #{model_forward.15} parent=0 // pred_fallthru
    _
  // Predicated region
  $region14: #{model_forward.15} parent=0 // pred_check
    _
  $region15: #{model_forward.15} parent=0 // pred_check_branch
    %16 = sbr.rel (0) target = $region17
  $region16: #{model_forward.15} parent=0 // pred_region
    _
  $region17: #{model_forward.15} parent=0 // pred_fallthru
    _
  %v18 = vld [vmem:[%s0] sm:$0xf]
  %v19 = vld [vmem:[%s0 + $0x4] sm:$0xf]
  %v20 = vld [vmem:[%s0 + $0x8] sm:$0xf]
  %v21 = vld [vmem:[%s0 + $0xc] sm:$0xf]
  %v22 = vld [vmem:[%s1] sm:$0xf]
  %v23 = vld [vmem:[%s1 + $0x4] sm:$0xf]
  %v24 = vld [vmem:[%s1 + $0x8] sm:$0xf]
  %v25 = vld [vmem:[%s1 + $0xc] sm:$0xf]
  %v26 = vld [vmem:[%s1 + $0x10] sm:$0xf]
  %v27 = vld [vmem:[%s1 + $0x14] sm:$0xf]
  %v28 = vld [vmem:[%s1 + $0x18] sm:$0xf]
  %v29 = vld [vmem:[%s1 + $0x1c] sm:$0xf]
  %v30 = vld [vmem:[%s1 + $0x20] sm:$0xf]
  %v31 = vld [vmem:[%s1 + $0x24] sm:$0xf]
  %v32 = vld [vmem:[%s1 + $0x28] sm:$0xf]
  %v33 = vld [vmem:[%s1 + $0x2c] sm:$0xf]
  %v34 = vld [vmem:[%s1 + $0x30] sm:$0xf]
  %v35 = vld [vmem:[%s1 + $0x34] sm:$0xf]
  %v36 = vld [vmem:[%s1 + $0x38] sm:$0xf]
  %v37 = vld [vmem:[%s1 + $0x3c] sm:$0xf]
  %v42 = vunpack.c.l.b16 %v18
  %v43 = vunpack.c.l.b16 %v19
  %v44 = vunpack.c.l.b16 %v20
  %v45 = vunpack.c.l.b16 %v21
  %v46 = vpack.c.b16 %v43, %v42
  %v47 = vpack.c.b16 %v45, %v44
  %v66 = vunpack.c.l.b16 %v22
  %v67 = vunpack.c.l.b16 %v23
  %v68 = vunpack.c.l.b16 %v24
  %v69 = vunpack.c.l.b16 %v25
  %v70 = vunpack.c.l.b16 %v26
  %v71 = vunpack.c.l.b16 %v27
  %v72 = vunpack.c.l.b16 %v28
  %v73 = vunpack.c.l.b16 %v29
  %v74 = vunpack.c.l.b16 %v30
  %v75 = vunpack.c.l.b16 %v31
  %v76 = vunpack.c.l.b16 %v32
  %v77 = vunpack.c.l.b16 %v33
  %v78 = vunpack.c.l.b16 %v34
  %v79 = vunpack.c.l.b16 %v35
  %v80 = vunpack.c.l.b16 %v36
  %v81 = vunpack.c.l.b16 %v37
  %v82 = vpack.c.b16 %v67, %v66
  %v83 = vpack.c.b16 %v69, %v68
  %v84 = vpack.c.b16 %v71, %v70
  %v85 = vpack.c.b16 %v73, %v72
  %v86 = vpack.c.b16 %v75, %v74
  %v87 = vpack.c.b16 %v77, %v76
  %v88 = vpack.c.b16 %v79, %v78
  %v89 = vpack.c.b16 %v81, %v80
  %98 = vmatprep.subr.bf16.mxu0 0
  %99 = vmatpush1.bf16.msra.mxu0 %v82
  %100 = vmatprep.subr.bf16.mxu0 0
  %101 = vmatpush1.bf16.msra.mxu0 %v83
  %102 = vmatprep.subr.bf16.mxu0 0
  %103 = vmatpush1.bf16.msra.mxu0 %v84
  %104 = vmatprep.subr.bf16.mxu0 0
  %105 = vmatpush1.bf16.msra.mxu0 %v85
  %106 = vmatprep.subr.bf16.mxu0 0
  %107 = vmatpush1.bf16.msra.mxu0 %v86
  %108 = vmatprep.subr.bf16.mxu0 0
  %109 = vmatpush1.bf16.msra.mxu0 %v87
  %110 = vmatprep.subr.bf16.mxu0 0
  %111 = vmatpush1.bf16.msra.mxu0 %v88
  %112 = vmatprep.subr.bf16.mxu0 0
  %113 = vmatpush1.bf16.msra.mxu0 %v89
  %114 = vmatprep.subr.bf16.mxu0 0
  %115 = vmatpush1.bf16.msra.mxu0 0
  %116 = vmatprep.subr.bf16.mxu0 0
  %117 = vmatpush1.bf16.msra.mxu0 0
  %118 = vmatprep.subr.bf16.mxu0 0
  %119 = vmatpush1.bf16.msra.mxu0 0
  %120 = vmatprep.subr.bf16.mxu0 0
  %121 = vmatpush1.bf16.msra.mxu0 0
  %122 = vmatprep.subr.bf16.mxu0 0
  %123 = vmatpush1.bf16.msra.mxu0 0
  %124 = vmatprep.subr.bf16.mxu0 0
  %125 = vmatpush1.bf16.msra.mxu0 0
  %126 = vmatprep.subr.bf16.mxu0 0
  %127 = vmatpush1.bf16.msra.mxu0 0
  %128 = vmatprep.subr.bf16.mxu0 0
  %129 = vmatpush1.bf16.msra.mxu0 0
  %130 = vmatprep.mubr.bf16.mxu0 0
  %131 = vmatmul.mubr.bf16.gmra.mrb[0].mxu0 %v46
  %v132 = vpop.f32.mrb[0].mxu0
  %v133 = vadd.f32 0.0, %v132
  %v134 = vpop.f32.mrb[0].mxu0
  %v135 = vpop.f32.mrb[0].mxu0
  %v136 = vadd.f32 0.0, %v135
  %v137 = vpop.f32.mrb[0].mxu0
  %138 = vmatprep.mubr.bf16.mxu0 0
  %139 = vmatmul.mubr.bf16.gmra.mrb[0].mxu0 %v47
  %v140 = vpop.f32.mrb[0].mxu0
  %v141 = vadd.f32 0.0, %v140
  %v142 = vpop.f32.mrb[0].mxu0
  %v143 = vpop.f32.mrb[0].mxu0
  %v144 = vadd.f32 0.0, %v143
  %v145 = vpop.f32.mrb[0].mxu0
  %146 = vdwg.mxu0
  %v147 = vld [vmem:[%s2] sm:$0x1]
  %v148 = vld [vmem:[%s3] sm:$0x1]
  %v149 = vadd.f32 %v133, %v136
  %v150 = vadd.f32 %v149, %v141
  %v151 = vadd.f32 %v150, %v144
  %v152 = vrot.slane %v151, 4
  %v153 = vadd.f32 %v151, %v152
  %v154 = vrot.slane %v153, 2
  %v155 = vadd.f32 %v153, %v154
  %v156 = vrot.slane %v155, 1
  %v157 = vadd.f32 %v155, %v156
  %v158 = vrcp.pop 32.0
  %v159 = vmul.f32 %v157, %v158
  %v160 = vsub.f32 %v133, %v159
  %v161 = vsub.f32 %v136, %v159
  %v162 = vsub.f32 %v141, %v159
  %v163 = vsub.f32 %v144, %v159
  %v164 = vmul.f32 %v160, %v160
  %v165 = vmul.f32 %v161, %v161
  %v166 = vmul.f32 %v162, %v162
  %v167 = vmul.f32 %v163, %v163
  %v168 = vadd.f32 %v164, %v165
  %v169 = vadd.f32 %v168, %v166
  %v170 = vadd.f32 %v169, %v167
  %v171 = vrot.slane %v170, 4
  %v172 = vadd.f32 %v170, %v171
  %v173 = vrot.slane %v172, 2
  %v174 = vadd.f32 %v172, %v173
  %v175 = vrot.slane %v174, 1
  %v176 = vadd.f32 %v174, %v175
  %v177 = vmul.f32 %v176, %v158
  %v178 = vadd.f32 %v177, 1e-05
  %v179 = vrsqrt.pop %v178
  %v180 = vmul.f32 %v179, %v147
  %v181 = vmul.f32 %v159, %v180
  %v182 = vsub.f32 %v148, %v181
  %v183 = vlaneseq
  %v184 = vshrl.u32 %v183, 7
  %v185 = vsub.s32 0, %v184
  %v186 = vrot.slane %v180, %v185
  %v187 = vmul.f32 %v133, %v186
  %v188 = vmul.f32 %v136, %v186
  %v189 = vmul.f32 %v141, %v186
  %v190 = vmul.f32 %v144, %v186
  %v192 = vlaneseq
  %v193 = vshrl.u32 %v192, 7
  %v194 = vsub.s32 0, %v193
  %v195 = vrot.slane %v182, %v194
  %v197 = vadd.f32 %v187, %v195
  %v198 = vadd.f32 %v188, %v195
  %v199 = vadd.f32 %v189, %v195
  %v200 = vadd.f32 %v190, %v195
  %v201 = vmax.f32 %v197, 0.0
  %v202 = vmax.f32 %v198, 0.0
  %v203 = vmax.f32 %v199, 0.0
  %v204 = vmax.f32 %v200, 0.0
  %v205 = vpack.c.bf16 %v202, %v201
  %v206 = vpack.c.bf16 %v204, %v203
  %v209 = vunpack.c.l.b16 %v205
  %v210 = vunpack.c.h.b16 %v205
  %v211 = vunpack.c.l.b16 %v206
  %v212 = vunpack.c.h.b16 %v206
  %v213 = vpack.c.b16 %v209, %v209
  %v214 = vpack.c.b16 %v210, %v210
  %v215 = vpack.c.b16 %v211, %v211
  %v216 = vpack.c.b16 %v212, %v212
  %221 = vst [vmem:[%s4] sm:$0xf] %v213
  %222 = vst [vmem:[%s4 + $0x4] sm:$0xf] %v214
  %223 = vst [vmem:[%s4 + $0x8] sm:$0xf] %v215
  %224 = vst [vmem:[%s4 + $0xc] sm:$0xf] %v216
  // Predicated region
  $region18: #{model_forward.15} parent=0 // pred_check
    _
  $region19: #{model_forward.15} parent=0 // pred_check_branch
    %226 = sbr.rel (0) target = $region21
  $region20: #{model_forward.15} parent=0 // pred_region
    _
  $region21: #{model_forward.15} parent=0 // pred_fallthru
    _
  // Predicated region
  $region22: #{model_forward.15} parent=0 // pred_check
    _
  $region23: #{model_forward.15} parent=0 // pred_check_branch
    %228 = sbr.rel (0) target = $region25
  $region24: #{model_forward.15} parent=0 // pred_region
    _
  $region25: #{model_forward.15} parent=0 // pred_fallthru
    _

// kernel: model_forward.14
$region0: #{model_forward.14}
  #allocation0 [shape = 'u32[]', space=smem, size = 0x4, offset = 0x4, fixed_abs, tag = 'smem constant byte address 0x4 - core index']
  #allocation1 [shape = 'u32[144,128]{1,0:T(1,128)}', space=vmem, size = 0x12000, scoped, tag = 'internal scratch']
  %s0 = inlined_call_operand.vmem [shape: bf16[32,256], index: 0, kind: input, shape index: {}]
  %s1 = inlined_call_operand.vmem [shape: bf16[256,128], index: 1, kind: input, shape index: {}]
  %s2 = inlined_call_operand.vmem [shape: f32[1,128], index: 2, kind: input, shape index: {}]
  %s3 = inlined_call_operand.vmem [shape: f32[1,128], index: 3, kind: input, shape index: {}]
  %s4 = inlined_call_operand.vmem [shape: bf16[128,128], index: 4, kind: input, shape index: {}]
  %s5 = inlined_call_operand.vmem [shape: f32[1,128], index: 5, kind: input, shape index: {}]
  %s6 = inlined_call_operand.vmem [shape: f32[1,128], index: 6, kind: input, shape index: {}]
  %s7 = inlined_call_operand.vmem [shape: bf16[32,128], index: 7, kind: input, shape index: {}]
  %s8 = inlined_call_operand.vmem [shape: bf16[128,128], index: 8, kind: input, shape index: {}]
  %s9 = inlined_call_operand.vmem [shape: f32[1,128], index: 9, kind: input, shape index: {}]
  %s10 = inlined_call_operand.vmem [shape: f32[1,128], index: 10, kind: input, shape index: {}]
  %s11 = inlined_call_operand.vmem [shape: bf16[32,128], index: 11, kind: output, shape index: {}]
  %s12 = sld [smem:[#allocation0]]
  $region54: #{model_forward.14} parent=0
    _
  %s14 = ssub.s32 1, %s12
  %s15 = scalar_select 0, %s14, %s12
  // Predicated region
  $region2: #{model_forward.14} parent=0 // pred_check
    _
  $region3: #{model_forward.14} parent=0 // pred_check_branch
    %17 = sbr.rel (0) target = $region5
  $region4: #{model_forward.14} parent=0 // pred_region
    _
  $region5: #{model_forward.14} parent=0 // pred_fallthru
    _
  // Predicated region
  $region6: #{model_forward.14} parent=0 // pred_check
    _
  $region7: #{model_forward.14} parent=0 // pred_check_branch
    %19 = sbr.rel (0) target = $region9
  $region8: #{model_forward.14} parent=0 // pred_region
    _
  $region9: #{model_forward.14} parent=0 // pred_fallthru
    _
  // Predicated region
  $region10: #{model_forward.14} parent=0 // pred_check
    _
  $region11: #{model_forward.14} parent=0 // pred_check_branch
    %21 = sbr.rel (0) target = $region13
  $region12: #{model_forward.14} parent=0 // pred_region
    _
  $region13: #{model_forward.14} parent=0 // pred_fallthru
    _
  // Predicated region
  $region14: #{model_forward.14} parent=0 // pred_check
    _
  $region15: #{model_forward.14} parent=0 // pred_check_branch
    %23 = sbr.rel (0) target = $region17
  $region16: #{model_forward.14} parent=0 // pred_region
    _
  $region17: #{model_forward.14} parent=0 // pred_fallthru
    _
  // Predicated region
  $region18: #{model_forward.14} parent=0 // pred_check
    _
  $region19: #{model_forward.14} parent=0 // pred_check_branch
    %25 = sbr.rel (0) target = $region21
  $region20: #{model_forward.14} parent=0 // pred_region
    _
  $region21: #{model_forward.14} parent=0 // pred_fallthru
    _
  // Predicated region
  $region22: #{model_forward.14} parent=0 // pred_check
    _
  $region23: #{model_forward.14} parent=0 // pred_check_branch
    %27 = sbr.rel (0) target = $region25
  $region24: #{model_forward.14} parent=0 // pred_region
    _
  $region25: #{model_forward.14} parent=0 // pred_fallthru
    _
  // Predicated region
  $region26: #{model_forward.14} parent=0 // pred_check
    _
  $region27: #{model_forward.14} parent=0 // pred_check_branch
    %29 = sbr.rel (0) target = $region29
  $region28: #{model_forward.14} parent=0 // pred_region
    _
  $region29: #{model_forward.14} parent=0 // pred_fallthru
    _
  // Predicated region
  $region30: #{model_forward.14} parent=0 // pred_check
    _
  $region31: #{model_forward.14} parent=0 // pred_check_branch
    %31 = sbr.rel (0) target = $region33
  $region32: #{model_forward.14} parent=0 // pred_region
    _
  $region33: #{model_forward.14} parent=0 // pred_fallthru
    _
  // Predicated region
  $region34: #{model_forward.14} parent=0 // pred_check
    _
  $region35: #{model_forward.14} parent=0 // pred_check_branch
    %33 = sbr.rel (0) target = $region37
  $region36: #{model_forward.14} parent=0 // pred_region
    _
  $region37: #{model_forward.14} parent=0 // pred_fallthru
    _
  // Predicated region
  $region38: #{model_forward.14} parent=0 // pred_check
    _
  $region39: #{model_forward.14} parent=0 // pred_check_branch
    %35 = sbr.rel (0) target = $region41
  $region40: #{model_forward.14} parent=0 // pred_region
    _
  $region41: #{model_forward.14} parent=0 // pred_fallthru
    _
  // Predicated region
  $region42: #{model_forward.14} parent=0 // pred_check
    _
  $region43: #{model_forward.14} parent=0 // pred_check_branch
    %37 = sbr.rel (0) target = $region45
  $region44: #{model_forward.14} parent=0 // pred_region
    _
  $region45: #{model_forward.14} parent=0 // pred_fallthru
    _
  %v39 = vld [vmem:[%s0] sm:$0xff]
  %v40 = vld [vmem:[%s0 + $0x8] sm:$0xff]
  %v41 = vld [vmem:[%s0 + $0x10] sm:$0xff]
  %v42 = vld [vmem:[%s0 + $0x18] sm:$0xff]
  %v43 = vld [vmem:[%s1] sm:$0xf]
  %v44 = vld [vmem:[%s1 + $0x4] sm:$0xf]
  %v45 = vld [vmem:[%s1 + $0x8] sm:$0xf]
  %v46 = vld [vmem:[%s1 + $0xc] sm:$0xf]
  %v47 = vld [vmem:[%s1 + $0x10] sm:$0xf]
  %v48 = vld [vmem:[%s1 + $0x14] sm:$0xf]
  %v49 = vld [vmem:[%s1 + $0x18] sm:$0xf]
  %v50 = vld [vmem:[%s1 + $0x1c] sm:$0xf]
  %v51 = vld [vmem:[%s1 + $0x20] sm:$0xf]
  %v52 = vld [vmem:[%s1 + $0x24] sm:$0xf]
  %v53 = vld [vmem:[%s1 + $0x28] sm:$0xf]
  %v54 = vld [vmem:[%s1 + $0x2c] sm:$0xf]
  %v55 = vld [vmem:[%s1 + $0x30] sm:$0xf]
  %v56 = vld [vmem:[%s1 + $0x34] sm:$0xf]
  %v57 = vld [vmem:[%s1 + $0x38] sm:$0xf]
  %v58 = vld [vmem:[%s1 + $0x3c] sm:$0xf]
  %v59 = vld [vmem:[%s1 + $0x40] sm:$0xf]
  %v60 = vld [vmem:[%s1 + $0x44] sm:$0xf]
  %v61 = vld [vmem:[%s1 + $0x48] sm:$0xf]
  %v62 = vld [vmem:[%s1 + $0x4c] sm:$0xf]
  %v63 = vld [vmem:[%s1 + $0x50] sm:$0xf]
  %v64 = vld [vmem:[%s1 + $0x54] sm:$0xf]
  %v65 = vld [vmem:[%s1 + $0x58] sm:$0xf]
  %v66 = vld [vmem:[%s1 + $0x5c] sm:$0xf]
  %v67 = vld [vmem:[%s1 + $0x60] sm:$0xf]
  %v68 = vld [vmem:[%s1 + $0x64] sm:$0xf]
  %v69 = vld [vmem:[%s1 + $0x68] sm:$0xf]
  %v70 = vld [vmem:[%s1 + $0x6c] sm:$0xf]
  %v71 = vld [vmem:[%s1 + $0x70] sm:$0xf]
  %v72 = vld [vmem:[%s1 + $0x74] sm:$0xf]
  %v73 = vld [vmem:[%s1 + $0x78] sm:$0xf]
  %v74 = vld [vmem:[%s1 + $0x7c] sm:$0xf]
  %v79 = vunpack.c.l.b16 %v39
  %v80 = vunpack.c.h.b16 %v39
  %v81 = vunpack.c.l.b16 %v40
  %v82 = vunpack.c.h.b16 %v40
  %v83 = vunpack.c.l.b16 %v41
  %v84 = vunpack.c.h.b16 %v41
  %v85 = vunpack.c.l.b16 %v42
  %v86 = vunpack.c.h.b16 %v42
  %v87 = vpack.c.b16 %v81, %v79
  %v88 = vpack.c.b16 %v82, %v80
  %v89 = vpack.c.b16 %v85, %v83
  %v90 = vpack.c.b16 %v86, %v84
  %v127 = vunpack.c.l.b16 %v43
  %v128 = vunpack.c.l.b16 %v44
  %v129 = vunpack.c.l.b16 %v45
  %v130 = vunpack.c.l.b16 %v46
  %v131 = vunpack.c.l.b16 %v47
  %v132 = vunpack.c.l.b16 %v48
  %v133 = vunpack.c.l.b16 %v49
  %v134 = vunpack.c.l.b16 %v50
  %v135 = vunpack.c.l.b16 %v51
  %v136 = vunpack.c.l.b16 %v52
  %v137 = vunpack.c.l.b16 %v53
  %v138 = vunpack.c.l.b16 %v54
  %v139 = vunpack.c.l.b16 %v55
  %v140 = vunpack.c.l.b16 %v56
  %v141 = vunpack.c.l.b16 %v57
  %v142 = vunpack.c.l.b16 %v58
  %v143 = vunpack.c.l.b16 %v59
  %v144 = vunpack.c.l.b16 %v60
  %v145 = vunpack.c.l.b16 %v61
  %v146 = vunpack.c.l.b16 %v62
  %v147 = vunpack.c.l.b16 %v63
  %v148 = vunpack.c.l.b16 %v64
  %v149 = vunpack.c.l.b16 %v65
  %v150 = vunpack.c.l.b16 %v66
  %v151 = vunpack.c.l.b16 %v67
  %v152 = vunpack.c.l.b16 %v68
  %v153 = vunpack.c.l.b16 %v69
  %v154 = vunpack.c.l.b16 %v70
  %v155 = vunpack.c.l.b16 %v71
  %v156 = vunpack.c.l.b16 %v72
  %v157 = vunpack.c.l.b16 %v73
  %v158 = vunpack.c.l.b16 %v74
  %v159 = vpack.c.b16 %v128, %v127
  %v160 = vpack.c.b16 %v130, %v129
  %v161 = vpack.c.b16 %v132, %v131
  %v162 = vpack.c.b16 %v134, %v133
  %v163 = vpack.c.b16 %v136, %v135
  %v164 = vpack.c.b16 %v138, %v137
  %v165 = vpack.c.b16 %v140, %v139
  %v166 = vpack.c.b16 %v142, %v141
  %v167 = vpack.c.b16 %v144, %v143
  %v168 = vpack.c.b16 %v146, %v145
  %v169 = vpack.c.b16 %v148, %v147
  %v170 = vpack.c.b16 %v150, %v149
  %v171 = vpack.c.b16 %v152, %v151
  %v172 = vpack.c.b16 %v154, %v153
  %v173 = vpack.c.b16 %v156, %v155
  %v174 = vpack.c.b16 %v158, %v157
  %191 = vmatprep.subr.bf16.mxu0 0
  %192 = vmatpush1.bf16.msra.mxu0 %v159
  %193 = vmatprep.subr.bf16.mxu0 0
  %194 = vmatpush1.bf16.msra.mxu0 %v160
  %195 = vmatprep.subr.bf16.mxu0 0
  %196 = vmatpush1.bf16.msra.mxu0 %v161
  %197 = vmatprep.subr.bf16.mxu0 0
  %198 = vmatpush1.bf16.msra.mxu0 %v162
  %199 = vmatprep.subr.bf16.mxu0 0
  %200 = vmatpush1.bf16.msra.mxu0 %v163
  %201 = vmatprep.subr.bf16.mxu0 0
  %202 = vmatpush1.bf16.msra.mxu0 %v164
  %203 = vmatprep.subr.bf16.mxu0 0
  %204 = vmatpush1.bf16.msra.mxu0 %v165
  %205 = vmatprep.subr.bf16.mxu0 0
  %206 = vmatpush1.bf16.msra.mxu0 %v166
  %207 = vmatprep.subr.bf16.mxu0 0
  %208 = vmatpush1.bf16.msra.mxu0 %v167
  %209 = vmatprep.subr.bf16.mxu0 0
  %210 = vmatpush1.bf16.msra.mxu0 %v168
  %211 = vmatprep.subr.bf16.mxu0 0
  %212 = vmatpush1.bf16.msra.mxu0 %v169
  %213 = vmatprep.subr.bf16.mxu0 0
  %214 = vmatpush1.bf16.msra.mxu0 %v170
  %215 = vmatprep.subr.bf16.mxu0 0
  %216 = vmatpush1.bf16.msra.mxu0 %v171
  %217 = vmatprep.subr.bf16.mxu0 0
  %218 = vmatpush1.bf16.msra.mxu0 %v172
  %219 = vmatprep.subr.bf16.mxu0 0
  %220 = vmatpush1.bf16.msra.mxu0 %v173
  %221 = vmatprep.subr.bf16.mxu0 0
  %222 = vmatpush1.bf16.msra.mxu0 %v174
  %223 = vmatprep.mubr.bf16.mxu0 %v88
  %224 = vmatmul.mubr.bf16.gmra.mrb[0].mxu0 %v87
  %v225 = vpop.f32.mrb[0].mxu0
  %v226 = vadd.f32 0.0, %v225
  %v227 = vpop.f32.mrb[0].mxu0
  %v228 = vpop.f32.mrb[0].mxu0
  %v229 = vadd.f32 0.0, %v228
  %v230 = vpop.f32.mrb[0].mxu0
  %231 = vmatprep.mubr.bf16.mxu0 %v90
  %232 = vmatmul.mubr.bf16.gmra.mrb[0].mxu0 %v89
  %v233 = vpop.f32.mrb[0].mxu0
  %v234 = vadd.f32 0.0, %v233
  %v235 = vpop.f32.mrb[0].mxu0
  %v236 = vpop.f32.mrb[0].mxu0
  %v237 = vadd.f32 0.0, %v236
  %v238 = vpop.f32.mrb[0].mxu0
  %239 = vdwg.mxu0
  %v240 = vld [vmem:[%s2] sm:$0x1]
  %v241 = vld [vmem:[%s3] sm:$0x1]
  %v242 = vadd.f32 %v226, %v229
  %v243 = vadd.f32 %v242, %v234
  %v244 = vadd.f32 %v243, %v237
  %v245 = vrot.slane %v244, 4
  %v246 = vadd.f32 %v244, %v245
  %v247 = vrot.slane %v246, 2
  %v248 = vadd.f32 %v246, %v247
  %v249 = vrot.slane %v248, 1
  %v250 = vadd.f32 %v248, %v249
  %v251 = vrcp.pop 32.0
  %v252 = vmul.f32 %v250, %v251
  %v253 = vsub.f32 %v226, %v252
  %v254 = vsub.f32 %v229, %v252
  %v255 = vsub.f32 %v234, %v252
  %v256 = vsub.f32 %v237, %v252
  %v257 = vmul.f32 %v253, %v253
  %v258 = vmul.f32 %v254, %v254
  %v259 = vmul.f32 %v255, %v255
  %v260 = vmul.f32 %v256, %v256
  %v261 = vadd.f32 %v257, %v258
  %v262 = vadd.f32 %v261, %v259
  %v263 = vadd.f32 %v262, %v260
  %v264 = vrot.slane %v263, 4
  %v265 = vadd.f32 %v263, %v264
  %v266 = vrot.slane %v265, 2
  %v267 = vadd.f32 %v265, %v266
  %v268 = vrot.slane %v267, 1
  %v269 = vadd.f32 %v267, %v268
  %v270 = vmul.f32 %v269, %v251
  %v271 = vadd.f32 %v270, 1e-05
  %v272 = vrsqrt.pop %v271
  %v273 = vmul.f32 %v272, %v240
  %v274 = vmul.f32 %v252, %v273
  %v275 = vsub.f32 %v241, %v274
  %v276 = vlaneseq
  %v277 = vshrl.u32 %v276, 7
  %v278 = vsub.s32 0, %v277
  %v279 = vrot.slane %v273, %v278
  %v280 = vmul.f32 %v226, %v279
  %v281 = vmul.f32 %v229, %v279
  %v282 = vmul.f32 %v234, %v279
  %v283 = vmul.f32 %v237, %v279
  %v285 = vlaneseq
  %v286 = vshrl.u32 %v285, 7
  %v287 = vsub.s32 0, %v286
  %v288 = vrot.slane %v275, %v287
  %v290 = vadd.f32 %v280, %v288
  %v291 = vadd.f32 %v281, %v288
  %v292 = vadd.f32 %v282, %v288
  %v293 = vadd.f32 %v283, %v288
  %v294 = vmax.f32 %v290, 0.0
  %v295 = vmax.f32 %v291, 0.0
  %v296 = vmax.f32 %v292, 0.0
  %v297 = vmax.f32 %v293, 0.0
  %v298 = vpack.c.bf16 %v295, %v294
  %v299 = vpack.c.bf16 %v297, %v296
  %v300 = vld [vmem:[%s4] sm:$0xf]
  %v301 = vld [vmem:[%s4 + $0x4] sm:$0xf]
  %v302 = vld [vmem:[%s4 + $0x8] sm:$0xf]
  %v303 = vld [vmem:[%s4 + $0xc] sm:$0xf]
  %v304 = vld [vmem:[%s4 + $0x10] sm:$0xf]
  %v305 = vld [vmem:[%s4 + $0x14] sm:$0xf]
  %v306 = vld [vmem:[%s4 + $0x18] sm:$0xf]
  %v307 = vld [vmem:[%s4 + $0x1c] sm:$0xf]
  %v308 = vld [vmem:[%s4 + $0x20] sm:$0xf]
  %v309 = vld [vmem:[%s4 + $0x24] sm:$0xf]
  %v310 = vld [vmem:[%s4 + $0x28] sm:$0xf]
  %v311 = vld [vmem:[%s4 + $0x2c] sm:$0xf]
  %v312 = vld [vmem:[%s4 + $0x30] sm:$0xf]
  %v313 = vld [vmem:[%s4 + $0x34] sm:$0xf]
  %v314 = vld [vmem:[%s4 + $0x38] sm:$0xf]
  %v315 = vld [vmem:[%s4 + $0x3c] sm:$0xf]
  %v332 = vunpack.c.l.b16 %v300
  %v333 = vunpack.c.l.b16 %v301
  %v334 = vunpack.c.l.b16 %v302
  %v335 = vunpack.c.l.b16 %v303
  %v336 = vunpack.c.l.b16 %v304
  %v337 = vunpack.c.l.b16 %v305
  %v338 = vunpack.c.l.b16 %v306
  %v339 = vunpack.c.l.b16 %v307
  %v340 = vunpack.c.l.b16 %v308
  %v341 = vunpack.c.l.b16 %v309
  %v342 = vunpack.c.l.b16 %v310
  %v343 = vunpack.c.l.b16 %v311
  %v344 = vunpack.c.l.b16 %v312
  %v345 = vunpack.c.l.b16 %v313
  %v346 = vunpack.c.l.b16 %v314
  %v347 = vunpack.c.l.b16 %v315
  %v348 = vpack.c.b16 %v333, %v332
  %v349 = vpack.c.b16 %v335, %v334
  %v350 = vpack.c.b16 %v337, %v336
  %v351 = vpack.c.b16 %v339, %v338
  %v352 = vpack.c.b16 %v341, %v340
  %v353 = vpack.c.b16 %v343, %v342
  %v354 = vpack.c.b16 %v345, %v344
  %v355 = vpack.c.b16 %v347, %v346
  %364 = vmatprep.subr.bf16.mxu0 0
  %365 = vmatpush1.bf16.msra.mxu0 %v348
  %366 = vmatprep.subr.bf16.mxu0 0
  %367 = vmatpush1.bf16.msra.mxu0 %v349
  %368 = vmatprep.subr.bf16.mxu0 0
  %369 = vmatpush1.bf16.msra.mxu0 %v350
  %370 = vmatprep.subr.bf16.mxu0 0
  %371 = vmatpush1.bf16.msra.mxu0 %v351
  %372 = vmatprep.subr.bf16.mxu0 0
  %373 = vmatpush1.bf16.msra.mxu0 %v352
  %374 = vmatprep.subr.bf16.mxu0 0
  %375 = vmatpush1.bf16.msra.mxu0 %v353
  %376 = vmatprep.subr.bf16.mxu0 0
  %377 = vmatpush1.bf16.msra.mxu0 %v354
  %378 = vmatprep.subr.bf16.mxu0 0
  %379 = vmatpush1.bf16.msra.mxu0 %v355
  %380 = vmatprep.subr.bf16.mxu0 0
  %381 = vmatpush1.bf16.msra.mxu0 0
  %382 = vmatprep.subr.bf16.mxu0 0
  %383 = vmatpush1.bf16.msra.mxu0 0
  %384 = vmatprep.subr.bf16.mxu0 0
  %385 = vmatpush1.bf16.msra.mxu0 0
  %386 = vmatprep.subr.bf16.mxu0 0
  %387 = vmatpush1.bf16.msra.mxu0 0
  %388 = vmatprep.subr.bf16.mxu0 0
  %389 = vmatpush1.bf16.msra.mxu0 0
  %390 = vmatprep.subr.bf16.mxu0 0
  %391 = vmatpush1.bf16.msra.mxu0 0
  %392 = vmatprep.subr.bf16.mxu0 0
  %393 = vmatpush1.bf16.msra.mxu0 0
  %394 = vmatprep.subr.bf16.mxu0 0
  %395 = vmatpush1.bf16.msra.mxu0 0
  %396 = vmatprep.mubr.bf16.mxu0 0
  %397 = vmatmul.mubr.bf16.gmra.mrb[0].mxu0 %v298
  %v398 = vpop.f32.mrb[0].mxu0
  %v399 = vadd.f32 0.0, %v398
  %v400 = vpop.f32.mrb[0].mxu0
  %v401 = vpop.f32.mrb[0].mxu0
  %v402 = vadd.f32 0.0, %v401
  %v403 = vpop.f32.mrb[0].mxu0
  %404 = vmatprep.mubr.bf16.mxu0 0
  %405 = vmatmul.mubr.bf16.gmra.mrb[0].mxu0 %v299
  %v406 = vpop.f32.mrb[0].mxu0
  %v407 = vadd.f32 0.0, %v406
  %v408 = vpop.f32.mrb[0].mxu0
  %v409 = vpop.f32.mrb[0].mxu0
  %v410 = vadd.f32 0.0, %v409
  %v411 = vpop.f32.mrb[0].mxu0
  %412 = vdwg.mxu0
  %v413 = vld [vmem:[%s5] sm:$0x1]
  %v414 = vld [vmem:[%s6] sm:$0x1]
  %v415 = vadd.f32 %v399, %v402
  %v416 = vadd.f32 %v415, %v407
  %v417 = vadd.f32 %v416, %v410
  %v418 = vrot.slane %v417, 4
  %v419 = vadd.f32 %v417, %v418
  %v420 = vrot.slane %v419, 2
  %v421 = vadd.f32 %v419, %v420
  %v422 = vrot.slane %v421, 1
  %v423 = vadd.f32 %v421, %v422
  %v424 = vmul.f32 %v423, %v251
  %v425 = vsub.f32 %v399, %v424
  %v426 = vsub.f32 %v402, %v424
  %v427 = vsub.f32 %v407, %v424
  %v428 = vsub.f32 %v410, %v424
  %v429 = vmul.f32 %v425, %v425
  %v430 = vmul.f32 %v426, %v426
  %v431 = vmul.f32 %v427, %v427
  %v432 = vmul.f32 %v428, %v428
  %v433 = vadd.f32 %v429, %v430
  %v434 = vadd.f32 %v433, %v431
  %v435 = vadd.f32 %v434, %v432
  %v436 = vrot.slane %v435, 4
  %v437 = vadd.f32 %v435, %v436
  %v438 = vrot.slane %v437, 2
  %v439 = vadd.f32 %v437, %v438
  %v440 = vrot.slane %v439, 1
  %v441 = vadd.f32 %v439, %v440
  %v442 = vmul.f32 %v441, %v251
  %v443 = vadd.f32 %v442, 1e-05
  %v444 = vrsqrt.pop %v443
  %v445 = vmul.f32 %v444, %v413
  %v446 = vmul.f32 %v424, %v445
  %v447 = vsub.f32 %v414, %v446
  %v448 = vlaneseq
  %v449 = vshrl.u32 %v448, 7
  %v450 = vsub.s32 0, %v449
  %v451 = vrot.slane %v445, %v450
  %v452 = vmul.f32 %v399, %v451
  %v453 = vmul.f32 %v402, %v451
  %v454 = vmul.f32 %v407, %v451
  %v455 = vmul.f32 %v410, %v451
  %v457 = vlaneseq
  %v458 = vshrl.u32 %v457, 7
  %v459 = vsub.s32 0, %v458
  %v460 = vrot.slane %v447, %v459
  %v462 = vadd.f32 %v452, %v460
  %v463 = vadd.f32 %v453, %v460
  %v464 = vadd.f32 %v454, %v460
  %v465 = vadd.f32 %v455, %v460
  %v466 = vld [vmem:[%s7] sm:$0xf]
  %v467 = vld [vmem:[%s7 + $0x4] sm:$0xf]
  %v468 = vld [vmem:[%s7 + $0x8] sm:$0xf]
  %v469 = vld [vmem:[%s7 + $0xc] sm:$0xf]
  %v470 = vld [vmem:[%s8] sm:$0xf]
  %v471 = vld [vmem:[%s8 + $0x4] sm:$0xf]
  %v472 = vld [vmem:[%s8 + $0x8] sm:$0xf]
  %v473 = vld [vmem:[%s8 + $0xc] sm:$0xf]
  %v474 = vld [vmem:[%s8 + $0x10] sm:$0xf]
  %v475 = vld [vmem:[%s8 + $0x14] sm:$0xf]
  %v476 = vld [vmem:[%s8 + $0x18] sm:$0xf]
  %v477 = vld [vmem:[%s8 + $0x1c] sm:$0xf]
  %v478 = vld [vmem:[%s8 + $0x20] sm:$0xf]
  %v479 = vld [vmem:[%s8 + $0x24] sm:$0xf]
  %v480 = vld [vmem:[%s8 + $0x28] sm:$0xf]
  %v481 = vld [vmem:[%s8 + $0x2c] sm:$0xf]
  %v482 = vld [vmem:[%s8 + $0x30] sm:$0xf]
  %v483 = vld [vmem:[%s8 + $0x34] sm:$0xf]
  %v484 = vld [vmem:[%s8 + $0x38] sm:$0xf]
  %v485 = vld [vmem:[%s8 + $0x3c] sm:$0xf]
  %v490 = vunpack.c.l.b16 %v466
  %v491 = vunpack.c.l.b16 %v467
  %v492 = vunpack.c.l.b16 %v468
  %v493 = vunpack.c.l.b16 %v469
  %v494 = vpack.c.b16 %v491, %v490
  %v495 = vpack.c.b16 %v493, %v492
  %v514 = vunpack.c.l.b16 %v470
  %v515 = vunpack.c.l.b16 %v471
  %v516 = vunpack.c.l.b16 %v472
  %v517 = vunpack.c.l.b16 %v473
  %v518 = vunpack.c.l.b16 %v474
  %v519 = vunpack.c.l.b16 %v475
  %v520 = vunpack.c.l.b16 %v476
  %v521 = vunpack.c.l.b16 %v477
  %v522 = vunpack.c.l.b16 %v478
  %v523 = vunpack.c.l.b16 %v479
  %v524 = vunpack.c.l.b16 %v480
  %v525 = vunpack.c.l.b16 %v481
  %v526 = vunpack.c.l.b16 %v482
  %v527 = vunpack.c.l.b16 %v483
  %v528 = vunpack.c.l.b16 %v484
  %v529 = vunpack.c.l.b16 %v485
  %v530 = vpack.c.b16 %v515, %v514
  %v531 = vpack.c.b16 %v517, %v516
  %v532 = vpack.c.b16 %v519, %v518
  %v533 = vpack.c.b16 %v521, %v520
  %v534 = vpack.c.b16 %v523, %v522
  %v535 = vpack.c.b16 %v525, %v524
  %v536 = vpack.c.b16 %v527, %v526
  %v537 = vpack.c.b16 %v529, %v528
  %546 = vmatprep.subr.bf16.mxu0 0
  %547 = vmatpush1.bf16.msra.mxu0 %v530
  %548 = vmatprep.subr.bf16.mxu0 0
  %549 = vmatpush1.bf16.msra.mxu0 %v531
  %550 = vmatprep.subr.bf16.mxu0 0
  %551 = vmatpush1.bf16.msra.mxu0 %v532
  %552 = vmatprep.subr.bf16.mxu0 0
  %553 = vmatpush1.bf16.msra.mxu0 %v533
  %554 = vmatprep.subr.bf16.mxu0 0
  %555 = vmatpush1.bf16.msra.mxu0 %v534
  %556 = vmatprep.subr.bf16.mxu0 0
  %557 = vmatpush1.bf16.msra.mxu0 %v535
  %558 = vmatprep.subr.bf16.mxu0 0
  %559 = vmatpush1.bf16.msra.mxu0 %v536
  %560 = vmatprep.subr.bf16.mxu0 0
  %561 = vmatpush1.bf16.msra.mxu0 %v537
  %562 = vmatprep.subr.bf16.mxu0 0
  %563 = vmatpush1.bf16.msra.mxu0 0
  %564 = vmatprep.subr.bf16.mxu0 0
  %565 = vmatpush1.bf16.msra.mxu0 0
  %566 = vmatprep.subr.bf16.mxu0 0
  %567 = vmatpush1.bf16.msra.mxu0 0
  %568 = vmatprep.subr.bf16.mxu0 0
  %569 = vmatpush1.bf16.msra.mxu0 0
  %570 = vmatprep.subr.bf16.mxu0 0
  %571 = vmatpush1.bf16.msra.mxu0 0
  %572 = vmatprep.subr.bf16.mxu0 0
  %573 = vmatpush1.bf16.msra.mxu0 0
  %574 = vmatprep.subr.bf16.mxu0 0
  %575 = vmatpush1.bf16.msra.mxu0 0
  %576 = vmatprep.subr.bf16.mxu0 0
  %577 = vmatpush1.bf16.msra.mxu0 0
  %578 = vmatprep.mubr.bf16.mxu0 0
  %579 = vmatmul.mubr.bf16.gmra.mrb[0].mxu0 %v494
  %v580 = vpop.f32.mrb[0].mxu0
  %v581 = vadd.f32 0.0, %v580
  %v582 = vpop.f32.mrb[0].mxu0
  %v583 = vpop.f32.mrb[0].mxu0
  %v584 = vadd.f32 0.0, %v583
  %v585 = vpop.f32.mrb[0].mxu0
  %586 = vmatprep.mubr.bf16.mxu0 0
  %587 = vmatmul.mubr.bf16.gmra.mrb[0].mxu0 %v495
  %v588 = vpop.f32.mrb[0].mxu0
  %v589 = vadd.f32 0.0, %v588
  %v590 = vpop.f32.mrb[0].mxu0
  %v591 = vpop.f32.mrb[0].mxu0
  %v592 = vadd.f32 0.0, %v591
  %v593 = vpop.f32.mrb[0].mxu0
  %594 = vdwg.mxu0
  %v595 = vld [vmem:[%s9] sm:$0x1]
  %v596 = vld [vmem:[%s10] sm:$0x1]
  %v597 = vadd.f32 %v581, %v584
  %v598 = vadd.f32 %v597, %v589
  %v599 = vadd.f32 %v598, %v592
  %v600 = vrot.slane %v599, 4
  %v601 = vadd.f32 %v599, %v600
  %v602 = vrot.slane %v601, 2
  %v603 = vadd.f32 %v601, %v602
  %v604 = vrot.slane %v603, 1
  %v605 = vadd.f32 %v603, %v604
  %v606 = vmul.f32 %v605, %v251
  %v607 = vsub.f32 %v581, %v606
  %v608 = vsub.f32 %v584, %v606
  %v609 = vsub.f32 %v589, %v606
  %v610 = vsub.f32 %v592, %v606
  %v611 = vmul.f32 %v607, %v607
  %v612 = vmul.f32 %v608, %v608
  %v613 = vmul.f32 %v609, %v609
  %v614 = vmul.f32 %v610, %v610
  %v615 = vadd.f32 %v611, %v612
  %v616 = vadd.f32 %v615, %v613
  %v617 = vadd.f32 %v616, %v614
  %v618 = vrot.slane %v617, 4
  %v619 = vadd.f32 %v617, %v618
  %v620 = vrot.slane %v619, 2
  %v621 = vadd.f32 %v619, %v620
  %v622 = vrot.slane %v621, 1
  %v623 = vadd.f32 %v621, %v622
  %v624 = vmul.f32 %v623, %v251
  %v625 = vadd.f32 %v624, 1e-05
  %v626 = vrsqrt.pop %v625
  %v627 = vmul.f32 %v626, %v595
  %v628 = vmul.f32 %v606, %v627
  %v629 = vsub.f32 %v596, %v628
  %v630 = vlaneseq
  %v631 = vshrl.u32 %v630, 7
  %v632 = vsub.s32 0, %v631
  %v633 = vrot.slane %v627, %v632
  %v634 = vmul.f32 %v581, %v633
  %v635 = vmul.f32 %v584, %v633
  %v636 = vmul.f32 %v589, %v633
  %v637 = vmul.f32 %v592, %v633
  %v639 = vlaneseq
  %v640 = vshrl.u32 %v639, 7
  %v641 = vsub.s32 0, %v640
  %v642 = vrot.slane %v629, %v641
  %v644 = vadd.f32 %v634, %v642
  %v645 = vadd.f32 %v635, %v642
  %v646 = vadd.f32 %v636, %v642
  %v647 = vadd.f32 %v637, %v642
  %v648 = vadd.f32 %v462, %v644
  %v649 = vadd.f32 %v463, %v645
  %v650 = vadd.f32 %v464, %v646
  %v651 = vadd.f32 %v465, %v647
  %v652 = vmax.f32 %v648, 0.0
  %v653 = vmax.f32 %v649, 0.0
  %v654 = vmax.f32 %v650, 0.0
  %v655 = vmax.f32 %v651, 0.0
  %v656 = vpack.c.bf16 %v653, %v652
  %v657 = vpack.c.bf16 %v655, %v654
  %v660 = vunpack.c.l.b16 %v656
  %v661 = vunpack.c.h.b16 %v656
  %v662 = vunpack.c.l.b16 %v657
  %v663 = vunpack.c.h.b16 %v657
  %v664 = vpack.c.b16 %v660, %v660
  %v665 = vpack.c.b16 %v661, %v661
  %v666 = vpack.c.b16 %v662, %v662
  %v667 = vpack.c.b16 %v663, %v663
  %672 = vst [vmem:[%s11] sm:$0xf] %v664
  %673 = vst [vmem:[%s11 + $0x4] sm:$0xf] %v665
  %674 = vst [vmem:[%s11 + $0x8] sm:$0xf] %v666
  %675 = vst [vmem:[%s11 + $0xc] sm:$0xf] %v667
  // Predicated region
  $region46: #{model_forward.14} parent=0 // pred_check
    _
  $region47: #{model_forward.14} parent=0 // pred_check_branch
    %677 = sbr.rel (0) target = $region49
  $region48: #{model_forward.14} parent=0 // pred_region
    _
  $region49: #{model_forward.14} parent=0 // pred_fallthru
    _
  // Predicated region
  $region50: #{model_forward.14} parent=0 // pred_check
    _
  $region51: #{model_forward.14} parent=0 // pred_check_branch
    %679 = sbr.rel (0) target = $region53
  $region52: #{model_forward.14} parent=0 // pred_region
    _
  $region53: #{model_forward.14} parent=0 // pred_fallthru
    _

// kernel: model_forward.17
$region0: #{model_forward.17}
  #allocation0 [shape = 'u32[]', space=smem, size = 0x4, offset = 0x4, fixed_abs, tag = 'smem constant byte address 0x4 - core index']
  #allocation1 [shape = 'u32[144,128]{1,0:T(1,128)}', space=vmem, size = 0x12000, scoped, tag = 'internal scratch']
  %s0 = inlined_call_operand.vmem [shape: bf16[8,128], index: 0, kind: input, shape index: {}]
  %s1 = inlined_call_operand.vmem [shape: bf16[128,128], index: 1, kind: input, shape index: {}]
  %s2 = inlined_call_operand.vmem [shape: f32[1,128], index: 2, kind: input, shape index: {}]
  %s3 = inlined_call_operand.vmem [shape: f32[1,128], index: 3, kind: input, shape index: {}]
  %s4 = inlined_call_operand.vmem [shape: bf16[8,128], index: 4, kind: output, shape index: {}]
  %s5 = sld [smem:[#allocation0]]
  $region26: #{model_forward.17} parent=0
    _
  %s7 = ssub.s32 1, %s5
  %s8 = scalar_select 0, %s7, %s5
  // Predicated region
  $region2: #{model_forward.17} parent=0 // pred_check
    _
  $region3: #{model_forward.17} parent=0 // pred_check_branch
    %10 = sbr.rel (0) target = $region5
  $region4: #{model_forward.17} parent=0 // pred_region
    _
  $region5: #{model_forward.17} parent=0 // pred_fallthru
    _
  // Predicated region
  $region6: #{model_forward.17} parent=0 // pred_check
    _
  $region7: #{model_forward.17} parent=0 // pred_check_branch
    %12 = sbr.rel (0) target = $region9
  $region8: #{model_forward.17} parent=0 // pred_region
    _
  $region9: #{model_forward.17} parent=0 // pred_fallthru
    _
  // Predicated region
  $region10: #{model_forward.17} parent=0 // pred_check
    _
  $region11: #{model_forward.17} parent=0 // pred_check_branch
    %14 = sbr.rel (0) target = $region13
  $region12: #{model_forward.17} parent=0 // pred_region
    _
  $region13: #{model_forward.17} parent=0 // pred_fallthru
    _
  // Predicated region
  $region14: #{model_forward.17} parent=0 // pred_check
    _
  $region15: #{model_forward.17} parent=0 // pred_check_branch
    %16 = sbr.rel (0) target = $region17
  $region16: #{model_forward.17} parent=0 // pred_region
    _
  $region17: #{model_forward.17} parent=0 // pred_fallthru
    _
  %v18 = vld [vmem:[%s0] sm:$0xf]
  %v19 = vld [vmem:[%s1] sm:$0xf]
  %v20 = vld [vmem:[%s1 + $0x4] sm:$0xf]
  %v21 = vld [vmem:[%s1 + $0x8] sm:$0xf]
  %v22 = vld [vmem:[%s1 + $0xc] sm:$0xf]
  %v23 = vld [vmem:[%s1 + $0x10] sm:$0xf]
  %v24 = vld [vmem:[%s1 + $0x14] sm:$0xf]
  %v25 = vld [vmem:[%s1 + $0x18] sm:$0xf]
  %v26 = vld [vmem:[%s1 + $0x1c] sm:$0xf]
  %v27 = vld [vmem:[%s1 + $0x20] sm:$0xf]
  %v28 = vld [vmem:[%s1 + $0x24] sm:$0xf]
  %v29 = vld [vmem:[%s1 + $0x28] sm:$0xf]
  %v30 = vld [vmem:[%s1 + $0x2c] sm:$0xf]
  %v31 = vld [vmem:[%s1 + $0x30] sm:$0xf]
  %v32 = vld [vmem:[%s1 + $0x34] sm:$0xf]
  %v33 = vld [vmem:[%s1 + $0x38] sm:$0xf]
  %v34 = vld [vmem:[%s1 + $0x3c] sm:$0xf]
  %v51 = vunpack.c.l.b16 %v19
  %v52 = vunpack.c.l.b16 %v20
  %v53 = vunpack.c.l.b16 %v21
  %v54 = vunpack.c.l.b16 %v22
  %v55 = vunpack.c.l.b16 %v23
  %v56 = vunpack.c.l.b16 %v24
  %v57 = vunpack.c.l.b16 %v25
  %v58 = vunpack.c.l.b16 %v26
  %v59 = vunpack.c.l.b16 %v27
  %v60 = vunpack.c.l.b16 %v28
  %v61 = vunpack.c.l.b16 %v29
  %v62 = vunpack.c.l.b16 %v30
  %v63 = vunpack.c.l.b16 %v31
  %v64 = vunpack.c.l.b16 %v32
  %v65 = vunpack.c.l.b16 %v33
  %v66 = vunpack.c.l.b16 %v34
  %v67 = vpack.c.b16 %v52, %v51
  %v68 = vpack.c.b16 %v54, %v53
  %v69 = vpack.c.b16 %v56, %v55
  %v70 = vpack.c.b16 %v58, %v57
  %v71 = vpack.c.b16 %v60, %v59
  %v72 = vpack.c.b16 %v62, %v61
  %v73 = vpack.c.b16 %v64, %v63
  %v74 = vpack.c.b16 %v66, %v65
  %83 = vmatprep.subr.bf16.mxu0 0
  %84 = vmatpush1.bf16.msra.mxu0 %v67
  %85 = vmatprep.subr.bf16.mxu0 0
  %86 = vmatpush1.bf16.msra.mxu0 %v68
  %87 = vmatprep.subr.bf16.mxu0 0
  %88 = vmatpush1.bf16.msra.mxu0 %v69
  %89 = vmatprep.subr.bf16.mxu0 0
  %90 = vmatpush1.bf16.msra.mxu0 %v70
  %91 = vmatprep.subr.bf16.mxu0 0
  %92 = vmatpush1.bf16.msra.mxu0 %v71
  %93 = vmatprep.subr.bf16.mxu0 0
  %94 = vmatpush1.bf16.msra.mxu0 %v72
  %95 = vmatprep.subr.bf16.mxu0 0
  %96 = vmatpush1.bf16.msra.mxu0 %v73
  %97 = vmatprep.subr.bf16.mxu0 0
  %98 = vmatpush1.bf16.msra.mxu0 %v74
  %99 = vmatprep.subr.bf16.mxu0 0
  %100 = vmatpush1.bf16.msra.mxu0 0
  %101 = vmatprep.subr.bf16.mxu0 0
  %102 = vmatpush1.bf16.msra.mxu0 0
  %103 = vmatprep.subr.bf16.mxu0 0
  %104 = vmatpush1.bf16.msra.mxu0 0
  %105 = vmatprep.subr.bf16.mxu0 0
  %106 = vmatpush1.bf16.msra.mxu0 0
  %107 = vmatprep.subr.bf16.mxu0 0
  %108 = vmatpush1.bf16.msra.mxu0 0
  %109 = vmatprep.subr.bf16.mxu0 0
  %110 = vmatpush1.bf16.msra.mxu0 0
  %111 = vmatprep.subr.bf16.mxu0 0
  %112 = vmatpush1.bf16.msra.mxu0 0
  %113 = vmatprep.subr.bf16.mxu0 0
  %114 = vmatpush1.bf16.msra.mxu0 0
  %115 = vmatprep.mubr.bf16.mxu0 0
  %116 = vmatmul.mubr.bf16.gmra.mrb[0].mxu0 %v18
  %v117 = vpop.f32.mrb[0].mxu0
  %v118 = vadd.f32 0.0, %v117
  %v119 = vpop.f32.mrb[0].mxu0
  %v120 = vpop.f32.mrb[0].mxu0
  %v121 = vpop.f32.mrb[0].mxu0
  %122 = vdwg.mxu0
  %v123 = vld [vmem:[%s2] sm:$0x1]
  %v124 = vld [vmem:[%s3] sm:$0x1]
  %v125 = vrot.slane %v118, 4
  %v126 = vadd.f32 %v118, %v125
  %v127 = vrot.slane %v126, 2
  %v128 = vadd.f32 %v126, %v127
  %v129 = vrot.slane %v128, 1
  %v130 = vadd.f32 %v128, %v129
  %v131 = vrcp.pop 8.0
  %v132 = vmul.f32 %v130, %v131
  %v133 = vsub.f32 %v118, %v132
  %v134 = vmul.f32 %v133, %v133
  %v135 = vrot.slane %v134, 4
  %v136 = vadd.f32 %v134, %v135
  %v137 = vrot.slane %v136, 2
  %v138 = vadd.f32 %v136, %v137
  %v139 = vrot.slane %v138, 1
  %v140 = vadd.f32 %v138, %v139
  %v141 = vmul.f32 %v140, %v131
  %v142 = vadd.f32 %v141, 1e-05
  %v143 = vrsqrt.pop %v142
  %v144 = vmul.f32 %v143, %v123
  %v145 = vmul.f32 %v132, %v144
  %v146 = vsub.f32 %v124, %v145
  %v147 = vlaneseq
  %v148 = vshrl.u32 %v147, 7
  %v149 = vsub.s32 0, %v148
  %v150 = vrot.slane %v144, %v149
  %v151 = vmul.f32 %v118, %v150
  %v153 = vlaneseq
  %v154 = vshrl.u32 %v153, 7
  %v155 = vsub.s32 0, %v154
  %v156 = vrot.slane %v146, %v155
  %v158 = vadd.f32 %v151, %v156
  %v159 = vmax.f32 %v158, 0.0
  %v160 = vpack.c.bf16 %v159, %v159
  %161 = vst [vmem:[%s4] sm:$0xf] %v160
  // Predicated region
  $region18: #{model_forward.17} parent=0 // pred_check
    _
  $region19: #{model_forward.17} parent=0 // pred_check_branch
    %163 = sbr.rel (0) target = $region21
  $region20: #{model_forward.17} parent=0 // pred_region
    _
  $region21: #{model_forward.17} parent=0 // pred_fallthru
    _
  // Predicated region
  $region22: #{model_forward.17} parent=0 // pred_check
    _
  $region23: #{model_forward.17} parent=0 // pred_check_branch
    %165 = sbr.rel (0) target = $region25
  $region24: #{model_forward.17} parent=0 // pred_region
    _
  $region25: #{model_forward.17} parent=0 // pred_fallthru
    _

// kernel: model_forward.16
$region0: #{model_forward.16}
  #allocation0 [shape = 'u32[]', space=smem, size = 0x4, offset = 0x4, fixed_abs, tag = 'smem constant byte address 0x4 - core index']
  #allocation1 [shape = 'u32[144,128]{1,0:T(1,128)}', space=vmem, size = 0x12000, scoped, tag = 'internal scratch']
  %s0 = inlined_call_operand.vmem [shape: bf16[8,384], index: 0, kind: input, shape index: {}]
  %s1 = inlined_call_operand.vmem [shape: bf16[384,128], index: 1, kind: input, shape index: {}]
  %s2 = inlined_call_operand.vmem [shape: f32[1,128], index: 2, kind: input, shape index: {}]
  %s3 = inlined_call_operand.vmem [shape: f32[1,128], index: 3, kind: input, shape index: {}]
  %s4 = inlined_call_operand.vmem [shape: bf16[128,128], index: 4, kind: input, shape index: {}]
  %s5 = inlined_call_operand.vmem [shape: f32[1,128], index: 5, kind: input, shape index: {}]
  %s6 = inlined_call_operand.vmem [shape: f32[1,128], index: 6, kind: input, shape index: {}]
  %s7 = inlined_call_operand.vmem [shape: bf16[8,128], index: 7, kind: input, shape index: {}]
  %s8 = inlined_call_operand.vmem [shape: bf16[128,128], index: 8, kind: input, shape index: {}]
  %s9 = inlined_call_operand.vmem [shape: f32[1,128], index: 9, kind: input, shape index: {}]
  %s10 = inlined_call_operand.vmem [shape: f32[1,128], index: 10, kind: input, shape index: {}]
  %s11 = inlined_call_operand.vmem [shape: bf16[8,128], index: 11, kind: output, shape index: {}]
  %s12 = sld [smem:[#allocation0]]
  $region54: #{model_forward.16} parent=0
    _
  %s14 = ssub.s32 1, %s12
  %s15 = scalar_select 0, %s14, %s12
  // Predicated region
  $region2: #{model_forward.16} parent=0 // pred_check
    _
  $region3: #{model_forward.16} parent=0 // pred_check_branch
    %17 = sbr.rel (0) target = $region5
  $region4: #{model_forward.16} parent=0 // pred_region
    _
  $region5: #{model_forward.16} parent=0 // pred_fallthru
    _
  // Predicated region
  $region6: #{model_forward.16} parent=0 // pred_check
    _
  $region7: #{model_forward.16} parent=0 // pred_check_branch
    %19 = sbr.rel (0) target = $region9
  $region8: #{model_forward.16} parent=0 // pred_region
    _
  $region9: #{model_forward.16} parent=0 // pred_fallthru
    _
  // Predicated region
  $region10: #{model_forward.16} parent=0 // pred_check
    _
  $region11: #{model_forward.16} parent=0 // pred_check_branch
    %21 = sbr.rel (0) target = $region13
  $region12: #{model_forward.16} parent=0 // pred_region
    _
  $region13: #{model_forward.16} parent=0 // pred_fallthru
    _
  // Predicated region
  $region14: #{model_forward.16} parent=0 // pred_check
    _
  $region15: #{model_forward.16} parent=0 // pred_check_branch
    %23 = sbr.rel (0) target = $region17
  $region16: #{model_forward.16} parent=0 // pred_region
    _
  $region17: #{model_forward.16} parent=0 // pred_fallthru
    _
  // Predicated region
  $region18: #{model_forward.16} parent=0 // pred_check
    _
  $region19: #{model_forward.16} parent=0 // pred_check_branch
    %25 = sbr.rel (0) target = $region21
  $region20: #{model_forward.16} parent=0 // pred_region
    _
  $region21: #{model_forward.16} parent=0 // pred_fallthru
    _
  // Predicated region
  $region22: #{model_forward.16} parent=0 // pred_check
    _
  $region23: #{model_forward.16} parent=0 // pred_check_branch
    %27 = sbr.rel (0) target = $region25
  $region24: #{model_forward.16} parent=0 // pred_region
    _
  $region25: #{model_forward.16} parent=0 // pred_fallthru
    _
  // Predicated region
  $region26: #{model_forward.16} parent=0 // pred_check
    _
  $region27: #{model_forward.16} parent=0 // pred_check_branch
    %29 = sbr.rel (0) target = $region29
  $region28: #{model_forward.16} parent=0 // pred_region
    _
  $region29: #{model_forward.16} parent=0 // pred_fallthru
    _
  // Predicated region
  $region30: #{model_forward.16} parent=0 // pred_check
    _
  $region31: #{model_forward.16} parent=0 // pred_check_branch
    %31 = sbr.rel (0) target = $region33
  $region32: #{model_forward.16} parent=0 // pred_region
    _
  $region33: #{model_forward.16} parent=0 // pred_fallthru
    _
  // Predicated region
  $region34: #{model_forward.16} parent=0 // pred_check
    _
  $region35: #{model_forward.16} parent=0 // pred_check_branch
    %33 = sbr.rel (0) target = $region37
  $region36: #{model_forward.16} parent=0 // pred_region
    _
  $region37: #{model_forward.16} parent=0 // pred_fallthru
    _
  // Predicated region
  $region38: #{model_forward.16} parent=0 // pred_check
    _
  $region39: #{model_forward.16} parent=0 // pred_check_branch
    %35 = sbr.rel (0) target = $region41
  $region40: #{model_forward.16} parent=0 // pred_region
    _
  $region41: #{model_forward.16} parent=0 // pred_fallthru
    _
  // Predicated region
  $region42: #{model_forward.16} parent=0 // pred_check
    _
  $region43: #{model_forward.16} parent=0 // pred_check_branch
    %37 = sbr.rel (0) target = $region45
  $region44: #{model_forward.16} parent=0 // pred_region
    _
  $region45: #{model_forward.16} parent=0 // pred_fallthru
    _
  %v39 = vld [vmem:[%s0] sm:$0xff]
  %v40 = vld [vmem:[%s0 + $0x8] sm:$0xf]
  %v41 = vld [vmem:[%s1] sm:$0xf]
  %v42 = vld [vmem:[%s1 + $0x4] sm:$0xf]
  %v43 = vld [vmem:[%s1 + $0x8] sm:$0xf]
  %v44 = vld [vmem:[%s1 + $0xc] sm:$0xf]
  %v45 = vld [vmem:[%s1 + $0x10] sm:$0xf]
  %v46 = vld [vmem:[%s1 + $0x14] sm:$0xf]
  %v47 = vld [vmem:[%s1 + $0x18] sm:$0xf]
  %v48 = vld [vmem:[%s1 + $0x1c] sm:$0xf]
  %v49 = vld [vmem:[%s1 + $0x20] sm:$0xf]
  %v50 = vld [vmem:[%s1 + $0x24] sm:$0xf]
  %v51 = vld [vmem:[%s1 + $0x28] sm:$0xf]
  %v52 = vld [vmem:[%s1 + $0x2c] sm:$0xf]
  %v53 = vld [vmem:[%s1 + $0x30] sm:$0xf]
  %v54 = vld [vmem:[%s1 + $0x34] sm:$0xf]
  %v55 = vld [vmem:[%s1 + $0x38] sm:$0xf]
  %v56 = vld [vmem:[%s1 + $0x3c] sm:$0xf]
  %v57 = vld [vmem:[%s1 + $0x40] sm:$0xf]
  %v58 = vld [vmem:[%s1 + $0x44] sm:$0xf]
  %v59 = vld [vmem:[%s1 + $0x48] sm:$0xf]
  %v60 = vld [vmem:[%s1 + $0x4c] sm:$0xf]
  %v61 = vld [vmem:[%s1 + $0x50] sm:$0xf]
  %v62 = vld [vmem:[%s1 + $0x54] sm:$0xf]
  %v63 = vld [vmem:[%s1 + $0x58] sm:$0xf]
  %v64 = vld [vmem:[%s1 + $0x5c] sm:$0xf]
  %v65 = vld [vmem:[%s1 + $0x60] sm:$0xf]
  %v66 = vld [vmem:[%s1 + $0x64] sm:$0xf]
  %v67 = vld [vmem:[%s1 + $0x68] sm:$0xf]
  %v68 = vld [vmem:[%s1 + $0x6c] sm:$0xf]
  %v69 = vld [vmem:[%s1 + $0x70] sm:$0xf]
  %v70 = vld [vmem:[%s1 + $0x74] sm:$0xf]
  %v71 = vld [vmem:[%s1 + $0x78] sm:$0xf]
  %v72 = vld [vmem:[%s1 + $0x7c] sm:$0xf]
  %v73 = vld [vmem:[%s1 + $0x80] sm:$0xf]
  %v74 = vld [vmem:[%s1 + $0x84] sm:$0xf]
  %v75 = vld [vmem:[%s1 + $0x88] sm:$0xf]
  %v76 = vld [vmem:[%s1 + $0x8c] sm:$0xf]
  %v77 = vld [vmem:[%s1 + $0x90] sm:$0xf]
  %v78 = vld [vmem:[%s1 + $0x94] sm:$0xf]
  %v79 = vld [vmem:[%s1 + $0x98] sm:$0xf]
  %v80 = vld [vmem:[%s1 + $0x9c] sm:$0xf]
  %v81 = vld [vmem:[%s1 + $0xa0] sm:$0xf]
  %v82 = vld [vmem:[%s1 + $0xa4] sm:$0xf]
  %v83 = vld [vmem:[%s1 + $0xa8] sm:$0xf]
  %v84 = vld [vmem:[%s1 + $0xac] sm:$0xf]
  %v85 = vld [vmem:[%s1 + $0xb0] sm:$0xf]
  %v86 = vld [vmem:[%s1 + $0xb4] sm:$0xf]
  %v87 = vld [vmem:[%s1 + $0xb8] sm:$0xf]
  %v88 = vld [vmem:[%s1 + $0xbc] sm:$0xf]
  %v91 = vunpack.c.l.b16 %v39
  %v92 = vunpack.c.h.b16 %v39
  %v93 = vunpack.c.l.b16 %v40
  %v94 = vpack.c.b16 %v91, %v91
  %v95 = vpack.c.b16 %v92, %v92
  %v96 = vpack.c.b16 %v93, %v93
  %v148 = vunpack.c.l.b16 %v41
  %v149 = vunpack.c.l.b16 %v42
  %v150 = vunpack.c.l.b16 %v43
  %v151 = vunpack.c.l.b16 %v44
  %v152 = vunpack.c.l.b16 %v45
  %v153 = vunpack.c.l.b16 %v46
  %v154 = vunpack.c.l.b16 %v47
  %v155 = vunpack.c.l.b16 %v48
  %v156 = vunpack.c.l.b16 %v49
  %v157 = vunpack.c.l.b16 %v50
  %v158 = vunpack.c.l.b16 %v51
  %v159 = vunpack.c.l.b16 %v52
  %v160 = vunpack.c.l.b16 %v53
  %v161 = vunpack.c.l.b16 %v54
  %v162 = vunpack.c.l.b16 %v55
  %v163 = vunpack.c.l.b16 %v56
  %v164 = vunpack.c.l.b16 %v57
  %v165 = vunpack.c.l.b16 %v58
  %v166 = vunpack.c.l.b16 %v59
  %v167 = vunpack.c.l.b16 %v60
  %v168 = vunpack.c.l.b16 %v61
  %v169 = vunpack.c.l.b16 %v62
  %v170 = vunpack.c.l.b16 %v63
  %v171 = vunpack.c.l.b16 %v64
  %v172 = vunpack.c.l.b16 %v65
  %v173 = vunpack.c.l.b16 %v66
  %v174 = vunpack.c.l.b16 %v67
  %v175 = vunpack.c.l.b16 %v68
  %v176 = vunpack.c.l.b16 %v69
  %v177 = vunpack.c.l.b16 %v70
  %v178 = vunpack.c.l.b16 %v71
  %v179 = vunpack.c.l.b16 %v72
  %v180 = vunpack.c.l.b16 %v73
  %v181 = vunpack.c.l.b16 %v74
  %v182 = vunpack.c.l.b16 %v75
  %v183 = vunpack.c.l.b16 %v76
  %v184 = vunpack.c.l.b16 %v77
  %v185 = vunpack.c.l.b16 %v78
  %v186 = vunpack.c.l.b16 %v79
  %v187 = vunpack.c.l.b16 %v80
  %v188 = vunpack.c.l.b16 %v81
  %v189 = vunpack.c.l.b16 %v82
  %v190 = vunpack.c.l.b16 %v83
  %v191 = vunpack.c.l.b16 %v84
  %v192 = vunpack.c.l.b16 %v85
  %v193 = vunpack.c.l.b16 %v86
  %v194 = vunpack.c.l.b16 %v87
  %v195 = vunpack.c.l.b16 %v88
  %v196 = vpack.c.b16 %v149, %v148
  %v197 = vpack.c.b16 %v151, %v150
  %v198 = vpack.c.b16 %v153, %v152
  %v199 = vpack.c.b16 %v155, %v154
  %v200 = vpack.c.b16 %v157, %v156
  %v201 = vpack.c.b16 %v159, %v158
  %v202 = vpack.c.b16 %v161, %v160
  %v203 = vpack.c.b16 %v163, %v162
  %v204 = vpack.c.b16 %v165, %v164
  %v205 = vpack.c.b16 %v167, %v166
  %v206 = vpack.c.b16 %v169, %v168
  %v207 = vpack.c.b16 %v171, %v170
  %v208 = vpack.c.b16 %v173, %v172
  %v209 = vpack.c.b16 %v175, %v174
  %v210 = vpack.c.b16 %v177, %v176
  %v211 = vpack.c.b16 %v179, %v178
  %v212 = vpack.c.b16 %v181, %v180
  %v213 = vpack.c.b16 %v183, %v182
  %v214 = vpack.c.b16 %v185, %v184
  %v215 = vpack.c.b16 %v187, %v186
  %v216 = vpack.c.b16 %v189, %v188
  %v217 = vpack.c.b16 %v191, %v190
  %v218 = vpack.c.b16 %v193, %v192
  %v219 = vpack.c.b16 %v195, %v194
  %244 = vmatprep.subr.bf16.mxu0 0
  %245 = vmatpush1.bf16.msra.mxu0 %v196
  %246 = vmatprep.subr.bf16.mxu0 0
  %247 = vmatpush1.bf16.msra.mxu0 %v197
  %248 = vmatprep.subr.bf16.mxu0 0
  %249 = vmatpush1.bf16.msra.mxu0 %v198
  %250 = vmatprep.subr.bf16.mxu0 0
  %251 = vmatpush1.bf16.msra.mxu0 %v199
  %252 = vmatprep.subr.bf16.mxu0 0
  %253 = vmatpush1.bf16.msra.mxu0 %v200
  %254 = vmatprep.subr.bf16.mxu0 0
  %255 = vmatpush1.bf16.msra.mxu0 %v201
  %256 = vmatprep.subr.bf16.mxu0 0
  %257 = vmatpush1.bf16.msra.mxu0 %v202
  %258 = vmatprep.subr.bf16.mxu0 0
  %259 = vmatpush1.bf16.msra.mxu0 %v203
  %260 = vmatprep.subr.bf16.mxu0 0
  %261 = vmatpush1.bf16.msra.mxu0 %v204
  %262 = vmatprep.subr.bf16.mxu0 0
  %263 = vmatpush1.bf16.msra.mxu0 %v205
  %264 = vmatprep.subr.bf16.mxu0 0
  %265 = vmatpush1.bf16.msra.mxu0 %v206
  %266 = vmatprep.subr.bf16.mxu0 0
  %267 = vmatpush1.bf16.msra.mxu0 %v207
  %268 = vmatprep.subr.bf16.mxu0 0
  %269 = vmatpush1.bf16.msra.mxu0 %v208
  %270 = vmatprep.subr.bf16.mxu0 0
  %271 = vmatpush1.bf16.msra.mxu0 %v209
  %272 = vmatprep.subr.bf16.mxu0 0
  %273 = vmatpush1.bf16.msra.mxu0 %v210
  %274 = vmatprep.subr.bf16.mxu0 0
  %275 = vmatpush1.bf16.msra.mxu0 %v211
  %276 = vmatprep.mubr.bf16.mxu0 %v95
  %277 = vmatmul.mubr.bf16.gmra.mrb[0].mxu0 %v94
  %v278 = vpop.f32.mrb[0].mxu0
  %v279 = vadd.f32 0.0, %v278
  %v280 = vpop.f32.mrb[0].mxu0
  %v281 = vpop.f32.mrb[0].mxu0
  %v282 = vpop.f32.mrb[0].mxu0
  %283 = vdwg.mxu0
  %284 = vmatprep.subr.bf16.mxu0 0
  %285 = vmatpush1.bf16.msra.mxu0 %v212
  %286 = vmatprep.subr.bf16.mxu0 0
  %287 = vmatpush1.bf16.msra.mxu0 %v213
  %288 = vmatprep.subr.bf16.mxu0 0
  %289 = vmatpush1.bf16.msra.mxu0 %v214
  %290 = vmatprep.subr.bf16.mxu0 0
  %291 = vmatpush1.bf16.msra.mxu0 %v215
  %292 = vmatprep.subr.bf16.mxu0 0
  %293 = vmatpush1.bf16.msra.mxu0 %v216
  %294 = vmatprep.subr.bf16.mxu0 0
  %295 = vmatpush1.bf16.msra.mxu0 %v217
  %296 = vmatprep.subr.bf16.mxu0 0
  %297 = vmatpush1.bf16.msra.mxu0 %v218
  %298 = vmatprep.subr.bf16.mxu0 0
  %299 = vmatpush1.bf16.msra.mxu0 %v219
  %300 = vmatprep.subr.bf16.mxu0 0
  %301 = vmatpush1.bf16.msra.mxu0 0
  %302 = vmatprep.subr.bf16.mxu0 0
  %303 = vmatpush1.bf16.msra.mxu0 0
  %304 = vmatprep.subr.bf16.mxu0 0
  %305 = vmatpush1.bf16.msra.mxu0 0
  %306 = vmatprep.subr.bf16.mxu0 0
  %307 = vmatpush1.bf16.msra.mxu0 0
  %308 = vmatprep.subr.bf16.mxu0 0
  %309 = vmatpush1.bf16.msra.mxu0 0
  %310 = vmatprep.subr.bf16.mxu0 0
  %311 = vmatpush1.bf16.msra.mxu0 0
  %312 = vmatprep.subr.bf16.mxu0 0
  %313 = vmatpush1.bf16.msra.mxu0 0
  %314 = vmatprep.subr.bf16.mxu0 0
  %315 = vmatpush1.bf16.msra.mxu0 0
  %316 = vmatprep.mubr.bf16.mxu0 0
  %317 = vmatmul.mubr.bf16.gmra.mrb[0].mxu0 %v96
  %v318 = vpop.f32.mrb[0].mxu0
  %v319 = vadd.f32 %v279, %v318
  %v320 = vpop.f32.mrb[0].mxu0
  %v321 = vpop.f32.mrb[0].mxu0
  %v322 = vpop.f32.mrb[0].mxu0
  %323 = vdwg.mxu0
  %v324 = vld [vmem:[%s2] sm:$0x1]
  %v325 = vld [vmem:[%s3] sm:$0x1]
  %v326 = vrot.slane %v319, 4
  %v327 = vadd.f32 %v319, %v326
  %v328 = vrot.slane %v327, 2
  %v329 = vadd.f32 %v327, %v328
  %v330 = vrot.slane %v329, 1
  %v331 = vadd.f32 %v329, %v330
  %v332 = vrcp.pop 8.0
  %v333 = vmul.f32 %v331, %v332
  %v334 = vsub.f32 %v319, %v333
  %v335 = vmul.f32 %v334, %v334
  %v336 = vrot.slane %v335, 4
  %v337 = vadd.f32 %v335, %v336
  %v338 = vrot.slane %v337, 2
  %v339 = vadd.f32 %v337, %v338
  %v340 = vrot.slane %v339, 1
  %v341 = vadd.f32 %v339, %v340
  %v342 = vmul.f32 %v341, %v332
  %v343 = vadd.f32 %v342, 1e-05
  %v344 = vrsqrt.pop %v343
  %v345 = vmul.f32 %v344, %v324
  %v346 = vmul.f32 %v333, %v345
  %v347 = vsub.f32 %v325, %v346
  %v348 = vlaneseq
  %v349 = vshrl.u32 %v348, 7
  %v350 = vsub.s32 0, %v349
  %v351 = vrot.slane %v345, %v350
  %v352 = vmul.f32 %v319, %v351
  %v354 = vlaneseq
  %v355 = vshrl.u32 %v354, 7
  %v356 = vsub.s32 0, %v355
  %v357 = vrot.slane %v347, %v356
  %v359 = vadd.f32 %v352, %v357
  %v360 = vmax.f32 %v359, 0.0
  %v361 = vpack.c.bf16 %v360, %v360
  %v362 = vld [vmem:[%s4] sm:$0xf]
  %v363 = vld [vmem:[%s4 + $0x4] sm:$0xf]
  %v364 = vld [vmem:[%s4 + $0x8] sm:$0xf]
  %v365 = vld [vmem:[%s4 + $0xc] sm:$0xf]
  %v366 = vld [vmem:[%s4 + $0x10] sm:$0xf]
  %v367 = vld [vmem:[%s4 + $0x14] sm:$0xf]
  %v368 = vld [vmem:[%s4 + $0x18] sm:$0xf]
  %v369 = vld [vmem:[%s4 + $0x1c] sm:$0xf]
  %v370 = vld [vmem:[%s4 + $0x20] sm:$0xf]
  %v371 = vld [vmem:[%s4 + $0x24] sm:$0xf]
  %v372 = vld [vmem:[%s4 + $0x28] sm:$0xf]
  %v373 = vld [vmem:[%s4 + $0x2c] sm:$0xf]
  %v374 = vld [vmem:[%s4 + $0x30] sm:$0xf]
  %v375 = vld [vmem:[%s4 + $0x34] sm:$0xf]
  %v376 = vld [vmem:[%s4 + $0x38] sm:$0xf]
  %v377 = vld [vmem:[%s4 + $0x3c] sm:$0xf]
  %v394 = vunpack.c.l.b16 %v362
  %v395 = vunpack.c.l.b16 %v363
  %v396 = vunpack.c.l.b16 %v364
  %v397 = vunpack.c.l.b16 %v365
  %v398 = vunpack.c.l.b16 %v366
  %v399 = vunpack.c.l.b16 %v367
  %v400 = vunpack.c.l.b16 %v368
  %v401 = vunpack.c.l.b16 %v369
  %v402 = vunpack.c.l.b16 %v370
  %v403 = vunpack.c.l.b16 %v371
  %v404 = vunpack.c.l.b16 %v372
  %v405 = vunpack.c.l.b16 %v373
  %v406 = vunpack.c.l.b16 %v374
  %v407 = vunpack.c.l.b16 %v375
  %v408 = vunpack.c.l.b16 %v376
  %v409 = vunpack.c.l.b16 %v377
  %v410 = vpack.c.b16 %v395, %v394
  %v411 = vpack.c.b16 %v397, %v396
  %v412 = vpack.c.b16 %v399, %v398
  %v413 = vpack.c.b16 %v401, %v400
  %v414 = vpack.c.b16 %v403, %v402
  %v415 = vpack.c.b16 %v405, %v404
  %v416 = vpack.c.b16 %v407, %v406
  %v417 = vpack.c.b16 %v409, %v408
  %426 = vmatprep.subr.bf16.mxu0 0
  %427 = vmatpush1.bf16.msra.mxu0 %v410
  %428 = vmatprep.subr.bf16.mxu0 0
  %429 = vmatpush1.bf16.msra.mxu0 %v411
  %430 = vmatprep.subr.bf16.mxu0 0
  %431 = vmatpush1.bf16.msra.mxu0 %v412
  %432 = vmatprep.subr.bf16.mxu0 0
  %433 = vmatpush1.bf16.msra.mxu0 %v413
  %434 = vmatprep.subr.bf16.mxu0 0
  %435 = vmatpush1.bf16.msra.mxu0 %v414
  %436 = vmatprep.subr.bf16.mxu0 0
  %437 = vmatpush1.bf16.msra.mxu0 %v415
  %438 = vmatprep.subr.bf16.mxu0 0
  %439 = vmatpush1.bf16.msra.mxu0 %v416
  %440 = vmatprep.subr.bf16.mxu0 0
  %441 = vmatpush1.bf16.msra.mxu0 %v417
  %442 = vmatprep.subr.bf16.mxu0 0
  %443 = vmatpush1.bf16.msra.mxu0 0
  %444 = vmatprep.subr.bf16.mxu0 0
  %445 = vmatpush1.bf16.msra.mxu0 0
  %446 = vmatprep.subr.bf16.mxu0 0
  %447 = vmatpush1.bf16.msra.mxu0 0
  %448 = vmatprep.subr.bf16.mxu0 0
  %449 = vmatpush1.bf16.msra.mxu0 0
  %450 = vmatprep.subr.bf16.mxu0 0
  %451 = vmatpush1.bf16.msra.mxu0 0
  %452 = vmatprep.subr.bf16.mxu0 0
  %453 = vmatpush1.bf16.msra.mxu0 0
  %454 = vmatprep.subr.bf16.mxu0 0
  %455 = vmatpush1.bf16.msra.mxu0 0
  %456 = vmatprep.subr.bf16.mxu0 0
  %457 = vmatpush1.bf16.msra.mxu0 0
  %458 = vmatprep.mubr.bf16.mxu0 0
  %459 = vmatmul.mubr.bf16.gmra.mrb[0].mxu0 %v361
  %v460 = vpop.f32.mrb[0].mxu0
  %v461 = vadd.f32 0.0, %v460
  %v462 = vpop.f32.mrb[0].mxu0
  %v463 = vpop.f32.mrb[0].mxu0
  %v464 = vpop.f32.mrb[0].mxu0
  %465 = vdwg.mxu0
  %v466 = vld [vmem:[%s5] sm:$0x1]
  %v467 = vld [vmem:[%s6] sm:$0x1]
  %v468 = vrot.slane %v461, 4
  %v469 = vadd.f32 %v461, %v468
  %v470 = vrot.slane %v469, 2
  %v471 = vadd.f32 %v469, %v470
  %v472 = vrot.slane %v471, 1
  %v473 = vadd.f32 %v471, %v472
  %v474 = vmul.f32 %v473, %v332
  %v475 = vsub.f32 %v461, %v474
  %v476 = vmul.f32 %v475, %v475
  %v477 = vrot.slane %v476, 4
  %v478 = vadd.f32 %v476, %v477
  %v479 = vrot.slane %v478, 2
  %v480 = vadd.f32 %v478, %v479
  %v481 = vrot.slane %v480, 1
  %v482 = vadd.f32 %v480, %v481
  %v483 = vmul.f32 %v482, %v332
  %v484 = vadd.f32 %v483, 1e-05
  %v485 = vrsqrt.pop %v484
  %v486 = vmul.f32 %v485, %v466
  %v487 = vmul.f32 %v474, %v486
  %v488 = vsub.f32 %v467, %v487
  %v489 = vlaneseq
  %v490 = vshrl.u32 %v489, 7
  %v491 = vsub.s32 0, %v490
  %v492 = vrot.slane %v486, %v491
  %v493 = vmul.f32 %v461, %v492
  %v495 = vlaneseq
  %v496 = vshrl.u32 %v495, 7
  %v497 = vsub.s32 0, %v496
  %v498 = vrot.slane %v488, %v497
  %v500 = vadd.f32 %v493, %v498
  %v501 = vld [vmem:[%s7] sm:$0xf]
  %v502 = vld [vmem:[%s8] sm:$0xf]
  %v503 = vld [vmem:[%s8 + $0x4] sm:$0xf]
  %v504 = vld [vmem:[%s8 + $0x8] sm:$0xf]
  %v505 = vld [vmem:[%s8 + $0xc] sm:$0xf]
  %v506 = vld [vmem:[%s8 + $0x10] sm:$0xf]
  %v507 = vld [vmem:[%s8 + $0x14] sm:$0xf]
  %v508 = vld [vmem:[%s8 + $0x18] sm:$0xf]
  %v509 = vld [vmem:[%s8 + $0x1c] sm:$0xf]
  %v510 = vld [vmem:[%s8 + $0x20] sm:$0xf]
  %v511 = vld [vmem:[%s8 + $0x24] sm:$0xf]
  %v512 = vld [vmem:[%s8 + $0x28] sm:$0xf]
  %v513 = vld [vmem:[%s8 + $0x2c] sm:$0xf]
  %v514 = vld [vmem:[%s8 + $0x30] sm:$0xf]
  %v515 = vld [vmem:[%s8 + $0x34] sm:$0xf]
  %v516 = vld [vmem:[%s8 + $0x38] sm:$0xf]
  %v517 = vld [vmem:[%s8 + $0x3c] sm:$0xf]
  %v534 = vunpack.c.l.b16 %v502
  %v535 = vunpack.c.l.b16 %v503
  %v536 = vunpack.c.l.b16 %v504
  %v537 = vunpack.c.l.b16 %v505
  %v538 = vunpack.c.l.b16 %v506
  %v539 = vunpack.c.l.b16 %v507
  %v540 = vunpack.c.l.b16 %v508
  %v541 = vunpack.c.l.b16 %v509
  %v542 = vunpack.c.l.b16 %v510
  %v543 = vunpack.c.l.b16 %v511
  %v544 = vunpack.c.l.b16 %v512
  %v545 = vunpack.c.l.b16 %v513
  %v546 = vunpack.c.l.b16 %v514
  %v547 = vunpack.c.l.b16 %v515
  %v548 = vunpack.c.l.b16 %v516
  %v549 = vunpack.c.l.b16 %v517
  %v550 = vpack.c.b16 %v535, %v534
  %v551 = vpack.c.b16 %v537, %v536
  %v552 = vpack.c.b16 %v539, %v538
  %v553 = vpack.c.b16 %v541, %v540
  %v554 = vpack.c.b16 %v543, %v542
  %v555 = vpack.c.b16 %v545, %v544
  %v556 = vpack.c.b16 %v547, %v546
  %v557 = vpack.c.b16 %v549, %v548
  %566 = vmatprep.subr.bf16.mxu0 0
  %567 = vmatpush1.bf16.msra.mxu0 %v550
  %568 = vmatprep.subr.bf16.mxu0 0
  %569 = vmatpush1.bf16.msra.mxu0 %v551
  %570 = vmatprep.subr.bf16.mxu0 0
  %571 = vmatpush1.bf16.msra.mxu0 %v552
  %572 = vmatprep.subr.bf16.mxu0 0
  %573 = vmatpush1.bf16.msra.mxu0 %v553
  %574 = vmatprep.subr.bf16.mxu0 0
  %575 = vmatpush1.bf16.msra.mxu0 %v554
  %576 = vmatprep.subr.bf16.mxu0 0
  %577 = vmatpush1.bf16.msra.mxu0 %v555
  %578 = vmatprep.subr.bf16.mxu0 0
  %579 = vmatpush1.bf16.msra.mxu0 %v556
  %580 = vmatprep.subr.bf16.mxu0 0
  %581 = vmatpush1.bf16.msra.mxu0 %v557
  %582 = vmatprep.subr.bf16.mxu0 0
  %583 = vmatpush1.bf16.msra.mxu0 0
  %584 = vmatprep.subr.bf16.mxu0 0
  %585 = vmatpush1.bf16.msra.mxu0 0
  %586 = vmatprep.subr.bf16.mxu0 0
  %587 = vmatpush1.bf16.msra.mxu0 0
  %588 = vmatprep.subr.bf16.mxu0 0
  %589 = vmatpush1.bf16.msra.mxu0 0
  %590 = vmatprep.subr.bf16.mxu0 0
  %591 = vmatpush1.bf16.msra.mxu0 0
  %592 = vmatprep.subr.bf16.mxu0 0
  %593 = vmatpush1.bf16.msra.mxu0 0
  %594 = vmatprep.subr.bf16.mxu0 0
  %595 = vmatpush1.bf16.msra.mxu0 0
  %596 = vmatprep.subr.bf16.mxu0 0
  %597 = vmatpush1.bf16.msra.mxu0 0
  %598 = vmatprep.mubr.bf16.mxu0 0
  %599 = vmatmul.mubr.bf16.gmra.mrb[0].mxu0 %v501
  %v600 = vpop.f32.mrb[0].mxu0
  %v601 = vadd.f32 0.0, %v600
  %v602 = vpop.f32.mrb[0].mxu0
  %v603 = vpop.f32.mrb[0].mxu0
  %v604 = vpop.f32.mrb[0].mxu0
  %605 = vdwg.mxu0
  %v606 = vld [vmem:[%s9] sm:$0x1]
  %v607 = vld [vmem:[%s10] sm:$0x1]
  %v608 = vrot.slane %v601, 4
  %v609 = vadd.f32 %v601, %v608
  %v610 = vrot.slane %v609, 2
  %v611 = vadd.f32 %v609, %v610
  %v612 = vrot.slane %v611, 1
  %v613 = vadd.f32 %v611, %v612
  %v614 = vmul.f32 %v613, %v332
  %v615 = vsub.f32 %v601, %v614
  %v616 = vmul.f32 %v615, %v615
  %v617 = vrot.slane %v616, 4
  %v618 = vadd.f32 %v616, %v617
  %v619 = vrot.slane %v618, 2
  %v620 = vadd.f32 %v618, %v619
  %v621 = vrot.slane %v620, 1
  %v622 = vadd.f32 %v620, %v621
  %v623 = vmul.f32 %v622, %v332
  %v624 = vadd.f32 %v623, 1e-05
  %v625 = vrsqrt.pop %v624
  %v626 = vmul.f32 %v625, %v606
  %v627 = vmul.f32 %v614, %v626
  %v628 = vsub.f32 %v607, %v627
  %v629 = vlaneseq
  %v630 = vshrl.u32 %v629, 7
  %v631 = vsub.s32 0, %v630
  %v632 = vrot.slane %v626, %v631
  %v633 = vmul.f32 %v601, %v632
  %v635 = vlaneseq
  %v636 = vshrl.u32 %v635, 7
  %v637 = vsub.s32 0, %v636
  %v638 = vrot.slane %v628, %v637
  %v640 = vadd.f32 %v633, %v638
  %v641 = vadd.f32 %v500, %v640
  %v642 = vmax.f32 %v641, 0.0
  %v643 = vpack.c.bf16 %v642, %v642
  %644 = vst [vmem:[%s11] sm:$0xf] %v643
  // Predicated region
  $region46: #{model_forward.16} parent=0 // pred_check
    _
  $region47: #{model_forward.16} parent=0 // pred_check_branch
    %646 = sbr.rel (0) target = $region49
  $region48: #{model_forward.16} parent=0 // pred_region
    _
  $region49: #{model_forward.16} parent=0 // pred_fallthru
    _
  // Predicated region
  $region50: #{model_forward.16} parent=0 // pred_check
    _
  $region51: #{model_forward.16} parent=0 // pred_check_branch
    %648 = sbr.rel (0) target = $region53
  $region52: #{model_forward.16} parent=0 // pred_region
    _
  $region53: #{model_forward.16} parent=0 // pred_fallthru
    _

// kernel: model_forward.19
$region0: #{model_forward.19}
  #allocation0 [shape = 'u32[]', space=smem, size = 0x4, offset = 0x4, fixed_abs, tag = 'smem constant byte address 0x4 - core index']
  #allocation1 [shape = 'u32[144,128]{1,0:T(1,128)}', space=vmem, size = 0x12000, scoped, tag = 'internal scratch']
  %s0 = inlined_call_operand.vmem [shape: bf16[2,1,256], index: 0, kind: input, shape index: {}]
  %s1 = inlined_call_operand.vmem [shape: f32[256,128], index: 1, kind: input, shape index: {}]
  %s2 = inlined_call_operand.vmem [shape: f32[1,128], index: 2, kind: input, shape index: {}]
  %s3 = inlined_call_operand.vmem [shape: f32[2,128], index: 3, kind: output, shape index: {}]
  %s4 = sld [smem:[#allocation0]]
  $region22: #{model_forward.19} parent=0
    _
  %s6 = ssub.s32 1, %s4
  %s7 = scalar_select 0, %s6, %s4
  // Predicated region
  $region2: #{model_forward.19} parent=0 // pred_check
    _
  $region3: #{model_forward.19} parent=0 // pred_check_branch
    %9 = sbr.rel (0) target = $region5
  $region4: #{model_forward.19} parent=0 // pred_region
    _
  $region5: #{model_forward.19} parent=0 // pred_fallthru
    _
  // Predicated region
  $region6: #{model_forward.19} parent=0 // pred_check
    _
  $region7: #{model_forward.19} parent=0 // pred_check_branch
    %11 = sbr.rel (0) target = $region9
  $region8: #{model_forward.19} parent=0 // pred_region
    _
  $region9: #{model_forward.19} parent=0 // pred_fallthru
    _
  // Predicated region
  $region10: #{model_forward.19} parent=0 // pred_check
    _
  $region11: #{model_forward.19} parent=0 // pred_check_branch
    %13 = sbr.rel (0) target = $region13
  $region12: #{model_forward.19} parent=0 // pred_region
    _
  $region13: #{model_forward.19} parent=0 // pred_fallthru
    _
  %v14 = vld [vmem:[%s0] sm:$0x3]
  %v15 = vld [vmem:[%s0 + $0x2] sm:$0x3]
  %v16 = vunpack.c.l.bf16 %v14
  %v17 = vunpack.c.l.bf16 %v15
  %v18 = vadd.f32 %v16, 0.0
  %v19 = vadd.f32 %v17, 0.0
  %v20 = vld [vmem:[%s1] sm:$0xff]
  %v21 = vld [vmem:[%s1 + $0x8] sm:$0xff]
  %v22 = vld [vmem:[%s1 + $0x10] sm:$0xff]
  %v23 = vld [vmem:[%s1 + $0x18] sm:$0xff]
  %v24 = vld [vmem:[%s1 + $0x20] sm:$0xff]
  %v25 = vld [vmem:[%s1 + $0x28] sm:$0xff]
  %v26 = vld [vmem:[%s1 + $0x30] sm:$0xff]
  %v27 = vld [vmem:[%s1 + $0x38] sm:$0xff]
  %v28 = vld [vmem:[%s1 + $0x40] sm:$0xff]
  %v29 = vld [vmem:[%s1 + $0x48] sm:$0xff]
  %v30 = vld [vmem:[%s1 + $0x50] sm:$0xff]
  %v31 = vld [vmem:[%s1 + $0x58] sm:$0xff]
  %v32 = vld [vmem:[%s1 + $0x60] sm:$0xff]
  %v33 = vld [vmem:[%s1 + $0x68] sm:$0xff]
  %v34 = vld [vmem:[%s1 + $0x70] sm:$0xff]
  %v35 = vld [vmem:[%s1 + $0x78] sm:$0xff]
  %v36 = vld [vmem:[%s1 + $0x80] sm:$0xff]
  %v37 = vld [vmem:[%s1 + $0x88] sm:$0xff]
  %v38 = vld [vmem:[%s1 + $0x90] sm:$0xff]
  %v39 = vld [vmem:[%s1 + $0x98] sm:$0xff]
  %v40 = vld [vmem:[%s1 + $0xa0] sm:$0xff]
  %v41 = vld [vmem:[%s1 + $0xa8] sm:$0xff]
  %v42 = vld [vmem:[%s1 + $0xb0] sm:$0xff]
  %v43 = vld [vmem:[%s1 + $0xb8] sm:$0xff]
  %v44 = vld [vmem:[%s1 + $0xc0] sm:$0xff]
  %v45 = vld [vmem:[%s1 + $0xc8] sm:$0xff]
  %v46 = vld [vmem:[%s1 + $0xd0] sm:$0xff]
  %v47 = vld [vmem:[%s1 + $0xd8] sm:$0xff]
  %v48 = vld [vmem:[%s1 + $0xe0] sm:$0xff]
  %v49 = vld [vmem:[%s1 + $0xe8] sm:$0xff]
  %v50 = vld [vmem:[%s1 + $0xf0] sm:$0xff]
  %v51 = vld [vmem:[%s1 + $0xf8] sm:$0xff]
  %v52 = vld [vmem:[%s2] sm:$0x1]
  %v54 = vlaneseq
  %v55 = vshrl.u32 %v54, 7
  %v56 = vsub.s32 0, %v55
  %v57 = vrot.slane %v52, %v56
  %v61 = vlaneseq
  %v62 = vshrl.u32 %v61, 7
  %v63 = vsub.s32 0, %v62
  %v64 = vrot.slane %v18, %v63
  %v65 = vlaneseq
  %v66 = vshrl.u32 %v65, 7
  %v67 = vsub.s32 2, %v66
  %v68 = vrot.slane %v18, %v67
  %v69 = vlaneseq
  %v70 = vshrl.u32 %v69, 7
  %v71 = vsub.s32 0, %v70
  %v72 = vrot.slane %v19, %v71
  %v73 = vlaneseq
  %v74 = vshrl.u32 %v73, 7
  %v75 = vsub.s32 2, %v74
  %v76 = vrot.slane %v19, %v75
  %vm77 = vcmask 1041409
  %v78 = vsel %vm77, %v72, %v64
  %v79 = vsel %vm77, %v76, %v68
  %82 = vmatprep.subr.mxu0 0.0
  %83 = vmatpush1.msra.mxu0 %v20
  %84 = vmatprep.subr.mxu0 0.0
  %85 = vmatpush1.msra.mxu0 %v21
  %86 = vmatprep.subr.mxu0 0.0
  %87 = vmatpush1.msra.mxu0 %v22
  %88 = vmatprep.subr.mxu0 0.0
  %89 = vmatpush1.msra.mxu0 %v23
  %90 = vmatprep.subr.mxu0 0.0
  %91 = vmatpush1.msra.mxu0 %v24
  %92 = vmatprep.subr.mxu0 0.0
  %93 = vmatpush1.msra.mxu0 %v25
  %94 = vmatprep.subr.mxu0 0.0
  %95 = vmatpush1.msra.mxu0 %v26
  %96 = vmatprep.subr.mxu0 0.0
  %97 = vmatpush1.msra.mxu0 %v27
  %98 = vmatprep.subr.mxu0 0.0
  %99 = vmatpush1.msra.mxu0 %v28
  %100 = vmatprep.subr.mxu0 0.0
  %101 = vmatpush1.msra.mxu0 %v29
  %102 = vmatprep.subr.mxu0 0.0
  %103 = vmatpush1.msra.mxu0 %v30
  %104 = vmatprep.subr.mxu0 0.0
  %105 = vmatpush1.msra.mxu0 %v31
  %106 = vmatprep.subr.mxu0 0.0
  %107 = vmatpush1.msra.mxu0 %v32
  %108 = vmatprep.subr.mxu0 0.0
  %109 = vmatpush1.msra.mxu0 %v33
  %110 = vmatprep.subr.mxu0 0.0
  %111 = vmatpush1.msra.mxu0 %v34
  %112 = vmatprep.subr.mxu0 0.0
  %113 = vmatpush1.msra.mxu0 %v35
  %114 = vmatprep.subr.mxu0 0.0
  %115 = vmatpush1.msra.mxu0 %v36
  %116 = vmatprep.subr.mxu0 0.0
  %117 = vmatpush1.msra.mxu0 %v37
  %118 = vmatprep.subr.mxu0 0.0
  %119 = vmatpush1.msra.mxu0 %v38
  %120 = vmatprep.subr.mxu0 0.0
  %121 = vmatpush1.msra.mxu0 %v39
  %122 = vmatprep.subr.mxu0 0.0
  %123 = vmatpush1.msra.mxu0 %v40
  %124 = vmatprep.subr.mxu0 0.0
  %125 = vmatpush1.msra.mxu0 %v41
  %126 = vmatprep.subr.mxu0 0.0
  %127 = vmatpush1.msra.mxu0 %v42
  %128 = vmatprep.subr.mxu0 0.0
  %129 = vmatpush1.msra.mxu0 %v43
  %130 = vmatprep.subr.mxu0 0.0
  %131 = vmatpush1.msra.mxu0 %v44
  %132 = vmatprep.subr.mxu0 0.0
  %133 = vmatpush1.msra.mxu0 %v45
  %134 = vmatprep.subr.mxu0 0.0
  %135 = vmatpush1.msra.mxu0 %v46
  %136 = vmatprep.subr.mxu0 0.0
  %137 = vmatpush1.msra.mxu0 %v47
  %138 = vmatprep.subr.mxu0 0.0
  %139 = vmatpush1.msra.mxu0 %v48
  %140 = vmatprep.subr.mxu0 0.0
  %141 = vmatpush1.msra.mxu0 %v49
  %142 = vmatprep.subr.mxu0 0.0
  %143 = vmatpush1.msra.mxu0 %v50
  %144 = vmatprep.subr.mxu0 0.0
  %145 = vmatpush1.msra.mxu0 %v51
  %146 = vmatprep.mubr.f32.mxu0 %v79
  %147 = vmatmul.mubr.f32.gmra.mrb[0].mxu0 %v78
  %v148 = vpop.f32.mrb[0].mxu0
  %v149 = vadd.f32 %v57, %v148
  %v150 = vpop.f32.mrb[0].mxu0
  %151 = vdwg.mxu0
  %152 = vst [vmem:[%s3] sm:$0x3] %v149
  // Predicated region
  $region14: #{model_forward.19} parent=0 // pred_check
    _
  $region15: #{model_forward.19} parent=0 // pred_check_branch
    %154 = sbr.rel (0) target = $region17
  $region16: #{model_forward.19} parent=0 // pred_region
    _
  $region17: #{model_forward.19} parent=0 // pred_fallthru
    _
  // Predicated region
  $region18: #{model_forward.19} parent=0 // pred_check
    _
  $region19: #{model_forward.19} parent=0 // pred_check_branch
    %156 = sbr.rel (0) target = $region21
  $region20: #{model_forward.19} parent=0 // pred_region
    _
  $region21: #{model_forward.19} parent=0 // pred_fallthru
    _

// kernel: model_forward.18
$region0: #{model_forward.18}
  #allocation0 [shape = 'u32[]', space=smem, size = 0x4, offset = 0x4, fixed_abs, tag = 'smem constant byte address 0x4 - core index']
  #allocation1 [shape = 'u32[144,128]{1,0:T(1,128)}', space=vmem, size = 0x12000, scoped, tag = 'internal scratch']
  %s0 = inlined_call_operand.vmem [shape: bf16[2,640], index: 0, kind: input, shape index: {}]
  %s1 = inlined_call_operand.vmem [shape: bf16[640,128], index: 1, kind: input, shape index: {}]
  %s2 = inlined_call_operand.vmem [shape: f32[1,128], index: 2, kind: input, shape index: {}]
  %s3 = inlined_call_operand.vmem [shape: f32[1,128], index: 3, kind: input, shape index: {}]
  %s4 = inlined_call_operand.vmem [shape: bf16[128,256], index: 4, kind: input, shape index: {}]
  %s5 = inlined_call_operand.vmem [shape: f32[1,256], index: 5, kind: input, shape index: {}]
  %s6 = inlined_call_operand.vmem [shape: f32[1,256], index: 6, kind: input, shape index: {}]
  %s7 = inlined_call_operand.vmem [shape: bf16[2,128], index: 7, kind: input, shape index: {}]
  %s8 = inlined_call_operand.vmem [shape: bf16[128,256], index: 8, kind: input, shape index: {}]
  %s9 = inlined_call_operand.vmem [shape: f32[1,256], index: 9, kind: input, shape index: {}]
  %s10 = inlined_call_operand.vmem [shape: f32[1,256], index: 10, kind: input, shape index: {}]
  %s11 = inlined_call_operand.vmem [shape: bf16[2,256], index: 11, kind: output, shape index: {}]
  %s12 = sld [smem:[#allocation0]]
  $region54: #{model_forward.18} parent=0
    _
  %s14 = ssub.s32 1, %s12
  %s15 = scalar_select 0, %s14, %s12
  // Predicated region
  $region2: #{model_forward.18} parent=0 // pred_check
    _
  $region3: #{model_forward.18} parent=0 // pred_check_branch
    %17 = sbr.rel (0) target = $region5
  $region4: #{model_forward.18} parent=0 // pred_region
    _
  $region5: #{model_forward.18} parent=0 // pred_fallthru
    _
  // Predicated region
  $region6: #{model_forward.18} parent=0 // pred_check
    _
  $region7: #{model_forward.18} parent=0 // pred_check_branch
    %19 = sbr.rel (0) target = $region9
  $region8: #{model_forward.18} parent=0 // pred_region
    _
  $region9: #{model_forward.18} parent=0 // pred_fallthru
    _
  // Predicated region
  $region10: #{model_forward.18} parent=0 // pred_check
    _
  $region11: #{model_forward.18} parent=0 // pred_check_branch
    %21 = sbr.rel (0) target = $region13
  $region12: #{model_forward.18} parent=0 // pred_region
    _
  $region13: #{model_forward.18} parent=0 // pred_fallthru
    _
  // Predicated region
  $region14: #{model_forward.18} parent=0 // pred_check
    _
  $region15: #{model_forward.18} parent=0 // pred_check_branch
    %23 = sbr.rel (0) target = $region17
  $region16: #{model_forward.18} parent=0 // pred_region
    _
  $region17: #{model_forward.18} parent=0 // pred_fallthru
    _
  // Predicated region
  $region18: #{model_forward.18} parent=0 // pred_check
    _
  $region19: #{model_forward.18} parent=0 // pred_check_branch
    %25 = sbr.rel (0) target = $region21
  $region20: #{model_forward.18} parent=0 // pred_region
    _
  $region21: #{model_forward.18} parent=0 // pred_fallthru
    _
  // Predicated region
  $region22: #{model_forward.18} parent=0 // pred_check
    _
  $region23: #{model_forward.18} parent=0 // pred_check_branch
    %27 = sbr.rel (0) target = $region25
  $region24: #{model_forward.18} parent=0 // pred_region
    _
  $region25: #{model_forward.18} parent=0 // pred_fallthru
    _
  // Predicated region
  $region26: #{model_forward.18} parent=0 // pred_check
    _
  $region27: #{model_forward.18} parent=0 // pred_check_branch
    %29 = sbr.rel (0) target = $region29
  $region28: #{model_forward.18} parent=0 // pred_region
    _
  $region29: #{model_forward.18} parent=0 // pred_fallthru
    _
  // Predicated region
  $region30: #{model_forward.18} parent=0 // pred_check
    _
  $region31: #{model_forward.18} parent=0 // pred_check_branch
    %31 = sbr.rel (0) target = $region33
  $region32: #{model_forward.18} parent=0 // pred_region
    _
  $region33: #{model_forward.18} parent=0 // pred_fallthru
    _
  // Predicated region
  $region34: #{model_forward.18} parent=0 // pred_check
    _
  $region35: #{model_forward.18} parent=0 // pred_check_branch
    %33 = sbr.rel (0) target = $region37
  $region36: #{model_forward.18} parent=0 // pred_region
    _
  $region37: #{model_forward.18} parent=0 // pred_fallthru
    _
  // Predicated region
  $region38: #{model_forward.18} parent=0 // pred_check
    _
  $region39: #{model_forward.18} parent=0 // pred_check_branch
    %35 = sbr.rel (0) target = $region41
  $region40: #{model_forward.18} parent=0 // pred_region
    _
  $region41: #{model_forward.18} parent=0 // pred_fallthru
    _
  // Predicated region
  $region42: #{model_forward.18} parent=0 // pred_check
    _
  $region43: #{model_forward.18} parent=0 // pred_check_branch
    %37 = sbr.rel (0) target = $region45
  $region44: #{model_forward.18} parent=0 // pred_region
    _
  $region45: #{model_forward.18} parent=0 // pred_fallthru
    _
  %v39 = vld [vmem:[%s0] sm:$0x1f]
  %v40 = vld [vmem:[%s1] sm:$0xf]
  %v41 = vld [vmem:[%s1 + $0x4] sm:$0xf]
  %v42 = vld [vmem:[%s1 + $0x8] sm:$0xf]
  %v43 = vld [vmem:[%s1 + $0xc] sm:$0xf]
  %v44 = vld [vmem:[%s1 + $0x10] sm:$0xf]
  %v45 = vld [vmem:[%s1 + $0x14] sm:$0xf]
  %v46 = vld [vmem:[%s1 + $0x18] sm:$0xf]
  %v47 = vld [vmem:[%s1 + $0x1c] sm:$0xf]
  %v48 = vld [vmem:[%s1 + $0x20] sm:$0xf]
  %v49 = vld [vmem:[%s1 + $0x24] sm:$0xf]
  %v50 = vld [vmem:[%s1 + $0x28] sm:$0xf]
  %v51 = vld [vmem:[%s1 + $0x2c] sm:$0xf]
  %v52 = vld [vmem:[%s1 + $0x30] sm:$0xf]
  %v53 = vld [vmem:[%s1 + $0x34] sm:$0xf]
  %v54 = vld [vmem:[%s1 + $0x38] sm:$0xf]
  %v55 = vld [vmem:[%s1 + $0x3c] sm:$0xf]
  %v56 = vld [vmem:[%s1 + $0x40] sm:$0xf]
  %v57 = vld [vmem:[%s1 + $0x44] sm:$0xf]
  %v58 = vld [vmem:[%s1 + $0x48] sm:$0xf]
  %v59 = vld [vmem:[%s1 + $0x4c] sm:$0xf]
  %v60 = vld [vmem:[%s1 + $0x50] sm:$0xf]
  %v61 = vld [vmem:[%s1 + $0x54] sm:$0xf]
  %v62 = vld [vmem:[%s1 + $0x58] sm:$0xf]
  %v63 = vld [vmem:[%s1 + $0x5c] sm:$0xf]
  %v64 = vld [vmem:[%s1 + $0x60] sm:$0xf]
  %v65 = vld [vmem:[%s1 + $0x64] sm:$0xf]
  %v66 = vld [vmem:[%s1 + $0x68] sm:$0xf]
  %v67 = vld [vmem:[%s1 + $0x6c] sm:$0xf]
  %v68 = vld [vmem:[%s1 + $0x70] sm:$0xf]
  %v69 = vld [vmem:[%s1 + $0x74] sm:$0xf]
  %v70 = vld [vmem:[%s1 + $0x78] sm:$0xf]
  %v71 = vld [vmem:[%s1 + $0x7c] sm:$0xf]
  %v72 = vld [vmem:[%s1 + $0x80] sm:$0xf]
  %v73 = vld [vmem:[%s1 + $0x84] sm:$0xf]
  %v74 = vld [vmem:[%s1 + $0x88] sm:$0xf]
  %v75 = vld [vmem:[%s1 + $0x8c] sm:$0xf]
  %v76 = vld [vmem:[%s1 + $0x90] sm:$0xf]
  %v77 = vld [vmem:[%s1 + $0x94] sm:$0xf]
  %v78 = vld [vmem:[%s1 + $0x98] sm:$0xf]
  %v79 = vld [vmem:[%s1 + $0x9c] sm:$0xf]
  %v80 = vld [vmem:[%s1 + $0xa0] sm:$0xf]
  %v81 = vld [vmem:[%s1 + $0xa4] sm:$0xf]
  %v82 = vld [vmem:[%s1 + $0xa8] sm:$0xf]
  %v83 = vld [vmem:[%s1 + $0xac] sm:$0xf]
  %v84 = vld [vmem:[%s1 + $0xb0] sm:$0xf]
  %v85 = vld [vmem:[%s1 + $0xb4] sm:$0xf]
  %v86 = vld [vmem:[%s1 + $0xb8] sm:$0xf]
  %v87 = vld [vmem:[%s1 + $0xbc] sm:$0xf]
  %v88 = vld [vmem:[%s1 + $0xc0] sm:$0xf]
  %v89 = vld [vmem:[%s1 + $0xc4] sm:$0xf]
  %v90 = vld [vmem:[%s1 + $0xc8] sm:$0xf]
  %v91 = vld [vmem:[%s1 + $0xcc] sm:$0xf]
  %v92 = vld [vmem:[%s1 + $0xd0] sm:$0xf]
  %v93 = vld [vmem:[%s1 + $0xd4] sm:$0xf]
  %v94 = vld [vmem:[%s1 + $0xd8] sm:$0xf]
  %v95 = vld [vmem:[%s1 + $0xdc] sm:$0xf]
  %v96 = vld [vmem:[%s1 + $0xe0] sm:$0xf]
  %v97 = vld [vmem:[%s1 + $0xe4] sm:$0xf]
  %v98 = vld [vmem:[%s1 + $0xe8] sm:$0xf]
  %v99 = vld [vmem:[%s1 + $0xec] sm:$0xf]
  %v100 = vld [vmem:[%s1 + $0xf0] sm:$0xf]
  %v101 = vld [vmem:[%s1 + $0xf4] sm:$0xf]
  %v102 = vld [vmem:[%s1 + $0xf8] sm:$0xf]
  %v103 = vld [vmem:[%s1 + $0xfc] sm:$0xf]
  %v104 = vld [vmem:[%s1 + $0x100] sm:$0xf]
  %v105 = vld [vmem:[%s1 + $0x104] sm:$0xf]
  %v106 = vld [vmem:[%s1 + $0x108] sm:$0xf]
  %v107 = vld [vmem:[%s1 + $0x10c] sm:$0xf]
  %v108 = vld [vmem:[%s1 + $0x110] sm:$0xf]
  %v109 = vld [vmem:[%s1 + $0x114] sm:$0xf]
  %v110 = vld [vmem:[%s1 + $0x118] sm:$0xf]
  %v111 = vld [vmem:[%s1 + $0x11c] sm:$0xf]
  %v112 = vld [vmem:[%s1 + $0x120] sm:$0xf]
  %v113 = vld [vmem:[%s1 + $0x124] sm:$0xf]
  %v114 = vld [vmem:[%s1 + $0x128] sm:$0xf]
  %v115 = vld [vmem:[%s1 + $0x12c] sm:$0xf]
  %v116 = vld [vmem:[%s1 + $0x130] sm:$0xf]
  %v117 = vld [vmem:[%s1 + $0x134] sm:$0xf]
  %v118 = vld [vmem:[%s1 + $0x138] sm:$0xf]
  %v119 = vld [vmem:[%s1 + $0x13c] sm:$0xf]
  %v121 = vcombine.high %v39, %v39
  %v123 = vunpack.c.l.s4 1966171168
  %v124 = vunpack.c.0.s8 %v123
  %v125 = vlaneseq
  %v126 = vshrl.u32 %v125, 7
  %v127 = vsub.s32 %v124, %v126
  %v128 = vrot.slane %v39, %v127
  %v130 = vunpack.c.l.s4 1966171168
  %v131 = vunpack.c.0.s8 %v130
  %v132 = vlaneseq
  %v133 = vshrl.u32 %v132, 7
  %v134 = vsub.s32 %v131, %v133
  %v135 = vrot.slane %v121, %v134
  %v136 = vcombine.high %v128, %v128
  %v138 = vunpack.c.l.s4 1966171168
  %v139 = vunpack.c.0.s8 %v138
  %v140 = vlaneseq
  %v141 = vshrl.u32 %v140, 7
  %v142 = vsub.s32 %v139, %v141
  %v143 = vrot.slane %v128, %v142
  %v145 = vunpack.c.l.s4 1966171168
  %v146 = vunpack.c.0.s8 %v145
  %v147 = vlaneseq
  %v148 = vshrl.u32 %v147, 7
  %v149 = vsub.s32 %v146, %v148
  %v150 = vrot.slane %v135, %v149
  %v152 = vunpack.c.l.s4 1966171168
  %v153 = vunpack.c.0.s8 %v152
  %v154 = vlaneseq
  %v155 = vshrl.u32 %v154, 7
  %v156 = vsub.s32 %v153, %v155
  %v157 = vrot.slane %v136, %v156
  %v158 = vcombine.high %v143, %v143
  %v159 = vcombine.high %v157, %v157
  %v245 = vunpack.c.l.b16 %v40
  %v246 = vunpack.c.l.b16 %v41
  %v247 = vunpack.c.l.b16 %v42
  %v248 = vunpack.c.l.b16 %v43
  %v249 = vunpack.c.l.b16 %v44
  %v250 = vunpack.c.l.b16 %v45
  %v251 = vunpack.c.l.b16 %v46
  %v252 = vunpack.c.l.b16 %v47
  %v253 = vunpack.c.l.b16 %v48
  %v254 = vunpack.c.l.b16 %v49
  %v255 = vunpack.c.l.b16 %v50
  %v256 = vunpack.c.l.b16 %v51
  %v257 = vunpack.c.l.b16 %v52
  %v258 = vunpack.c.l.b16 %v53
  %v259 = vunpack.c.l.b16 %v54
  %v260 = vunpack.c.l.b16 %v55
  %v261 = vunpack.c.l.b16 %v56
  %v262 = vunpack.c.l.b16 %v57
  %v263 = vunpack.c.l.b16 %v58
  %v264 = vunpack.c.l.b16 %v59
  %v265 = vunpack.c.l.b16 %v60
  %v266 = vunpack.c.l.b16 %v61
  %v267 = vunpack.c.l.b16 %v62
  %v268 = vunpack.c.l.b16 %v63
  %v269 = vunpack.c.l.b16 %v64
  %v270 = vunpack.c.l.b16 %v65
  %v271 = vunpack.c.l.b16 %v66
  %v272 = vunpack.c.l.b16 %v67
  %v273 = vunpack.c.l.b16 %v68
  %v274 = vunpack.c.l.b16 %v69
  %v275 = vunpack.c.l.b16 %v70
  %v276 = vunpack.c.l.b16 %v71
  %v277 = vunpack.c.l.b16 %v72
  %v278 = vunpack.c.l.b16 %v73
  %v279 = vunpack.c.l.b16 %v74
  %v280 = vunpack.c.l.b16 %v75
  %v281 = vunpack.c.l.b16 %v76
  %v282 = vunpack.c.l.b16 %v77
  %v283 = vunpack.c.l.b16 %v78
  %v284 = vunpack.c.l.b16 %v79
  %v285 = vunpack.c.l.b16 %v80
  %v286 = vunpack.c.l.b16 %v81
  %v287 = vunpack.c.l.b16 %v82
  %v288 = vunpack.c.l.b16 %v83
  %v289 = vunpack.c.l.b16 %v84
  %v290 = vunpack.c.l.b16 %v85
  %v291 = vunpack.c.l.b16 %v86
  %v292 = vunpack.c.l.b16 %v87
  %v293 = vunpack.c.l.b16 %v88
  %v294 = vunpack.c.l.b16 %v89
  %v295 = vunpack.c.l.b16 %v90
  %v296 = vunpack.c.l.b16 %v91
  %v297 = vunpack.c.l.b16 %v92
  %v298 = vunpack.c.l.b16 %v93
  %v299 = vunpack.c.l.b16 %v94
  %v300 = vunpack.c.l.b16 %v95
  %v301 = vunpack.c.l.b16 %v96
  %v302 = vunpack.c.l.b16 %v97
  %v303 = vunpack.c.l.b16 %v98
  %v304 = vunpack.c.l.b16 %v99
  %v305 = vunpack.c.l.b16 %v100
  %v306 = vunpack.c.l.b16 %v101
  %v307 = vunpack.c.l.b16 %v102
  %v308 = vunpack.c.l.b16 %v103
  %v309 = vunpack.c.l.b16 %v104
  %v310 = vunpack.c.l.b16 %v105
  %v311 = vunpack.c.l.b16 %v106
  %v312 = vunpack.c.l.b16 %v107
  %v313 = vunpack.c.l.b16 %v108
  %v314 = vunpack.c.l.b16 %v109
  %v315 = vunpack.c.l.b16 %v110
  %v316 = vunpack.c.l.b16 %v111
  %v317 = vunpack.c.l.b16 %v112
  %v318 = vunpack.c.l.b16 %v113
  %v319 = vunpack.c.l.b16 %v114
  %v320 = vunpack.c.l.b16 %v115
  %v321 = vunpack.c.l.b16 %v116
  %v322 = vunpack.c.l.b16 %v117
  %v323 = vunpack.c.l.b16 %v118
  %v324 = vunpack.c.l.b16 %v119
  %v325 = vpack.c.b16 %v246, %v245
  %v326 = vpack.c.b16 %v248, %v247
  %v327 = vpack.c.b16 %v250, %v249
  %v328 = vpack.c.b16 %v252, %v251
  %v329 = vpack.c.b16 %v254, %v253
  %v330 = vpack.c.b16 %v256, %v255
  %v331 = vpack.c.b16 %v258, %v257
  %v332 = vpack.c.b16 %v260, %v259
  %v333 = vpack.c.b16 %v262, %v261
  %v334 = vpack.c.b16 %v264, %v263
  %v335 = vpack.c.b16 %v266, %v265
  %v336 = vpack.c.b16 %v268, %v267
  %v337 = vpack.c.b16 %v270, %v269
  %v338 = vpack.c.b16 %v272, %v271
  %v339 = vpack.c.b16 %v274, %v273
  %v340 = vpack.c.b16 %v276, %v275
  %v341 = vpack.c.b16 %v278, %v277
  %v342 = vpack.c.b16 %v280, %v279
  %v343 = vpack.c.b16 %v282, %v281
  %v344 = vpack.c.b16 %v284, %v283
  %v345 = vpack.c.b16 %v286, %v285
  %v346 = vpack.c.b16 %v288, %v287
  %v347 = vpack.c.b16 %v290, %v289
  %v348 = vpack.c.b16 %v292, %v291
  %v349 = vpack.c.b16 %v294, %v293
  %v350 = vpack.c.b16 %v296, %v295
  %v351 = vpack.c.b16 %v298, %v297
  %v352 = vpack.c.b16 %v300, %v299
  %v353 = vpack.c.b16 %v302, %v301
  %v354 = vpack.c.b16 %v304, %v303
  %v355 = vpack.c.b16 %v306, %v305
  %v356 = vpack.c.b16 %v308, %v307
  %v357 = vpack.c.b16 %v310, %v309
  %v358 = vpack.c.b16 %v312, %v311
  %v359 = vpack.c.b16 %v314, %v313
  %v360 = vpack.c.b16 %v316, %v315
  %v361 = vpack.c.b16 %v318, %v317
  %v362 = vpack.c.b16 %v320, %v319
  %v363 = vpack.c.b16 %v322, %v321
  %v364 = vpack.c.b16 %v324, %v323
  %405 = vmatprep.subr.bf16.mxu0 0
  %406 = vmatpush1.bf16.msra.mxu0 %v325
  %407 = vmatprep.subr.bf16.mxu0 0
  %408 = vmatpush1.bf16.msra.mxu0 %v326
  %409 = vmatprep.subr.bf16.mxu0 0
  %410 = vmatpush1.bf16.msra.mxu0 %v327
  %411 = vmatprep.subr.bf16.mxu0 0
  %412 = vmatpush1.bf16.msra.mxu0 %v328
  %413 = vmatprep.subr.bf16.mxu0 0
  %414 = vmatpush1.bf16.msra.mxu0 %v329
  %415 = vmatprep.subr.bf16.mxu0 0
  %416 = vmatpush1.bf16.msra.mxu0 %v330
  %417 = vmatprep.subr.bf16.mxu0 0
  %418 = vmatpush1.bf16.msra.mxu0 %v331
  %419 = vmatprep.subr.bf16.mxu0 0
  %420 = vmatpush1.bf16.msra.mxu0 %v332
  %421 = vmatprep.subr.bf16.mxu0 0
  %422 = vmatpush1.bf16.msra.mxu0 %v333
  %423 = vmatprep.subr.bf16.mxu0 0
  %424 = vmatpush1.bf16.msra.mxu0 %v334
  %425 = vmatprep.subr.bf16.mxu0 0
  %426 = vmatpush1.bf16.msra.mxu0 %v335
  %427 = vmatprep.subr.bf16.mxu0 0
  %428 = vmatpush1.bf16.msra.mxu0 %v336
  %429 = vmatprep.subr.bf16.mxu0 0
  %430 = vmatpush1.bf16.msra.mxu0 %v337
  %431 = vmatprep.subr.bf16.mxu0 0
  %432 = vmatpush1.bf16.msra.mxu0 %v338
  %433 = vmatprep.subr.bf16.mxu0 0
  %434 = vmatpush1.bf16.msra.mxu0 %v339
  %435 = vmatprep.subr.bf16.mxu0 0
  %436 = vmatpush1.bf16.msra.mxu0 %v340
  %437 = vmatprep.mubr.bf16.mxu0 %v157
  %438 = vmatmul.mubr.bf16.gmra.mrb[0].mxu0 %v143
  %v439 = vpop.f32.mrb[0].mxu0
  %v440 = vadd.f32 0.0, %v439
  %v441 = vpop.f32.mrb[0].mxu0
  %v442 = vpop.f32.mrb[0].mxu0
  %v443 = vpop.f32.mrb[0].mxu0
  %444 = vdwg.mxu0
  %445 = vmatprep.subr.bf16.mxu0 0
  %446 = vmatpush1.bf16.msra.mxu0 %v341
  %447 = vmatprep.subr.bf16.mxu0 0
  %448 = vmatpush1.bf16.msra.mxu0 %v342
  %449 = vmatprep.subr.bf16.mxu0 0
  %450 = vmatpush1.bf16.msra.mxu0 %v343
  %451 = vmatprep.subr.bf16.mxu0 0
  %452 = vmatpush1.bf16.msra.mxu0 %v344
  %453 = vmatprep.subr.bf16.mxu0 0
  %454 = vmatpush1.bf16.msra.mxu0 %v345
  %455 = vmatprep.subr.bf16.mxu0 0
  %456 = vmatpush1.bf16.msra.mxu0 %v346
  %457 = vmatprep.subr.bf16.mxu0 0
  %458 = vmatpush1.bf16.msra.mxu0 %v347
  %459 = vmatprep.subr.bf16.mxu0 0
  %460 = vmatpush1.bf16.msra.mxu0 %v348
  %461 = vmatprep.subr.bf16.mxu0 0
  %462 = vmatpush1.bf16.msra.mxu0 %v349
  %463 = vmatprep.subr.bf16.mxu0 0
  %464 = vmatpush1.bf16.msra.mxu0 %v350
  %465 = vmatprep.subr.bf16.mxu0 0
  %466 = vmatpush1.bf16.msra.mxu0 %v351
  %467 = vmatprep.subr.bf16.mxu0 0
  %468 = vmatpush1.bf16.msra.mxu0 %v352
  %469 = vmatprep.subr.bf16.mxu0 0
  %470 = vmatpush1.bf16.msra.mxu0 %v353
  %471 = vmatprep.subr.bf16.mxu0 0
  %472 = vmatpush1.bf16.msra.mxu0 %v354
  %473 = vmatprep.subr.bf16.mxu0 0
  %474 = vmatpush1.bf16.msra.mxu0 %v355
  %475 = vmatprep.subr.bf16.mxu0 0
  %476 = vmatpush1.bf16.msra.mxu0 %v356
  %477 = vmatprep.mubr.bf16.mxu0 %v159
  %478 = vmatmul.mubr.bf16.gmra.mrb[0].mxu0 %v158
  %v479 = vpop.f32.mrb[0].mxu0
  %v480 = vadd.f32 %v440, %v479
  %v481 = vpop.f32.mrb[0].mxu0
  %v482 = vpop.f32.mrb[0].mxu0
  %v483 = vpop.f32.mrb[0].mxu0
  %484 = vdwg.mxu0
  %485 = vmatprep.subr.bf16.mxu0 0
  %486 = vmatpush1.bf16.msra.mxu0 %v357
  %487 = vmatprep.subr.bf16.mxu0 0
  %488 = vmatpush1.bf16.msra.mxu0 %v358
  %489 = vmatprep.subr.bf16.mxu0 0
  %490 = vmatpush1.bf16.msra.mxu0 %v359
  %491 = vmatprep.subr.bf16.mxu0 0
  %492 = vmatpush1.bf16.msra.mxu0 %v360
  %493 = vmatprep.subr.bf16.mxu0 0
  %494 = vmatpush1.bf16.msra.mxu0 %v361
  %495 = vmatprep.subr.bf16.mxu0 0
  %496 = vmatpush1.bf16.msra.mxu0 %v362
  %497 = vmatprep.subr.bf16.mxu0 0
  %498 = vmatpush1.bf16.msra.mxu0 %v363
  %499 = vmatprep.subr.bf16.mxu0 0
  %500 = vmatpush1.bf16.msra.mxu0 %v364
  %501 = vmatprep.subr.bf16.mxu0 0
  %502 = vmatpush1.bf16.msra.mxu0 0
  %503 = vmatprep.subr.bf16.mxu0 0
  %504 = vmatpush1.bf16.msra.mxu0 0
  %505 = vmatprep.subr.bf16.mxu0 0
  %506 = vmatpush1.bf16.msra.mxu0 0
  %507 = vmatprep.subr.bf16.mxu0 0
  %508 = vmatpush1.bf16.msra.mxu0 0
  %509 = vmatprep.subr.bf16.mxu0 0
  %510 = vmatpush1.bf16.msra.mxu0 0
  %511 = vmatprep.subr.bf16.mxu0 0
  %512 = vmatpush1.bf16.msra.mxu0 0
  %513 = vmatprep.subr.bf16.mxu0 0
  %514 = vmatpush1.bf16.msra.mxu0 0
  %515 = vmatprep.subr.bf16.mxu0 0
  %516 = vmatpush1.bf16.msra.mxu0 0
  %517 = vmatprep.mubr.bf16.mxu0 0
  %518 = vmatmul.mubr.bf16.gmra.mrb[0].mxu0 %v150
  %v519 = vpop.f32.mrb[0].mxu0
  %v520 = vadd.f32 %v480, %v519
  %v521 = vpop.f32.mrb[0].mxu0
  %v522 = vpop.f32.mrb[0].mxu0
  %v523 = vpop.f32.mrb[0].mxu0
  %524 = vdwg.mxu0
  %v525 = vld [vmem:[%s2] sm:$0x1]
  %v526 = vld [vmem:[%s3] sm:$0x1]
  %vm527 = vcmask 1041408
  %v528 = vsel %vm527, %v520, 0.0
  %v529 = vrot.slane %v528, 4
  %v530 = vadd.f32 %v528, %v529
  %v531 = vrot.slane %v530, 2
  %v532 = vadd.f32 %v530, %v531
  %v533 = vrot.slane %v532, 1
  %v534 = vadd.f32 %v532, %v533
  %v535 = vrcp.pop 2.0
  %v536 = vmul.f32 %v534, %v535
  %v537 = vsub.f32 %v520, %v536
  %v538 = vmul.f32 %v537, %v537
  %v539 = vsel %vm527, %v538, 0.0
  %v540 = vrot.slane %v539, 4
  %v541 = vadd.f32 %v539, %v540
  %v542 = vrot.slane %v541, 2
  %v543 = vadd.f32 %v541, %v542
  %v544 = vrot.slane %v543, 1
  %v545 = vadd.f32 %v543, %v544
  %v546 = vmul.f32 %v545, %v535
  %v547 = vadd.f32 %v546, 1e-05
  %v548 = vrsqrt.pop %v547
  %v549 = vmul.f32 %v548, %v525
  %v550 = vmul.f32 %v536, %v549
  %v551 = vsub.f32 %v526, %v550
  %v552 = vlaneseq
  %v553 = vshrl.u32 %v552, 7
  %v554 = vsub.s32 0, %v553
  %v555 = vrot.slane %v549, %v554
  %v556 = vmul.f32 %v520, %v555
  %v558 = vlaneseq
  %v559 = vshrl.u32 %v558, 7
  %v560 = vsub.s32 0, %v559
  %v561 = vrot.slane %v551, %v560
  %v563 = vadd.f32 %v556, %v561
  %v564 = vmax.f32 %v563, 0.0
  %v565 = vpack.c.bf16 %v564, %v564
  %v566 = vld [vmem:[%s4] sm:$0xff]
  %v567 = vld [vmem:[%s4 + $0x8] sm:$0xff]
  %v568 = vld [vmem:[%s4 + $0x10] sm:$0xff]
  %v569 = vld [vmem:[%s4 + $0x18] sm:$0xff]
  %v570 = vld [vmem:[%s4 + $0x20] sm:$0xff]
  %v571 = vld [vmem:[%s4 + $0x28] sm:$0xff]
  %v572 = vld [vmem:[%s4 + $0x30] sm:$0xff]
  %v573 = vld [vmem:[%s4 + $0x38] sm:$0xff]
  %v574 = vld [vmem:[%s4 + $0x40] sm:$0xff]
  %v575 = vld [vmem:[%s4 + $0x48] sm:$0xff]
  %v576 = vld [vmem:[%s4 + $0x50] sm:$0xff]
  %v577 = vld [vmem:[%s4 + $0x58] sm:$0xff]
  %v578 = vld [vmem:[%s4 + $0x60] sm:$0xff]
  %v579 = vld [vmem:[%s4 + $0x68] sm:$0xff]
  %v580 = vld [vmem:[%s4 + $0x70] sm:$0xff]
  %v581 = vld [vmem:[%s4 + $0x78] sm:$0xff]
  %v598 = vunpack.c.l.b16 %v566
  %v599 = vunpack.c.h.b16 %v566
  %v600 = vunpack.c.l.b16 %v567
  %v601 = vunpack.c.h.b16 %v567
  %v602 = vunpack.c.l.b16 %v568
  %v603 = vunpack.c.h.b16 %v568
  %v604 = vunpack.c.l.b16 %v569
  %v605 = vunpack.c.h.b16 %v569
  %v606 = vunpack.c.l.b16 %v570
  %v607 = vunpack.c.h.b16 %v570
  %v608 = vunpack.c.l.b16 %v571
  %v609 = vunpack.c.h.b16 %v571
  %v610 = vunpack.c.l.b16 %v572
  %v611 = vunpack.c.h.b16 %v572
  %v612 = vunpack.c.l.b16 %v573
  %v613 = vunpack.c.h.b16 %v573
  %v614 = vunpack.c.l.b16 %v574
  %v615 = vunpack.c.h.b16 %v574
  %v616 = vunpack.c.l.b16 %v575
  %v617 = vunpack.c.h.b16 %v575
  %v618 = vunpack.c.l.b16 %v576
  %v619 = vunpack.c.h.b16 %v576
  %v620 = vunpack.c.l.b16 %v577
  %v621 = vunpack.c.h.b16 %v577
  %v622 = vunpack.c.l.b16 %v578
  %v623 = vunpack.c.h.b16 %v578
  %v624 = vunpack.c.l.b16 %v579
  %v625 = vunpack.c.h.b16 %v579
  %v626 = vunpack.c.l.b16 %v580
  %v627 = vunpack.c.h.b16 %v580
  %v628 = vunpack.c.l.b16 %v581
  %v629 = vunpack.c.h.b16 %v581
  %v630 = vpack.c.b16 %v600, %v598
  %v631 = vpack.c.b16 %v601, %v599
  %v632 = vpack.c.b16 %v604, %v602
  %v633 = vpack.c.b16 %v605, %v603
  %v634 = vpack.c.b16 %v608, %v606
  %v635 = vpack.c.b16 %v609, %v607
  %v636 = vpack.c.b16 %v612, %v610
  %v637 = vpack.c.b16 %v613, %v611
  %v638 = vpack.c.b16 %v616, %v614
  %v639 = vpack.c.b16 %v617, %v615
  %v640 = vpack.c.b16 %v620, %v618
  %v641 = vpack.c.b16 %v621, %v619
  %v642 = vpack.c.b16 %v624, %v622
  %v643 = vpack.c.b16 %v625, %v623
  %v644 = vpack.c.b16 %v628, %v626
  %v645 = vpack.c.b16 %v629, %v627
  %662 = vmatprep.subr.bf16.mxu0 %v631
  %663 = vmatpush1.bf16.msra.mxu0 %v630
  %664 = vmatprep.subr.bf16.mxu0 %v633
  %665 = vmatpush1.bf16.msra.mxu0 %v632
  %666 = vmatprep.subr.bf16.mxu0 %v635
  %667 = vmatpush1.bf16.msra.mxu0 %v634
  %668 = vmatprep.subr.bf16.mxu0 %v637
  %669 = vmatpush1.bf16.msra.mxu0 %v636
  %670 = vmatprep.subr.bf16.mxu0 %v639
  %671 = vmatpush1.bf16.msra.mxu0 %v638
  %672 = vmatprep.subr.bf16.mxu0 %v641
  %673 = vmatpush1.bf16.msra.mxu0 %v640
  %674 = vmatprep.subr.bf16.mxu0 %v643
  %675 = vmatpush1.bf16.msra.mxu0 %v642
  %676 = vmatprep.subr.bf16.mxu0 %v645
  %677 = vmatpush1.bf16.msra.mxu0 %v644
  %678 = vmatprep.subr.bf16.mxu0 0
  %679 = vmatpush1.bf16.msra.mxu0 0
  %680 = vmatprep.subr.bf16.mxu0 0
  %681 = vmatpush1.bf16.msra.mxu0 0
  %682 = vmatprep.subr.bf16.mxu0 0
  %683 = vmatpush1.bf16.msra.mxu0 0
  %684 = vmatprep.subr.bf16.mxu0 0
  %685 = vmatpush1.bf16.msra.mxu0 0
  %686 = vmatprep.subr.bf16.mxu0 0
  %687 = vmatpush1.bf16.msra.mxu0 0
  %688 = vmatprep.subr.bf16.mxu0 0
  %689 = vmatpush1.bf16.msra.mxu0 0
  %690 = vmatprep.subr.bf16.mxu0 0
  %691 = vmatpush1.bf16.msra.mxu0 0
  %692 = vmatprep.subr.bf16.mxu0 0
  %693 = vmatpush1.bf16.msra.mxu0 0
  %694 = vmatprep.mubr.bf16.mxu0 0
  %695 = vmatmul.mubr.bf16.gmra.mrb[0].mxu0 %v565
  %v696 = vpop.f32.mrb[0].mxu0
  %v697 = vadd.f32 0.0, %v696
  %v698 = vpop.f32.mrb[0].mxu0
  %v699 = vadd.f32 0.0, %v698
  %v700 = vpop.f32.mrb[0].mxu0
  %v701 = vpop.f32.mrb[0].mxu0
  %702 = vdwg.mxu0
  %v703 = vld [vmem:[%s5] sm:$0x3]
  %v704 = vld [vmem:[%s6] sm:$0x3]
  %v705 = vsel %vm527, %v697, 0.0
  %v706 = vrot.slane %v705, 4
  %v707 = vadd.f32 %v705, %v706
  %v708 = vrot.slane %v707, 2
  %v709 = vadd.f32 %v707, %v708
  %v710 = vrot.slane %v709, 1
  %v711 = vadd.f32 %v709, %v710
  %v712 = vsel %vm527, %v699, 0.0
  %v713 = vrot.slane %v712, 4
  %v714 = vadd.f32 %v712, %v713
  %v715 = vrot.slane %v714, 2
  %v716 = vadd.f32 %v714, %v715
  %v717 = vrot.slane %v716, 1
  %v718 = vadd.f32 %v716, %v717
  %v719 = vmul.f32 %v711, %v535
  %v720 = vmul.f32 %v718, %v535
  %v721 = vsub.f32 %v697, %v719
  %v722 = vsub.f32 %v699, %v720
  %v723 = vmul.f32 %v721, %v721
  %v724 = vmul.f32 %v722, %v722
  %v725 = vsel %vm527, %v723, 0.0
  %v726 = vrot.slane %v725, 4
  %v727 = vadd.f32 %v725, %v726
  %v728 = vrot.slane %v727, 2
  %v729 = vadd.f32 %v727, %v728
  %v730 = vrot.slane %v729, 1
  %v731 = vadd.f32 %v729, %v730
  %v732 = vsel %vm527, %v724, 0.0
  %v733 = vrot.slane %v732, 4
  %v734 = vadd.f32 %v732, %v733
  %v735 = vrot.slane %v734, 2
  %v736 = vadd.f32 %v734, %v735
  %v737 = vrot.slane %v736, 1
  %v738 = vadd.f32 %v736, %v737
  %v739 = vmul.f32 %v731, %v535
  %v740 = vmul.f32 %v738, %v535
  %v741 = vadd.f32 %v739, 1e-05
  %v742 = vadd.f32 %v740, 1e-05
  %v743 = vrsqrt.pop %v741
  %v744 = vrsqrt.pop %v742
  %v746 = vlaneseq
  %v747 = vshrl.u32 %v746, 7
  %v748 = vsub.s32 0, %v747
  %v749 = vrot.slane %v703, %v748
  %v750 = vlaneseq
  %v751 = vshrl.u32 %v750, 7
  %v752 = vsub.s32 1, %v751
  %v753 = vrot.slane %v703, %v752
  %v756 = vmul.f32 %v743, %v749
  %v757 = vmul.f32 %v744, %v753
  %v758 = vmul.f32 %v719, %v756
  %v759 = vmul.f32 %v720, %v757
  %v762 = vcombine.low %v758, %v759
  %v764 = vunpack.c.l.s4 1966171168
  %v765 = vunpack.c.0.s8 %v764
  %v766 = vlaneseq
  %v767 = vshrl.u32 %v766, 7
  %v768 = vsub.s32 %v765, %v767
  %v769 = vrot.slane %v762, %v768
  %v771 = vunpack.c.l.s4 1966171168
  %v772 = vunpack.c.0.s8 %v771
  %v773 = vlaneseq
  %v774 = vshrl.u32 %v773, 7
  %v775 = vsub.s32 %v772, %v774
  %v776 = vrot.slane %v769, %v775
  %v778 = vsub.f32 %v704, %v776
  %v779 = vlaneseq
  %v780 = vshrl.u32 %v779, 7
  %v781 = vsub.s32 0, %v780
  %v782 = vrot.slane %v756, %v781
  %v783 = vlaneseq
  %v784 = vshrl.u32 %v783, 7
  %v785 = vsub.s32 0, %v784
  %v786 = vrot.slane %v757, %v785
  %v787 = vmul.f32 %v697, %v782
  %v788 = vmul.f32 %v699, %v786
  %v790 = vlaneseq
  %v791 = vshrl.u32 %v790, 7
  %v792 = vsub.s32 0, %v791
  %v793 = vrot.slane %v778, %v792
  %v794 = vlaneseq
  %v795 = vshrl.u32 %v794, 7
  %v796 = vsub.s32 1, %v795
  %v797 = vrot.slane %v778, %v796
  %v800 = vadd.f32 %v787, %v793
  %v801 = vadd.f32 %v788, %v797
  %v802 = vld [vmem:[%s7] sm:$0x1]
  %v803 = vld [vmem:[%s8] sm:$0xff]
  %v804 = vld [vmem:[%s8 + $0x8] sm:$0xff]
  %v805 = vld [vmem:[%s8 + $0x10] sm:$0xff]
  %v806 = vld [vmem:[%s8 + $0x18] sm:$0xff]
  %v807 = vld [vmem:[%s8 + $0x20] sm:$0xff]
  %v808 = vld [vmem:[%s8 + $0x28] sm:$0xff]
  %v809 = vld [vmem:[%s8 + $0x30] sm:$0xff]
  %v810 = vld [vmem:[%s8 + $0x38] sm:$0xff]
  %v811 = vld [vmem:[%s8 + $0x40] sm:$0xff]
  %v812 = vld [vmem:[%s8 + $0x48] sm:$0xff]
  %v813 = vld [vmem:[%s8 + $0x50] sm:$0xff]
  %v814 = vld [vmem:[%s8 + $0x58] sm:$0xff]
  %v815 = vld [vmem:[%s8 + $0x60] sm:$0xff]
  %v816 = vld [vmem:[%s8 + $0x68] sm:$0xff]
  %v817 = vld [vmem:[%s8 + $0x70] sm:$0xff]
  %v818 = vld [vmem:[%s8 + $0x78] sm:$0xff]
  %v835 = vunpack.c.l.b16 %v803
  %v836 = vunpack.c.h.b16 %v803
  %v837 = vunpack.c.l.b16 %v804
  %v838 = vunpack.c.h.b16 %v804
  %v839 = vunpack.c.l.b16 %v805
  %v840 = vunpack.c.h.b16 %v805
  %v841 = vunpack.c.l.b16 %v806
  %v842 = vunpack.c.h.b16 %v806
  %v843 = vunpack.c.l.b16 %v807
  %v844 = vunpack.c.h.b16 %v807
  %v845 = vunpack.c.l.b16 %v808
  %v846 = vunpack.c.h.b16 %v808
  %v847 = vunpack.c.l.b16 %v809
  %v848 = vunpack.c.h.b16 %v809
  %v849 = vunpack.c.l.b16 %v810
  %v850 = vunpack.c.h.b16 %v810
  %v851 = vunpack.c.l.b16 %v811
  %v852 = vunpack.c.h.b16 %v811
  %v853 = vunpack.c.l.b16 %v812
  %v854 = vunpack.c.h.b16 %v812
  %v855 = vunpack.c.l.b16 %v813
  %v856 = vunpack.c.h.b16 %v813
  %v857 = vunpack.c.l.b16 %v814
  %v858 = vunpack.c.h.b16 %v814
  %v859 = vunpack.c.l.b16 %v815
  %v860 = vunpack.c.h.b16 %v815
  %v861 = vunpack.c.l.b16 %v816
  %v862 = vunpack.c.h.b16 %v816
  %v863 = vunpack.c.l.b16 %v817
  %v864 = vunpack.c.h.b16 %v817
  %v865 = vunpack.c.l.b16 %v818
  %v866 = vunpack.c.h.b16 %v818
  %v867 = vpack.c.b16 %v837, %v835
  %v868 = vpack.c.b16 %v838, %v836
  %v869 = vpack.c.b16 %v841, %v839
  %v870 = vpack.c.b16 %v842, %v840
  %v871 = vpack.c.b16 %v845, %v843
  %v872 = vpack.c.b16 %v846, %v844
  %v873 = vpack.c.b16 %v849, %v847
  %v874 = vpack.c.b16 %v850, %v848
  %v875 = vpack.c.b16 %v853, %v851
  %v876 = vpack.c.b16 %v854, %v852
  %v877 = vpack.c.b16 %v857, %v855
  %v878 = vpack.c.b16 %v858, %v856
  %v879 = vpack.c.b16 %v861, %v859
  %v880 = vpack.c.b16 %v862, %v860
  %v881 = vpack.c.b16 %v865, %v863
  %v882 = vpack.c.b16 %v866, %v864
  %899 = vmatprep.subr.bf16.mxu0 %v868
  %900 = vmatpush1.bf16.msra.mxu0 %v867
  %901 = vmatprep.subr.bf16.mxu0 %v870
  %902 = vmatpush1.bf16.msra.mxu0 %v869
  %903 = vmatprep.subr.bf16.mxu0 %v872
  %904 = vmatpush1.bf16.msra.mxu0 %v871
  %905 = vmatprep.subr.bf16.mxu0 %v874
  %906 = vmatpush1.bf16.msra.mxu0 %v873
  %907 = vmatprep.subr.bf16.mxu0 %v876
  %908 = vmatpush1.bf16.msra.mxu0 %v875
  %909 = vmatprep.subr.bf16.mxu0 %v878
  %910 = vmatpush1.bf16.msra.mxu0 %v877
  %911 = vmatprep.subr.bf16.mxu0 %v880
  %912 = vmatpush1.bf16.msra.mxu0 %v879
  %913 = vmatprep.subr.bf16.mxu0 %v882
  %914 = vmatpush1.bf16.msra.mxu0 %v881
  %915 = vmatprep.subr.bf16.mxu0 0
  %916 = vmatpush1.bf16.msra.mxu0 0
  %917 = vmatprep.subr.bf16.mxu0 0
  %918 = vmatpush1.bf16.msra.mxu0 0
  %919 = vmatprep.subr.bf16.mxu0 0
  %920 = vmatpush1.bf16.msra.mxu0 0
  %921 = vmatprep.subr.bf16.mxu0 0
  %922 = vmatpush1.bf16.msra.mxu0 0
  %923 = vmatprep.subr.bf16.mxu0 0
  %924 = vmatpush1.bf16.msra.mxu0 0
  %925 = vmatprep.subr.bf16.mxu0 0
  %926 = vmatpush1.bf16.msra.mxu0 0
  %927 = vmatprep.subr.bf16.mxu0 0
  %928 = vmatpush1.bf16.msra.mxu0 0
  %929 = vmatprep.subr.bf16.mxu0 0
  %930 = vmatpush1.bf16.msra.mxu0 0
  %931 = vmatprep.mubr.bf16.mxu0 0
  %932 = vmatmul.mubr.bf16.gmra.mrb[0].mxu0 %v802
  %v933 = vpop.f32.mrb[0].mxu0
  %v934 = vadd.f32 0.0, %v933
  %v935 = vpop.f32.mrb[0].mxu0
  %v936 = vadd.f32 0.0, %v935
  %v937 = vpop.f32.mrb[0].mxu0
  %v938 = vpop.f32.mrb[0].mxu0
  %939 = vdwg.mxu0
  %v940 = vld [vmem:[%s9] sm:$0x3]
  %v941 = vld [vmem:[%s10] sm:$0x3]
  %v942 = vsel %vm527, %v934, 0.0
  %v943 = vrot.slane %v942, 4
  %v944 = vadd.f32 %v942, %v943
  %v945 = vrot.slane %v944, 2
  %v946 = vadd.f32 %v944, %v945
  %v947 = vrot.slane %v946, 1
  %v948 = vadd.f32 %v946, %v947
  %v949 = vsel %vm527, %v936, 0.0
  %v950 = vrot.slane %v949, 4
  %v951 = vadd.f32 %v949, %v950
  %v952 = vrot.slane %v951, 2
  %v953 = vadd.f32 %v951, %v952
  %v954 = vrot.slane %v953, 1
  %v955 = vadd.f32 %v953, %v954
  %v956 = vmul.f32 %v948, %v535
  %v957 = vmul.f32 %v955, %v535
  %v958 = vsub.f32 %v934, %v956
  %v959 = vsub.f32 %v936, %v957
  %v960 = vmul.f32 %v958, %v958
  %v961 = vmul.f32 %v959, %v959
  %v962 = vsel %vm527, %v960, 0.0
  %v963 = vrot.slane %v962, 4
  %v964 = vadd.f32 %v962, %v963
  %v965 = vrot.slane %v964, 2
  %v966 = vadd.f32 %v964, %v965
  %v967 = vrot.slane %v966, 1
  %v968 = vadd.f32 %v966, %v967
  %v969 = vsel %vm527, %v961, 0.0
  %v970 = vrot.slane %v969, 4
  %v971 = vadd.f32 %v969, %v970
  %v972 = vrot.slane %v971, 2
  %v973 = vadd.f32 %v971, %v972
  %v974 = vrot.slane %v973, 1
  %v975 = vadd.f32 %v973, %v974
  %v976 = vmul.f32 %v968, %v535
  %v977 = vmul.f32 %v975, %v535
  %v978 = vadd.f32 %v976, 1e-05
  %v979 = vadd.f32 %v977, 1e-05
  %v980 = vrsqrt.pop %v978
  %v981 = vrsqrt.pop %v979
  %v983 = vlaneseq
  %v984 = vshrl.u32 %v983, 7
  %v985 = vsub.s32 0, %v984
  %v986 = vrot.slane %v940, %v985
  %v987 = vlaneseq
  %v988 = vshrl.u32 %v987, 7
  %v989 = vsub.s32 1, %v988
  %v990 = vrot.slane %v940, %v989
  %v993 = vmul.f32 %v980, %v986
  %v994 = vmul.f32 %v981, %v990
  %v995 = vmul.f32 %v956, %v993
  %v996 = vmul.f32 %v957, %v994
  %v999 = vcombine.low %v995, %v996
  %v1001 = vunpack.c.l.s4 1966171168
  %v1002 = vunpack.c.0.s8 %v1001
  %v1003 = vlaneseq
  %v1004 = vshrl.u32 %v1003, 7
  %v1005 = vsub.s32 %v1002, %v1004
  %v1006 = vrot.slane %v999, %v1005
  %v1008 = vunpack.c.l.s4 1966171168
  %v1009 = vunpack.c.0.s8 %v1008
  %v1010 = vlaneseq
  %v1011 = vshrl.u32 %v1010, 7
  %v1012 = vsub.s32 %v1009, %v1011
  %v1013 = vrot.slane %v1006, %v1012
  %v1015 = vsub.f32 %v941, %v1013
  %v1016 = vlaneseq
  %v1017 = vshrl.u32 %v1016, 7
  %v1018 = vsub.s32 0, %v1017
  %v1019 = vrot.slane %v993, %v1018
  %v1020 = vlaneseq
  %v1021 = vshrl.u32 %v1020, 7
  %v1022 = vsub.s32 0, %v1021
  %v1023 = vrot.slane %v994, %v1022
  %v1024 = vmul.f32 %v934, %v1019
  %v1025 = vmul.f32 %v936, %v1023
  %v1027 = vlaneseq
  %v1028 = vshrl.u32 %v1027, 7
  %v1029 = vsub.s32 0, %v1028
  %v1030 = vrot.slane %v1015, %v1029
  %v1031 = vlaneseq
  %v1032 = vshrl.u32 %v1031, 7
  %v1033 = vsub.s32 1, %v1032
  %v1034 = vrot.slane %v1015, %v1033
  %v1037 = vadd.f32 %v1024, %v1030
  %v1038 = vadd.f32 %v1025, %v1034
  %v1039 = vadd.f32 %v800, %v1037
  %v1040 = vadd.f32 %v801, %v1038
  %v1041 = vmax.f32 %v1039, 0.0
  %v1042 = vmax.f32 %v1040, 0.0
  %v1043 = vpack.c.bf16 %v1041, %v1041
  %v1044 = vpack.c.bf16 %v1042, %v1042
  %v1047 = vcombine.low %v1043, %v1044
  %v1049 = vunpack.c.l.s4 1966171168
  %v1050 = vunpack.c.0.s8 %v1049
  %v1051 = vlaneseq
  %v1052 = vshrl.u32 %v1051, 7
  %v1053 = vsub.s32 %v1050, %v1052
  %v1054 = vrot.slane %v1047, %v1053
  %v1056 = vunpack.c.l.s4 1966171168
  %v1057 = vunpack.c.0.s8 %v1056
  %v1058 = vlaneseq
  %v1059 = vshrl.u32 %v1058, 7
  %v1060 = vsub.s32 %v1057, %v1059
  %v1061 = vrot.slane %v1054, %v1060
  %1063 = vst [vmem:[%s11] sm:$0x3] %v1061
  // Predicated region
  $region46: #{model_forward.18} parent=0 // pred_check
    _
  $region47: #{model_forward.18} parent=0 // pred_check_branch
    %1065 = sbr.rel (0) target = $region49
  $region48: #{model_forward.18} parent=0 // pred_region
    _
  $region49: #{model_forward.18} parent=0 // pred_fallthru
    _
  // Predicated region
  $region50: #{model_forward.18} parent=0 // pred_check
    _
  $region51: #{model_forward.18} parent=0 // pred_check_branch
    %1067 = sbr.rel (0) target = $region53
  $region52: #{model_forward.18} parent=0 // pred_region
    _
  $region53: #{model_forward.18} parent=0 // pred_fallthru
    _

</llo_original>
